<compile_context>
chip_gen: v7x
topology: tpu7x:2x2x1
jax: 0.10.0
libtpu: 0.0.40
codegen_flags: <defaults>
</compile_context>

<pallas_src>
import jax
import jax.numpy as jnp
from jax.experimental import pallas as pl
from jax.experimental.pallas import tpu as pltpu

LANE = 128


def _round_up(x, m):
    return ((x + m - 1) // m) * m


def _choose_tb(B, tb=None):
    """Pick a batch tile (multiple of 128), clamped to the 128-padded batch."""
    Bp = _round_up(B, LANE)
    if tb is not None:
        assert tb % LANE == 0, "batch tile must be a multiple of 128 (lane width)"
        return min(tb, Bp)
    if Bp <= LANE:
        return LANE
    # Aim for 2 balanced tiles: both v7x TensorCores get work, and the extra
    # grid step is only ~0.35us on single-TC v5e/v6e. Cap at 1024 rows/tile.
    half = _round_up((Bp + 1) // 2, LANE)
    return min(half, 1024)


def mlp_kernel(x_ref, w1_ref, b1_ref, w2_ref, b2_ref, w3_ref, b3_ref, o_ref):
    """Fused 3-layer MLP for one batch tile.

    x_ref:  (tb, F)   VMEM batch tile, f32
    w1_ref: (F, Hp)   VMEM bf16, resident across grid steps (constant index map)
    b1_ref: (1, Hp)   f32
    w2_ref: (Hp, Hp)  VMEM bf16, resident
    b2_ref: (1, Hp)   f32
    w3_ref: (1, Hp)   f32 final-layer weights as a row vector (VPU path)
    b3_ref: (1,)      SMEM f32 scalar
    o_ref:  (1, tb)   lane-dense output row, f32
    """
    # bf16 operands into the MXU, f32 accumulation; bias/ReLU in f32.
    x = x_ref[...].astype(jnp.bfloat16)
    h1 = jnp.dot(x, w1_ref[...], preferred_element_type=jnp.float32) + b1_ref[...]
    h1 = jnp.maximum(h1, 0.0)
    # TODO(synk): nn.Dropout is identity in eval/inference mode; training-mode
    # stochastic dropout (pltpu.prng_seed / prng_random_bits) is not implemented.
    h2 = jnp.dot(h1.astype(jnp.bfloat16), w2_ref[...],
                 preferred_element_type=jnp.float32) + b2_ref[...]
    h2 = jnp.maximum(h2, 0.0)
    # Final Linear(H, 1): an N=1 matmul wastes >99% of an MXU push, so do it as
    # a VPU multiply + cross-lane reduction. (A fully batch-on-lanes transposed
    # formulation would avoid the row relayout, but the review bounds that at a
    # few % -- kept simple here.)
    y = jnp.sum(h2 * w3_ref[...], axis=-1) + b3_ref[0]          # (tb,)
    o_ref[...] = y[None, :].astype(o_ref.dtype)                  # (1, tb) lane-dense


def _build_mlp_call(Bp, tb, F, Hp, n_tiles, cost, single_buffer_weights):
    const_kw = {"pipeline_mode": pl.Buffered(1)} if single_buffer_weights else {}
    return pl.pallas_call(
        mlp_kernel,
        out_shape=jax.ShapeDtypeStruct((1, Bp), jnp.float32),
        grid_spec=pltpu.PrefetchScalarGridSpec(
            num_scalar_prefetch=0,
            grid=(n_tiles,),
            in_specs=[
                pl.BlockSpec((tb, F), lambda i: (i, 0)),                # x tile
                pl.BlockSpec((F, Hp), lambda i: (0, 0), **const_kw),    # W1 bf16 (resident)
                pl.BlockSpec((1, Hp), lambda i: (0, 0), **const_kw),    # b1
                pl.BlockSpec((Hp, Hp), lambda i: (0, 0), **const_kw),   # W2 bf16 (resident)
                pl.BlockSpec((1, Hp), lambda i: (0, 0), **const_kw),    # b2
                pl.BlockSpec((1, Hp), lambda i: (0, 0), **const_kw),    # w3 row
                pl.BlockSpec(memory_space=pltpu.MemorySpace.SMEM),      # b3 scalar
            ],
            out_specs=pl.BlockSpec((1, tb), lambda i: (0, i)),          # lane-dense out
        ),
        compiler_params=pltpu.CompilerParams(
            dimension_semantics=("parallel",),
        ),
        cost_estimate=cost,
    )


def prepare_params(params):
    """One-time parameter prep (call once, NOT per forward).

    Pads the hidden dim 200 -> 256 so weight tiles / activations are
    (8,128)-aligned (zero padding is exact through ReLU and the final reduce)
    and stores the two MXU weight matrices in bf16. Biases, the final-layer row
    vector and b3 stay f32 (used on the VPU / for accumulation).
    """
    w1, b1, w2, b2, w3, b3 = params
    F, H = w1.shape
    Hp = _round_up(H, LANE)
    w1p = jnp.zeros((F, Hp), jnp.bfloat16).at[:, :H].set(w1.astype(jnp.bfloat16))
    b1p = jnp.zeros((1, Hp), jnp.float32).at[:, :H].set(
        jnp.reshape(b1, (1, H)).astype(jnp.float32))
    w2p = jnp.zeros((Hp, Hp), jnp.bfloat16).at[:H, :H].set(w2.astype(jnp.bfloat16))
    b2p = jnp.zeros((1, Hp), jnp.float32).at[:, :H].set(
        jnp.reshape(b2, (1, H)).astype(jnp.float32))
    w3p = jnp.zeros((1, Hp), jnp.float32).at[:, :H].set(
        jnp.reshape(w3, (1, H)).astype(jnp.float32))
    b3p = jnp.reshape(jnp.asarray(b3, jnp.float32), (1,))
    return (w1p, b1p, w2p, b2p, w3p, b3p)


def neural_model_forward(x, prepared_params, tb=None):
    """Forward pass of NeuralModel (model_type='nonlinear').

    x:               [B, F] float32
    prepared_params: output of prepare_params() (padded + bf16 weights)
    tb:              optional batch tile (multiple of 128); None -> auto.
    """
    w1p, b1p, w2p, b2p, w3p, b3p = prepared_params
    B, F = x.shape
    assert w1p.shape[0] == F, "feature dim mismatch with prepared params"
    Hp = w1p.shape[1]

    tb = _choose_tb(B, tb)
    Bp = _round_up(B, tb)
    xp = x if Bp == B else jnp.pad(x, ((0, Bp - B), (0, 0)))
    n_tiles = Bp // tb

    cost = pl.CostEstimate(
        flops=2 * Bp * Hp * (F + Hp) + 4 * Bp * Hp,
        transcendentals=0,
        bytes_accessed=(4 * Bp * F                      # x (f32)
                        + 2 * (F * Hp + Hp * Hp)        # W1/W2 (bf16)
                        + 4 * (3 * Hp + 1)              # b1, b2, w3 row, b3 (f32)
                        + 4 * Bp),                      # output (f32)
    )

    args = (xp, w1p, b1p, w2p, b2p, w3p, b3p)
    try:
        out = _build_mlp_call(Bp, tb, F, Hp, n_tiles, cost,
                              single_buffer_weights=True)(*args)
    except Exception:
        # pipeline_mode / pl.Buffered(1) unsupported in this jax build: fall
        # back to default double-buffering of the (constant) weight tiles.
        out = _build_mlp_call(Bp, tb, F, Hp, n_tiles, cost,
                              single_buffer_weights=False)(*args)

    return out[0, :B].reshape(B, 1)


def init_params(key, nfeatures, hidden=200):
    """Deterministic init mimicking nn.Linear's U(-1/sqrt(fan_in), 1/sqrt(fan_in))."""
    k1, k2, k3, k4, k5, k6 = jax.random.split(key, 6)

    def lin(kw, kb, fan_in, fan_out):
        bound = 1.0 / jnp.sqrt(fan_in)
        w = jax.random.uniform(kw, (fan_in, fan_out), jnp.float32, -bound, bound)
        b = jax.random.uniform(kb, (fan_out,), jnp.float32, -bound, bound)
        return w, b

    w1, b1 = lin(k1, k2, nfeatures, hidden)
    w2, b2 = lin(k3, k4, hidden, hidden)
    w3, b3 = lin(k5, k6, hidden, 1)
    return (w1, b1, w2, b2, w3.reshape(hidden), b3.reshape(1))


def reference_forward_f32(x, params):
    """Full f32 reference of the PyTorch module (eval mode, dropout = identity)."""
    w1, b1, w2, b2, w3, b3 = params
    h1 = jnp.maximum(x @ w1 + b1[None, :], 0.0)
    h2 = jnp.maximum(h1 @ w2 + b2[None, :], 0.0)
    return h2 @ w3.reshape(-1, 1) + b3.reshape(1, 1)


def reference_forward_bf16(x, params):
    """Reference following the same bf16-operand / f32-accumulate matmul path."""
    w1, b1, w2, b2, w3, b3 = params
    h1 = jnp.dot(x.astype(jnp.bfloat16), w1.astype(jnp.bfloat16),
                 preferred_element_type=jnp.float32) + b1[None, :]
    h1 = jnp.maximum(h1, 0.0)
    h2 = jnp.dot(h1.astype(jnp.bfloat16), w2.astype(jnp.bfloat16),
                 preferred_element_type=jnp.float32) + b2[None, :]
    h2 = jnp.maximum(h2, 0.0)
    return jnp.sum(h2 * w3[None, :], axis=-1, keepdims=True) + b3.reshape(1, 1)


if __name__ == "__main__":
    nfeatures = 32
    hidden = 200
    batch = 512   # auto-tiler -> 2 tiles of 256: both v7x TCs busy, cheap on v5e/v6e

    key = jax.random.PRNGKey(0)
    kx, kp, kx2 = jax.random.split(key, 3)
    x = jax.random.normal(kx, (batch, nfeatures), dtype=jnp.float32)
    params = init_params(kp, nfeatures, hidden)

    # One-time parameter prep (pad hidden dim, cast MXU weights to bf16).
    prepped = prepare_params(params)

    y = neural_model_forward(x, prepped)
    y = jax.block_until_ready(y)
    assert y.shape == (batch, 1)

    # Tight check vs a reference using the same bf16-operand matmul path, plus a
    # loose sanity check vs the full-f32 math (bf16 MXU precision trade-off).
    y_bf16 = reference_forward_bf16(x, params)
    y_f32 = reference_forward_f32(x, params)
    assert jnp.allclose(y, y_bf16, atol=2e-3, rtol=2e-3), "mismatch vs bf16-path reference"
    assert jnp.allclose(y, y_f32, atol=5e-2, rtol=5e-2), "mismatch vs f32 reference"

    # Unaligned-batch path (pad + slice) sanity check.
    x2 = jax.random.normal(kx2, (37, nfeatures), dtype=jnp.float32)
    y2 = jax.block_until_ready(neural_model_forward(x2, prepped))
    assert y2.shape == (37, 1)
    assert jnp.allclose(y2, reference_forward_bf16(x2, params), atol=2e-3, rtol=2e-3)

    print("KERNEL_OK")
</pallas_src>

<mosaic_0001>
module attributes {stable_mosaic.version = 11 : i64} {
  func.func @mlp_kernel(%arg0: i32, %arg1: memref<256x32xf32, #tpu.memory_space<vmem>>, %arg2: memref<32x256xbf16, #tpu.memory_space<vmem>>, %arg3: memref<1x256xf32, #tpu.memory_space<vmem>>, %arg4: memref<256x256xbf16, #tpu.memory_space<vmem>>, %arg5: memref<1x256xf32, #tpu.memory_space<vmem>>, %arg6: memref<1x256xf32, #tpu.memory_space<vmem>>, %arg7: memref<1xf32, #tpu.memory_space<smem>>, %arg8: memref<1x256xf32, #tpu.memory_space<vmem>>) attributes {dimension_semantics = [#tpu.dimension_semantics<parallel>], iteration_bounds = array<i64: 2>, scalar_prefetch = 0 : i64, scratch_operands = 0 : i64, tpu.core_type = #tpu.core_type<tc>, window_params = [{transform_indices = @transform_0, window_bounds = array<i64: 256, 32>}, {pipeline_mode = #tpu.pipeline_mode<synchronous>, transform_indices = @transform_1, window_bounds = array<i64: 32, 256>}, {pipeline_mode = #tpu.pipeline_mode<synchronous>, transform_indices = @transform_2, window_bounds = array<i64: 1, 256>}, {pipeline_mode = #tpu.pipeline_mode<synchronous>, transform_indices = @transform_3, window_bounds = array<i64: 256, 256>}, {pipeline_mode = #tpu.pipeline_mode<synchronous>, transform_indices = @transform_4, window_bounds = array<i64: 1, 256>}, {pipeline_mode = #tpu.pipeline_mode<synchronous>, transform_indices = @transform_5, window_bounds = array<i64: 1, 256>}, {transform_indices = @transform_6, window_bounds = array<i64: 1>}, {transform_indices = @transform_7, window_bounds = array<i64: 1, 256>}]} {
    %c0 = arith.constant 0 : index
    %c0_0 = arith.constant 0 : index
    %0 = vector.load %arg1[%c0, %c0_0] : memref<256x32xf32, #tpu.memory_space<vmem>>, vector<256x32xf32>
    %1 = arith.truncf %0 : vector<256x32xf32> to vector<256x32xbf16>
    %c0_1 = arith.constant 0 : index
    %c0_2 = arith.constant 0 : index
    %2 = vector.load %arg2[%c0_1, %c0_2] : memref<32x256xbf16, #tpu.memory_space<vmem>>, vector<32x256xbf16>
    %cst = arith.constant dense<0.000000e+00> : vector<256x256xf32>
    %3 = tpu.matmul %1, %2, %cst {dimension_numbers = #tpu.dot_dimension_numbers<[1], [0], [0], [1], [0, 0, 1, 1], [], []>} : vector<256x32xbf16>, vector<32x256xbf16>, vector<256x256xf32> -> vector<256x256xf32>
    %c0_3 = arith.constant 0 : index
    %c0_4 = arith.constant 0 : index
    %4 = vector.load %arg3[%c0_3, %c0_4] : memref<1x256xf32, #tpu.memory_space<vmem>>, vector<1x256xf32>
    %5 = vector.broadcast %4 : vector<1x256xf32> to vector<256x256xf32>
    %6 = arith.addf %3, %5 : vector<256x256xf32>
    %cst_5 = arith.constant 0.000000e+00 : f32
    %7 = vector.broadcast %cst_5 : f32 to vector<256x256xf32>
    %8 = arith.maximumf %6, %7 : vector<256x256xf32>
    %9 = arith.truncf %8 : vector<256x256xf32> to vector<256x256xbf16>
    %c0_6 = arith.constant 0 : index
    %c0_7 = arith.constant 0 : index
    %10 = vector.load %arg4[%c0_6, %c0_7] : memref<256x256xbf16, #tpu.memory_space<vmem>>, vector<256x256xbf16>
    %cst_8 = arith.constant dense<0.000000e+00> : vector<256x256xf32>
    %11 = tpu.matmul %9, %10, %cst_8 {dimension_numbers = #tpu.dot_dimension_numbers<[1], [0], [0], [1], [0, 0, 1, 1], [], []>} : vector<256x256xbf16>, vector<256x256xbf16>, vector<256x256xf32> -> vector<256x256xf32>
    %c0_9 = arith.constant 0 : index
    %c0_10 = arith.constant 0 : index
    %12 = vector.load %arg5[%c0_9, %c0_10] : memref<1x256xf32, #tpu.memory_space<vmem>>, vector<1x256xf32>
    %13 = vector.broadcast %12 : vector<1x256xf32> to vector<256x256xf32>
    %14 = arith.addf %11, %13 : vector<256x256xf32>
    %cst_11 = arith.constant 0.000000e+00 : f32
    %15 = vector.broadcast %cst_11 : f32 to vector<256x256xf32>
    %16 = arith.maximumf %14, %15 : vector<256x256xf32>
    %c0_12 = arith.constant 0 : index
    %c0_13 = arith.constant 0 : index
    %17 = vector.load %arg6[%c0_12, %c0_13] : memref<1x256xf32, #tpu.memory_space<vmem>>, vector<1x256xf32>
    %18 = vector.broadcast %17 : vector<1x256xf32> to vector<256x256xf32>
    %19 = arith.mulf %16, %18 : vector<256x256xf32>
    %cst_14 = arith.constant dense<0.000000e+00> : vector<256xf32>
    %20 = vector.multi_reduction <add>, %19, %cst_14 [1] : vector<256x256xf32> to vector<256xf32>
    %c0_15 = arith.constant 0 : index
    %21 = memref.load %arg7[%c0_15] : memref<1xf32, #tpu.memory_space<smem>>
    %22 = vector.broadcast %21 : f32 to vector<256xf32>
    %23 = arith.addf %20, %22 : vector<256xf32>
    %24 = vector.shape_cast %23 : vector<256xf32> to vector<1x256xf32>
    %c0_16 = arith.constant 0 : index
    %c0_17 = arith.constant 0 : index
    %25 = vector.load %arg8[%c0_16, %c0_17] : memref<1x256xf32, #tpu.memory_space<vmem>>, vector<1x256xf32>
    tpu.vector_store %arg8[%c0_16, %c0_17], %24 {strides = array<i32>} : memref<1x256xf32, #tpu.memory_space<vmem>>, vector<1x256xf32>,
    return
  }
  func.func @transform_0(%arg0: i32) -> (i32, i32) {
    %c0_i32 = arith.constant 0 : i32
    %c0_i32_0 = arith.constant 0 : i32
    return %arg0, %c0_i32 : i32, i32
  }
  func.func @transform_1(%arg0: i32) -> (i32, i32) {
    %c0_i32 = arith.constant 0 : i32
    %c0_i32_0 = arith.constant 0 : i32
    %c0_i32_1 = arith.constant 0 : i32
    return %c0_i32, %c0_i32_0 : i32, i32
  }
  func.func @transform_2(%arg0: i32) -> (i32, i32) {
    %c0_i32 = arith.constant 0 : i32
    %c0_i32_0 = arith.constant 0 : i32
    %c0_i32_1 = arith.constant 0 : i32
    return %c0_i32, %c0_i32_0 : i32, i32
  }
  func.func @transform_3(%arg0: i32) -> (i32, i32) {
    %c0_i32 = arith.constant 0 : i32
    %c0_i32_0 = arith.constant 0 : i32
    %c0_i32_1 = arith.constant 0 : i32
    return %c0_i32, %c0_i32_0 : i32, i32
  }
  func.func @transform_4(%arg0: i32) -> (i32, i32) {
    %c0_i32 = arith.constant 0 : i32
    %c0_i32_0 = arith.constant 0 : i32
    %c0_i32_1 = arith.constant 0 : i32
    return %c0_i32, %c0_i32_0 : i32, i32
  }
  func.func @transform_5(%arg0: i32) -> (i32, i32) {
    %c0_i32 = arith.constant 0 : i32
    %c0_i32_0 = arith.constant 0 : i32
    %c0_i32_1 = arith.constant 0 : i32
    return %c0_i32, %c0_i32_0 : i32, i32
  }
  func.func @transform_6(%arg0: i32) -> i32 {
    %c0_i32 = arith.constant 0 : i32
    %c0_i32_0 = arith.constant 0 : i32
    return %c0_i32 : i32
  }
  func.func @transform_7(%arg0: i32) -> (i32, i32) {
    %c0_i32 = arith.constant 0 : i32
    %c0_i32_0 = arith.constant 0 : i32
    return %c0_i32, %arg0 : i32, i32
  }
}

module attributes {stable_mosaic.version = 11 : i64} {
  func.func @mlp_kernel(%arg0: i32, %arg1: memref<256x32xf32, #tpu.memory_space<vmem>>, %arg2: memref<32x256xbf16, #tpu.memory_space<vmem>>, %arg3: memref<1x256xf32, #tpu.memory_space<vmem>>, %arg4: memref<256x256xbf16, #tpu.memory_space<vmem>>, %arg5: memref<1x256xf32, #tpu.memory_space<vmem>>, %arg6: memref<1x256xf32, #tpu.memory_space<vmem>>, %arg7: memref<1xf32, #tpu.memory_space<smem>>, %arg8: memref<1x256xf32, #tpu.memory_space<vmem>>) attributes {dimension_semantics = [#tpu.dimension_semantics<parallel>], iteration_bounds = array<i64: 2>, scalar_prefetch = 0 : i64, scratch_operands = 0 : i64, tpu.core_type = #tpu.core_type<tc>, window_params = [{transform_indices = @transform_0, window_bounds = array<i64: 256, 32>}, {pipeline_mode = #tpu.pipeline_mode<synchronous>, transform_indices = @transform_1, window_bounds = array<i64: 32, 256>}, {pipeline_mode = #tpu.pipeline_mode<synchronous>, transform_indices = @transform_2, window_bounds = array<i64: 1, 256>}, {pipeline_mode = #tpu.pipeline_mode<synchronous>, transform_indices = @transform_3, window_bounds = array<i64: 256, 256>}, {pipeline_mode = #tpu.pipeline_mode<synchronous>, transform_indices = @transform_4, window_bounds = array<i64: 1, 256>}, {pipeline_mode = #tpu.pipeline_mode<synchronous>, transform_indices = @transform_5, window_bounds = array<i64: 1, 256>}, {transform_indices = @transform_6, window_bounds = array<i64: 1>}, {transform_indices = @transform_7, window_bounds = array<i64: 1, 256>}]} {
    %c0 = arith.constant 0 : index
    %c0_0 = arith.constant 0 : index
    %0 = vector.load %arg1[%c0, %c0_0] : memref<256x32xf32, #tpu.memory_space<vmem>>, vector<256x32xf32>
    %1 = arith.truncf %0 : vector<256x32xf32> to vector<256x32xbf16>
    %c0_1 = arith.constant 0 : index
    %c0_2 = arith.constant 0 : index
    %2 = vector.load %arg2[%c0_1, %c0_2] : memref<32x256xbf16, #tpu.memory_space<vmem>>, vector<32x256xbf16>
    %cst = arith.constant dense<0.000000e+00> : vector<256x256xf32>
    %3 = tpu.matmul %1, %2, %cst {dimension_numbers = #tpu.dot_dimension_numbers<[1], [0], [0], [1], [0, 0, 1, 1], [], []>} : vector<256x32xbf16>, vector<32x256xbf16>, vector<256x256xf32> -> vector<256x256xf32>
    %c0_3 = arith.constant 0 : index
    %c0_4 = arith.constant 0 : index
    %4 = vector.load %arg3[%c0_3, %c0_4] : memref<1x256xf32, #tpu.memory_space<vmem>>, vector<1x256xf32>
    %5 = vector.broadcast %4 : vector<1x256xf32> to vector<256x256xf32>
    %6 = arith.addf %3, %5 : vector<256x256xf32>
    %cst_5 = arith.constant 0.000000e+00 : f32
    %7 = vector.broadcast %cst_5 : f32 to vector<256x256xf32>
    %8 = arith.maximumf %6, %7 : vector<256x256xf32>
    %9 = arith.truncf %8 : vector<256x256xf32> to vector<256x256xbf16>
    %c0_6 = arith.constant 0 : index
    %c0_7 = arith.constant 0 : index
    %10 = vector.load %arg4[%c0_6, %c0_7] : memref<256x256xbf16, #tpu.memory_space<vmem>>, vector<256x256xbf16>
    %cst_8 = arith.constant dense<0.000000e+00> : vector<256x256xf32>
    %11 = tpu.matmul %9, %10, %cst_8 {dimension_numbers = #tpu.dot_dimension_numbers<[1], [0], [0], [1], [0, 0, 1, 1], [], []>} : vector<256x256xbf16>, vector<256x256xbf16>, vector<256x256xf32> -> vector<256x256xf32>
    %c0_9 = arith.constant 0 : index
    %c0_10 = arith.constant 0 : index
    %12 = vector.load %arg5[%c0_9, %c0_10] : memref<1x256xf32, #tpu.memory_space<vmem>>, vector<1x256xf32>
    %13 = vector.broadcast %12 : vector<1x256xf32> to vector<256x256xf32>
    %14 = arith.addf %11, %13 : vector<256x256xf32>
    %cst_11 = arith.constant 0.000000e+00 : f32
    %15 = vector.broadcast %cst_11 : f32 to vector<256x256xf32>
    %16 = arith.maximumf %14, %15 : vector<256x256xf32>
    %c0_12 = arith.constant 0 : index
    %c0_13 = arith.constant 0 : index
    %17 = vector.load %arg6[%c0_12, %c0_13] : memref<1x256xf32, #tpu.memory_space<vmem>>, vector<1x256xf32>
    %18 = vector.broadcast %17 : vector<1x256xf32> to vector<256x256xf32>
    %19 = arith.mulf %16, %18 : vector<256x256xf32>
    %cst_14 = arith.constant dense<0.000000e+00> : vector<256xf32>
    %20 = vector.multi_reduction <add>, %19, %cst_14 [1] : vector<256x256xf32> to vector<256xf32>
    %c0_15 = arith.constant 0 : index
    %21 = memref.load %arg7[%c0_15] : memref<1xf32, #tpu.memory_space<smem>>
    %22 = vector.broadcast %21 : f32 to vector<256xf32>
    %23 = arith.addf %20, %22 : vector<256xf32>
    %24 = vector.shape_cast %23 : vector<256xf32> to vector<1x256xf32>
    %c0_16 = arith.constant 0 : index
    %c0_17 = arith.constant 0 : index
    %25 = vector.load %arg8[%c0_16, %c0_17] : memref<1x256xf32, #tpu.memory_space<vmem>>, vector<1x256xf32>
    tpu.vector_store %arg8[%c0_16, %c0_17], %24 {strides = array<i32>} : memref<1x256xf32, #tpu.memory_space<vmem>>, vector<1x256xf32>,
    return
  }
  func.func @transform_0(%arg0: i32) -> (i32, i32) {
    %c0_i32 = arith.constant 0 : i32
    %c0_i32_0 = arith.constant 0 : i32
    return %arg0, %c0_i32 : i32, i32
  }
  func.func @transform_1(%arg0: i32) -> (i32, i32) {
    %c0_i32 = arith.constant 0 : i32
    %c0_i32_0 = arith.constant 0 : i32
    %c0_i32_1 = arith.constant 0 : i32
    return %c0_i32, %c0_i32_0 : i32, i32
  }
  func.func @transform_2(%arg0: i32) -> (i32, i32) {
    %c0_i32 = arith.constant 0 : i32
    %c0_i32_0 = arith.constant 0 : i32
    %c0_i32_1 = arith.constant 0 : i32
    return %c0_i32, %c0_i32_0 : i32, i32
  }
  func.func @transform_3(%arg0: i32) -> (i32, i32) {
    %c0_i32 = arith.constant 0 : i32
    %c0_i32_0 = arith.constant 0 : i32
    %c0_i32_1 = arith.constant 0 : i32
    return %c0_i32, %c0_i32_0 : i32, i32
  }
  func.func @transform_4(%arg0: i32) -> (i32, i32) {
    %c0_i32 = arith.constant 0 : i32
    %c0_i32_0 = arith.constant 0 : i32
    %c0_i32_1 = arith.constant 0 : i32
    return %c0_i32, %c0_i32_0 : i32, i32
  }
  func.func @transform_5(%arg0: i32) -> (i32, i32) {
    %c0_i32 = arith.constant 0 : i32
    %c0_i32_0 = arith.constant 0 : i32
    %c0_i32_1 = arith.constant 0 : i32
    return %c0_i32, %c0_i32_0 : i32, i32
  }
  func.func @transform_6(%arg0: i32) -> i32 {
    %c0_i32 = arith.constant 0 : i32
    %c0_i32_0 = arith.constant 0 : i32
    return %c0_i32 : i32
  }
  func.func @transform_7(%arg0: i32) -> (i32, i32) {
    %c0_i32 = arith.constant 0 : i32
    %c0_i32_0 = arith.constant 0 : i32
    return %c0_i32, %arg0 : i32, i32
  }
}

</mosaic_0001>

<llo_original>
// kernel: tpu_custom_call.1
$region0: #{tpu_custom_call.1}
  #allocation0 [shape = 'u32[]', space=smem, size = 0x4, offset = 0x4, fixed_abs, tag = 'smem constant byte address 0x4 - core index']
  #allocation1 [shape = 'u32[144,128]{1,0:T(1,128)}', space=vmem, size = 0x12000, scoped, tag = 'internal scratch']
  #allocation2 [shape = 'f32[1]{0:T(128)S(6)}', space=smem, size = 0x200, scoped, tag = 'scoped memory for tpu_custom_call.1']
  %s0 = inlined_call_operand.vmem [shape: f32[512,32], index: 0, kind: input, shape index: {}]
  %s1 = inlined_call_operand.vmem [shape: bf16[32,256], index: 1, kind: input, shape index: {}]
  %s2 = inlined_call_operand.vmem [shape: f32[1,256], index: 2, kind: input, shape index: {}]
  %s3 = inlined_call_operand.vmem [shape: bf16[256,256], index: 3, kind: input, shape index: {}]
  %s4 = inlined_call_operand.vmem [shape: f32[1,256], index: 4, kind: input, shape index: {}]
  %s5 = inlined_call_operand.vmem [shape: f32[1,256], index: 5, kind: input, shape index: {}]
  %s6 = inlined_call_operand.<no memory space> [shape: f32[1], index: 6, kind: input, shape index: {}]
  %s7 = inlined_call_operand.hbm [shape: f32[1,512], index: 7, kind: output, shape index: {}]
  %s8 = sld [smem:[#allocation0]]
  $region61: #{tpu_custom_call.1} parent=0
    _
  %s10 = ssub.s32 1, %s8
  %s11 = scalar_select 0, %s10, %s8
  %12 = sst [smem:[#allocation2]] %s6
  $region1: #{tpu_custom_call.1} parent=0
    #allocation3 [shape = 'u8[2048]{0}', space=vmem, size = 0x800, scoped, tag = 'output window, operand 0']
    #allocation4 [shape = 's32[2]{0}', space=sflag, size = 0x8, scoped, tag = 'scoped memory for tpu_custom_call.1']
    %13 = vsyncpa [#allocation4], 0
    %s14 = scalar_lea.sflag [#allocation4], 1
    %15 = vsyncpa %s14, 0
    loop: start=0, step=1, limit=4
    $region2: #{tpu_custom_call.1} parent=1 // loop_pre_header
      _
    $region3: #{tpu_custom_call.1} parent=1 // loop_header
      %s17 = sphi 0, %s21
      %p18 = scmp.ge.s32.totalorder %s17, 4
      %s27 = sphi 0, %s29
      %s30 = sphi 0, %s27
      %s31 = sphi 0, %s30
      %s47 = sphi 0, %s31
      %s51 = sphi 0, %s51
      %s53 = sphi 0, %s51
      %s54 = sphi 0, %s53
      %s68 = sphi 0, %s54
      %s72 = sphi 0, %s72
      %s74 = sphi 0, %s72
      %s75 = sphi 0, %s74
      %s89 = sphi 0, %s75
      %s93 = sphi 0, %s93
      %s95 = sphi 0, %s93
      %s96 = sphi 0, %s95
      %s110 = sphi 0, %s96
      %s114 = sphi 0, %s114
      %s116 = sphi 0, %s114
      %s117 = sphi 0, %s116
      %s131 = sphi 0, %s117
      %s135 = sphi 0, %s135
      %s137 = sphi 0, %s135
      %s138 = sphi 0, %s137
      %s152 = sphi 0, %s138
      %s156 = sphi 0, %s156
      %s158 = sphi 0, %s156
      %s159 = sphi 0, %s158
      %s173 = sphi 0, %s159
      %s179 = sphi 0, %s181
      %s182 = sphi 0, %s179
      %s183 = sphi 0, %s182
      %s199 = sphi 0, %s183
    $region4: #{tpu_custom_call.1} parent=1 // loop_header_branch
      %20 = sbr.rel (%p18) target = $region8
    $region5: #{tpu_custom_call.1} parent=1 // loop_body
      %s22 = ssub.s32 %s17, 1
      %s23 = ssub.s32 %s17, 2
      %s24 = sadd.s32 %s17, 1
      %s25 = ssub.s32 %s17, %s24
      %p26 = scmp.eq.s32.totalorder %s25, 0
      %s28 = sadd.s32 %s27, 1
      %s29 = scalar_select %p26, %s27, %s28
      %p32 = pneg %p26
      %p33 = scmp.eq.s32.totalorder %s17, 1
      %p34 = por %p32, %p33
      %p35 = scmp.ne.s32.totalorder %s27, %s30
      %p36 = scmp.eq.s32.totalorder %s17, 0
      %p37 = por %p35, %p36
      %p38 = scmp.ne.s32.totalorder %s27, %s30
      %p39 = scmp.eq.s32.totalorder %s22, 1
      %p40 = por %p38, %p39
      %p41 = scmp.ne.s32.totalorder %s30, %s31
      %p42 = scmp.eq.s32.totalorder %s22, 0
      %p43 = por %p41, %p42
      %p44 = scmp.ne.s32.totalorder %s30, %s31
      %p45 = scmp.eq.s32.totalorder %s23, 1
      %p46 = por %p44, %p45
      %p48 = scmp.ne.s32.totalorder %s31, %s47
      %p49 = scmp.eq.s32.totalorder %s23, 0
      %p50 = por %p48, %p49
      %s52 = sadd.s32 %s51, 1
      %p55 = scmp.eq.s32.totalorder %s17, 1
      %p56 = scmp.ne.s32.totalorder %s51, %s53
      %p57 = scmp.eq.s32.totalorder %s17, 0
      %p58 = por %p56, %p57
      %p59 = scmp.ne.s32.totalorder %s51, %s53
      %p60 = scmp.eq.s32.totalorder %s22, 1
      %p61 = por %p59, %p60
      %p62 = scmp.ne.s32.totalorder %s53, %s54
      %p63 = scmp.eq.s32.totalorder %s22, 0
      %p64 = por %p62, %p63
      %p65 = scmp.ne.s32.totalorder %s53, %s54
      %p66 = scmp.eq.s32.totalorder %s23, 1
      %p67 = por %p65, %p66
      %p69 = scmp.ne.s32.totalorder %s54, %s68
      %p70 = scmp.eq.s32.totalorder %s23, 0
      %p71 = por %p69, %p70
      %s73 = sadd.s32 %s72, 1
      %p76 = scmp.eq.s32.totalorder %s17, 1
      %p77 = scmp.ne.s32.totalorder %s72, %s74
      %p78 = scmp.eq.s32.totalorder %s17, 0
      %p79 = por %p77, %p78
      %p80 = scmp.ne.s32.totalorder %s72, %s74
      %p81 = scmp.eq.s32.totalorder %s22, 1
      %p82 = por %p80, %p81
      %p83 = scmp.ne.s32.totalorder %s74, %s75
      %p84 = scmp.eq.s32.totalorder %s22, 0
      %p85 = por %p83, %p84
      %p86 = scmp.ne.s32.totalorder %s74, %s75
      %p87 = scmp.eq.s32.totalorder %s23, 1
      %p88 = por %p86, %p87
      %p90 = scmp.ne.s32.totalorder %s75, %s89
      %p91 = scmp.eq.s32.totalorder %s23, 0
      %p92 = por %p90, %p91
      %s94 = sadd.s32 %s93, 1
      %p97 = scmp.eq.s32.totalorder %s17, 1
      %p98 = scmp.ne.s32.totalorder %s93, %s95
      %p99 = scmp.eq.s32.totalorder %s17, 0
      %p100 = por %p98, %p99
      %p101 = scmp.ne.s32.totalorder %s93, %s95
      %p102 = scmp.eq.s32.totalorder %s22, 1
      %p103 = por %p101, %p102
      %p104 = scmp.ne.s32.totalorder %s95, %s96
      %p105 = scmp.eq.s32.totalorder %s22, 0
      %p106 = por %p104, %p105
      %p107 = scmp.ne.s32.totalorder %s95, %s96
      %p108 = scmp.eq.s32.totalorder %s23, 1
      %p109 = por %p107, %p108
      %p111 = scmp.ne.s32.totalorder %s96, %s110
      %p112 = scmp.eq.s32.totalorder %s23, 0
      %p113 = por %p111, %p112
      %s115 = sadd.s32 %s114, 1
      %p118 = scmp.eq.s32.totalorder %s17, 1
      %p119 = scmp.ne.s32.totalorder %s114, %s116
      %p120 = scmp.eq.s32.totalorder %s17, 0
      %p121 = por %p119, %p120
      %p122 = scmp.ne.s32.totalorder %s114, %s116
      %p123 = scmp.eq.s32.totalorder %s22, 1
      %p124 = por %p122, %p123
      %p125 = scmp.ne.s32.totalorder %s116, %s117
      %p126 = scmp.eq.s32.totalorder %s22, 0
      %p127 = por %p125, %p126
      %p128 = scmp.ne.s32.totalorder %s116, %s117
      %p129 = scmp.eq.s32.totalorder %s23, 1
      %p130 = por %p128, %p129
      %p132 = scmp.ne.s32.totalorder %s117, %s131
      %p133 = scmp.eq.s32.totalorder %s23, 0
      %p134 = por %p132, %p133
      %s136 = sadd.s32 %s135, 1
      %p139 = scmp.eq.s32.totalorder %s17, 1
      %p140 = scmp.ne.s32.totalorder %s135, %s137
      %p141 = scmp.eq.s32.totalorder %s17, 0
      %p142 = por %p140, %p141
      %p143 = scmp.ne.s32.totalorder %s135, %s137
      %p144 = scmp.eq.s32.totalorder %s22, 1
      %p145 = por %p143, %p144
      %p146 = scmp.ne.s32.totalorder %s137, %s138
      %p147 = scmp.eq.s32.totalorder %s22, 0
      %p148 = por %p146, %p147
      %p149 = scmp.ne.s32.totalorder %s137, %s138
      %p150 = scmp.eq.s32.totalorder %s23, 1
      %p151 = por %p149, %p150
      %p153 = scmp.ne.s32.totalorder %s138, %s152
      %p154 = scmp.eq.s32.totalorder %s23, 0
      %p155 = por %p153, %p154
      %s157 = sadd.s32 %s156, 1
      %p160 = scmp.eq.s32.totalorder %s17, 1
      %p161 = scmp.ne.s32.totalorder %s156, %s158
      %p162 = scmp.eq.s32.totalorder %s17, 0
      %p163 = por %p161, %p162
      %p164 = scmp.ne.s32.totalorder %s156, %s158
      %p165 = scmp.eq.s32.totalorder %s22, 1
      %p166 = por %p164, %p165
      %p167 = scmp.ne.s32.totalorder %s158, %s159
      %p168 = scmp.eq.s32.totalorder %s22, 0
      %p169 = por %p167, %p168
      %p170 = scmp.ne.s32.totalorder %s158, %s159
      %p171 = scmp.eq.s32.totalorder %s23, 1
      %p172 = por %p170, %p171
      %p174 = scmp.ne.s32.totalorder %s159, %s173
      %p175 = scmp.eq.s32.totalorder %s23, 0
      %p176 = por %p174, %p175
      %s177 = ssub.s32 %s17, %s24
      %p178 = scmp.eq.s32.totalorder %s177, 0
      %s180 = sadd.s32 %s179, 1
      %s181 = scalar_select %p178, %s179, %s180
      %p184 = pneg %p178
      %p185 = scmp.eq.s32.totalorder %s17, 1
      %p186 = por %p184, %p185
      %p187 = scmp.ne.s32.totalorder %s179, %s182
      %p188 = scmp.eq.s32.totalorder %s17, 0
      %p189 = por %p187, %p188
      %p190 = scmp.ne.s32.totalorder %s179, %s182
      %p191 = scmp.eq.s32.totalorder %s22, 1
      %p192 = por %p190, %p191
      %p193 = scmp.ne.s32.totalorder %s182, %s183
      %p194 = scmp.eq.s32.totalorder %s22, 0
      %p195 = por %p193, %p194
      %p196 = scmp.ne.s32.totalorder %s182, %s183
      %p197 = scmp.eq.s32.totalorder %s23, 1
      %p198 = por %p196, %p197
      %p200 = scmp.ne.s32.totalorder %s183, %s199
      %p201 = scmp.eq.s32.totalorder %s23, 0
      %p202 = por %p200, %p201
      %p203 = scmp.le.s32.totalorder 1, %s17
      %p204 = scmp.lt.s32.totalorder %s17, 3
      %p205 = pnand %p203, %p204
      %p206 = pneg %p205
      // Predicated region
      $region9: #{tpu_custom_call.1} parent=5 // pred_check
        _
      $region10: #{tpu_custom_call.1} parent=5 // pred_check_branch
        %208 = sbr.rel (%p205) target = $region12
      $region11: #{tpu_custom_call.1} parent=5 // pred_region
        %s209 = ssub.s32 %s17, 1
        // Predicated region
        $region13: #{tpu_custom_call.1} parent=11 // pred_check
          %p210 = pneg %p64
        $region14: #{tpu_custom_call.1} parent=11 // pred_check_branch
          %212 = sbr.rel (%p210) target = $region16
        $region15: #{tpu_custom_call.1} parent=11 // pred_region
          _
        $region16: #{tpu_custom_call.1} parent=11 // pred_fallthru
          _
        // Predicated region
        $region17: #{tpu_custom_call.1} parent=11 // pred_check
          %p213 = pneg %p85
        $region18: #{tpu_custom_call.1} parent=11 // pred_check_branch
          %215 = sbr.rel (%p213) target = $region20
        $region19: #{tpu_custom_call.1} parent=11 // pred_region
          _
        $region20: #{tpu_custom_call.1} parent=11 // pred_fallthru
          _
        // Predicated region
        $region21: #{tpu_custom_call.1} parent=11 // pred_check
          %p216 = pneg %p106
        $region22: #{tpu_custom_call.1} parent=11 // pred_check_branch
          %218 = sbr.rel (%p216) target = $region24
        $region23: #{tpu_custom_call.1} parent=11 // pred_region
          _
        $region24: #{tpu_custom_call.1} parent=11 // pred_fallthru
          _
        // Predicated region
        $region25: #{tpu_custom_call.1} parent=11 // pred_check
          %p219 = pneg %p127
        $region26: #{tpu_custom_call.1} parent=11 // pred_check_branch
          %221 = sbr.rel (%p219) target = $region28
        $region27: #{tpu_custom_call.1} parent=11 // pred_region
          _
        $region28: #{tpu_custom_call.1} parent=11 // pred_fallthru
          _
        // Predicated region
        $region29: #{tpu_custom_call.1} parent=11 // pred_check
          %p222 = pneg %p148
        $region30: #{tpu_custom_call.1} parent=11 // pred_check_branch
          %224 = sbr.rel (%p222) target = $region32
        $region31: #{tpu_custom_call.1} parent=11 // pred_region
          _
        $region32: #{tpu_custom_call.1} parent=11 // pred_fallthru
          _
        // Predicated region
        $region33: #{tpu_custom_call.1} parent=11 // pred_check
          %p225 = pneg %p169
        $region34: #{tpu_custom_call.1} parent=11 // pred_check_branch
          %227 = sbr.rel (%p225) target = $region36
        $region35: #{tpu_custom_call.1} parent=11 // pred_region
          _
        $region36: #{tpu_custom_call.1} parent=11 // pred_fallthru
          _
      $region12: #{tpu_custom_call.1} parent=5 // pred_fallthru
        _
      %p228 = scmp.lt.s32.totalorder %s17, 2
      // Predicated region
      $region37: #{tpu_custom_call.1} parent=5 // pred_check
        %p229 = pneg %p228
      $region38: #{tpu_custom_call.1} parent=5 // pred_check_branch
        %231 = sbr.rel (%p229) target = $region40
      $region39: #{tpu_custom_call.1} parent=5 // pred_region
        // Predicated region
        $region41: #{tpu_custom_call.1} parent=39 // pred_check
          %p232 = pneg %p37
        $region42: #{tpu_custom_call.1} parent=39 // pred_check_branch
          %234 = sbr.rel (%p232) target = $region44
        $region43: #{tpu_custom_call.1} parent=39 // pred_region
          %s235 = smul.u32 32, %s17
          %p236 = scmp.lt.s32.totalorder %s235, 63
          %s237 = scalar_select %p236, %s235, 63
          %s238 = smul.addr %s237, 8
          %s239 = scalar_lea.vmem %s0, %s238
          %s240 = smul.u32 32, %s17
        $region44: #{tpu_custom_call.1} parent=39 // pred_fallthru
          _
      $region40: #{tpu_custom_call.1} parent=5 // pred_fallthru
        _
      %p241 = scmp.le.s32.totalorder 1, %s17
      %p242 = scmp.lt.s32.totalorder %s17, 3
      %p243 = pnand %p241, %p242
      %p244 = pneg %p243
      // Predicated region
      $region45: #{tpu_custom_call.1} parent=5 // pred_check
        _
      $region46: #{tpu_custom_call.1} parent=5 // pred_check_branch
        %246 = sbr.rel (%p243) target = $region48
      $region47: #{tpu_custom_call.1} parent=5 // pred_region
        %s247 = ssub.s32 %s17, 1
        %s248 = smul.u32 32, %s22
        %p249 = scmp.lt.s32.totalorder %s248, 63
        %s250 = scalar_select %p249, %s248, 63
        %s251 = smul.addr %s250, 8
        %s252 = scalar_lea.vmem %s0, %s251
        %p253 = pneg %p43
        %p254 = pneg %p40
        %p255 = pneg %p64
        %p256 = pneg %p61
        %p257 = pneg %p85
        %p258 = pneg %p82
        %p259 = pneg %p106
        %p260 = pneg %p103
        %p261 = pneg %p127
        %p262 = pneg %p124
        %p263 = pneg %p148
        %p264 = pneg %p145
        %p265 = pneg %p169
        %p266 = pneg %p166
        %p267 = pneg %p195
        %p268 = pneg %p192
        %s269 = sand.u32 %s182, 1
        %s270 = scalar_lea.sflag [#allocation4], %s269
        %s271 = sand.u32 %s182, 1
        %s272 = smul.addr %s271, 2
        %s273 = scalar_lea.vmem [#allocation3], %s272
        %s274 = smul.u32 32, %s22
        %p275 = scmp.lt.s32.totalorder %s274, 63
        %s276 = scalar_select %p275, %s274, 63
        %s277 = smul.addr %s276, 8
        %s278 = scalar_lea.vmem %s0, %s277
        %s279 = smul.u32 32, %s22
        %s280 = smul.u32 2, %s22
        %v282 = vld [vmem:[%s278] sm:$0xff]
        %v283 = vld [vmem:[%s278 + $0x8] sm:$0xff]
        %v284 = vld [vmem:[%s278 + $0x10] sm:$0xff]
        %v285 = vld [vmem:[%s278 + $0x18] sm:$0xff]
        %v286 = vld [vmem:[%s278 + $0x20] sm:$0xff]
        %v287 = vld [vmem:[%s278 + $0x28] sm:$0xff]
        %v288 = vld [vmem:[%s278 + $0x30] sm:$0xff]
        %v289 = vld [vmem:[%s278 + $0x38] sm:$0xff]
        %v290 = vld [vmem:[%s278 + $0x40] sm:$0xff]
        %v291 = vld [vmem:[%s278 + $0x48] sm:$0xff]
        %v292 = vld [vmem:[%s278 + $0x50] sm:$0xff]
        %v293 = vld [vmem:[%s278 + $0x58] sm:$0xff]
        %v294 = vld [vmem:[%s278 + $0x60] sm:$0xff]
        %v295 = vld [vmem:[%s278 + $0x68] sm:$0xff]
        %v296 = vld [vmem:[%s278 + $0x70] sm:$0xff]
        %v297 = vld [vmem:[%s278 + $0x78] sm:$0xff]
        %v298 = vld [vmem:[%s278 + $0x80] sm:$0xff]
        %v299 = vld [vmem:[%s278 + $0x88] sm:$0xff]
        %v300 = vld [vmem:[%s278 + $0x90] sm:$0xff]
        %v301 = vld [vmem:[%s278 + $0x98] sm:$0xff]
        %v302 = vld [vmem:[%s278 + $0xa0] sm:$0xff]
        %v303 = vld [vmem:[%s278 + $0xa8] sm:$0xff]
        %v304 = vld [vmem:[%s278 + $0xb0] sm:$0xff]
        %v305 = vld [vmem:[%s278 + $0xb8] sm:$0xff]
        %v306 = vld [vmem:[%s278 + $0xc0] sm:$0xff]
        %v307 = vld [vmem:[%s278 + $0xc8] sm:$0xff]
        %v308 = vld [vmem:[%s278 + $0xd0] sm:$0xff]
        %v309 = vld [vmem:[%s278 + $0xd8] sm:$0xff]
        %v310 = vld [vmem:[%s278 + $0xe0] sm:$0xff]
        %v311 = vld [vmem:[%s278 + $0xe8] sm:$0xff]
        %v312 = vld [vmem:[%s278 + $0xf0] sm:$0xff]
        %v313 = vld [vmem:[%s278 + $0xf8] sm:$0xff]
        %v314 = vpack.c.bf16 %v283, %v282
        %v315 = vpack.c.bf16 %v285, %v284
        %v316 = vpack.c.bf16 %v287, %v286
        %v317 = vpack.c.bf16 %v289, %v288
        %v318 = vpack.c.bf16 %v291, %v290
        %v319 = vpack.c.bf16 %v293, %v292
        %v320 = vpack.c.bf16 %v295, %v294
        %v321 = vpack.c.bf16 %v297, %v296
        %v322 = vpack.c.bf16 %v299, %v298
        %v323 = vpack.c.bf16 %v301, %v300
        %v324 = vpack.c.bf16 %v303, %v302
        %v325 = vpack.c.bf16 %v305, %v304
        %v326 = vpack.c.bf16 %v307, %v306
        %v327 = vpack.c.bf16 %v309, %v308
        %v328 = vpack.c.bf16 %v311, %v310
        %v329 = vpack.c.bf16 %v313, %v312
        %v330 = vld [vmem:[%s1] sm:$0xff]
        %v331 = vld [vmem:[%s1 + $0x8] sm:$0xff]
        %v332 = vld [vmem:[%s1 + $0x10] sm:$0xff]
        %v333 = vld [vmem:[%s1 + $0x18] sm:$0xff]
        %v334 = vld [vmem:[%s2] sm:$0x3]
        %v336 = vlaneseq
        %v337 = vshrl.u32 %v336, 7
        %v338 = vsub.s32 0, %v337
        %v339 = vrot.slane %v334, %v338
        %v340 = vlaneseq
        %v341 = vshrl.u32 %v340, 7
        %v342 = vsub.s32 1, %v341
        %v343 = vrot.slane %v334, %v342
        %v350 = vunpack.c.l.b16 %v330
        %v351 = vunpack.c.h.b16 %v330
        %v352 = vunpack.c.l.b16 %v331
        %v353 = vunpack.c.h.b16 %v331
        %v354 = vunpack.c.l.b16 %v332
        %v355 = vunpack.c.h.b16 %v332
        %v356 = vunpack.c.l.b16 %v333
        %v357 = vunpack.c.h.b16 %v333
        %v358 = vpack.c.b16 %v352, %v350
        %v359 = vpack.c.b16 %v353, %v351
        %v360 = vpack.c.b16 %v356, %v354
        %v361 = vpack.c.b16 %v357, %v355
        %vm366 = vcmask 261120
        %v368 = vsel %vm366, %v314, 0
        %v371 = vsel %vm366, %v315, 0
        %v374 = vsel %vm366, %v316, 0
        %v377 = vsel %vm366, %v317, 0
        %v380 = vsel %vm366, %v318, 0
        %v383 = vsel %vm366, %v319, 0
        %v386 = vsel %vm366, %v320, 0
        %v389 = vsel %vm366, %v321, 0
        %v392 = vsel %vm366, %v322, 0
        %v395 = vsel %vm366, %v323, 0
        %v398 = vsel %vm366, %v324, 0
        %v401 = vsel %vm366, %v325, 0
        %v404 = vsel %vm366, %v326, 0
        %v407 = vsel %vm366, %v327, 0
        %v410 = vsel %vm366, %v328, 0
        %v413 = vsel %vm366, %v329, 0
        %415 = vmatprep.subr.bf16.mxu0 %v359
        %416 = vmatpush1.bf16.msra.mxu0 %v358
        %417 = vmatprep.subr.bf16.mxu0 %v361
        %418 = vmatpush1.bf16.msra.mxu0 %v360
        %419 = vmatprep.subr.bf16.mxu0 0
        %420 = vmatpush1.bf16.msra.mxu0 0
        %421 = vmatprep.subr.bf16.mxu0 0
        %422 = vmatpush1.bf16.msra.mxu0 0
        %423 = vmatprep.subr.bf16.mxu0 0
        %424 = vmatpush1.bf16.msra.mxu0 0
        %425 = vmatprep.subr.bf16.mxu0 0
        %426 = vmatpush1.bf16.msra.mxu0 0
        %427 = vmatprep.subr.bf16.mxu0 0
        %428 = vmatpush1.bf16.msra.mxu0 0
        %429 = vmatprep.subr.bf16.mxu0 0
        %430 = vmatpush1.bf16.msra.mxu0 0
        %431 = vmatprep.subr.bf16.mxu0 0
        %432 = vmatpush1.bf16.msra.mxu0 0
        %433 = vmatprep.subr.bf16.mxu0 0
        %434 = vmatpush1.bf16.msra.mxu0 0
        %435 = vmatprep.subr.bf16.mxu0 0
        %436 = vmatpush1.bf16.msra.mxu0 0
        %437 = vmatprep.subr.bf16.mxu0 0
        %438 = vmatpush1.bf16.msra.mxu0 0
        %439 = vmatprep.subr.bf16.mxu0 0
        %440 = vmatpush1.bf16.msra.mxu0 0
        %441 = vmatprep.subr.bf16.mxu0 0
        %442 = vmatpush1.bf16.msra.mxu0 0
        %443 = vmatprep.subr.bf16.mxu0 0
        %444 = vmatpush1.bf16.msra.mxu0 0
        %445 = vmatprep.subr.bf16.mxu0 0
        %446 = vmatpush1.bf16.msra.mxu0 0
        %447 = vmatprep.mubr.bf16.mxu0 0
        %448 = vmatmul.mubr.bf16.gmra.mrb[0].mxu0 %v368
        %v449 = vpop.f32.mrb[0].mxu0
        %v450 = vadd.f32 %v339, %v449
        %v451 = vpop.f32.mrb[0].mxu0
        %v452 = vadd.f32 %v343, %v451
        %v453 = vpop.f32.mrb[0].mxu0
        %v454 = vadd.f32 %v339, %v453
        %v455 = vpop.f32.mrb[0].mxu0
        %v456 = vadd.f32 %v343, %v455
        %457 = vmatprep.mubr.bf16.mxu0 0
        %458 = vmatmul.mubr.bf16.gmra.mrb[0].mxu0 %v371
        %v459 = vpop.f32.mrb[0].mxu0
        %v460 = vadd.f32 %v339, %v459
        %v461 = vpop.f32.mrb[0].mxu0
        %v462 = vadd.f32 %v343, %v461
        %v463 = vpop.f32.mrb[0].mxu0
        %v464 = vadd.f32 %v339, %v463
        %v465 = vpop.f32.mrb[0].mxu0
        %v466 = vadd.f32 %v343, %v465
        %467 = vmatprep.mubr.bf16.mxu0 0
        %468 = vmatmul.mubr.bf16.gmra.mrb[0].mxu0 %v374
        %v469 = vpop.f32.mrb[0].mxu0
        %v470 = vadd.f32 %v339, %v469
        %v471 = vpop.f32.mrb[0].mxu0
        %v472 = vadd.f32 %v343, %v471
        %v473 = vpop.f32.mrb[0].mxu0
        %v474 = vadd.f32 %v339, %v473
        %v475 = vpop.f32.mrb[0].mxu0
        %v476 = vadd.f32 %v343, %v475
        %477 = vmatprep.mubr.bf16.mxu0 0
        %478 = vmatmul.mubr.bf16.gmra.mrb[0].mxu0 %v377
        %v479 = vpop.f32.mrb[0].mxu0
        %v480 = vadd.f32 %v339, %v479
        %v481 = vpop.f32.mrb[0].mxu0
        %v482 = vadd.f32 %v343, %v481
        %v483 = vpop.f32.mrb[0].mxu0
        %v484 = vadd.f32 %v339, %v483
        %v485 = vpop.f32.mrb[0].mxu0
        %v486 = vadd.f32 %v343, %v485
        %487 = vmatprep.mubr.bf16.mxu0 0
        %488 = vmatmul.mubr.bf16.gmra.mrb[0].mxu0 %v380
        %v489 = vpop.f32.mrb[0].mxu0
        %v490 = vadd.f32 %v339, %v489
        %v491 = vpop.f32.mrb[0].mxu0
        %v492 = vadd.f32 %v343, %v491
        %v493 = vpop.f32.mrb[0].mxu0
        %v494 = vadd.f32 %v339, %v493
        %v495 = vpop.f32.mrb[0].mxu0
        %v496 = vadd.f32 %v343, %v495
        %497 = vmatprep.mubr.bf16.mxu0 0
        %498 = vmatmul.mubr.bf16.gmra.mrb[0].mxu0 %v383
        %v499 = vpop.f32.mrb[0].mxu0
        %v500 = vadd.f32 %v339, %v499
        %v501 = vpop.f32.mrb[0].mxu0
        %v502 = vadd.f32 %v343, %v501
        %v503 = vpop.f32.mrb[0].mxu0
        %v504 = vadd.f32 %v339, %v503
        %v505 = vpop.f32.mrb[0].mxu0
        %v506 = vadd.f32 %v343, %v505
        %507 = vmatprep.mubr.bf16.mxu0 0
        %508 = vmatmul.mubr.bf16.gmra.mrb[0].mxu0 %v386
        %v509 = vpop.f32.mrb[0].mxu0
        %v510 = vadd.f32 %v339, %v509
        %v511 = vpop.f32.mrb[0].mxu0
        %v512 = vadd.f32 %v343, %v511
        %v513 = vpop.f32.mrb[0].mxu0
        %v514 = vadd.f32 %v339, %v513
        %v515 = vpop.f32.mrb[0].mxu0
        %v516 = vadd.f32 %v343, %v515
        %517 = vmatprep.mubr.bf16.mxu0 0
        %518 = vmatmul.mubr.bf16.gmra.mrb[0].mxu0 %v389
        %v519 = vpop.f32.mrb[0].mxu0
        %v520 = vadd.f32 %v339, %v519
        %v521 = vpop.f32.mrb[0].mxu0
        %v522 = vadd.f32 %v343, %v521
        %v523 = vpop.f32.mrb[0].mxu0
        %v524 = vadd.f32 %v339, %v523
        %v525 = vpop.f32.mrb[0].mxu0
        %v526 = vadd.f32 %v343, %v525
        %527 = vmatprep.mubr.bf16.mxu0 0
        %528 = vmatmul.mubr.bf16.gmra.mrb[0].mxu0 %v392
        %v529 = vpop.f32.mrb[0].mxu0
        %v530 = vadd.f32 %v339, %v529
        %v531 = vpop.f32.mrb[0].mxu0
        %v532 = vadd.f32 %v343, %v531
        %v533 = vpop.f32.mrb[0].mxu0
        %v534 = vadd.f32 %v339, %v533
        %v535 = vpop.f32.mrb[0].mxu0
        %v536 = vadd.f32 %v343, %v535
        %537 = vmatprep.mubr.bf16.mxu0 0
        %538 = vmatmul.mubr.bf16.gmra.mrb[0].mxu0 %v395
        %v539 = vpop.f32.mrb[0].mxu0
        %v540 = vadd.f32 %v339, %v539
        %v541 = vpop.f32.mrb[0].mxu0
        %v542 = vadd.f32 %v343, %v541
        %v543 = vpop.f32.mrb[0].mxu0
        %v544 = vadd.f32 %v339, %v543
        %v545 = vpop.f32.mrb[0].mxu0
        %v546 = vadd.f32 %v343, %v545
        %547 = vmatprep.mubr.bf16.mxu0 0
        %548 = vmatmul.mubr.bf16.gmra.mrb[0].mxu0 %v398
        %v549 = vpop.f32.mrb[0].mxu0
        %v550 = vadd.f32 %v339, %v549
        %v551 = vpop.f32.mrb[0].mxu0
        %v552 = vadd.f32 %v343, %v551
        %v553 = vpop.f32.mrb[0].mxu0
        %v554 = vadd.f32 %v339, %v553
        %v555 = vpop.f32.mrb[0].mxu0
        %v556 = vadd.f32 %v343, %v555
        %557 = vmatprep.mubr.bf16.mxu0 0
        %558 = vmatmul.mubr.bf16.gmra.mrb[0].mxu0 %v401
        %v559 = vpop.f32.mrb[0].mxu0
        %v560 = vadd.f32 %v339, %v559
        %v561 = vpop.f32.mrb[0].mxu0
        %v562 = vadd.f32 %v343, %v561
        %v563 = vpop.f32.mrb[0].mxu0
        %v564 = vadd.f32 %v339, %v563
        %v565 = vpop.f32.mrb[0].mxu0
        %v566 = vadd.f32 %v343, %v565
        %567 = vmatprep.mubr.bf16.mxu0 0
        %568 = vmatmul.mubr.bf16.gmra.mrb[0].mxu0 %v404
        %v569 = vpop.f32.mrb[0].mxu0
        %v570 = vadd.f32 %v339, %v569
        %v571 = vpop.f32.mrb[0].mxu0
        %v572 = vadd.f32 %v343, %v571
        %v573 = vpop.f32.mrb[0].mxu0
        %v574 = vadd.f32 %v339, %v573
        %v575 = vpop.f32.mrb[0].mxu0
        %v576 = vadd.f32 %v343, %v575
        %577 = vmatprep.mubr.bf16.mxu0 0
        %578 = vmatmul.mubr.bf16.gmra.mrb[0].mxu0 %v407
        %v579 = vpop.f32.mrb[0].mxu0
        %v580 = vadd.f32 %v339, %v579
        %v581 = vpop.f32.mrb[0].mxu0
        %v582 = vadd.f32 %v343, %v581
        %v583 = vpop.f32.mrb[0].mxu0
        %v584 = vadd.f32 %v339, %v583
        %v585 = vpop.f32.mrb[0].mxu0
        %v586 = vadd.f32 %v343, %v585
        %587 = vmatprep.mubr.bf16.mxu0 0
        %588 = vmatmul.mubr.bf16.gmra.mrb[0].mxu0 %v410
        %v589 = vpop.f32.mrb[0].mxu0
        %v590 = vadd.f32 %v339, %v589
        %v591 = vpop.f32.mrb[0].mxu0
        %v592 = vadd.f32 %v343, %v591
        %v593 = vpop.f32.mrb[0].mxu0
        %v594 = vadd.f32 %v339, %v593
        %v595 = vpop.f32.mrb[0].mxu0
        %v596 = vadd.f32 %v343, %v595
        %597 = vmatprep.mubr.bf16.mxu0 0
        %598 = vmatmul.mubr.bf16.gmra.mrb[0].mxu0 %v413
        %v599 = vpop.f32.mrb[0].mxu0
        %v600 = vadd.f32 %v339, %v599
        %v601 = vpop.f32.mrb[0].mxu0
        %v602 = vadd.f32 %v343, %v601
        %v603 = vpop.f32.mrb[0].mxu0
        %v604 = vadd.f32 %v339, %v603
        %v605 = vpop.f32.mrb[0].mxu0
        %v606 = vadd.f32 %v343, %v605
        %607 = vdwg.mxu0
        %v608 = vmax.f32 %v450, 0.0
        %v609 = vmax.f32 %v452, 0.0
        %v610 = vmax.f32 %v454, 0.0
        %v611 = vmax.f32 %v456, 0.0
        %v612 = vmax.f32 %v460, 0.0
        %v613 = vmax.f32 %v462, 0.0
        %v614 = vmax.f32 %v464, 0.0
        %v615 = vmax.f32 %v466, 0.0
        %v616 = vmax.f32 %v470, 0.0
        %v617 = vmax.f32 %v472, 0.0
        %v618 = vmax.f32 %v474, 0.0
        %v619 = vmax.f32 %v476, 0.0
        %v620 = vmax.f32 %v480, 0.0
        %v621 = vmax.f32 %v482, 0.0
        %v622 = vmax.f32 %v484, 0.0
        %v623 = vmax.f32 %v486, 0.0
        %v624 = vmax.f32 %v490, 0.0
        %v625 = vmax.f32 %v492, 0.0
        %v626 = vmax.f32 %v494, 0.0
        %v627 = vmax.f32 %v496, 0.0
        %v628 = vmax.f32 %v500, 0.0
        %v629 = vmax.f32 %v502, 0.0
        %v630 = vmax.f32 %v504, 0.0
        %v631 = vmax.f32 %v506, 0.0
        %v632 = vmax.f32 %v510, 0.0
        %v633 = vmax.f32 %v512, 0.0
        %v634 = vmax.f32 %v514, 0.0
        %v635 = vmax.f32 %v516, 0.0
        %v636 = vmax.f32 %v520, 0.0
        %v637 = vmax.f32 %v522, 0.0
        %v638 = vmax.f32 %v524, 0.0
        %v639 = vmax.f32 %v526, 0.0
        %v640 = vmax.f32 %v530, 0.0
        %v641 = vmax.f32 %v532, 0.0
        %v642 = vmax.f32 %v534, 0.0
        %v643 = vmax.f32 %v536, 0.0
        %v644 = vmax.f32 %v540, 0.0
        %v645 = vmax.f32 %v542, 0.0
        %v646 = vmax.f32 %v544, 0.0
        %v647 = vmax.f32 %v546, 0.0
        %v648 = vmax.f32 %v550, 0.0
        %v649 = vmax.f32 %v552, 0.0
        %v650 = vmax.f32 %v554, 0.0
        %v651 = vmax.f32 %v556, 0.0
        %v652 = vmax.f32 %v560, 0.0
        %v653 = vmax.f32 %v562, 0.0
        %v654 = vmax.f32 %v564, 0.0
        %v655 = vmax.f32 %v566, 0.0
        %v656 = vmax.f32 %v570, 0.0
        %v657 = vmax.f32 %v572, 0.0
        %v658 = vmax.f32 %v574, 0.0
        %v659 = vmax.f32 %v576, 0.0
        %v660 = vmax.f32 %v580, 0.0
        %v661 = vmax.f32 %v582, 0.0
        %v662 = vmax.f32 %v584, 0.0
        %v663 = vmax.f32 %v586, 0.0
        %v664 = vmax.f32 %v590, 0.0
        %v665 = vmax.f32 %v592, 0.0
        %v666 = vmax.f32 %v594, 0.0
        %v667 = vmax.f32 %v596, 0.0
        %v668 = vmax.f32 %v600, 0.0
        %v669 = vmax.f32 %v602, 0.0
        %v670 = vmax.f32 %v604, 0.0
        %v671 = vmax.f32 %v606, 0.0
        %v672 = vpack.c.bf16 %v610, %v608
        %v673 = vpack.c.bf16 %v611, %v609
        %v674 = vpack.c.bf16 %v614, %v612
        %v675 = vpack.c.bf16 %v615, %v613
        %v676 = vpack.c.bf16 %v618, %v616
        %v677 = vpack.c.bf16 %v619, %v617
        %v678 = vpack.c.bf16 %v622, %v620
        %v679 = vpack.c.bf16 %v623, %v621
        %v680 = vpack.c.bf16 %v626, %v624
        %v681 = vpack.c.bf16 %v627, %v625
        %v682 = vpack.c.bf16 %v630, %v628
        %v683 = vpack.c.bf16 %v631, %v629
        %v684 = vpack.c.bf16 %v634, %v632
        %v685 = vpack.c.bf16 %v635, %v633
        %v686 = vpack.c.bf16 %v638, %v636
        %v687 = vpack.c.bf16 %v639, %v637
        %v688 = vpack.c.bf16 %v642, %v640
        %v689 = vpack.c.bf16 %v643, %v641
        %v690 = vpack.c.bf16 %v646, %v644
        %v691 = vpack.c.bf16 %v647, %v645
        %v692 = vpack.c.bf16 %v650, %v648
        %v693 = vpack.c.bf16 %v651, %v649
        %v694 = vpack.c.bf16 %v654, %v652
        %v695 = vpack.c.bf16 %v655, %v653
        %v696 = vpack.c.bf16 %v658, %v656
        %v697 = vpack.c.bf16 %v659, %v657
        %v698 = vpack.c.bf16 %v662, %v660
        %v699 = vpack.c.bf16 %v663, %v661
        %v700 = vpack.c.bf16 %v666, %v664
        %v701 = vpack.c.bf16 %v667, %v665
        %v702 = vpack.c.bf16 %v670, %v668
        %v703 = vpack.c.bf16 %v671, %v669
        %v704 = vld [vmem:[%s3] sm:$0xff]
        %v705 = vld [vmem:[%s3 + $0x8] sm:$0xff]
        %v706 = vld [vmem:[%s3 + $0x10] sm:$0xff]
        %v707 = vld [vmem:[%s3 + $0x18] sm:$0xff]
        %v708 = vld [vmem:[%s3 + $0x20] sm:$0xff]
        %v709 = vld [vmem:[%s3 + $0x28] sm:$0xff]
        %v710 = vld [vmem:[%s3 + $0x30] sm:$0xff]
        %v711 = vld [vmem:[%s3 + $0x38] sm:$0xff]
        %v712 = vld [vmem:[%s3 + $0x40] sm:$0xff]
        %v713 = vld [vmem:[%s3 + $0x48] sm:$0xff]
        %v714 = vld [vmem:[%s3 + $0x50] sm:$0xff]
        %v715 = vld [vmem:[%s3 + $0x58] sm:$0xff]
        %v716 = vld [vmem:[%s3 + $0x60] sm:$0xff]
        %v717 = vld [vmem:[%s3 + $0x68] sm:$0xff]
        %v718 = vld [vmem:[%s3 + $0x70] sm:$0xff]
        %v719 = vld [vmem:[%s3 + $0x78] sm:$0xff]
        %v720 = vld [vmem:[%s3 + $0x80] sm:$0xff]
        %v721 = vld [vmem:[%s3 + $0x88] sm:$0xff]
        %v722 = vld [vmem:[%s3 + $0x90] sm:$0xff]
        %v723 = vld [vmem:[%s3 + $0x98] sm:$0xff]
        %v724 = vld [vmem:[%s3 + $0xa0] sm:$0xff]
        %v725 = vld [vmem:[%s3 + $0xa8] sm:$0xff]
        %v726 = vld [vmem:[%s3 + $0xb0] sm:$0xff]
        %v727 = vld [vmem:[%s3 + $0xb8] sm:$0xff]
        %v728 = vld [vmem:[%s3 + $0xc0] sm:$0xff]
        %v729 = vld [vmem:[%s3 + $0xc8] sm:$0xff]
        %v730 = vld [vmem:[%s3 + $0xd0] sm:$0xff]
        %v731 = vld [vmem:[%s3 + $0xd8] sm:$0xff]
        %v732 = vld [vmem:[%s3 + $0xe0] sm:$0xff]
        %v733 = vld [vmem:[%s3 + $0xe8] sm:$0xff]
        %v734 = vld [vmem:[%s3 + $0xf0] sm:$0xff]
        %v735 = vld [vmem:[%s3 + $0xf8] sm:$0xff]
        %v736 = vld [vmem:[%s4] sm:$0x3]
        %v738 = vlaneseq
        %v739 = vshrl.u32 %v738, 7
        %v740 = vsub.s32 0, %v739
        %v741 = vrot.slane %v736, %v740
        %v742 = vlaneseq
        %v743 = vshrl.u32 %v742, 7
        %v744 = vsub.s32 1, %v743
        %v745 = vrot.slane %v736, %v744
        %v780 = vunpack.c.l.b16 %v704
        %v781 = vunpack.c.h.b16 %v704
        %v782 = vunpack.c.l.b16 %v705
        %v783 = vunpack.c.h.b16 %v705
        %v784 = vunpack.c.l.b16 %v706
        %v785 = vunpack.c.h.b16 %v706
        %v786 = vunpack.c.l.b16 %v707
        %v787 = vunpack.c.h.b16 %v707
        %v788 = vunpack.c.l.b16 %v708
        %v789 = vunpack.c.h.b16 %v708
        %v790 = vunpack.c.l.b16 %v709
        %v791 = vunpack.c.h.b16 %v709
        %v792 = vunpack.c.l.b16 %v710
        %v793 = vunpack.c.h.b16 %v710
        %v794 = vunpack.c.l.b16 %v711
        %v795 = vunpack.c.h.b16 %v711
        %v796 = vunpack.c.l.b16 %v712
        %v797 = vunpack.c.h.b16 %v712
        %v798 = vunpack.c.l.b16 %v713
        %v799 = vunpack.c.h.b16 %v713
        %v800 = vunpack.c.l.b16 %v714
        %v801 = vunpack.c.h.b16 %v714
        %v802 = vunpack.c.l.b16 %v715
        %v803 = vunpack.c.h.b16 %v715
        %v804 = vunpack.c.l.b16 %v716
        %v805 = vunpack.c.h.b16 %v716
        %v806 = vunpack.c.l.b16 %v717
        %v807 = vunpack.c.h.b16 %v717
        %v808 = vunpack.c.l.b16 %v718
        %v809 = vunpack.c.h.b16 %v718
        %v810 = vunpack.c.l.b16 %v719
        %v811 = vunpack.c.h.b16 %v719
        %v812 = vunpack.c.l.b16 %v720
        %v813 = vunpack.c.h.b16 %v720
        %v814 = vunpack.c.l.b16 %v721
        %v815 = vunpack.c.h.b16 %v721
        %v816 = vunpack.c.l.b16 %v722
        %v817 = vunpack.c.h.b16 %v722
        %v818 = vunpack.c.l.b16 %v723
        %v819 = vunpack.c.h.b16 %v723
        %v820 = vunpack.c.l.b16 %v724
        %v821 = vunpack.c.h.b16 %v724
        %v822 = vunpack.c.l.b16 %v725
        %v823 = vunpack.c.h.b16 %v725
        %v824 = vunpack.c.l.b16 %v726
        %v825 = vunpack.c.h.b16 %v726
        %v826 = vunpack.c.l.b16 %v727
        %v827 = vunpack.c.h.b16 %v727
        %v828 = vunpack.c.l.b16 %v728
        %v829 = vunpack.c.h.b16 %v728
        %v830 = vunpack.c.l.b16 %v729
        %v831 = vunpack.c.h.b16 %v729
        %v832 = vunpack.c.l.b16 %v730
        %v833 = vunpack.c.h.b16 %v730
        %v834 = vunpack.c.l.b16 %v731
        %v835 = vunpack.c.h.b16 %v731
        %v836 = vunpack.c.l.b16 %v732
        %v837 = vunpack.c.h.b16 %v732
        %v838 = vunpack.c.l.b16 %v733
        %v839 = vunpack.c.h.b16 %v733
        %v840 = vunpack.c.l.b16 %v734
        %v841 = vunpack.c.h.b16 %v734
        %v842 = vunpack.c.l.b16 %v735
        %v843 = vunpack.c.h.b16 %v735
        %v844 = vpack.c.b16 %v782, %v780
        %v845 = vpack.c.b16 %v783, %v781
        %v846 = vpack.c.b16 %v786, %v784
        %v847 = vpack.c.b16 %v787, %v785
        %v848 = vpack.c.b16 %v790, %v788
        %v849 = vpack.c.b16 %v791, %v789
        %v850 = vpack.c.b16 %v794, %v792
        %v851 = vpack.c.b16 %v795, %v793
        %v852 = vpack.c.b16 %v798, %v796
        %v853 = vpack.c.b16 %v799, %v797
        %v854 = vpack.c.b16 %v802, %v800
        %v855 = vpack.c.b16 %v803, %v801
        %v856 = vpack.c.b16 %v806, %v804
        %v857 = vpack.c.b16 %v807, %v805
        %v858 = vpack.c.b16 %v810, %v808
        %v859 = vpack.c.b16 %v811, %v809
        %v860 = vpack.c.b16 %v814, %v812
        %v861 = vpack.c.b16 %v815, %v813
        %v862 = vpack.c.b16 %v818, %v816
        %v863 = vpack.c.b16 %v819, %v817
        %v864 = vpack.c.b16 %v822, %v820
        %v865 = vpack.c.b16 %v823, %v821
        %v866 = vpack.c.b16 %v826, %v824
        %v867 = vpack.c.b16 %v827, %v825
        %v868 = vpack.c.b16 %v830, %v828
        %v869 = vpack.c.b16 %v831, %v829
        %v870 = vpack.c.b16 %v834, %v832
        %v871 = vpack.c.b16 %v835, %v833
        %v872 = vpack.c.b16 %v838, %v836
        %v873 = vpack.c.b16 %v839, %v837
        %v874 = vpack.c.b16 %v842, %v840
        %v875 = vpack.c.b16 %v843, %v841
        %908 = vmatprep.subr.bf16.mxu0 %v845
        %909 = vmatpush1.bf16.msra.mxu0 %v844
        %910 = vmatprep.subr.bf16.mxu0 %v847
        %911 = vmatpush1.bf16.msra.mxu0 %v846
        %912 = vmatprep.subr.bf16.mxu0 %v849
        %913 = vmatpush1.bf16.msra.mxu0 %v848
        %914 = vmatprep.subr.bf16.mxu0 %v851
        %915 = vmatpush1.bf16.msra.mxu0 %v850
        %916 = vmatprep.subr.bf16.mxu0 %v853
        %917 = vmatpush1.bf16.msra.mxu0 %v852
        %918 = vmatprep.subr.bf16.mxu0 %v855
        %919 = vmatpush1.bf16.msra.mxu0 %v854
        %920 = vmatprep.subr.bf16.mxu0 %v857
        %921 = vmatpush1.bf16.msra.mxu0 %v856
        %922 = vmatprep.subr.bf16.mxu0 %v859
        %923 = vmatpush1.bf16.msra.mxu0 %v858
        %924 = vmatprep.subr.bf16.mxu0 %v861
        %925 = vmatpush1.bf16.msra.mxu0 %v860
        %926 = vmatprep.subr.bf16.mxu0 %v863
        %927 = vmatpush1.bf16.msra.mxu0 %v862
        %928 = vmatprep.subr.bf16.mxu0 %v865
        %929 = vmatpush1.bf16.msra.mxu0 %v864
        %930 = vmatprep.subr.bf16.mxu0 %v867
        %931 = vmatpush1.bf16.msra.mxu0 %v866
        %932 = vmatprep.subr.bf16.mxu0 %v869
        %933 = vmatpush1.bf16.msra.mxu0 %v868
        %934 = vmatprep.subr.bf16.mxu0 %v871
        %935 = vmatpush1.bf16.msra.mxu0 %v870
        %936 = vmatprep.subr.bf16.mxu0 %v873
        %937 = vmatpush1.bf16.msra.mxu0 %v872
        %938 = vmatprep.subr.bf16.mxu0 %v875
        %939 = vmatpush1.bf16.msra.mxu0 %v874
        %940 = vmatprep.mubr.bf16.mxu0 %v673
        %941 = vmatmul.mubr.bf16.gmra.mrb[0].mxu0 %v672
        %v942 = vpop.f32.mrb[0].mxu0
        %v943 = vadd.f32 %v741, %v942
        %v944 = vpop.f32.mrb[0].mxu0
        %v945 = vadd.f32 %v745, %v944
        %v946 = vpop.f32.mrb[0].mxu0
        %v947 = vadd.f32 %v741, %v946
        %v948 = vpop.f32.mrb[0].mxu0
        %v949 = vadd.f32 %v745, %v948
        %950 = vmatprep.mubr.bf16.mxu0 %v675
        %951 = vmatmul.mubr.bf16.gmra.mrb[0].mxu0 %v674
        %v952 = vpop.f32.mrb[0].mxu0
        %v953 = vadd.f32 %v741, %v952
        %v954 = vpop.f32.mrb[0].mxu0
        %v955 = vadd.f32 %v745, %v954
        %v956 = vpop.f32.mrb[0].mxu0
        %v957 = vadd.f32 %v741, %v956
        %v958 = vpop.f32.mrb[0].mxu0
        %v959 = vadd.f32 %v745, %v958
        %960 = vmatprep.mubr.bf16.mxu0 %v677
        %961 = vmatmul.mubr.bf16.gmra.mrb[0].mxu0 %v676
        %v962 = vpop.f32.mrb[0].mxu0
        %v963 = vadd.f32 %v741, %v962
        %v964 = vpop.f32.mrb[0].mxu0
        %v965 = vadd.f32 %v745, %v964
        %v966 = vpop.f32.mrb[0].mxu0
        %v967 = vadd.f32 %v741, %v966
        %v968 = vpop.f32.mrb[0].mxu0
        %v969 = vadd.f32 %v745, %v968
        %970 = vmatprep.mubr.bf16.mxu0 %v679
        %971 = vmatmul.mubr.bf16.gmra.mrb[0].mxu0 %v678
        %v972 = vpop.f32.mrb[0].mxu0
        %v973 = vadd.f32 %v741, %v972
        %v974 = vpop.f32.mrb[0].mxu0
        %v975 = vadd.f32 %v745, %v974
        %v976 = vpop.f32.mrb[0].mxu0
        %v977 = vadd.f32 %v741, %v976
        %v978 = vpop.f32.mrb[0].mxu0
        %v979 = vadd.f32 %v745, %v978
        %980 = vmatprep.mubr.bf16.mxu0 %v681
        %981 = vmatmul.mubr.bf16.gmra.mrb[0].mxu0 %v680
        %v982 = vpop.f32.mrb[0].mxu0
        %v983 = vadd.f32 %v741, %v982
        %v984 = vpop.f32.mrb[0].mxu0
        %v985 = vadd.f32 %v745, %v984
        %v986 = vpop.f32.mrb[0].mxu0
        %v987 = vadd.f32 %v741, %v986
        %v988 = vpop.f32.mrb[0].mxu0
        %v989 = vadd.f32 %v745, %v988
        %990 = vmatprep.mubr.bf16.mxu0 %v683
        %991 = vmatmul.mubr.bf16.gmra.mrb[0].mxu0 %v682
        %v992 = vpop.f32.mrb[0].mxu0
        %v993 = vadd.f32 %v741, %v992
        %v994 = vpop.f32.mrb[0].mxu0
        %v995 = vadd.f32 %v745, %v994
        %v996 = vpop.f32.mrb[0].mxu0
        %v997 = vadd.f32 %v741, %v996
        %v998 = vpop.f32.mrb[0].mxu0
        %v999 = vadd.f32 %v745, %v998
        %1000 = vmatprep.mubr.bf16.mxu0 %v685
        %1001 = vmatmul.mubr.bf16.gmra.mrb[0].mxu0 %v684
        %v1002 = vpop.f32.mrb[0].mxu0
        %v1003 = vadd.f32 %v741, %v1002
        %v1004 = vpop.f32.mrb[0].mxu0
        %v1005 = vadd.f32 %v745, %v1004
        %v1006 = vpop.f32.mrb[0].mxu0
        %v1007 = vadd.f32 %v741, %v1006
        %v1008 = vpop.f32.mrb[0].mxu0
        %v1009 = vadd.f32 %v745, %v1008
        %1010 = vmatprep.mubr.bf16.mxu0 %v687
        %1011 = vmatmul.mubr.bf16.gmra.mrb[0].mxu0 %v686
        %v1012 = vpop.f32.mrb[0].mxu0
        %v1013 = vadd.f32 %v741, %v1012
        %v1014 = vpop.f32.mrb[0].mxu0
        %v1015 = vadd.f32 %v745, %v1014
        %v1016 = vpop.f32.mrb[0].mxu0
        %v1017 = vadd.f32 %v741, %v1016
        %v1018 = vpop.f32.mrb[0].mxu0
        %v1019 = vadd.f32 %v745, %v1018
        %1020 = vmatprep.mubr.bf16.mxu0 %v689
        %1021 = vmatmul.mubr.bf16.gmra.mrb[0].mxu0 %v688
        %v1022 = vpop.f32.mrb[0].mxu0
        %v1023 = vadd.f32 %v741, %v1022
        %v1024 = vpop.f32.mrb[0].mxu0
        %v1025 = vadd.f32 %v745, %v1024
        %v1026 = vpop.f32.mrb[0].mxu0
        %v1027 = vadd.f32 %v741, %v1026
        %v1028 = vpop.f32.mrb[0].mxu0
        %v1029 = vadd.f32 %v745, %v1028
        %1030 = vmatprep.mubr.bf16.mxu0 %v691
        %1031 = vmatmul.mubr.bf16.gmra.mrb[0].mxu0 %v690
        %v1032 = vpop.f32.mrb[0].mxu0
        %v1033 = vadd.f32 %v741, %v1032
        %v1034 = vpop.f32.mrb[0].mxu0
        %v1035 = vadd.f32 %v745, %v1034
        %v1036 = vpop.f32.mrb[0].mxu0
        %v1037 = vadd.f32 %v741, %v1036
        %v1038 = vpop.f32.mrb[0].mxu0
        %v1039 = vadd.f32 %v745, %v1038
        %1040 = vmatprep.mubr.bf16.mxu0 %v693
        %1041 = vmatmul.mubr.bf16.gmra.mrb[0].mxu0 %v692
        %v1042 = vpop.f32.mrb[0].mxu0
        %v1043 = vadd.f32 %v741, %v1042
        %v1044 = vpop.f32.mrb[0].mxu0
        %v1045 = vadd.f32 %v745, %v1044
        %v1046 = vpop.f32.mrb[0].mxu0
        %v1047 = vadd.f32 %v741, %v1046
        %v1048 = vpop.f32.mrb[0].mxu0
        %v1049 = vadd.f32 %v745, %v1048
        %1050 = vmatprep.mubr.bf16.mxu0 %v695
        %1051 = vmatmul.mubr.bf16.gmra.mrb[0].mxu0 %v694
        %v1052 = vpop.f32.mrb[0].mxu0
        %v1053 = vadd.f32 %v741, %v1052
        %v1054 = vpop.f32.mrb[0].mxu0
        %v1055 = vadd.f32 %v745, %v1054
        %v1056 = vpop.f32.mrb[0].mxu0
        %v1057 = vadd.f32 %v741, %v1056
        %v1058 = vpop.f32.mrb[0].mxu0
        %v1059 = vadd.f32 %v745, %v1058
        %1060 = vmatprep.mubr.bf16.mxu0 %v697
        %1061 = vmatmul.mubr.bf16.gmra.mrb[0].mxu0 %v696
        %v1062 = vpop.f32.mrb[0].mxu0
        %v1063 = vadd.f32 %v741, %v1062
        %v1064 = vpop.f32.mrb[0].mxu0
        %v1065 = vadd.f32 %v745, %v1064
        %v1066 = vpop.f32.mrb[0].mxu0
        %v1067 = vadd.f32 %v741, %v1066
        %v1068 = vpop.f32.mrb[0].mxu0
        %v1069 = vadd.f32 %v745, %v1068
        %1070 = vmatprep.mubr.bf16.mxu0 %v699
        %1071 = vmatmul.mubr.bf16.gmra.mrb[0].mxu0 %v698
        %v1072 = vpop.f32.mrb[0].mxu0
        %v1073 = vadd.f32 %v741, %v1072
        %v1074 = vpop.f32.mrb[0].mxu0
        %v1075 = vadd.f32 %v745, %v1074
        %v1076 = vpop.f32.mrb[0].mxu0
        %v1077 = vadd.f32 %v741, %v1076
        %v1078 = vpop.f32.mrb[0].mxu0
        %v1079 = vadd.f32 %v745, %v1078
        %1080 = vmatprep.mubr.bf16.mxu0 %v701
        %1081 = vmatmul.mubr.bf16.gmra.mrb[0].mxu0 %v700
        %v1082 = vpop.f32.mrb[0].mxu0
        %v1083 = vadd.f32 %v741, %v1082
        %v1084 = vpop.f32.mrb[0].mxu0
        %v1085 = vadd.f32 %v745, %v1084
        %v1086 = vpop.f32.mrb[0].mxu0
        %v1087 = vadd.f32 %v741, %v1086
        %v1088 = vpop.f32.mrb[0].mxu0
        %v1089 = vadd.f32 %v745, %v1088
        %1090 = vmatprep.mubr.bf16.mxu0 %v703
        %1091 = vmatmul.mubr.bf16.gmra.mrb[0].mxu0 %v702
        %v1092 = vpop.f32.mrb[0].mxu0
        %v1093 = vadd.f32 %v741, %v1092
        %v1094 = vpop.f32.mrb[0].mxu0
        %v1095 = vadd.f32 %v745, %v1094
        %v1096 = vpop.f32.mrb[0].mxu0
        %v1097 = vadd.f32 %v741, %v1096
        %v1098 = vpop.f32.mrb[0].mxu0
        %v1099 = vadd.f32 %v745, %v1098
        %1100 = vdwg.mxu0
        %v1101 = vmax.f32 %v943, 0.0
        %v1102 = vmax.f32 %v945, 0.0
        %v1103 = vmax.f32 %v947, 0.0
        %v1104 = vmax.f32 %v949, 0.0
        %v1105 = vmax.f32 %v953, 0.0
        %v1106 = vmax.f32 %v955, 0.0
        %v1107 = vmax.f32 %v957, 0.0
        %v1108 = vmax.f32 %v959, 0.0
        %v1109 = vmax.f32 %v963, 0.0
        %v1110 = vmax.f32 %v965, 0.0
        %v1111 = vmax.f32 %v967, 0.0
        %v1112 = vmax.f32 %v969, 0.0
        %v1113 = vmax.f32 %v973, 0.0
        %v1114 = vmax.f32 %v975, 0.0
        %v1115 = vmax.f32 %v977, 0.0
        %v1116 = vmax.f32 %v979, 0.0
        %v1117 = vmax.f32 %v983, 0.0
        %v1118 = vmax.f32 %v985, 0.0
        %v1119 = vmax.f32 %v987, 0.0
        %v1120 = vmax.f32 %v989, 0.0
        %v1121 = vmax.f32 %v993, 0.0
        %v1122 = vmax.f32 %v995, 0.0
        %v1123 = vmax.f32 %v997, 0.0
        %v1124 = vmax.f32 %v999, 0.0
        %v1125 = vmax.f32 %v1003, 0.0
        %v1126 = vmax.f32 %v1005, 0.0
        %v1127 = vmax.f32 %v1007, 0.0
        %v1128 = vmax.f32 %v1009, 0.0
        %v1129 = vmax.f32 %v1013, 0.0
        %v1130 = vmax.f32 %v1015, 0.0
        %v1131 = vmax.f32 %v1017, 0.0
        %v1132 = vmax.f32 %v1019, 0.0
        %v1133 = vmax.f32 %v1023, 0.0
        %v1134 = vmax.f32 %v1025, 0.0
        %v1135 = vmax.f32 %v1027, 0.0
        %v1136 = vmax.f32 %v1029, 0.0
        %v1137 = vmax.f32 %v1033, 0.0
        %v1138 = vmax.f32 %v1035, 0.0
        %v1139 = vmax.f32 %v1037, 0.0
        %v1140 = vmax.f32 %v1039, 0.0
        %v1141 = vmax.f32 %v1043, 0.0
        %v1142 = vmax.f32 %v1045, 0.0
        %v1143 = vmax.f32 %v1047, 0.0
        %v1144 = vmax.f32 %v1049, 0.0
        %v1145 = vmax.f32 %v1053, 0.0
        %v1146 = vmax.f32 %v1055, 0.0
        %v1147 = vmax.f32 %v1057, 0.0
        %v1148 = vmax.f32 %v1059, 0.0
        %v1149 = vmax.f32 %v1063, 0.0
        %v1150 = vmax.f32 %v1065, 0.0
        %v1151 = vmax.f32 %v1067, 0.0
        %v1152 = vmax.f32 %v1069, 0.0
        %v1153 = vmax.f32 %v1073, 0.0
        %v1154 = vmax.f32 %v1075, 0.0
        %v1155 = vmax.f32 %v1077, 0.0
        %v1156 = vmax.f32 %v1079, 0.0
        %v1157 = vmax.f32 %v1083, 0.0
        %v1158 = vmax.f32 %v1085, 0.0
        %v1159 = vmax.f32 %v1087, 0.0
        %v1160 = vmax.f32 %v1089, 0.0
        %v1161 = vmax.f32 %v1093, 0.0
        %v1162 = vmax.f32 %v1095, 0.0
        %v1163 = vmax.f32 %v1097, 0.0
        %v1164 = vmax.f32 %v1099, 0.0
        %v1165 = vld [vmem:[%s5] sm:$0x3]
        %v1167 = vlaneseq
        %v1168 = vshrl.u32 %v1167, 7
        %v1169 = vsub.s32 0, %v1168
        %v1170 = vrot.slane %v1165, %v1169
        %v1171 = vlaneseq
        %v1172 = vshrl.u32 %v1171, 7
        %v1173 = vsub.s32 1, %v1172
        %v1174 = vrot.slane %v1165, %v1173
        %v1177 = vmul.f32 %v1101, %v1170
        %v1178 = vmul.f32 %v1102, %v1174
        %v1179 = vmul.f32 %v1103, %v1170
        %v1180 = vmul.f32 %v1104, %v1174
        %v1181 = vmul.f32 %v1105, %v1170
        %v1182 = vmul.f32 %v1106, %v1174
        %v1183 = vmul.f32 %v1107, %v1170
        %v1184 = vmul.f32 %v1108, %v1174
        %v1185 = vmul.f32 %v1109, %v1170
        %v1186 = vmul.f32 %v1110, %v1174
        %v1187 = vmul.f32 %v1111, %v1170
        %v1188 = vmul.f32 %v1112, %v1174
        %v1189 = vmul.f32 %v1113, %v1170
        %v1190 = vmul.f32 %v1114, %v1174
        %v1191 = vmul.f32 %v1115, %v1170
        %v1192 = vmul.f32 %v1116, %v1174
        %v1193 = vmul.f32 %v1117, %v1170
        %v1194 = vmul.f32 %v1118, %v1174
        %v1195 = vmul.f32 %v1119, %v1170
        %v1196 = vmul.f32 %v1120, %v1174
        %v1197 = vmul.f32 %v1121, %v1170
        %v1198 = vmul.f32 %v1122, %v1174
        %v1199 = vmul.f32 %v1123, %v1170
        %v1200 = vmul.f32 %v1124, %v1174
        %v1201 = vmul.f32 %v1125, %v1170
        %v1202 = vmul.f32 %v1126, %v1174
        %v1203 = vmul.f32 %v1127, %v1170
        %v1204 = vmul.f32 %v1128, %v1174
        %v1205 = vmul.f32 %v1129, %v1170
        %v1206 = vmul.f32 %v1130, %v1174
        %v1207 = vmul.f32 %v1131, %v1170
        %v1208 = vmul.f32 %v1132, %v1174
        %v1209 = vmul.f32 %v1133, %v1170
        %v1210 = vmul.f32 %v1134, %v1174
        %v1211 = vmul.f32 %v1135, %v1170
        %v1212 = vmul.f32 %v1136, %v1174
        %v1213 = vmul.f32 %v1137, %v1170
        %v1214 = vmul.f32 %v1138, %v1174
        %v1215 = vmul.f32 %v1139, %v1170
        %v1216 = vmul.f32 %v1140, %v1174
        %v1217 = vmul.f32 %v1141, %v1170
        %v1218 = vmul.f32 %v1142, %v1174
        %v1219 = vmul.f32 %v1143, %v1170
        %v1220 = vmul.f32 %v1144, %v1174
        %v1221 = vmul.f32 %v1145, %v1170
        %v1222 = vmul.f32 %v1146, %v1174
        %v1223 = vmul.f32 %v1147, %v1170
        %v1224 = vmul.f32 %v1148, %v1174
        %v1225 = vmul.f32 %v1149, %v1170
        %v1226 = vmul.f32 %v1150, %v1174
        %v1227 = vmul.f32 %v1151, %v1170
        %v1228 = vmul.f32 %v1152, %v1174
        %v1229 = vmul.f32 %v1153, %v1170
        %v1230 = vmul.f32 %v1154, %v1174
        %v1231 = vmul.f32 %v1155, %v1170
        %v1232 = vmul.f32 %v1156, %v1174
        %v1233 = vmul.f32 %v1157, %v1170
        %v1234 = vmul.f32 %v1158, %v1174
        %v1235 = vmul.f32 %v1159, %v1170
        %v1236 = vmul.f32 %v1160, %v1174
        %v1237 = vmul.f32 %v1161, %v1170
        %v1238 = vmul.f32 %v1162, %v1174
        %v1239 = vmul.f32 %v1163, %v1170
        %v1240 = vmul.f32 %v1164, %v1174
        %v1241 = vadd.f32 %v1177, %v1178
        %1242 = vadd.xlane.f32.xlu0 %v1241
        %v1243 = vpop.xlane.xlu0 %1242
        %v1244 = vadd.f32 %v1179, %v1180
        %1245 = vadd.xlane.f32.xlu0 %v1244
        %v1246 = vpop.xlane.xlu0 %1245
        %v1247 = vadd.f32 %v1181, %v1182
        %1248 = vadd.xlane.f32.xlu0 %v1247
        %v1249 = vpop.xlane.xlu0 %1248
        %v1250 = vadd.f32 %v1183, %v1184
        %1251 = vadd.xlane.f32.xlu0 %v1250
        %v1252 = vpop.xlane.xlu0 %1251
        %v1253 = vadd.f32 %v1185, %v1186
        %1254 = vadd.xlane.f32.xlu0 %v1253
        %v1255 = vpop.xlane.xlu0 %1254
        %v1256 = vadd.f32 %v1187, %v1188
        %1257 = vadd.xlane.f32.xlu0 %v1256
        %v1258 = vpop.xlane.xlu0 %1257
        %v1259 = vadd.f32 %v1189, %v1190
        %1260 = vadd.xlane.f32.xlu0 %v1259
        %v1261 = vpop.xlane.xlu0 %1260
        %v1262 = vadd.f32 %v1191, %v1192
        %1263 = vadd.xlane.f32.xlu0 %v1262
        %v1264 = vpop.xlane.xlu0 %1263
        %v1265 = vadd.f32 %v1193, %v1194
        %1266 = vadd.xlane.f32.xlu0 %v1265
        %v1267 = vpop.xlane.xlu0 %1266
        %v1268 = vadd.f32 %v1195, %v1196
        %1269 = vadd.xlane.f32.xlu0 %v1268
        %v1270 = vpop.xlane.xlu0 %1269
        %v1271 = vadd.f32 %v1197, %v1198
        %1272 = vadd.xlane.f32.xlu0 %v1271
        %v1273 = vpop.xlane.xlu0 %1272
        %v1274 = vadd.f32 %v1199, %v1200
        %1275 = vadd.xlane.f32.xlu0 %v1274
        %v1276 = vpop.xlane.xlu0 %1275
        %v1277 = vadd.f32 %v1201, %v1202
        %1278 = vadd.xlane.f32.xlu0 %v1277
        %v1279 = vpop.xlane.xlu0 %1278
        %v1280 = vadd.f32 %v1203, %v1204
        %1281 = vadd.xlane.f32.xlu0 %v1280
        %v1282 = vpop.xlane.xlu0 %1281
        %v1283 = vadd.f32 %v1205, %v1206
        %1284 = vadd.xlane.f32.xlu0 %v1283
        %v1285 = vpop.xlane.xlu0 %1284
        %v1286 = vadd.f32 %v1207, %v1208
        %1287 = vadd.xlane.f32.xlu0 %v1286
        %v1288 = vpop.xlane.xlu0 %1287
        %v1289 = vadd.f32 %v1209, %v1210
        %1290 = vadd.xlane.f32.xlu0 %v1289
        %v1291 = vpop.xlane.xlu0 %1290
        %v1292 = vadd.f32 %v1211, %v1212
        %1293 = vadd.xlane.f32.xlu0 %v1292
        %v1294 = vpop.xlane.xlu0 %1293
        %v1295 = vadd.f32 %v1213, %v1214
        %1296 = vadd.xlane.f32.xlu0 %v1295
        %v1297 = vpop.xlane.xlu0 %1296
        %v1298 = vadd.f32 %v1215, %v1216
        %1299 = vadd.xlane.f32.xlu0 %v1298
        %v1300 = vpop.xlane.xlu0 %1299
        %v1301 = vadd.f32 %v1217, %v1218
        %1302 = vadd.xlane.f32.xlu0 %v1301
        %v1303 = vpop.xlane.xlu0 %1302
        %v1304 = vadd.f32 %v1219, %v1220
        %1305 = vadd.xlane.f32.xlu0 %v1304
        %v1306 = vpop.xlane.xlu0 %1305
        %v1307 = vadd.f32 %v1221, %v1222
        %1308 = vadd.xlane.f32.xlu0 %v1307
        %v1309 = vpop.xlane.xlu0 %1308
        %v1310 = vadd.f32 %v1223, %v1224
        %1311 = vadd.xlane.f32.xlu0 %v1310
        %v1312 = vpop.xlane.xlu0 %1311
        %v1313 = vadd.f32 %v1225, %v1226
        %1314 = vadd.xlane.f32.xlu0 %v1313
        %v1315 = vpop.xlane.xlu0 %1314
        %v1316 = vadd.f32 %v1227, %v1228
        %1317 = vadd.xlane.f32.xlu0 %v1316
        %v1318 = vpop.xlane.xlu0 %1317
        %v1319 = vadd.f32 %v1229, %v1230
        %1320 = vadd.xlane.f32.xlu0 %v1319
        %v1321 = vpop.xlane.xlu0 %1320
        %v1322 = vadd.f32 %v1231, %v1232
        %1323 = vadd.xlane.f32.xlu0 %v1322
        %v1324 = vpop.xlane.xlu0 %1323
        %v1325 = vadd.f32 %v1233, %v1234
        %1326 = vadd.xlane.f32.xlu0 %v1325
        %v1327 = vpop.xlane.xlu0 %1326
        %v1328 = vadd.f32 %v1235, %v1236
        %1329 = vadd.xlane.f32.xlu0 %v1328
        %v1330 = vpop.xlane.xlu0 %1329
        %v1331 = vadd.f32 %v1237, %v1238
        %1332 = vadd.xlane.f32.xlu0 %v1331
        %v1333 = vpop.xlane.xlu0 %1332
        %v1334 = vadd.f32 %v1239, %v1240
        %1335 = vadd.xlane.f32.xlu0 %v1334
        %v1336 = vpop.xlane.xlu0 %1335
        %s1337 = sld [smem:[#allocation2]]
        %v1338 = vstv %s1337
        %v1339 = vadd.f32 %v1243, %v1338
        %v1340 = vadd.f32 %v1246, %v1338
        %v1341 = vadd.f32 %v1249, %v1338
        %v1342 = vadd.f32 %v1252, %v1338
        %v1343 = vadd.f32 %v1255, %v1338
        %v1344 = vadd.f32 %v1258, %v1338
        %v1345 = vadd.f32 %v1261, %v1338
        %v1346 = vadd.f32 %v1264, %v1338
        %v1347 = vadd.f32 %v1267, %v1338
        %v1348 = vadd.f32 %v1270, %v1338
        %v1349 = vadd.f32 %v1273, %v1338
        %v1350 = vadd.f32 %v1276, %v1338
        %v1351 = vadd.f32 %v1279, %v1338
        %v1352 = vadd.f32 %v1282, %v1338
        %v1353 = vadd.f32 %v1285, %v1338
        %v1354 = vadd.f32 %v1288, %v1338
        %v1355 = vadd.f32 %v1291, %v1338
        %v1356 = vadd.f32 %v1294, %v1338
        %v1357 = vadd.f32 %v1297, %v1338
        %v1358 = vadd.f32 %v1300, %v1338
        %v1359 = vadd.f32 %v1303, %v1338
        %v1360 = vadd.f32 %v1306, %v1338
        %v1361 = vadd.f32 %v1309, %v1338
        %v1362 = vadd.f32 %v1312, %v1338
        %v1363 = vadd.f32 %v1315, %v1338
        %v1364 = vadd.f32 %v1318, %v1338
        %v1365 = vadd.f32 %v1321, %v1338
        %v1366 = vadd.f32 %v1324, %v1338
        %v1367 = vadd.f32 %v1327, %v1338
        %v1368 = vadd.f32 %v1330, %v1338
        %v1369 = vadd.f32 %v1333, %v1338
        %v1370 = vadd.f32 %v1336, %v1338
        %v1403 = vlaneseq
        %v1404 = vshrl.u32 %v1403, 7
        %v1405 = vsub.s32 0, %v1404
        %v1406 = vrot.slane %v1339, %v1405
        %v1407 = vlaneseq
        %v1408 = vshrl.u32 %v1407, 7
        %v1409 = vsub.s32 1, %v1408
        %v1410 = vrot.slane %v1339, %v1409
        %v1411 = vlaneseq
        %v1412 = vshrl.u32 %v1411, 7
        %v1413 = vsub.s32 2, %v1412
        %v1414 = vrot.slane %v1339, %v1413
        %v1415 = vlaneseq
        %v1416 = vshrl.u32 %v1415, 7
        %v1417 = vsub.s32 3, %v1416
        %v1418 = vrot.slane %v1339, %v1417
        %v1419 = vlaneseq
        %v1420 = vshrl.u32 %v1419, 7
        %v1421 = vsub.s32 4, %v1420
        %v1422 = vrot.slane %v1339, %v1421
        %v1423 = vlaneseq
        %v1424 = vshrl.u32 %v1423, 7
        %v1425 = vsub.s32 5, %v1424
        %v1426 = vrot.slane %v1339, %v1425
        %v1427 = vlaneseq
        %v1428 = vshrl.u32 %v1427, 7
        %v1429 = vsub.s32 6, %v1428
        %v1430 = vrot.slane %v1339, %v1429
        %v1431 = vlaneseq
        %v1432 = vshrl.u32 %v1431, 7
        %v1433 = vsub.s32 7, %v1432
        %v1434 = vrot.slane %v1339, %v1433
        %v1435 = vlaneseq
        %v1436 = vshrl.u32 %v1435, 7
        %v1437 = vsub.s32 0, %v1436
        %v1438 = vrot.slane %v1340, %v1437
        %v1439 = vlaneseq
        %v1440 = vshrl.u32 %v1439, 7
        %v1441 = vsub.s32 1, %v1440
        %v1442 = vrot.slane %v1340, %v1441
        %v1443 = vlaneseq
        %v1444 = vshrl.u32 %v1443, 7
        %v1445 = vsub.s32 2, %v1444
        %v1446 = vrot.slane %v1340, %v1445
        %v1447 = vlaneseq
        %v1448 = vshrl.u32 %v1447, 7
        %v1449 = vsub.s32 3, %v1448
        %v1450 = vrot.slane %v1340, %v1449
        %v1451 = vlaneseq
        %v1452 = vshrl.u32 %v1451, 7
        %v1453 = vsub.s32 4, %v1452
        %v1454 = vrot.slane %v1340, %v1453
        %v1455 = vlaneseq
        %v1456 = vshrl.u32 %v1455, 7
        %v1457 = vsub.s32 5, %v1456
        %v1458 = vrot.slane %v1340, %v1457
        %v1459 = vlaneseq
        %v1460 = vshrl.u32 %v1459, 7
        %v1461 = vsub.s32 6, %v1460
        %v1462 = vrot.slane %v1340, %v1461
        %v1463 = vlaneseq
        %v1464 = vshrl.u32 %v1463, 7
        %v1465 = vsub.s32 7, %v1464
        %v1466 = vrot.slane %v1340, %v1465
        %v1467 = vlaneseq
        %v1468 = vshrl.u32 %v1467, 7
        %v1469 = vsub.s32 0, %v1468
        %v1470 = vrot.slane %v1341, %v1469
        %v1471 = vlaneseq
        %v1472 = vshrl.u32 %v1471, 7
        %v1473 = vsub.s32 1, %v1472
        %v1474 = vrot.slane %v1341, %v1473
        %v1475 = vlaneseq
        %v1476 = vshrl.u32 %v1475, 7
        %v1477 = vsub.s32 2, %v1476
        %v1478 = vrot.slane %v1341, %v1477
        %v1479 = vlaneseq
        %v1480 = vshrl.u32 %v1479, 7
        %v1481 = vsub.s32 3, %v1480
        %v1482 = vrot.slane %v1341, %v1481
        %v1483 = vlaneseq
        %v1484 = vshrl.u32 %v1483, 7
        %v1485 = vsub.s32 4, %v1484
        %v1486 = vrot.slane %v1341, %v1485
        %v1487 = vlaneseq
        %v1488 = vshrl.u32 %v1487, 7
        %v1489 = vsub.s32 5, %v1488
        %v1490 = vrot.slane %v1341, %v1489
        %v1491 = vlaneseq
        %v1492 = vshrl.u32 %v1491, 7
        %v1493 = vsub.s32 6, %v1492
        %v1494 = vrot.slane %v1341, %v1493
        %v1495 = vlaneseq
        %v1496 = vshrl.u32 %v1495, 7
        %v1497 = vsub.s32 7, %v1496
        %v1498 = vrot.slane %v1341, %v1497
        %v1499 = vlaneseq
        %v1500 = vshrl.u32 %v1499, 7
        %v1501 = vsub.s32 0, %v1500
        %v1502 = vrot.slane %v1342, %v1501
        %v1503 = vlaneseq
        %v1504 = vshrl.u32 %v1503, 7
        %v1505 = vsub.s32 1, %v1504
        %v1506 = vrot.slane %v1342, %v1505
        %v1507 = vlaneseq
        %v1508 = vshrl.u32 %v1507, 7
        %v1509 = vsub.s32 2, %v1508
        %v1510 = vrot.slane %v1342, %v1509
        %v1511 = vlaneseq
        %v1512 = vshrl.u32 %v1511, 7
        %v1513 = vsub.s32 3, %v1512
        %v1514 = vrot.slane %v1342, %v1513
        %v1515 = vlaneseq
        %v1516 = vshrl.u32 %v1515, 7
        %v1517 = vsub.s32 4, %v1516
        %v1518 = vrot.slane %v1342, %v1517
        %v1519 = vlaneseq
        %v1520 = vshrl.u32 %v1519, 7
        %v1521 = vsub.s32 5, %v1520
        %v1522 = vrot.slane %v1342, %v1521
        %v1523 = vlaneseq
        %v1524 = vshrl.u32 %v1523, 7
        %v1525 = vsub.s32 6, %v1524
        %v1526 = vrot.slane %v1342, %v1525
        %v1527 = vlaneseq
        %v1528 = vshrl.u32 %v1527, 7
        %v1529 = vsub.s32 7, %v1528
        %v1530 = vrot.slane %v1342, %v1529
        %v1531 = vlaneseq
        %v1532 = vshrl.u32 %v1531, 7
        %v1533 = vsub.s32 0, %v1532
        %v1534 = vrot.slane %v1343, %v1533
        %v1535 = vlaneseq
        %v1536 = vshrl.u32 %v1535, 7
        %v1537 = vsub.s32 1, %v1536
        %v1538 = vrot.slane %v1343, %v1537
        %v1539 = vlaneseq
        %v1540 = vshrl.u32 %v1539, 7
        %v1541 = vsub.s32 2, %v1540
        %v1542 = vrot.slane %v1343, %v1541
        %v1543 = vlaneseq
        %v1544 = vshrl.u32 %v1543, 7
        %v1545 = vsub.s32 3, %v1544
        %v1546 = vrot.slane %v1343, %v1545
        %v1547 = vlaneseq
        %v1548 = vshrl.u32 %v1547, 7
        %v1549 = vsub.s32 4, %v1548
        %v1550 = vrot.slane %v1343, %v1549
        %v1551 = vlaneseq
        %v1552 = vshrl.u32 %v1551, 7
        %v1553 = vsub.s32 5, %v1552
        %v1554 = vrot.slane %v1343, %v1553
        %v1555 = vlaneseq
        %v1556 = vshrl.u32 %v1555, 7
        %v1557 = vsub.s32 6, %v1556
        %v1558 = vrot.slane %v1343, %v1557
        %v1559 = vlaneseq
        %v1560 = vshrl.u32 %v1559, 7
        %v1561 = vsub.s32 7, %v1560
        %v1562 = vrot.slane %v1343, %v1561
        %v1563 = vlaneseq
        %v1564 = vshrl.u32 %v1563, 7
        %v1565 = vsub.s32 0, %v1564
        %v1566 = vrot.slane %v1344, %v1565
        %v1567 = vlaneseq
        %v1568 = vshrl.u32 %v1567, 7
        %v1569 = vsub.s32 1, %v1568
        %v1570 = vrot.slane %v1344, %v1569
        %v1571 = vlaneseq
        %v1572 = vshrl.u32 %v1571, 7
        %v1573 = vsub.s32 2, %v1572
        %v1574 = vrot.slane %v1344, %v1573
        %v1575 = vlaneseq
        %v1576 = vshrl.u32 %v1575, 7
        %v1577 = vsub.s32 3, %v1576
        %v1578 = vrot.slane %v1344, %v1577
        %v1579 = vlaneseq
        %v1580 = vshrl.u32 %v1579, 7
        %v1581 = vsub.s32 4, %v1580
        %v1582 = vrot.slane %v1344, %v1581
        %v1583 = vlaneseq
        %v1584 = vshrl.u32 %v1583, 7
        %v1585 = vsub.s32 5, %v1584
        %v1586 = vrot.slane %v1344, %v1585
        %v1587 = vlaneseq
        %v1588 = vshrl.u32 %v1587, 7
        %v1589 = vsub.s32 6, %v1588
        %v1590 = vrot.slane %v1344, %v1589
        %v1591 = vlaneseq
        %v1592 = vshrl.u32 %v1591, 7
        %v1593 = vsub.s32 7, %v1592
        %v1594 = vrot.slane %v1344, %v1593
        %v1595 = vlaneseq
        %v1596 = vshrl.u32 %v1595, 7
        %v1597 = vsub.s32 0, %v1596
        %v1598 = vrot.slane %v1345, %v1597
        %v1599 = vlaneseq
        %v1600 = vshrl.u32 %v1599, 7
        %v1601 = vsub.s32 1, %v1600
        %v1602 = vrot.slane %v1345, %v1601
        %v1603 = vlaneseq
        %v1604 = vshrl.u32 %v1603, 7
        %v1605 = vsub.s32 2, %v1604
        %v1606 = vrot.slane %v1345, %v1605
        %v1607 = vlaneseq
        %v1608 = vshrl.u32 %v1607, 7
        %v1609 = vsub.s32 3, %v1608
        %v1610 = vrot.slane %v1345, %v1609
        %v1611 = vlaneseq
        %v1612 = vshrl.u32 %v1611, 7
        %v1613 = vsub.s32 4, %v1612
        %v1614 = vrot.slane %v1345, %v1613
        %v1615 = vlaneseq
        %v1616 = vshrl.u32 %v1615, 7
        %v1617 = vsub.s32 5, %v1616
        %v1618 = vrot.slane %v1345, %v1617
        %v1619 = vlaneseq
        %v1620 = vshrl.u32 %v1619, 7
        %v1621 = vsub.s32 6, %v1620
        %v1622 = vrot.slane %v1345, %v1621
        %v1623 = vlaneseq
        %v1624 = vshrl.u32 %v1623, 7
        %v1625 = vsub.s32 7, %v1624
        %v1626 = vrot.slane %v1345, %v1625
        %v1627 = vlaneseq
        %v1628 = vshrl.u32 %v1627, 7
        %v1629 = vsub.s32 0, %v1628
        %v1630 = vrot.slane %v1346, %v1629
        %v1631 = vlaneseq
        %v1632 = vshrl.u32 %v1631, 7
        %v1633 = vsub.s32 1, %v1632
        %v1634 = vrot.slane %v1346, %v1633
        %v1635 = vlaneseq
        %v1636 = vshrl.u32 %v1635, 7
        %v1637 = vsub.s32 2, %v1636
        %v1638 = vrot.slane %v1346, %v1637
        %v1639 = vlaneseq
        %v1640 = vshrl.u32 %v1639, 7
        %v1641 = vsub.s32 3, %v1640
        %v1642 = vrot.slane %v1346, %v1641
        %v1643 = vlaneseq
        %v1644 = vshrl.u32 %v1643, 7
        %v1645 = vsub.s32 4, %v1644
        %v1646 = vrot.slane %v1346, %v1645
        %v1647 = vlaneseq
        %v1648 = vshrl.u32 %v1647, 7
        %v1649 = vsub.s32 5, %v1648
        %v1650 = vrot.slane %v1346, %v1649
        %v1651 = vlaneseq
        %v1652 = vshrl.u32 %v1651, 7
        %v1653 = vsub.s32 6, %v1652
        %v1654 = vrot.slane %v1346, %v1653
        %v1655 = vlaneseq
        %v1656 = vshrl.u32 %v1655, 7
        %v1657 = vsub.s32 7, %v1656
        %v1658 = vrot.slane %v1346, %v1657
        %v1659 = vlaneseq
        %v1660 = vshrl.u32 %v1659, 7
        %v1661 = vsub.s32 0, %v1660
        %v1662 = vrot.slane %v1347, %v1661
        %v1663 = vlaneseq
        %v1664 = vshrl.u32 %v1663, 7
        %v1665 = vsub.s32 1, %v1664
        %v1666 = vrot.slane %v1347, %v1665
        %v1667 = vlaneseq
        %v1668 = vshrl.u32 %v1667, 7
        %v1669 = vsub.s32 2, %v1668
        %v1670 = vrot.slane %v1347, %v1669
        %v1671 = vlaneseq
        %v1672 = vshrl.u32 %v1671, 7
        %v1673 = vsub.s32 3, %v1672
        %v1674 = vrot.slane %v1347, %v1673
        %v1675 = vlaneseq
        %v1676 = vshrl.u32 %v1675, 7
        %v1677 = vsub.s32 4, %v1676
        %v1678 = vrot.slane %v1347, %v1677
        %v1679 = vlaneseq
        %v1680 = vshrl.u32 %v1679, 7
        %v1681 = vsub.s32 5, %v1680
        %v1682 = vrot.slane %v1347, %v1681
        %v1683 = vlaneseq
        %v1684 = vshrl.u32 %v1683, 7
        %v1685 = vsub.s32 6, %v1684
        %v1686 = vrot.slane %v1347, %v1685
        %v1687 = vlaneseq
        %v1688 = vshrl.u32 %v1687, 7
        %v1689 = vsub.s32 7, %v1688
        %v1690 = vrot.slane %v1347, %v1689
        %v1691 = vlaneseq
        %v1692 = vshrl.u32 %v1691, 7
        %v1693 = vsub.s32 0, %v1692
        %v1694 = vrot.slane %v1348, %v1693
        %v1695 = vlaneseq
        %v1696 = vshrl.u32 %v1695, 7
        %v1697 = vsub.s32 1, %v1696
        %v1698 = vrot.slane %v1348, %v1697
        %v1699 = vlaneseq
        %v1700 = vshrl.u32 %v1699, 7
        %v1701 = vsub.s32 2, %v1700
        %v1702 = vrot.slane %v1348, %v1701
        %v1703 = vlaneseq
        %v1704 = vshrl.u32 %v1703, 7
        %v1705 = vsub.s32 3, %v1704
        %v1706 = vrot.slane %v1348, %v1705
        %v1707 = vlaneseq
        %v1708 = vshrl.u32 %v1707, 7
        %v1709 = vsub.s32 4, %v1708
        %v1710 = vrot.slane %v1348, %v1709
        %v1711 = vlaneseq
        %v1712 = vshrl.u32 %v1711, 7
        %v1713 = vsub.s32 5, %v1712
        %v1714 = vrot.slane %v1348, %v1713
        %v1715 = vlaneseq
        %v1716 = vshrl.u32 %v1715, 7
        %v1717 = vsub.s32 6, %v1716
        %v1718 = vrot.slane %v1348, %v1717
        %v1719 = vlaneseq
        %v1720 = vshrl.u32 %v1719, 7
        %v1721 = vsub.s32 7, %v1720
        %v1722 = vrot.slane %v1348, %v1721
        %v1723 = vlaneseq
        %v1724 = vshrl.u32 %v1723, 7
        %v1725 = vsub.s32 0, %v1724
        %v1726 = vrot.slane %v1349, %v1725
        %v1727 = vlaneseq
        %v1728 = vshrl.u32 %v1727, 7
        %v1729 = vsub.s32 1, %v1728
        %v1730 = vrot.slane %v1349, %v1729
        %v1731 = vlaneseq
        %v1732 = vshrl.u32 %v1731, 7
        %v1733 = vsub.s32 2, %v1732
        %v1734 = vrot.slane %v1349, %v1733
        %v1735 = vlaneseq
        %v1736 = vshrl.u32 %v1735, 7
        %v1737 = vsub.s32 3, %v1736
        %v1738 = vrot.slane %v1349, %v1737
        %v1739 = vlaneseq
        %v1740 = vshrl.u32 %v1739, 7
        %v1741 = vsub.s32 4, %v1740
        %v1742 = vrot.slane %v1349, %v1741
        %v1743 = vlaneseq
        %v1744 = vshrl.u32 %v1743, 7
        %v1745 = vsub.s32 5, %v1744
        %v1746 = vrot.slane %v1349, %v1745
        %v1747 = vlaneseq
        %v1748 = vshrl.u32 %v1747, 7
        %v1749 = vsub.s32 6, %v1748
        %v1750 = vrot.slane %v1349, %v1749
        %v1751 = vlaneseq
        %v1752 = vshrl.u32 %v1751, 7
        %v1753 = vsub.s32 7, %v1752
        %v1754 = vrot.slane %v1349, %v1753
        %v1755 = vlaneseq
        %v1756 = vshrl.u32 %v1755, 7
        %v1757 = vsub.s32 0, %v1756
        %v1758 = vrot.slane %v1350, %v1757
        %v1759 = vlaneseq
        %v1760 = vshrl.u32 %v1759, 7
        %v1761 = vsub.s32 1, %v1760
        %v1762 = vrot.slane %v1350, %v1761
        %v1763 = vlaneseq
        %v1764 = vshrl.u32 %v1763, 7
        %v1765 = vsub.s32 2, %v1764
        %v1766 = vrot.slane %v1350, %v1765
        %v1767 = vlaneseq
        %v1768 = vshrl.u32 %v1767, 7
        %v1769 = vsub.s32 3, %v1768
        %v1770 = vrot.slane %v1350, %v1769
        %v1771 = vlaneseq
        %v1772 = vshrl.u32 %v1771, 7
        %v1773 = vsub.s32 4, %v1772
        %v1774 = vrot.slane %v1350, %v1773
        %v1775 = vlaneseq
        %v1776 = vshrl.u32 %v1775, 7
        %v1777 = vsub.s32 5, %v1776
        %v1778 = vrot.slane %v1350, %v1777
        %v1779 = vlaneseq
        %v1780 = vshrl.u32 %v1779, 7
        %v1781 = vsub.s32 6, %v1780
        %v1782 = vrot.slane %v1350, %v1781
        %v1783 = vlaneseq
        %v1784 = vshrl.u32 %v1783, 7
        %v1785 = vsub.s32 7, %v1784
        %v1786 = vrot.slane %v1350, %v1785
        %v1787 = vlaneseq
        %v1788 = vshrl.u32 %v1787, 7
        %v1789 = vsub.s32 0, %v1788
        %v1790 = vrot.slane %v1351, %v1789
        %v1791 = vlaneseq
        %v1792 = vshrl.u32 %v1791, 7
        %v1793 = vsub.s32 1, %v1792
        %v1794 = vrot.slane %v1351, %v1793
        %v1795 = vlaneseq
        %v1796 = vshrl.u32 %v1795, 7
        %v1797 = vsub.s32 2, %v1796
        %v1798 = vrot.slane %v1351, %v1797
        %v1799 = vlaneseq
        %v1800 = vshrl.u32 %v1799, 7
        %v1801 = vsub.s32 3, %v1800
        %v1802 = vrot.slane %v1351, %v1801
        %v1803 = vlaneseq
        %v1804 = vshrl.u32 %v1803, 7
        %v1805 = vsub.s32 4, %v1804
        %v1806 = vrot.slane %v1351, %v1805
        %v1807 = vlaneseq
        %v1808 = vshrl.u32 %v1807, 7
        %v1809 = vsub.s32 5, %v1808
        %v1810 = vrot.slane %v1351, %v1809
        %v1811 = vlaneseq
        %v1812 = vshrl.u32 %v1811, 7
        %v1813 = vsub.s32 6, %v1812
        %v1814 = vrot.slane %v1351, %v1813
        %v1815 = vlaneseq
        %v1816 = vshrl.u32 %v1815, 7
        %v1817 = vsub.s32 7, %v1816
        %v1818 = vrot.slane %v1351, %v1817
        %v1819 = vlaneseq
        %v1820 = vshrl.u32 %v1819, 7
        %v1821 = vsub.s32 0, %v1820
        %v1822 = vrot.slane %v1352, %v1821
        %v1823 = vlaneseq
        %v1824 = vshrl.u32 %v1823, 7
        %v1825 = vsub.s32 1, %v1824
        %v1826 = vrot.slane %v1352, %v1825
        %v1827 = vlaneseq
        %v1828 = vshrl.u32 %v1827, 7
        %v1829 = vsub.s32 2, %v1828
        %v1830 = vrot.slane %v1352, %v1829
        %v1831 = vlaneseq
        %v1832 = vshrl.u32 %v1831, 7
        %v1833 = vsub.s32 3, %v1832
        %v1834 = vrot.slane %v1352, %v1833
        %v1835 = vlaneseq
        %v1836 = vshrl.u32 %v1835, 7
        %v1837 = vsub.s32 4, %v1836
        %v1838 = vrot.slane %v1352, %v1837
        %v1839 = vlaneseq
        %v1840 = vshrl.u32 %v1839, 7
        %v1841 = vsub.s32 5, %v1840
        %v1842 = vrot.slane %v1352, %v1841
        %v1843 = vlaneseq
        %v1844 = vshrl.u32 %v1843, 7
        %v1845 = vsub.s32 6, %v1844
        %v1846 = vrot.slane %v1352, %v1845
        %v1847 = vlaneseq
        %v1848 = vshrl.u32 %v1847, 7
        %v1849 = vsub.s32 7, %v1848
        %v1850 = vrot.slane %v1352, %v1849
        %v1851 = vlaneseq
        %v1852 = vshrl.u32 %v1851, 7
        %v1853 = vsub.s32 0, %v1852
        %v1854 = vrot.slane %v1353, %v1853
        %v1855 = vlaneseq
        %v1856 = vshrl.u32 %v1855, 7
        %v1857 = vsub.s32 1, %v1856
        %v1858 = vrot.slane %v1353, %v1857
        %v1859 = vlaneseq
        %v1860 = vshrl.u32 %v1859, 7
        %v1861 = vsub.s32 2, %v1860
        %v1862 = vrot.slane %v1353, %v1861
        %v1863 = vlaneseq
        %v1864 = vshrl.u32 %v1863, 7
        %v1865 = vsub.s32 3, %v1864
        %v1866 = vrot.slane %v1353, %v1865
        %v1867 = vlaneseq
        %v1868 = vshrl.u32 %v1867, 7
        %v1869 = vsub.s32 4, %v1868
        %v1870 = vrot.slane %v1353, %v1869
        %v1871 = vlaneseq
        %v1872 = vshrl.u32 %v1871, 7
        %v1873 = vsub.s32 5, %v1872
        %v1874 = vrot.slane %v1353, %v1873
        %v1875 = vlaneseq
        %v1876 = vshrl.u32 %v1875, 7
        %v1877 = vsub.s32 6, %v1876
        %v1878 = vrot.slane %v1353, %v1877
        %v1879 = vlaneseq
        %v1880 = vshrl.u32 %v1879, 7
        %v1881 = vsub.s32 7, %v1880
        %v1882 = vrot.slane %v1353, %v1881
        %v1883 = vlaneseq
        %v1884 = vshrl.u32 %v1883, 7
        %v1885 = vsub.s32 0, %v1884
        %v1886 = vrot.slane %v1354, %v1885
        %v1887 = vlaneseq
        %v1888 = vshrl.u32 %v1887, 7
        %v1889 = vsub.s32 1, %v1888
        %v1890 = vrot.slane %v1354, %v1889
        %v1891 = vlaneseq
        %v1892 = vshrl.u32 %v1891, 7
        %v1893 = vsub.s32 2, %v1892
        %v1894 = vrot.slane %v1354, %v1893
        %v1895 = vlaneseq
        %v1896 = vshrl.u32 %v1895, 7
        %v1897 = vsub.s32 3, %v1896
        %v1898 = vrot.slane %v1354, %v1897
        %v1899 = vlaneseq
        %v1900 = vshrl.u32 %v1899, 7
        %v1901 = vsub.s32 4, %v1900
        %v1902 = vrot.slane %v1354, %v1901
        %v1903 = vlaneseq
        %v1904 = vshrl.u32 %v1903, 7
        %v1905 = vsub.s32 5, %v1904
        %v1906 = vrot.slane %v1354, %v1905
        %v1907 = vlaneseq
        %v1908 = vshrl.u32 %v1907, 7
        %v1909 = vsub.s32 6, %v1908
        %v1910 = vrot.slane %v1354, %v1909
        %v1911 = vlaneseq
        %v1912 = vshrl.u32 %v1911, 7
        %v1913 = vsub.s32 7, %v1912
        %v1914 = vrot.slane %v1354, %v1913
        %v1915 = vlaneseq
        %v1916 = vshrl.u32 %v1915, 7
        %v1917 = vsub.s32 0, %v1916
        %v1918 = vrot.slane %v1355, %v1917
        %v1919 = vlaneseq
        %v1920 = vshrl.u32 %v1919, 7
        %v1921 = vsub.s32 1, %v1920
        %v1922 = vrot.slane %v1355, %v1921
        %v1923 = vlaneseq
        %v1924 = vshrl.u32 %v1923, 7
        %v1925 = vsub.s32 2, %v1924
        %v1926 = vrot.slane %v1355, %v1925
        %v1927 = vlaneseq
        %v1928 = vshrl.u32 %v1927, 7
        %v1929 = vsub.s32 3, %v1928
        %v1930 = vrot.slane %v1355, %v1929
        %v1931 = vlaneseq
        %v1932 = vshrl.u32 %v1931, 7
        %v1933 = vsub.s32 4, %v1932
        %v1934 = vrot.slane %v1355, %v1933
        %v1935 = vlaneseq
        %v1936 = vshrl.u32 %v1935, 7
        %v1937 = vsub.s32 5, %v1936
        %v1938 = vrot.slane %v1355, %v1937
        %v1939 = vlaneseq
        %v1940 = vshrl.u32 %v1939, 7
        %v1941 = vsub.s32 6, %v1940
        %v1942 = vrot.slane %v1355, %v1941
        %v1943 = vlaneseq
        %v1944 = vshrl.u32 %v1943, 7
        %v1945 = vsub.s32 7, %v1944
        %v1946 = vrot.slane %v1355, %v1945
        %v1947 = vlaneseq
        %v1948 = vshrl.u32 %v1947, 7
        %v1949 = vsub.s32 0, %v1948
        %v1950 = vrot.slane %v1356, %v1949
        %v1951 = vlaneseq
        %v1952 = vshrl.u32 %v1951, 7
        %v1953 = vsub.s32 1, %v1952
        %v1954 = vrot.slane %v1356, %v1953
        %v1955 = vlaneseq
        %v1956 = vshrl.u32 %v1955, 7
        %v1957 = vsub.s32 2, %v1956
        %v1958 = vrot.slane %v1356, %v1957
        %v1959 = vlaneseq
        %v1960 = vshrl.u32 %v1959, 7
        %v1961 = vsub.s32 3, %v1960
        %v1962 = vrot.slane %v1356, %v1961
        %v1963 = vlaneseq
        %v1964 = vshrl.u32 %v1963, 7
        %v1965 = vsub.s32 4, %v1964
        %v1966 = vrot.slane %v1356, %v1965
        %v1967 = vlaneseq
        %v1968 = vshrl.u32 %v1967, 7
        %v1969 = vsub.s32 5, %v1968
        %v1970 = vrot.slane %v1356, %v1969
        %v1971 = vlaneseq
        %v1972 = vshrl.u32 %v1971, 7
        %v1973 = vsub.s32 6, %v1972
        %v1974 = vrot.slane %v1356, %v1973
        %v1975 = vlaneseq
        %v1976 = vshrl.u32 %v1975, 7
        %v1977 = vsub.s32 7, %v1976
        %v1978 = vrot.slane %v1356, %v1977
        %v1979 = vlaneseq
        %v1980 = vshrl.u32 %v1979, 7
        %v1981 = vsub.s32 0, %v1980
        %v1982 = vrot.slane %v1357, %v1981
        %v1983 = vlaneseq
        %v1984 = vshrl.u32 %v1983, 7
        %v1985 = vsub.s32 1, %v1984
        %v1986 = vrot.slane %v1357, %v1985
        %v1987 = vlaneseq
        %v1988 = vshrl.u32 %v1987, 7
        %v1989 = vsub.s32 2, %v1988
        %v1990 = vrot.slane %v1357, %v1989
        %v1991 = vlaneseq
        %v1992 = vshrl.u32 %v1991, 7
        %v1993 = vsub.s32 3, %v1992
        %v1994 = vrot.slane %v1357, %v1993
        %v1995 = vlaneseq
        %v1996 = vshrl.u32 %v1995, 7
        %v1997 = vsub.s32 4, %v1996
        %v1998 = vrot.slane %v1357, %v1997
        %v1999 = vlaneseq
        %v2000 = vshrl.u32 %v1999, 7
        %v2001 = vsub.s32 5, %v2000
        %v2002 = vrot.slane %v1357, %v2001
        %v2003 = vlaneseq
        %v2004 = vshrl.u32 %v2003, 7
        %v2005 = vsub.s32 6, %v2004
        %v2006 = vrot.slane %v1357, %v2005
        %v2007 = vlaneseq
        %v2008 = vshrl.u32 %v2007, 7
        %v2009 = vsub.s32 7, %v2008
        %v2010 = vrot.slane %v1357, %v2009
        %v2011 = vlaneseq
        %v2012 = vshrl.u32 %v2011, 7
        %v2013 = vsub.s32 0, %v2012
        %v2014 = vrot.slane %v1358, %v2013
        %v2015 = vlaneseq
        %v2016 = vshrl.u32 %v2015, 7
        %v2017 = vsub.s32 1, %v2016
        %v2018 = vrot.slane %v1358, %v2017
        %v2019 = vlaneseq
        %v2020 = vshrl.u32 %v2019, 7
        %v2021 = vsub.s32 2, %v2020
        %v2022 = vrot.slane %v1358, %v2021
        %v2023 = vlaneseq
        %v2024 = vshrl.u32 %v2023, 7
        %v2025 = vsub.s32 3, %v2024
        %v2026 = vrot.slane %v1358, %v2025
        %v2027 = vlaneseq
        %v2028 = vshrl.u32 %v2027, 7
        %v2029 = vsub.s32 4, %v2028
        %v2030 = vrot.slane %v1358, %v2029
        %v2031 = vlaneseq
        %v2032 = vshrl.u32 %v2031, 7
        %v2033 = vsub.s32 5, %v2032
        %v2034 = vrot.slane %v1358, %v2033
        %v2035 = vlaneseq
        %v2036 = vshrl.u32 %v2035, 7
        %v2037 = vsub.s32 6, %v2036
        %v2038 = vrot.slane %v1358, %v2037
        %v2039 = vlaneseq
        %v2040 = vshrl.u32 %v2039, 7
        %v2041 = vsub.s32 7, %v2040
        %v2042 = vrot.slane %v1358, %v2041
        %v2043 = vlaneseq
        %v2044 = vshrl.u32 %v2043, 7
        %v2045 = vsub.s32 0, %v2044
        %v2046 = vrot.slane %v1359, %v2045
        %v2047 = vlaneseq
        %v2048 = vshrl.u32 %v2047, 7
        %v2049 = vsub.s32 1, %v2048
        %v2050 = vrot.slane %v1359, %v2049
        %v2051 = vlaneseq
        %v2052 = vshrl.u32 %v2051, 7
        %v2053 = vsub.s32 2, %v2052
        %v2054 = vrot.slane %v1359, %v2053
        %v2055 = vlaneseq
        %v2056 = vshrl.u32 %v2055, 7
        %v2057 = vsub.s32 3, %v2056
        %v2058 = vrot.slane %v1359, %v2057
        %v2059 = vlaneseq
        %v2060 = vshrl.u32 %v2059, 7
        %v2061 = vsub.s32 4, %v2060
        %v2062 = vrot.slane %v1359, %v2061
        %v2063 = vlaneseq
        %v2064 = vshrl.u32 %v2063, 7
        %v2065 = vsub.s32 5, %v2064
        %v2066 = vrot.slane %v1359, %v2065
        %v2067 = vlaneseq
        %v2068 = vshrl.u32 %v2067, 7
        %v2069 = vsub.s32 6, %v2068
        %v2070 = vrot.slane %v1359, %v2069
        %v2071 = vlaneseq
        %v2072 = vshrl.u32 %v2071, 7
        %v2073 = vsub.s32 7, %v2072
        %v2074 = vrot.slane %v1359, %v2073
        %v2075 = vlaneseq
        %v2076 = vshrl.u32 %v2075, 7
        %v2077 = vsub.s32 0, %v2076
        %v2078 = vrot.slane %v1360, %v2077
        %v2079 = vlaneseq
        %v2080 = vshrl.u32 %v2079, 7
        %v2081 = vsub.s32 1, %v2080
        %v2082 = vrot.slane %v1360, %v2081
        %v2083 = vlaneseq
        %v2084 = vshrl.u32 %v2083, 7
        %v2085 = vsub.s32 2, %v2084
        %v2086 = vrot.slane %v1360, %v2085
        %v2087 = vlaneseq
        %v2088 = vshrl.u32 %v2087, 7
        %v2089 = vsub.s32 3, %v2088
        %v2090 = vrot.slane %v1360, %v2089
        %v2091 = vlaneseq
        %v2092 = vshrl.u32 %v2091, 7
        %v2093 = vsub.s32 4, %v2092
        %v2094 = vrot.slane %v1360, %v2093
        %v2095 = vlaneseq
        %v2096 = vshrl.u32 %v2095, 7
        %v2097 = vsub.s32 5, %v2096
        %v2098 = vrot.slane %v1360, %v2097
        %v2099 = vlaneseq
        %v2100 = vshrl.u32 %v2099, 7
        %v2101 = vsub.s32 6, %v2100
        %v2102 = vrot.slane %v1360, %v2101
        %v2103 = vlaneseq
        %v2104 = vshrl.u32 %v2103, 7
        %v2105 = vsub.s32 7, %v2104
        %v2106 = vrot.slane %v1360, %v2105
        %v2107 = vlaneseq
        %v2108 = vshrl.u32 %v2107, 7
        %v2109 = vsub.s32 0, %v2108
        %v2110 = vrot.slane %v1361, %v2109
        %v2111 = vlaneseq
        %v2112 = vshrl.u32 %v2111, 7
        %v2113 = vsub.s32 1, %v2112
        %v2114 = vrot.slane %v1361, %v2113
        %v2115 = vlaneseq
        %v2116 = vshrl.u32 %v2115, 7
        %v2117 = vsub.s32 2, %v2116
        %v2118 = vrot.slane %v1361, %v2117
        %v2119 = vlaneseq
        %v2120 = vshrl.u32 %v2119, 7
        %v2121 = vsub.s32 3, %v2120
        %v2122 = vrot.slane %v1361, %v2121
        %v2123 = vlaneseq
        %v2124 = vshrl.u32 %v2123, 7
        %v2125 = vsub.s32 4, %v2124
        %v2126 = vrot.slane %v1361, %v2125
        %v2127 = vlaneseq
        %v2128 = vshrl.u32 %v2127, 7
        %v2129 = vsub.s32 5, %v2128
        %v2130 = vrot.slane %v1361, %v2129
        %v2131 = vlaneseq
        %v2132 = vshrl.u32 %v2131, 7
        %v2133 = vsub.s32 6, %v2132
        %v2134 = vrot.slane %v1361, %v2133
        %v2135 = vlaneseq
        %v2136 = vshrl.u32 %v2135, 7
        %v2137 = vsub.s32 7, %v2136
        %v2138 = vrot.slane %v1361, %v2137
        %v2139 = vlaneseq
        %v2140 = vshrl.u32 %v2139, 7
        %v2141 = vsub.s32 0, %v2140
        %v2142 = vrot.slane %v1362, %v2141
        %v2143 = vlaneseq
        %v2144 = vshrl.u32 %v2143, 7
        %v2145 = vsub.s32 1, %v2144
        %v2146 = vrot.slane %v1362, %v2145
        %v2147 = vlaneseq
        %v2148 = vshrl.u32 %v2147, 7
        %v2149 = vsub.s32 2, %v2148
        %v2150 = vrot.slane %v1362, %v2149
        %v2151 = vlaneseq
        %v2152 = vshrl.u32 %v2151, 7
        %v2153 = vsub.s32 3, %v2152
        %v2154 = vrot.slane %v1362, %v2153
        %v2155 = vlaneseq
        %v2156 = vshrl.u32 %v2155, 7
        %v2157 = vsub.s32 4, %v2156
        %v2158 = vrot.slane %v1362, %v2157
        %v2159 = vlaneseq
        %v2160 = vshrl.u32 %v2159, 7
        %v2161 = vsub.s32 5, %v2160
        %v2162 = vrot.slane %v1362, %v2161
        %v2163 = vlaneseq
        %v2164 = vshrl.u32 %v2163, 7
        %v2165 = vsub.s32 6, %v2164
        %v2166 = vrot.slane %v1362, %v2165
        %v2167 = vlaneseq
        %v2168 = vshrl.u32 %v2167, 7
        %v2169 = vsub.s32 7, %v2168
        %v2170 = vrot.slane %v1362, %v2169
        %v2171 = vlaneseq
        %v2172 = vshrl.u32 %v2171, 7
        %v2173 = vsub.s32 0, %v2172
        %v2174 = vrot.slane %v1363, %v2173
        %v2175 = vlaneseq
        %v2176 = vshrl.u32 %v2175, 7
        %v2177 = vsub.s32 1, %v2176
        %v2178 = vrot.slane %v1363, %v2177
        %v2179 = vlaneseq
        %v2180 = vshrl.u32 %v2179, 7
        %v2181 = vsub.s32 2, %v2180
        %v2182 = vrot.slane %v1363, %v2181
        %v2183 = vlaneseq
        %v2184 = vshrl.u32 %v2183, 7
        %v2185 = vsub.s32 3, %v2184
        %v2186 = vrot.slane %v1363, %v2185
        %v2187 = vlaneseq
        %v2188 = vshrl.u32 %v2187, 7
        %v2189 = vsub.s32 4, %v2188
        %v2190 = vrot.slane %v1363, %v2189
        %v2191 = vlaneseq
        %v2192 = vshrl.u32 %v2191, 7
        %v2193 = vsub.s32 5, %v2192
        %v2194 = vrot.slane %v1363, %v2193
        %v2195 = vlaneseq
        %v2196 = vshrl.u32 %v2195, 7
        %v2197 = vsub.s32 6, %v2196
        %v2198 = vrot.slane %v1363, %v2197
        %v2199 = vlaneseq
        %v2200 = vshrl.u32 %v2199, 7
        %v2201 = vsub.s32 7, %v2200
        %v2202 = vrot.slane %v1363, %v2201
        %v2203 = vlaneseq
        %v2204 = vshrl.u32 %v2203, 7
        %v2205 = vsub.s32 0, %v2204
        %v2206 = vrot.slane %v1364, %v2205
        %v2207 = vlaneseq
        %v2208 = vshrl.u32 %v2207, 7
        %v2209 = vsub.s32 1, %v2208
        %v2210 = vrot.slane %v1364, %v2209
        %v2211 = vlaneseq
        %v2212 = vshrl.u32 %v2211, 7
        %v2213 = vsub.s32 2, %v2212
        %v2214 = vrot.slane %v1364, %v2213
        %v2215 = vlaneseq
        %v2216 = vshrl.u32 %v2215, 7
        %v2217 = vsub.s32 3, %v2216
        %v2218 = vrot.slane %v1364, %v2217
        %v2219 = vlaneseq
        %v2220 = vshrl.u32 %v2219, 7
        %v2221 = vsub.s32 4, %v2220
        %v2222 = vrot.slane %v1364, %v2221
        %v2223 = vlaneseq
        %v2224 = vshrl.u32 %v2223, 7
        %v2225 = vsub.s32 5, %v2224
        %v2226 = vrot.slane %v1364, %v2225
        %v2227 = vlaneseq
        %v2228 = vshrl.u32 %v2227, 7
        %v2229 = vsub.s32 6, %v2228
        %v2230 = vrot.slane %v1364, %v2229
        %v2231 = vlaneseq
        %v2232 = vshrl.u32 %v2231, 7
        %v2233 = vsub.s32 7, %v2232
        %v2234 = vrot.slane %v1364, %v2233
        %v2235 = vlaneseq
        %v2236 = vshrl.u32 %v2235, 7
        %v2237 = vsub.s32 0, %v2236
        %v2238 = vrot.slane %v1365, %v2237
        %v2239 = vlaneseq
        %v2240 = vshrl.u32 %v2239, 7
        %v2241 = vsub.s32 1, %v2240
        %v2242 = vrot.slane %v1365, %v2241
        %v2243 = vlaneseq
        %v2244 = vshrl.u32 %v2243, 7
        %v2245 = vsub.s32 2, %v2244
        %v2246 = vrot.slane %v1365, %v2245
        %v2247 = vlaneseq
        %v2248 = vshrl.u32 %v2247, 7
        %v2249 = vsub.s32 3, %v2248
        %v2250 = vrot.slane %v1365, %v2249
        %v2251 = vlaneseq
        %v2252 = vshrl.u32 %v2251, 7
        %v2253 = vsub.s32 4, %v2252
        %v2254 = vrot.slane %v1365, %v2253
        %v2255 = vlaneseq
        %v2256 = vshrl.u32 %v2255, 7
        %v2257 = vsub.s32 5, %v2256
        %v2258 = vrot.slane %v1365, %v2257
        %v2259 = vlaneseq
        %v2260 = vshrl.u32 %v2259, 7
        %v2261 = vsub.s32 6, %v2260
        %v2262 = vrot.slane %v1365, %v2261
        %v2263 = vlaneseq
        %v2264 = vshrl.u32 %v2263, 7
        %v2265 = vsub.s32 7, %v2264
        %v2266 = vrot.slane %v1365, %v2265
        %v2267 = vlaneseq
        %v2268 = vshrl.u32 %v2267, 7
        %v2269 = vsub.s32 0, %v2268
        %v2270 = vrot.slane %v1366, %v2269
        %v2271 = vlaneseq
        %v2272 = vshrl.u32 %v2271, 7
        %v2273 = vsub.s32 1, %v2272
        %v2274 = vrot.slane %v1366, %v2273
        %v2275 = vlaneseq
        %v2276 = vshrl.u32 %v2275, 7
        %v2277 = vsub.s32 2, %v2276
        %v2278 = vrot.slane %v1366, %v2277
        %v2279 = vlaneseq
        %v2280 = vshrl.u32 %v2279, 7
        %v2281 = vsub.s32 3, %v2280
        %v2282 = vrot.slane %v1366, %v2281
        %v2283 = vlaneseq
        %v2284 = vshrl.u32 %v2283, 7
        %v2285 = vsub.s32 4, %v2284
        %v2286 = vrot.slane %v1366, %v2285
        %v2287 = vlaneseq
        %v2288 = vshrl.u32 %v2287, 7
        %v2289 = vsub.s32 5, %v2288
        %v2290 = vrot.slane %v1366, %v2289
        %v2291 = vlaneseq
        %v2292 = vshrl.u32 %v2291, 7
        %v2293 = vsub.s32 6, %v2292
        %v2294 = vrot.slane %v1366, %v2293
        %v2295 = vlaneseq
        %v2296 = vshrl.u32 %v2295, 7
        %v2297 = vsub.s32 7, %v2296
        %v2298 = vrot.slane %v1366, %v2297
        %v2299 = vlaneseq
        %v2300 = vshrl.u32 %v2299, 7
        %v2301 = vsub.s32 0, %v2300
        %v2302 = vrot.slane %v1367, %v2301
        %v2303 = vlaneseq
        %v2304 = vshrl.u32 %v2303, 7
        %v2305 = vsub.s32 1, %v2304
        %v2306 = vrot.slane %v1367, %v2305
        %v2307 = vlaneseq
        %v2308 = vshrl.u32 %v2307, 7
        %v2309 = vsub.s32 2, %v2308
        %v2310 = vrot.slane %v1367, %v2309
        %v2311 = vlaneseq
        %v2312 = vshrl.u32 %v2311, 7
        %v2313 = vsub.s32 3, %v2312
        %v2314 = vrot.slane %v1367, %v2313
        %v2315 = vlaneseq
        %v2316 = vshrl.u32 %v2315, 7
        %v2317 = vsub.s32 4, %v2316
        %v2318 = vrot.slane %v1367, %v2317
        %v2319 = vlaneseq
        %v2320 = vshrl.u32 %v2319, 7
        %v2321 = vsub.s32 5, %v2320
        %v2322 = vrot.slane %v1367, %v2321
        %v2323 = vlaneseq
        %v2324 = vshrl.u32 %v2323, 7
        %v2325 = vsub.s32 6, %v2324
        %v2326 = vrot.slane %v1367, %v2325
        %v2327 = vlaneseq
        %v2328 = vshrl.u32 %v2327, 7
        %v2329 = vsub.s32 7, %v2328
        %v2330 = vrot.slane %v1367, %v2329
        %v2331 = vlaneseq
        %v2332 = vshrl.u32 %v2331, 7
        %v2333 = vsub.s32 0, %v2332
        %v2334 = vrot.slane %v1368, %v2333
        %v2335 = vlaneseq
        %v2336 = vshrl.u32 %v2335, 7
        %v2337 = vsub.s32 1, %v2336
        %v2338 = vrot.slane %v1368, %v2337
        %v2339 = vlaneseq
        %v2340 = vshrl.u32 %v2339, 7
        %v2341 = vsub.s32 2, %v2340
        %v2342 = vrot.slane %v1368, %v2341
        %v2343 = vlaneseq
        %v2344 = vshrl.u32 %v2343, 7
        %v2345 = vsub.s32 3, %v2344
        %v2346 = vrot.slane %v1368, %v2345
        %v2347 = vlaneseq
        %v2348 = vshrl.u32 %v2347, 7
        %v2349 = vsub.s32 4, %v2348
        %v2350 = vrot.slane %v1368, %v2349
        %v2351 = vlaneseq
        %v2352 = vshrl.u32 %v2351, 7
        %v2353 = vsub.s32 5, %v2352
        %v2354 = vrot.slane %v1368, %v2353
        %v2355 = vlaneseq
        %v2356 = vshrl.u32 %v2355, 7
        %v2357 = vsub.s32 6, %v2356
        %v2358 = vrot.slane %v1368, %v2357
        %v2359 = vlaneseq
        %v2360 = vshrl.u32 %v2359, 7
        %v2361 = vsub.s32 7, %v2360
        %v2362 = vrot.slane %v1368, %v2361
        %v2363 = vlaneseq
        %v2364 = vshrl.u32 %v2363, 7
        %v2365 = vsub.s32 0, %v2364
        %v2366 = vrot.slane %v1369, %v2365
        %v2367 = vlaneseq
        %v2368 = vshrl.u32 %v2367, 7
        %v2369 = vsub.s32 1, %v2368
        %v2370 = vrot.slane %v1369, %v2369
        %v2371 = vlaneseq
        %v2372 = vshrl.u32 %v2371, 7
        %v2373 = vsub.s32 2, %v2372
        %v2374 = vrot.slane %v1369, %v2373
        %v2375 = vlaneseq
        %v2376 = vshrl.u32 %v2375, 7
        %v2377 = vsub.s32 3, %v2376
        %v2378 = vrot.slane %v1369, %v2377
        %v2379 = vlaneseq
        %v2380 = vshrl.u32 %v2379, 7
        %v2381 = vsub.s32 4, %v2380
        %v2382 = vrot.slane %v1369, %v2381
        %v2383 = vlaneseq
        %v2384 = vshrl.u32 %v2383, 7
        %v2385 = vsub.s32 5, %v2384
        %v2386 = vrot.slane %v1369, %v2385
        %v2387 = vlaneseq
        %v2388 = vshrl.u32 %v2387, 7
        %v2389 = vsub.s32 6, %v2388
        %v2390 = vrot.slane %v1369, %v2389
        %v2391 = vlaneseq
        %v2392 = vshrl.u32 %v2391, 7
        %v2393 = vsub.s32 7, %v2392
        %v2394 = vrot.slane %v1369, %v2393
        %v2395 = vlaneseq
        %v2396 = vshrl.u32 %v2395, 7
        %v2397 = vsub.s32 0, %v2396
        %v2398 = vrot.slane %v1370, %v2397
        %v2399 = vlaneseq
        %v2400 = vshrl.u32 %v2399, 7
        %v2401 = vsub.s32 1, %v2400
        %v2402 = vrot.slane %v1370, %v2401
        %v2403 = vlaneseq
        %v2404 = vshrl.u32 %v2403, 7
        %v2405 = vsub.s32 2, %v2404
        %v2406 = vrot.slane %v1370, %v2405
        %v2407 = vlaneseq
        %v2408 = vshrl.u32 %v2407, 7
        %v2409 = vsub.s32 3, %v2408
        %v2410 = vrot.slane %v1370, %v2409
        %v2411 = vlaneseq
        %v2412 = vshrl.u32 %v2411, 7
        %v2413 = vsub.s32 4, %v2412
        %v2414 = vrot.slane %v1370, %v2413
        %v2415 = vlaneseq
        %v2416 = vshrl.u32 %v2415, 7
        %v2417 = vsub.s32 5, %v2416
        %v2418 = vrot.slane %v1370, %v2417
        %v2419 = vlaneseq
        %v2420 = vshrl.u32 %v2419, 7
        %v2421 = vsub.s32 6, %v2420
        %v2422 = vrot.slane %v1370, %v2421
        %v2423 = vlaneseq
        %v2424 = vshrl.u32 %v2423, 7
        %v2425 = vsub.s32 7, %v2424
        %v2426 = vrot.slane %v1370, %v2425
        %v2427 = vcombine.low %v1406, %v1410
        %v2428 = vcombine.low %v1414, %v1418
        %v2429 = vcombine.low %v1422, %v1426
        %v2430 = vcombine.low %v1430, %v1434
        %v2432 = vunpack.c.l.s4 1966171168
        %v2433 = vunpack.c.0.s8 %v2432
        %v2434 = vlaneseq
        %v2435 = vshrl.u32 %v2434, 7
        %v2436 = vsub.s32 %v2433, %v2435
        %v2437 = vrot.slane %v2427, %v2436
        %v2439 = vunpack.c.l.s4 1966171168
        %v2440 = vunpack.c.0.s8 %v2439
        %v2441 = vlaneseq
        %v2442 = vshrl.u32 %v2441, 7
        %v2443 = vsub.s32 %v2440, %v2442
        %v2444 = vrot.slane %v2428, %v2443
        %v2446 = vunpack.c.l.s4 1966171168
        %v2447 = vunpack.c.0.s8 %v2446
        %v2448 = vlaneseq
        %v2449 = vshrl.u32 %v2448, 7
        %v2450 = vsub.s32 %v2447, %v2449
        %v2451 = vrot.slane %v2429, %v2450
        %v2453 = vunpack.c.l.s4 1966171168
        %v2454 = vunpack.c.0.s8 %v2453
        %v2455 = vlaneseq
        %v2456 = vshrl.u32 %v2455, 7
        %v2457 = vsub.s32 %v2454, %v2456
        %v2458 = vrot.slane %v2430, %v2457
        %v2459 = vcombine.low %v2437, %v2444
        %v2460 = vcombine.low %v2451, %v2458
        %v2462 = vunpack.c.l.s4 1966171168
        %v2463 = vunpack.c.0.s8 %v2462
        %v2464 = vlaneseq
        %v2465 = vshrl.u32 %v2464, 7
        %v2466 = vsub.s32 %v2463, %v2465
        %v2467 = vrot.slane %v2459, %v2466
        %v2469 = vunpack.c.l.s4 1966171168
        %v2470 = vunpack.c.0.s8 %v2469
        %v2471 = vlaneseq
        %v2472 = vshrl.u32 %v2471, 7
        %v2473 = vsub.s32 %v2470, %v2472
        %v2474 = vrot.slane %v2460, %v2473
        %v2475 = vcombine.low %v2467, %v2474
        %v2476 = vcombine.low %v1438, %v1442
        %v2477 = vcombine.low %v1446, %v1450
        %v2478 = vcombine.low %v1454, %v1458
        %v2479 = vcombine.low %v1462, %v1466
        %v2481 = vunpack.c.l.s4 1966171168
        %v2482 = vunpack.c.0.s8 %v2481
        %v2483 = vlaneseq
        %v2484 = vshrl.u32 %v2483, 7
        %v2485 = vsub.s32 %v2482, %v2484
        %v2486 = vrot.slane %v2476, %v2485
        %v2488 = vunpack.c.l.s4 1966171168
        %v2489 = vunpack.c.0.s8 %v2488
        %v2490 = vlaneseq
        %v2491 = vshrl.u32 %v2490, 7
        %v2492 = vsub.s32 %v2489, %v2491
        %v2493 = vrot.slane %v2477, %v2492
        %v2495 = vunpack.c.l.s4 1966171168
        %v2496 = vunpack.c.0.s8 %v2495
        %v2497 = vlaneseq
        %v2498 = vshrl.u32 %v2497, 7
        %v2499 = vsub.s32 %v2496, %v2498
        %v2500 = vrot.slane %v2478, %v2499
        %v2502 = vunpack.c.l.s4 1966171168
        %v2503 = vunpack.c.0.s8 %v2502
        %v2504 = vlaneseq
        %v2505 = vshrl.u32 %v2504, 7
        %v2506 = vsub.s32 %v2503, %v2505
        %v2507 = vrot.slane %v2479, %v2506
        %v2508 = vcombine.low %v2486, %v2493
        %v2509 = vcombine.low %v2500, %v2507
        %v2511 = vunpack.c.l.s4 1966171168
        %v2512 = vunpack.c.0.s8 %v2511
        %v2513 = vlaneseq
        %v2514 = vshrl.u32 %v2513, 7
        %v2515 = vsub.s32 %v2512, %v2514
        %v2516 = vrot.slane %v2508, %v2515
        %v2518 = vunpack.c.l.s4 1966171168
        %v2519 = vunpack.c.0.s8 %v2518
        %v2520 = vlaneseq
        %v2521 = vshrl.u32 %v2520, 7
        %v2522 = vsub.s32 %v2519, %v2521
        %v2523 = vrot.slane %v2509, %v2522
        %v2524 = vcombine.low %v2516, %v2523
        %v2525 = vcombine.low %v1470, %v1474
        %v2526 = vcombine.low %v1478, %v1482
        %v2527 = vcombine.low %v1486, %v1490
        %v2528 = vcombine.low %v1494, %v1498
        %v2530 = vunpack.c.l.s4 1966171168
        %v2531 = vunpack.c.0.s8 %v2530
        %v2532 = vlaneseq
        %v2533 = vshrl.u32 %v2532, 7
        %v2534 = vsub.s32 %v2531, %v2533
        %v2535 = vrot.slane %v2525, %v2534
        %v2537 = vunpack.c.l.s4 1966171168
        %v2538 = vunpack.c.0.s8 %v2537
        %v2539 = vlaneseq
        %v2540 = vshrl.u32 %v2539, 7
        %v2541 = vsub.s32 %v2538, %v2540
        %v2542 = vrot.slane %v2526, %v2541
        %v2544 = vunpack.c.l.s4 1966171168
        %v2545 = vunpack.c.0.s8 %v2544
        %v2546 = vlaneseq
        %v2547 = vshrl.u32 %v2546, 7
        %v2548 = vsub.s32 %v2545, %v2547
        %v2549 = vrot.slane %v2527, %v2548
        %v2551 = vunpack.c.l.s4 1966171168
        %v2552 = vunpack.c.0.s8 %v2551
        %v2553 = vlaneseq
        %v2554 = vshrl.u32 %v2553, 7
        %v2555 = vsub.s32 %v2552, %v2554
        %v2556 = vrot.slane %v2528, %v2555
        %v2557 = vcombine.low %v2535, %v2542
        %v2558 = vcombine.low %v2549, %v2556
        %v2560 = vunpack.c.l.s4 1966171168
        %v2561 = vunpack.c.0.s8 %v2560
        %v2562 = vlaneseq
        %v2563 = vshrl.u32 %v2562, 7
        %v2564 = vsub.s32 %v2561, %v2563
        %v2565 = vrot.slane %v2557, %v2564
        %v2567 = vunpack.c.l.s4 1966171168
        %v2568 = vunpack.c.0.s8 %v2567
        %v2569 = vlaneseq
        %v2570 = vshrl.u32 %v2569, 7
        %v2571 = vsub.s32 %v2568, %v2570
        %v2572 = vrot.slane %v2558, %v2571
        %v2573 = vcombine.low %v2565, %v2572
        %v2574 = vcombine.low %v1502, %v1506
        %v2575 = vcombine.low %v1510, %v1514
        %v2576 = vcombine.low %v1518, %v1522
        %v2577 = vcombine.low %v1526, %v1530
        %v2579 = vunpack.c.l.s4 1966171168
        %v2580 = vunpack.c.0.s8 %v2579
        %v2581 = vlaneseq
        %v2582 = vshrl.u32 %v2581, 7
        %v2583 = vsub.s32 %v2580, %v2582
        %v2584 = vrot.slane %v2574, %v2583
        %v2586 = vunpack.c.l.s4 1966171168
        %v2587 = vunpack.c.0.s8 %v2586
        %v2588 = vlaneseq
        %v2589 = vshrl.u32 %v2588, 7
        %v2590 = vsub.s32 %v2587, %v2589
        %v2591 = vrot.slane %v2575, %v2590
        %v2593 = vunpack.c.l.s4 1966171168
        %v2594 = vunpack.c.0.s8 %v2593
        %v2595 = vlaneseq
        %v2596 = vshrl.u32 %v2595, 7
        %v2597 = vsub.s32 %v2594, %v2596
        %v2598 = vrot.slane %v2576, %v2597
        %v2600 = vunpack.c.l.s4 1966171168
        %v2601 = vunpack.c.0.s8 %v2600
        %v2602 = vlaneseq
        %v2603 = vshrl.u32 %v2602, 7
        %v2604 = vsub.s32 %v2601, %v2603
        %v2605 = vrot.slane %v2577, %v2604
        %v2606 = vcombine.low %v2584, %v2591
        %v2607 = vcombine.low %v2598, %v2605
        %v2609 = vunpack.c.l.s4 1966171168
        %v2610 = vunpack.c.0.s8 %v2609
        %v2611 = vlaneseq
        %v2612 = vshrl.u32 %v2611, 7
        %v2613 = vsub.s32 %v2610, %v2612
        %v2614 = vrot.slane %v2606, %v2613
        %v2616 = vunpack.c.l.s4 1966171168
        %v2617 = vunpack.c.0.s8 %v2616
        %v2618 = vlaneseq
        %v2619 = vshrl.u32 %v2618, 7
        %v2620 = vsub.s32 %v2617, %v2619
        %v2621 = vrot.slane %v2607, %v2620
        %v2622 = vcombine.low %v2614, %v2621
        %v2623 = vcombine.low %v1534, %v1538
        %v2624 = vcombine.low %v1542, %v1546
        %v2625 = vcombine.low %v1550, %v1554
        %v2626 = vcombine.low %v1558, %v1562
        %v2628 = vunpack.c.l.s4 1966171168
        %v2629 = vunpack.c.0.s8 %v2628
        %v2630 = vlaneseq
        %v2631 = vshrl.u32 %v2630, 7
        %v2632 = vsub.s32 %v2629, %v2631
        %v2633 = vrot.slane %v2623, %v2632
        %v2635 = vunpack.c.l.s4 1966171168
        %v2636 = vunpack.c.0.s8 %v2635
        %v2637 = vlaneseq
        %v2638 = vshrl.u32 %v2637, 7
        %v2639 = vsub.s32 %v2636, %v2638
        %v2640 = vrot.slane %v2624, %v2639
        %v2642 = vunpack.c.l.s4 1966171168
        %v2643 = vunpack.c.0.s8 %v2642
        %v2644 = vlaneseq
        %v2645 = vshrl.u32 %v2644, 7
        %v2646 = vsub.s32 %v2643, %v2645
        %v2647 = vrot.slane %v2625, %v2646
        %v2649 = vunpack.c.l.s4 1966171168
        %v2650 = vunpack.c.0.s8 %v2649
        %v2651 = vlaneseq
        %v2652 = vshrl.u32 %v2651, 7
        %v2653 = vsub.s32 %v2650, %v2652
        %v2654 = vrot.slane %v2626, %v2653
        %v2655 = vcombine.low %v2633, %v2640
        %v2656 = vcombine.low %v2647, %v2654
        %v2658 = vunpack.c.l.s4 1966171168
        %v2659 = vunpack.c.0.s8 %v2658
        %v2660 = vlaneseq
        %v2661 = vshrl.u32 %v2660, 7
        %v2662 = vsub.s32 %v2659, %v2661
        %v2663 = vrot.slane %v2655, %v2662
        %v2665 = vunpack.c.l.s4 1966171168
        %v2666 = vunpack.c.0.s8 %v2665
        %v2667 = vlaneseq
        %v2668 = vshrl.u32 %v2667, 7
        %v2669 = vsub.s32 %v2666, %v2668
        %v2670 = vrot.slane %v2656, %v2669
        %v2671 = vcombine.low %v2663, %v2670
        %v2672 = vcombine.low %v1566, %v1570
        %v2673 = vcombine.low %v1574, %v1578
        %v2674 = vcombine.low %v1582, %v1586
        %v2675 = vcombine.low %v1590, %v1594
        %v2677 = vunpack.c.l.s4 1966171168
        %v2678 = vunpack.c.0.s8 %v2677
        %v2679 = vlaneseq
        %v2680 = vshrl.u32 %v2679, 7
        %v2681 = vsub.s32 %v2678, %v2680
        %v2682 = vrot.slane %v2672, %v2681
        %v2684 = vunpack.c.l.s4 1966171168
        %v2685 = vunpack.c.0.s8 %v2684
        %v2686 = vlaneseq
        %v2687 = vshrl.u32 %v2686, 7
        %v2688 = vsub.s32 %v2685, %v2687
        %v2689 = vrot.slane %v2673, %v2688
        %v2691 = vunpack.c.l.s4 1966171168
        %v2692 = vunpack.c.0.s8 %v2691
        %v2693 = vlaneseq
        %v2694 = vshrl.u32 %v2693, 7
        %v2695 = vsub.s32 %v2692, %v2694
        %v2696 = vrot.slane %v2674, %v2695
        %v2698 = vunpack.c.l.s4 1966171168
        %v2699 = vunpack.c.0.s8 %v2698
        %v2700 = vlaneseq
        %v2701 = vshrl.u32 %v2700, 7
        %v2702 = vsub.s32 %v2699, %v2701
        %v2703 = vrot.slane %v2675, %v2702
        %v2704 = vcombine.low %v2682, %v2689
        %v2705 = vcombine.low %v2696, %v2703
        %v2707 = vunpack.c.l.s4 1966171168
        %v2708 = vunpack.c.0.s8 %v2707
        %v2709 = vlaneseq
        %v2710 = vshrl.u32 %v2709, 7
        %v2711 = vsub.s32 %v2708, %v2710
        %v2712 = vrot.slane %v2704, %v2711
        %v2714 = vunpack.c.l.s4 1966171168
        %v2715 = vunpack.c.0.s8 %v2714
        %v2716 = vlaneseq
        %v2717 = vshrl.u32 %v2716, 7
        %v2718 = vsub.s32 %v2715, %v2717
        %v2719 = vrot.slane %v2705, %v2718
        %v2720 = vcombine.low %v2712, %v2719
        %v2721 = vcombine.low %v1598, %v1602
        %v2722 = vcombine.low %v1606, %v1610
        %v2723 = vcombine.low %v1614, %v1618
        %v2724 = vcombine.low %v1622, %v1626
        %v2726 = vunpack.c.l.s4 1966171168
        %v2727 = vunpack.c.0.s8 %v2726
        %v2728 = vlaneseq
        %v2729 = vshrl.u32 %v2728, 7
        %v2730 = vsub.s32 %v2727, %v2729
        %v2731 = vrot.slane %v2721, %v2730
        %v2733 = vunpack.c.l.s4 1966171168
        %v2734 = vunpack.c.0.s8 %v2733
        %v2735 = vlaneseq
        %v2736 = vshrl.u32 %v2735, 7
        %v2737 = vsub.s32 %v2734, %v2736
        %v2738 = vrot.slane %v2722, %v2737
        %v2740 = vunpack.c.l.s4 1966171168
        %v2741 = vunpack.c.0.s8 %v2740
        %v2742 = vlaneseq
        %v2743 = vshrl.u32 %v2742, 7
        %v2744 = vsub.s32 %v2741, %v2743
        %v2745 = vrot.slane %v2723, %v2744
        %v2747 = vunpack.c.l.s4 1966171168
        %v2748 = vunpack.c.0.s8 %v2747
        %v2749 = vlaneseq
        %v2750 = vshrl.u32 %v2749, 7
        %v2751 = vsub.s32 %v2748, %v2750
        %v2752 = vrot.slane %v2724, %v2751
        %v2753 = vcombine.low %v2731, %v2738
        %v2754 = vcombine.low %v2745, %v2752
        %v2756 = vunpack.c.l.s4 1966171168
        %v2757 = vunpack.c.0.s8 %v2756
        %v2758 = vlaneseq
        %v2759 = vshrl.u32 %v2758, 7
        %v2760 = vsub.s32 %v2757, %v2759
        %v2761 = vrot.slane %v2753, %v2760
        %v2763 = vunpack.c.l.s4 1966171168
        %v2764 = vunpack.c.0.s8 %v2763
        %v2765 = vlaneseq
        %v2766 = vshrl.u32 %v2765, 7
        %v2767 = vsub.s32 %v2764, %v2766
        %v2768 = vrot.slane %v2754, %v2767
        %v2769 = vcombine.low %v2761, %v2768
        %v2770 = vcombine.low %v1630, %v1634
        %v2771 = vcombine.low %v1638, %v1642
        %v2772 = vcombine.low %v1646, %v1650
        %v2773 = vcombine.low %v1654, %v1658
        %v2775 = vunpack.c.l.s4 1966171168
        %v2776 = vunpack.c.0.s8 %v2775
        %v2777 = vlaneseq
        %v2778 = vshrl.u32 %v2777, 7
        %v2779 = vsub.s32 %v2776, %v2778
        %v2780 = vrot.slane %v2770, %v2779
        %v2782 = vunpack.c.l.s4 1966171168
        %v2783 = vunpack.c.0.s8 %v2782
        %v2784 = vlaneseq
        %v2785 = vshrl.u32 %v2784, 7
        %v2786 = vsub.s32 %v2783, %v2785
        %v2787 = vrot.slane %v2771, %v2786
        %v2789 = vunpack.c.l.s4 1966171168
        %v2790 = vunpack.c.0.s8 %v2789
        %v2791 = vlaneseq
        %v2792 = vshrl.u32 %v2791, 7
        %v2793 = vsub.s32 %v2790, %v2792
        %v2794 = vrot.slane %v2772, %v2793
        %v2796 = vunpack.c.l.s4 1966171168
        %v2797 = vunpack.c.0.s8 %v2796
        %v2798 = vlaneseq
        %v2799 = vshrl.u32 %v2798, 7
        %v2800 = vsub.s32 %v2797, %v2799
        %v2801 = vrot.slane %v2773, %v2800
        %v2802 = vcombine.low %v2780, %v2787
        %v2803 = vcombine.low %v2794, %v2801
        %v2805 = vunpack.c.l.s4 1966171168
        %v2806 = vunpack.c.0.s8 %v2805
        %v2807 = vlaneseq
        %v2808 = vshrl.u32 %v2807, 7
        %v2809 = vsub.s32 %v2806, %v2808
        %v2810 = vrot.slane %v2802, %v2809
        %v2812 = vunpack.c.l.s4 1966171168
        %v2813 = vunpack.c.0.s8 %v2812
        %v2814 = vlaneseq
        %v2815 = vshrl.u32 %v2814, 7
        %v2816 = vsub.s32 %v2813, %v2815
        %v2817 = vrot.slane %v2803, %v2816
        %v2818 = vcombine.low %v2810, %v2817
        %v2819 = vcombine.low %v1662, %v1666
        %v2820 = vcombine.low %v1670, %v1674
        %v2821 = vcombine.low %v1678, %v1682
        %v2822 = vcombine.low %v1686, %v1690
        %v2824 = vunpack.c.l.s4 1966171168
        %v2825 = vunpack.c.0.s8 %v2824
        %v2826 = vlaneseq
        %v2827 = vshrl.u32 %v2826, 7
        %v2828 = vsub.s32 %v2825, %v2827
        %v2829 = vrot.slane %v2819, %v2828
        %v2831 = vunpack.c.l.s4 1966171168
        %v2832 = vunpack.c.0.s8 %v2831
        %v2833 = vlaneseq
        %v2834 = vshrl.u32 %v2833, 7
        %v2835 = vsub.s32 %v2832, %v2834
        %v2836 = vrot.slane %v2820, %v2835
        %v2838 = vunpack.c.l.s4 1966171168
        %v2839 = vunpack.c.0.s8 %v2838
        %v2840 = vlaneseq
        %v2841 = vshrl.u32 %v2840, 7
        %v2842 = vsub.s32 %v2839, %v2841
        %v2843 = vrot.slane %v2821, %v2842
        %v2845 = vunpack.c.l.s4 1966171168
        %v2846 = vunpack.c.0.s8 %v2845
        %v2847 = vlaneseq
        %v2848 = vshrl.u32 %v2847, 7
        %v2849 = vsub.s32 %v2846, %v2848
        %v2850 = vrot.slane %v2822, %v2849
        %v2851 = vcombine.low %v2829, %v2836
        %v2852 = vcombine.low %v2843, %v2850
        %v2854 = vunpack.c.l.s4 1966171168
        %v2855 = vunpack.c.0.s8 %v2854
        %v2856 = vlaneseq
        %v2857 = vshrl.u32 %v2856, 7
        %v2858 = vsub.s32 %v2855, %v2857
        %v2859 = vrot.slane %v2851, %v2858
        %v2861 = vunpack.c.l.s4 1966171168
        %v2862 = vunpack.c.0.s8 %v2861
        %v2863 = vlaneseq
        %v2864 = vshrl.u32 %v2863, 7
        %v2865 = vsub.s32 %v2862, %v2864
        %v2866 = vrot.slane %v2852, %v2865
        %v2867 = vcombine.low %v2859, %v2866
        %v2868 = vcombine.low %v1694, %v1698
        %v2869 = vcombine.low %v1702, %v1706
        %v2870 = vcombine.low %v1710, %v1714
        %v2871 = vcombine.low %v1718, %v1722
        %v2873 = vunpack.c.l.s4 1966171168
        %v2874 = vunpack.c.0.s8 %v2873
        %v2875 = vlaneseq
        %v2876 = vshrl.u32 %v2875, 7
        %v2877 = vsub.s32 %v2874, %v2876
        %v2878 = vrot.slane %v2868, %v2877
        %v2880 = vunpack.c.l.s4 1966171168
        %v2881 = vunpack.c.0.s8 %v2880
        %v2882 = vlaneseq
        %v2883 = vshrl.u32 %v2882, 7
        %v2884 = vsub.s32 %v2881, %v2883
        %v2885 = vrot.slane %v2869, %v2884
        %v2887 = vunpack.c.l.s4 1966171168
        %v2888 = vunpack.c.0.s8 %v2887
        %v2889 = vlaneseq
        %v2890 = vshrl.u32 %v2889, 7
        %v2891 = vsub.s32 %v2888, %v2890
        %v2892 = vrot.slane %v2870, %v2891
        %v2894 = vunpack.c.l.s4 1966171168
        %v2895 = vunpack.c.0.s8 %v2894
        %v2896 = vlaneseq
        %v2897 = vshrl.u32 %v2896, 7
        %v2898 = vsub.s32 %v2895, %v2897
        %v2899 = vrot.slane %v2871, %v2898
        %v2900 = vcombine.low %v2878, %v2885
        %v2901 = vcombine.low %v2892, %v2899
        %v2903 = vunpack.c.l.s4 1966171168
        %v2904 = vunpack.c.0.s8 %v2903
        %v2905 = vlaneseq
        %v2906 = vshrl.u32 %v2905, 7
        %v2907 = vsub.s32 %v2904, %v2906
        %v2908 = vrot.slane %v2900, %v2907
        %v2910 = vunpack.c.l.s4 1966171168
        %v2911 = vunpack.c.0.s8 %v2910
        %v2912 = vlaneseq
        %v2913 = vshrl.u32 %v2912, 7
        %v2914 = vsub.s32 %v2911, %v2913
        %v2915 = vrot.slane %v2901, %v2914
        %v2916 = vcombine.low %v2908, %v2915
        %v2917 = vcombine.low %v1726, %v1730
        %v2918 = vcombine.low %v1734, %v1738
        %v2919 = vcombine.low %v1742, %v1746
        %v2920 = vcombine.low %v1750, %v1754
        %v2922 = vunpack.c.l.s4 1966171168
        %v2923 = vunpack.c.0.s8 %v2922
        %v2924 = vlaneseq
        %v2925 = vshrl.u32 %v2924, 7
        %v2926 = vsub.s32 %v2923, %v2925
        %v2927 = vrot.slane %v2917, %v2926
        %v2929 = vunpack.c.l.s4 1966171168
        %v2930 = vunpack.c.0.s8 %v2929
        %v2931 = vlaneseq
        %v2932 = vshrl.u32 %v2931, 7
        %v2933 = vsub.s32 %v2930, %v2932
        %v2934 = vrot.slane %v2918, %v2933
        %v2936 = vunpack.c.l.s4 1966171168
        %v2937 = vunpack.c.0.s8 %v2936
        %v2938 = vlaneseq
        %v2939 = vshrl.u32 %v2938, 7
        %v2940 = vsub.s32 %v2937, %v2939
        %v2941 = vrot.slane %v2919, %v2940
        %v2943 = vunpack.c.l.s4 1966171168
        %v2944 = vunpack.c.0.s8 %v2943
        %v2945 = vlaneseq
        %v2946 = vshrl.u32 %v2945, 7
        %v2947 = vsub.s32 %v2944, %v2946
        %v2948 = vrot.slane %v2920, %v2947
        %v2949 = vcombine.low %v2927, %v2934
        %v2950 = vcombine.low %v2941, %v2948
        %v2952 = vunpack.c.l.s4 1966171168
        %v2953 = vunpack.c.0.s8 %v2952
        %v2954 = vlaneseq
        %v2955 = vshrl.u32 %v2954, 7
        %v2956 = vsub.s32 %v2953, %v2955
        %v2957 = vrot.slane %v2949, %v2956
        %v2959 = vunpack.c.l.s4 1966171168
        %v2960 = vunpack.c.0.s8 %v2959
        %v2961 = vlaneseq
        %v2962 = vshrl.u32 %v2961, 7
        %v2963 = vsub.s32 %v2960, %v2962
        %v2964 = vrot.slane %v2950, %v2963
        %v2965 = vcombine.low %v2957, %v2964
        %v2966 = vcombine.low %v1758, %v1762
        %v2967 = vcombine.low %v1766, %v1770
        %v2968 = vcombine.low %v1774, %v1778
        %v2969 = vcombine.low %v1782, %v1786
        %v2971 = vunpack.c.l.s4 1966171168
        %v2972 = vunpack.c.0.s8 %v2971
        %v2973 = vlaneseq
        %v2974 = vshrl.u32 %v2973, 7
        %v2975 = vsub.s32 %v2972, %v2974
        %v2976 = vrot.slane %v2966, %v2975
        %v2978 = vunpack.c.l.s4 1966171168
        %v2979 = vunpack.c.0.s8 %v2978
        %v2980 = vlaneseq
        %v2981 = vshrl.u32 %v2980, 7
        %v2982 = vsub.s32 %v2979, %v2981
        %v2983 = vrot.slane %v2967, %v2982
        %v2985 = vunpack.c.l.s4 1966171168
        %v2986 = vunpack.c.0.s8 %v2985
        %v2987 = vlaneseq
        %v2988 = vshrl.u32 %v2987, 7
        %v2989 = vsub.s32 %v2986, %v2988
        %v2990 = vrot.slane %v2968, %v2989
        %v2992 = vunpack.c.l.s4 1966171168
        %v2993 = vunpack.c.0.s8 %v2992
        %v2994 = vlaneseq
        %v2995 = vshrl.u32 %v2994, 7
        %v2996 = vsub.s32 %v2993, %v2995
        %v2997 = vrot.slane %v2969, %v2996
        %v2998 = vcombine.low %v2976, %v2983
        %v2999 = vcombine.low %v2990, %v2997
        %v3001 = vunpack.c.l.s4 1966171168
        %v3002 = vunpack.c.0.s8 %v3001
        %v3003 = vlaneseq
        %v3004 = vshrl.u32 %v3003, 7
        %v3005 = vsub.s32 %v3002, %v3004
        %v3006 = vrot.slane %v2998, %v3005
        %v3008 = vunpack.c.l.s4 1966171168
        %v3009 = vunpack.c.0.s8 %v3008
        %v3010 = vlaneseq
        %v3011 = vshrl.u32 %v3010, 7
        %v3012 = vsub.s32 %v3009, %v3011
        %v3013 = vrot.slane %v2999, %v3012
        %v3014 = vcombine.low %v3006, %v3013
        %v3015 = vcombine.low %v1790, %v1794
        %v3016 = vcombine.low %v1798, %v1802
        %v3017 = vcombine.low %v1806, %v1810
        %v3018 = vcombine.low %v1814, %v1818
        %v3020 = vunpack.c.l.s4 1966171168
        %v3021 = vunpack.c.0.s8 %v3020
        %v3022 = vlaneseq
        %v3023 = vshrl.u32 %v3022, 7
        %v3024 = vsub.s32 %v3021, %v3023
        %v3025 = vrot.slane %v3015, %v3024
        %v3027 = vunpack.c.l.s4 1966171168
        %v3028 = vunpack.c.0.s8 %v3027
        %v3029 = vlaneseq
        %v3030 = vshrl.u32 %v3029, 7
        %v3031 = vsub.s32 %v3028, %v3030
        %v3032 = vrot.slane %v3016, %v3031
        %v3034 = vunpack.c.l.s4 1966171168
        %v3035 = vunpack.c.0.s8 %v3034
        %v3036 = vlaneseq
        %v3037 = vshrl.u32 %v3036, 7
        %v3038 = vsub.s32 %v3035, %v3037
        %v3039 = vrot.slane %v3017, %v3038
        %v3041 = vunpack.c.l.s4 1966171168
        %v3042 = vunpack.c.0.s8 %v3041
        %v3043 = vlaneseq
        %v3044 = vshrl.u32 %v3043, 7
        %v3045 = vsub.s32 %v3042, %v3044
        %v3046 = vrot.slane %v3018, %v3045
        %v3047 = vcombine.low %v3025, %v3032
        %v3048 = vcombine.low %v3039, %v3046
        %v3050 = vunpack.c.l.s4 1966171168
        %v3051 = vunpack.c.0.s8 %v3050
        %v3052 = vlaneseq
        %v3053 = vshrl.u32 %v3052, 7
        %v3054 = vsub.s32 %v3051, %v3053
        %v3055 = vrot.slane %v3047, %v3054
        %v3057 = vunpack.c.l.s4 1966171168
        %v3058 = vunpack.c.0.s8 %v3057
        %v3059 = vlaneseq
        %v3060 = vshrl.u32 %v3059, 7
        %v3061 = vsub.s32 %v3058, %v3060
        %v3062 = vrot.slane %v3048, %v3061
        %v3063 = vcombine.low %v3055, %v3062
        %v3064 = vcombine.low %v1822, %v1826
        %v3065 = vcombine.low %v1830, %v1834
        %v3066 = vcombine.low %v1838, %v1842
        %v3067 = vcombine.low %v1846, %v1850
        %v3069 = vunpack.c.l.s4 1966171168
        %v3070 = vunpack.c.0.s8 %v3069
        %v3071 = vlaneseq
        %v3072 = vshrl.u32 %v3071, 7
        %v3073 = vsub.s32 %v3070, %v3072
        %v3074 = vrot.slane %v3064, %v3073
        %v3076 = vunpack.c.l.s4 1966171168
        %v3077 = vunpack.c.0.s8 %v3076
        %v3078 = vlaneseq
        %v3079 = vshrl.u32 %v3078, 7
        %v3080 = vsub.s32 %v3077, %v3079
        %v3081 = vrot.slane %v3065, %v3080
        %v3083 = vunpack.c.l.s4 1966171168
        %v3084 = vunpack.c.0.s8 %v3083
        %v3085 = vlaneseq
        %v3086 = vshrl.u32 %v3085, 7
        %v3087 = vsub.s32 %v3084, %v3086
        %v3088 = vrot.slane %v3066, %v3087
        %v3090 = vunpack.c.l.s4 1966171168
        %v3091 = vunpack.c.0.s8 %v3090
        %v3092 = vlaneseq
        %v3093 = vshrl.u32 %v3092, 7
        %v3094 = vsub.s32 %v3091, %v3093
        %v3095 = vrot.slane %v3067, %v3094
        %v3096 = vcombine.low %v3074, %v3081
        %v3097 = vcombine.low %v3088, %v3095
        %v3099 = vunpack.c.l.s4 1966171168
        %v3100 = vunpack.c.0.s8 %v3099
        %v3101 = vlaneseq
        %v3102 = vshrl.u32 %v3101, 7
        %v3103 = vsub.s32 %v3100, %v3102
        %v3104 = vrot.slane %v3096, %v3103
        %v3106 = vunpack.c.l.s4 1966171168
        %v3107 = vunpack.c.0.s8 %v3106
        %v3108 = vlaneseq
        %v3109 = vshrl.u32 %v3108, 7
        %v3110 = vsub.s32 %v3107, %v3109
        %v3111 = vrot.slane %v3097, %v3110
        %v3112 = vcombine.low %v3104, %v3111
        %v3113 = vcombine.low %v1854, %v1858
        %v3114 = vcombine.low %v1862, %v1866
        %v3115 = vcombine.low %v1870, %v1874
        %v3116 = vcombine.low %v1878, %v1882
        %v3118 = vunpack.c.l.s4 1966171168
        %v3119 = vunpack.c.0.s8 %v3118
        %v3120 = vlaneseq
        %v3121 = vshrl.u32 %v3120, 7
        %v3122 = vsub.s32 %v3119, %v3121
        %v3123 = vrot.slane %v3113, %v3122
        %v3125 = vunpack.c.l.s4 1966171168
        %v3126 = vunpack.c.0.s8 %v3125
        %v3127 = vlaneseq
        %v3128 = vshrl.u32 %v3127, 7
        %v3129 = vsub.s32 %v3126, %v3128
        %v3130 = vrot.slane %v3114, %v3129
        %v3132 = vunpack.c.l.s4 1966171168
        %v3133 = vunpack.c.0.s8 %v3132
        %v3134 = vlaneseq
        %v3135 = vshrl.u32 %v3134, 7
        %v3136 = vsub.s32 %v3133, %v3135
        %v3137 = vrot.slane %v3115, %v3136
        %v3139 = vunpack.c.l.s4 1966171168
        %v3140 = vunpack.c.0.s8 %v3139
        %v3141 = vlaneseq
        %v3142 = vshrl.u32 %v3141, 7
        %v3143 = vsub.s32 %v3140, %v3142
        %v3144 = vrot.slane %v3116, %v3143
        %v3145 = vcombine.low %v3123, %v3130
        %v3146 = vcombine.low %v3137, %v3144
        %v3148 = vunpack.c.l.s4 1966171168
        %v3149 = vunpack.c.0.s8 %v3148
        %v3150 = vlaneseq
        %v3151 = vshrl.u32 %v3150, 7
        %v3152 = vsub.s32 %v3149, %v3151
        %v3153 = vrot.slane %v3145, %v3152
        %v3155 = vunpack.c.l.s4 1966171168
        %v3156 = vunpack.c.0.s8 %v3155
        %v3157 = vlaneseq
        %v3158 = vshrl.u32 %v3157, 7
        %v3159 = vsub.s32 %v3156, %v3158
        %v3160 = vrot.slane %v3146, %v3159
        %v3161 = vcombine.low %v3153, %v3160
        %v3162 = vcombine.low %v1886, %v1890
        %v3163 = vcombine.low %v1894, %v1898
        %v3164 = vcombine.low %v1902, %v1906
        %v3165 = vcombine.low %v1910, %v1914
        %v3167 = vunpack.c.l.s4 1966171168
        %v3168 = vunpack.c.0.s8 %v3167
        %v3169 = vlaneseq
        %v3170 = vshrl.u32 %v3169, 7
        %v3171 = vsub.s32 %v3168, %v3170
        %v3172 = vrot.slane %v3162, %v3171
        %v3174 = vunpack.c.l.s4 1966171168
        %v3175 = vunpack.c.0.s8 %v3174
        %v3176 = vlaneseq
        %v3177 = vshrl.u32 %v3176, 7
        %v3178 = vsub.s32 %v3175, %v3177
        %v3179 = vrot.slane %v3163, %v3178
        %v3181 = vunpack.c.l.s4 1966171168
        %v3182 = vunpack.c.0.s8 %v3181
        %v3183 = vlaneseq
        %v3184 = vshrl.u32 %v3183, 7
        %v3185 = vsub.s32 %v3182, %v3184
        %v3186 = vrot.slane %v3164, %v3185
        %v3188 = vunpack.c.l.s4 1966171168
        %v3189 = vunpack.c.0.s8 %v3188
        %v3190 = vlaneseq
        %v3191 = vshrl.u32 %v3190, 7
        %v3192 = vsub.s32 %v3189, %v3191
        %v3193 = vrot.slane %v3165, %v3192
        %v3194 = vcombine.low %v3172, %v3179
        %v3195 = vcombine.low %v3186, %v3193
        %v3197 = vunpack.c.l.s4 1966171168
        %v3198 = vunpack.c.0.s8 %v3197
        %v3199 = vlaneseq
        %v3200 = vshrl.u32 %v3199, 7
        %v3201 = vsub.s32 %v3198, %v3200
        %v3202 = vrot.slane %v3194, %v3201
        %v3204 = vunpack.c.l.s4 1966171168
        %v3205 = vunpack.c.0.s8 %v3204
        %v3206 = vlaneseq
        %v3207 = vshrl.u32 %v3206, 7
        %v3208 = vsub.s32 %v3205, %v3207
        %v3209 = vrot.slane %v3195, %v3208
        %v3210 = vcombine.low %v3202, %v3209
        %v3211 = vcombine.low %v1918, %v1922
        %v3212 = vcombine.low %v1926, %v1930
        %v3213 = vcombine.low %v1934, %v1938
        %v3214 = vcombine.low %v1942, %v1946
        %v3216 = vunpack.c.l.s4 1966171168
        %v3217 = vunpack.c.0.s8 %v3216
        %v3218 = vlaneseq
        %v3219 = vshrl.u32 %v3218, 7
        %v3220 = vsub.s32 %v3217, %v3219
        %v3221 = vrot.slane %v3211, %v3220
        %v3223 = vunpack.c.l.s4 1966171168
        %v3224 = vunpack.c.0.s8 %v3223
        %v3225 = vlaneseq
        %v3226 = vshrl.u32 %v3225, 7
        %v3227 = vsub.s32 %v3224, %v3226
        %v3228 = vrot.slane %v3212, %v3227
        %v3230 = vunpack.c.l.s4 1966171168
        %v3231 = vunpack.c.0.s8 %v3230
        %v3232 = vlaneseq
        %v3233 = vshrl.u32 %v3232, 7
        %v3234 = vsub.s32 %v3231, %v3233
        %v3235 = vrot.slane %v3213, %v3234
        %v3237 = vunpack.c.l.s4 1966171168
        %v3238 = vunpack.c.0.s8 %v3237
        %v3239 = vlaneseq
        %v3240 = vshrl.u32 %v3239, 7
        %v3241 = vsub.s32 %v3238, %v3240
        %v3242 = vrot.slane %v3214, %v3241
        %v3243 = vcombine.low %v3221, %v3228
        %v3244 = vcombine.low %v3235, %v3242
        %v3246 = vunpack.c.l.s4 1966171168
        %v3247 = vunpack.c.0.s8 %v3246
        %v3248 = vlaneseq
        %v3249 = vshrl.u32 %v3248, 7
        %v3250 = vsub.s32 %v3247, %v3249
        %v3251 = vrot.slane %v3243, %v3250
        %v3253 = vunpack.c.l.s4 1966171168
        %v3254 = vunpack.c.0.s8 %v3253
        %v3255 = vlaneseq
        %v3256 = vshrl.u32 %v3255, 7
        %v3257 = vsub.s32 %v3254, %v3256
        %v3258 = vrot.slane %v3244, %v3257
        %v3259 = vcombine.low %v3251, %v3258
        %v3260 = vcombine.low %v1950, %v1954
        %v3261 = vcombine.low %v1958, %v1962
        %v3262 = vcombine.low %v1966, %v1970
        %v3263 = vcombine.low %v1974, %v1978
        %v3265 = vunpack.c.l.s4 1966171168
        %v3266 = vunpack.c.0.s8 %v3265
        %v3267 = vlaneseq
        %v3268 = vshrl.u32 %v3267, 7
        %v3269 = vsub.s32 %v3266, %v3268
        %v3270 = vrot.slane %v3260, %v3269
        %v3272 = vunpack.c.l.s4 1966171168
        %v3273 = vunpack.c.0.s8 %v3272
        %v3274 = vlaneseq
        %v3275 = vshrl.u32 %v3274, 7
        %v3276 = vsub.s32 %v3273, %v3275
        %v3277 = vrot.slane %v3261, %v3276
        %v3279 = vunpack.c.l.s4 1966171168
        %v3280 = vunpack.c.0.s8 %v3279
        %v3281 = vlaneseq
        %v3282 = vshrl.u32 %v3281, 7
        %v3283 = vsub.s32 %v3280, %v3282
        %v3284 = vrot.slane %v3262, %v3283
        %v3286 = vunpack.c.l.s4 1966171168
        %v3287 = vunpack.c.0.s8 %v3286
        %v3288 = vlaneseq
        %v3289 = vshrl.u32 %v3288, 7
        %v3290 = vsub.s32 %v3287, %v3289
        %v3291 = vrot.slane %v3263, %v3290
        %v3292 = vcombine.low %v3270, %v3277
        %v3293 = vcombine.low %v3284, %v3291
        %v3295 = vunpack.c.l.s4 1966171168
        %v3296 = vunpack.c.0.s8 %v3295
        %v3297 = vlaneseq
        %v3298 = vshrl.u32 %v3297, 7
        %v3299 = vsub.s32 %v3296, %v3298
        %v3300 = vrot.slane %v3292, %v3299
        %v3302 = vunpack.c.l.s4 1966171168
        %v3303 = vunpack.c.0.s8 %v3302
        %v3304 = vlaneseq
        %v3305 = vshrl.u32 %v3304, 7
        %v3306 = vsub.s32 %v3303, %v3305
        %v3307 = vrot.slane %v3293, %v3306
        %v3308 = vcombine.low %v3300, %v3307
        %v3309 = vcombine.low %v1982, %v1986
        %v3310 = vcombine.low %v1990, %v1994
        %v3311 = vcombine.low %v1998, %v2002
        %v3312 = vcombine.low %v2006, %v2010
        %v3314 = vunpack.c.l.s4 1966171168
        %v3315 = vunpack.c.0.s8 %v3314
        %v3316 = vlaneseq
        %v3317 = vshrl.u32 %v3316, 7
        %v3318 = vsub.s32 %v3315, %v3317
        %v3319 = vrot.slane %v3309, %v3318
        %v3321 = vunpack.c.l.s4 1966171168
        %v3322 = vunpack.c.0.s8 %v3321
        %v3323 = vlaneseq
        %v3324 = vshrl.u32 %v3323, 7
        %v3325 = vsub.s32 %v3322, %v3324
        %v3326 = vrot.slane %v3310, %v3325
        %v3328 = vunpack.c.l.s4 1966171168
        %v3329 = vunpack.c.0.s8 %v3328
        %v3330 = vlaneseq
        %v3331 = vshrl.u32 %v3330, 7
        %v3332 = vsub.s32 %v3329, %v3331
        %v3333 = vrot.slane %v3311, %v3332
        %v3335 = vunpack.c.l.s4 1966171168
        %v3336 = vunpack.c.0.s8 %v3335
        %v3337 = vlaneseq
        %v3338 = vshrl.u32 %v3337, 7
        %v3339 = vsub.s32 %v3336, %v3338
        %v3340 = vrot.slane %v3312, %v3339
        %v3341 = vcombine.low %v3319, %v3326
        %v3342 = vcombine.low %v3333, %v3340
        %v3344 = vunpack.c.l.s4 1966171168
        %v3345 = vunpack.c.0.s8 %v3344
        %v3346 = vlaneseq
        %v3347 = vshrl.u32 %v3346, 7
        %v3348 = vsub.s32 %v3345, %v3347
        %v3349 = vrot.slane %v3341, %v3348
        %v3351 = vunpack.c.l.s4 1966171168
        %v3352 = vunpack.c.0.s8 %v3351
        %v3353 = vlaneseq
        %v3354 = vshrl.u32 %v3353, 7
        %v3355 = vsub.s32 %v3352, %v3354
        %v3356 = vrot.slane %v3342, %v3355
        %v3357 = vcombine.low %v3349, %v3356
        %v3358 = vcombine.low %v2014, %v2018
        %v3359 = vcombine.low %v2022, %v2026
        %v3360 = vcombine.low %v2030, %v2034
        %v3361 = vcombine.low %v2038, %v2042
        %v3363 = vunpack.c.l.s4 1966171168
        %v3364 = vunpack.c.0.s8 %v3363
        %v3365 = vlaneseq
        %v3366 = vshrl.u32 %v3365, 7
        %v3367 = vsub.s32 %v3364, %v3366
        %v3368 = vrot.slane %v3358, %v3367
        %v3370 = vunpack.c.l.s4 1966171168
        %v3371 = vunpack.c.0.s8 %v3370
        %v3372 = vlaneseq
        %v3373 = vshrl.u32 %v3372, 7
        %v3374 = vsub.s32 %v3371, %v3373
        %v3375 = vrot.slane %v3359, %v3374
        %v3377 = vunpack.c.l.s4 1966171168
        %v3378 = vunpack.c.0.s8 %v3377
        %v3379 = vlaneseq
        %v3380 = vshrl.u32 %v3379, 7
        %v3381 = vsub.s32 %v3378, %v3380
        %v3382 = vrot.slane %v3360, %v3381
        %v3384 = vunpack.c.l.s4 1966171168
        %v3385 = vunpack.c.0.s8 %v3384
        %v3386 = vlaneseq
        %v3387 = vshrl.u32 %v3386, 7
        %v3388 = vsub.s32 %v3385, %v3387
        %v3389 = vrot.slane %v3361, %v3388
        %v3390 = vcombine.low %v3368, %v3375
        %v3391 = vcombine.low %v3382, %v3389
        %v3393 = vunpack.c.l.s4 1966171168
        %v3394 = vunpack.c.0.s8 %v3393
        %v3395 = vlaneseq
        %v3396 = vshrl.u32 %v3395, 7
        %v3397 = vsub.s32 %v3394, %v3396
        %v3398 = vrot.slane %v3390, %v3397
        %v3400 = vunpack.c.l.s4 1966171168
        %v3401 = vunpack.c.0.s8 %v3400
        %v3402 = vlaneseq
        %v3403 = vshrl.u32 %v3402, 7
        %v3404 = vsub.s32 %v3401, %v3403
        %v3405 = vrot.slane %v3391, %v3404
        %v3406 = vcombine.low %v3398, %v3405
        %v3407 = vcombine.low %v2046, %v2050
        %v3408 = vcombine.low %v2054, %v2058
        %v3409 = vcombine.low %v2062, %v2066
        %v3410 = vcombine.low %v2070, %v2074
        %v3412 = vunpack.c.l.s4 1966171168
        %v3413 = vunpack.c.0.s8 %v3412
        %v3414 = vlaneseq
        %v3415 = vshrl.u32 %v3414, 7
        %v3416 = vsub.s32 %v3413, %v3415
        %v3417 = vrot.slane %v3407, %v3416
        %v3419 = vunpack.c.l.s4 1966171168
        %v3420 = vunpack.c.0.s8 %v3419
        %v3421 = vlaneseq
        %v3422 = vshrl.u32 %v3421, 7
        %v3423 = vsub.s32 %v3420, %v3422
        %v3424 = vrot.slane %v3408, %v3423
        %v3426 = vunpack.c.l.s4 1966171168
        %v3427 = vunpack.c.0.s8 %v3426
        %v3428 = vlaneseq
        %v3429 = vshrl.u32 %v3428, 7
        %v3430 = vsub.s32 %v3427, %v3429
        %v3431 = vrot.slane %v3409, %v3430
        %v3433 = vunpack.c.l.s4 1966171168
        %v3434 = vunpack.c.0.s8 %v3433
        %v3435 = vlaneseq
        %v3436 = vshrl.u32 %v3435, 7
        %v3437 = vsub.s32 %v3434, %v3436
        %v3438 = vrot.slane %v3410, %v3437
        %v3439 = vcombine.low %v3417, %v3424
        %v3440 = vcombine.low %v3431, %v3438
        %v3442 = vunpack.c.l.s4 1966171168
        %v3443 = vunpack.c.0.s8 %v3442
        %v3444 = vlaneseq
        %v3445 = vshrl.u32 %v3444, 7
        %v3446 = vsub.s32 %v3443, %v3445
        %v3447 = vrot.slane %v3439, %v3446
        %v3449 = vunpack.c.l.s4 1966171168
        %v3450 = vunpack.c.0.s8 %v3449
        %v3451 = vlaneseq
        %v3452 = vshrl.u32 %v3451, 7
        %v3453 = vsub.s32 %v3450, %v3452
        %v3454 = vrot.slane %v3440, %v3453
        %v3455 = vcombine.low %v3447, %v3454
        %v3456 = vcombine.low %v2078, %v2082
        %v3457 = vcombine.low %v2086, %v2090
        %v3458 = vcombine.low %v2094, %v2098
        %v3459 = vcombine.low %v2102, %v2106
        %v3461 = vunpack.c.l.s4 1966171168
        %v3462 = vunpack.c.0.s8 %v3461
        %v3463 = vlaneseq
        %v3464 = vshrl.u32 %v3463, 7
        %v3465 = vsub.s32 %v3462, %v3464
        %v3466 = vrot.slane %v3456, %v3465
        %v3468 = vunpack.c.l.s4 1966171168
        %v3469 = vunpack.c.0.s8 %v3468
        %v3470 = vlaneseq
        %v3471 = vshrl.u32 %v3470, 7
        %v3472 = vsub.s32 %v3469, %v3471
        %v3473 = vrot.slane %v3457, %v3472
        %v3475 = vunpack.c.l.s4 1966171168
        %v3476 = vunpack.c.0.s8 %v3475
        %v3477 = vlaneseq
        %v3478 = vshrl.u32 %v3477, 7
        %v3479 = vsub.s32 %v3476, %v3478
        %v3480 = vrot.slane %v3458, %v3479
        %v3482 = vunpack.c.l.s4 1966171168
        %v3483 = vunpack.c.0.s8 %v3482
        %v3484 = vlaneseq
        %v3485 = vshrl.u32 %v3484, 7
        %v3486 = vsub.s32 %v3483, %v3485
        %v3487 = vrot.slane %v3459, %v3486
        %v3488 = vcombine.low %v3466, %v3473
        %v3489 = vcombine.low %v3480, %v3487
        %v3491 = vunpack.c.l.s4 1966171168
        %v3492 = vunpack.c.0.s8 %v3491
        %v3493 = vlaneseq
        %v3494 = vshrl.u32 %v3493, 7
        %v3495 = vsub.s32 %v3492, %v3494
        %v3496 = vrot.slane %v3488, %v3495
        %v3498 = vunpack.c.l.s4 1966171168
        %v3499 = vunpack.c.0.s8 %v3498
        %v3500 = vlaneseq
        %v3501 = vshrl.u32 %v3500, 7
        %v3502 = vsub.s32 %v3499, %v3501
        %v3503 = vrot.slane %v3489, %v3502
        %v3504 = vcombine.low %v3496, %v3503
        %v3505 = vcombine.low %v2110, %v2114
        %v3506 = vcombine.low %v2118, %v2122
        %v3507 = vcombine.low %v2126, %v2130
        %v3508 = vcombine.low %v2134, %v2138
        %v3510 = vunpack.c.l.s4 1966171168
        %v3511 = vunpack.c.0.s8 %v3510
        %v3512 = vlaneseq
        %v3513 = vshrl.u32 %v3512, 7
        %v3514 = vsub.s32 %v3511, %v3513
        %v3515 = vrot.slane %v3505, %v3514
        %v3517 = vunpack.c.l.s4 1966171168
        %v3518 = vunpack.c.0.s8 %v3517
        %v3519 = vlaneseq
        %v3520 = vshrl.u32 %v3519, 7
        %v3521 = vsub.s32 %v3518, %v3520
        %v3522 = vrot.slane %v3506, %v3521
        %v3524 = vunpack.c.l.s4 1966171168
        %v3525 = vunpack.c.0.s8 %v3524
        %v3526 = vlaneseq
        %v3527 = vshrl.u32 %v3526, 7
        %v3528 = vsub.s32 %v3525, %v3527
        %v3529 = vrot.slane %v3507, %v3528
        %v3531 = vunpack.c.l.s4 1966171168
        %v3532 = vunpack.c.0.s8 %v3531
        %v3533 = vlaneseq
        %v3534 = vshrl.u32 %v3533, 7
        %v3535 = vsub.s32 %v3532, %v3534
        %v3536 = vrot.slane %v3508, %v3535
        %v3537 = vcombine.low %v3515, %v3522
        %v3538 = vcombine.low %v3529, %v3536
        %v3540 = vunpack.c.l.s4 1966171168
        %v3541 = vunpack.c.0.s8 %v3540
        %v3542 = vlaneseq
        %v3543 = vshrl.u32 %v3542, 7
        %v3544 = vsub.s32 %v3541, %v3543
        %v3545 = vrot.slane %v3537, %v3544
        %v3547 = vunpack.c.l.s4 1966171168
        %v3548 = vunpack.c.0.s8 %v3547
        %v3549 = vlaneseq
        %v3550 = vshrl.u32 %v3549, 7
        %v3551 = vsub.s32 %v3548, %v3550
        %v3552 = vrot.slane %v3538, %v3551
        %v3553 = vcombine.low %v3545, %v3552
        %v3554 = vcombine.low %v2142, %v2146
        %v3555 = vcombine.low %v2150, %v2154
        %v3556 = vcombine.low %v2158, %v2162
        %v3557 = vcombine.low %v2166, %v2170
        %v3559 = vunpack.c.l.s4 1966171168
        %v3560 = vunpack.c.0.s8 %v3559
        %v3561 = vlaneseq
        %v3562 = vshrl.u32 %v3561, 7
        %v3563 = vsub.s32 %v3560, %v3562
        %v3564 = vrot.slane %v3554, %v3563
        %v3566 = vunpack.c.l.s4 1966171168
        %v3567 = vunpack.c.0.s8 %v3566
        %v3568 = vlaneseq
        %v3569 = vshrl.u32 %v3568, 7
        %v3570 = vsub.s32 %v3567, %v3569
        %v3571 = vrot.slane %v3555, %v3570
        %v3573 = vunpack.c.l.s4 1966171168
        %v3574 = vunpack.c.0.s8 %v3573
        %v3575 = vlaneseq
        %v3576 = vshrl.u32 %v3575, 7
        %v3577 = vsub.s32 %v3574, %v3576
        %v3578 = vrot.slane %v3556, %v3577
        %v3580 = vunpack.c.l.s4 1966171168
        %v3581 = vunpack.c.0.s8 %v3580
        %v3582 = vlaneseq
        %v3583 = vshrl.u32 %v3582, 7
        %v3584 = vsub.s32 %v3581, %v3583
        %v3585 = vrot.slane %v3557, %v3584
        %v3586 = vcombine.low %v3564, %v3571
        %v3587 = vcombine.low %v3578, %v3585
        %v3589 = vunpack.c.l.s4 1966171168
        %v3590 = vunpack.c.0.s8 %v3589
        %v3591 = vlaneseq
        %v3592 = vshrl.u32 %v3591, 7
        %v3593 = vsub.s32 %v3590, %v3592
        %v3594 = vrot.slane %v3586, %v3593
        %v3596 = vunpack.c.l.s4 1966171168
        %v3597 = vunpack.c.0.s8 %v3596
        %v3598 = vlaneseq
        %v3599 = vshrl.u32 %v3598, 7
        %v3600 = vsub.s32 %v3597, %v3599
        %v3601 = vrot.slane %v3587, %v3600
        %v3602 = vcombine.low %v3594, %v3601
        %v3603 = vcombine.low %v2174, %v2178
        %v3604 = vcombine.low %v2182, %v2186
        %v3605 = vcombine.low %v2190, %v2194
        %v3606 = vcombine.low %v2198, %v2202
        %v3608 = vunpack.c.l.s4 1966171168
        %v3609 = vunpack.c.0.s8 %v3608
        %v3610 = vlaneseq
        %v3611 = vshrl.u32 %v3610, 7
        %v3612 = vsub.s32 %v3609, %v3611
        %v3613 = vrot.slane %v3603, %v3612
        %v3615 = vunpack.c.l.s4 1966171168
        %v3616 = vunpack.c.0.s8 %v3615
        %v3617 = vlaneseq
        %v3618 = vshrl.u32 %v3617, 7
        %v3619 = vsub.s32 %v3616, %v3618
        %v3620 = vrot.slane %v3604, %v3619
        %v3622 = vunpack.c.l.s4 1966171168
        %v3623 = vunpack.c.0.s8 %v3622
        %v3624 = vlaneseq
        %v3625 = vshrl.u32 %v3624, 7
        %v3626 = vsub.s32 %v3623, %v3625
        %v3627 = vrot.slane %v3605, %v3626
        %v3629 = vunpack.c.l.s4 1966171168
        %v3630 = vunpack.c.0.s8 %v3629
        %v3631 = vlaneseq
        %v3632 = vshrl.u32 %v3631, 7
        %v3633 = vsub.s32 %v3630, %v3632
        %v3634 = vrot.slane %v3606, %v3633
        %v3635 = vcombine.low %v3613, %v3620
        %v3636 = vcombine.low %v3627, %v3634
        %v3638 = vunpack.c.l.s4 1966171168
        %v3639 = vunpack.c.0.s8 %v3638
        %v3640 = vlaneseq
        %v3641 = vshrl.u32 %v3640, 7
        %v3642 = vsub.s32 %v3639, %v3641
        %v3643 = vrot.slane %v3635, %v3642
        %v3645 = vunpack.c.l.s4 1966171168
        %v3646 = vunpack.c.0.s8 %v3645
        %v3647 = vlaneseq
        %v3648 = vshrl.u32 %v3647, 7
        %v3649 = vsub.s32 %v3646, %v3648
        %v3650 = vrot.slane %v3636, %v3649
        %v3651 = vcombine.low %v3643, %v3650
        %v3652 = vcombine.low %v2206, %v2210
        %v3653 = vcombine.low %v2214, %v2218
        %v3654 = vcombine.low %v2222, %v2226
        %v3655 = vcombine.low %v2230, %v2234
        %v3657 = vunpack.c.l.s4 1966171168
        %v3658 = vunpack.c.0.s8 %v3657
        %v3659 = vlaneseq
        %v3660 = vshrl.u32 %v3659, 7
        %v3661 = vsub.s32 %v3658, %v3660
        %v3662 = vrot.slane %v3652, %v3661
        %v3664 = vunpack.c.l.s4 1966171168
        %v3665 = vunpack.c.0.s8 %v3664
        %v3666 = vlaneseq
        %v3667 = vshrl.u32 %v3666, 7
        %v3668 = vsub.s32 %v3665, %v3667
        %v3669 = vrot.slane %v3653, %v3668
        %v3671 = vunpack.c.l.s4 1966171168
        %v3672 = vunpack.c.0.s8 %v3671
        %v3673 = vlaneseq
        %v3674 = vshrl.u32 %v3673, 7
        %v3675 = vsub.s32 %v3672, %v3674
        %v3676 = vrot.slane %v3654, %v3675
        %v3678 = vunpack.c.l.s4 1966171168
        %v3679 = vunpack.c.0.s8 %v3678
        %v3680 = vlaneseq
        %v3681 = vshrl.u32 %v3680, 7
        %v3682 = vsub.s32 %v3679, %v3681
        %v3683 = vrot.slane %v3655, %v3682
        %v3684 = vcombine.low %v3662, %v3669
        %v3685 = vcombine.low %v3676, %v3683
        %v3687 = vunpack.c.l.s4 1966171168
        %v3688 = vunpack.c.0.s8 %v3687
        %v3689 = vlaneseq
        %v3690 = vshrl.u32 %v3689, 7
        %v3691 = vsub.s32 %v3688, %v3690
        %v3692 = vrot.slane %v3684, %v3691
        %v3694 = vunpack.c.l.s4 1966171168
        %v3695 = vunpack.c.0.s8 %v3694
        %v3696 = vlaneseq
        %v3697 = vshrl.u32 %v3696, 7
        %v3698 = vsub.s32 %v3695, %v3697
        %v3699 = vrot.slane %v3685, %v3698
        %v3700 = vcombine.low %v3692, %v3699
        %v3701 = vcombine.low %v2238, %v2242
        %v3702 = vcombine.low %v2246, %v2250
        %v3703 = vcombine.low %v2254, %v2258
        %v3704 = vcombine.low %v2262, %v2266
        %v3706 = vunpack.c.l.s4 1966171168
        %v3707 = vunpack.c.0.s8 %v3706
        %v3708 = vlaneseq
        %v3709 = vshrl.u32 %v3708, 7
        %v3710 = vsub.s32 %v3707, %v3709
        %v3711 = vrot.slane %v3701, %v3710
        %v3713 = vunpack.c.l.s4 1966171168
        %v3714 = vunpack.c.0.s8 %v3713
        %v3715 = vlaneseq
        %v3716 = vshrl.u32 %v3715, 7
        %v3717 = vsub.s32 %v3714, %v3716
        %v3718 = vrot.slane %v3702, %v3717
        %v3720 = vunpack.c.l.s4 1966171168
        %v3721 = vunpack.c.0.s8 %v3720
        %v3722 = vlaneseq
        %v3723 = vshrl.u32 %v3722, 7
        %v3724 = vsub.s32 %v3721, %v3723
        %v3725 = vrot.slane %v3703, %v3724
        %v3727 = vunpack.c.l.s4 1966171168
        %v3728 = vunpack.c.0.s8 %v3727
        %v3729 = vlaneseq
        %v3730 = vshrl.u32 %v3729, 7
        %v3731 = vsub.s32 %v3728, %v3730
        %v3732 = vrot.slane %v3704, %v3731
        %v3733 = vcombine.low %v3711, %v3718
        %v3734 = vcombine.low %v3725, %v3732
        %v3736 = vunpack.c.l.s4 1966171168
        %v3737 = vunpack.c.0.s8 %v3736
        %v3738 = vlaneseq
        %v3739 = vshrl.u32 %v3738, 7
        %v3740 = vsub.s32 %v3737, %v3739
        %v3741 = vrot.slane %v3733, %v3740
        %v3743 = vunpack.c.l.s4 1966171168
        %v3744 = vunpack.c.0.s8 %v3743
        %v3745 = vlaneseq
        %v3746 = vshrl.u32 %v3745, 7
        %v3747 = vsub.s32 %v3744, %v3746
        %v3748 = vrot.slane %v3734, %v3747
        %v3749 = vcombine.low %v3741, %v3748
        %v3750 = vcombine.low %v2270, %v2274
        %v3751 = vcombine.low %v2278, %v2282
        %v3752 = vcombine.low %v2286, %v2290
        %v3753 = vcombine.low %v2294, %v2298
        %v3755 = vunpack.c.l.s4 1966171168
        %v3756 = vunpack.c.0.s8 %v3755
        %v3757 = vlaneseq
        %v3758 = vshrl.u32 %v3757, 7
        %v3759 = vsub.s32 %v3756, %v3758
        %v3760 = vrot.slane %v3750, %v3759
        %v3762 = vunpack.c.l.s4 1966171168
        %v3763 = vunpack.c.0.s8 %v3762
        %v3764 = vlaneseq
        %v3765 = vshrl.u32 %v3764, 7
        %v3766 = vsub.s32 %v3763, %v3765
        %v3767 = vrot.slane %v3751, %v3766
        %v3769 = vunpack.c.l.s4 1966171168
        %v3770 = vunpack.c.0.s8 %v3769
        %v3771 = vlaneseq
        %v3772 = vshrl.u32 %v3771, 7
        %v3773 = vsub.s32 %v3770, %v3772
        %v3774 = vrot.slane %v3752, %v3773
        %v3776 = vunpack.c.l.s4 1966171168
        %v3777 = vunpack.c.0.s8 %v3776
        %v3778 = vlaneseq
        %v3779 = vshrl.u32 %v3778, 7
        %v3780 = vsub.s32 %v3777, %v3779
        %v3781 = vrot.slane %v3753, %v3780
        %v3782 = vcombine.low %v3760, %v3767
        %v3783 = vcombine.low %v3774, %v3781
        %v3785 = vunpack.c.l.s4 1966171168
        %v3786 = vunpack.c.0.s8 %v3785
        %v3787 = vlaneseq
        %v3788 = vshrl.u32 %v3787, 7
        %v3789 = vsub.s32 %v3786, %v3788
        %v3790 = vrot.slane %v3782, %v3789
        %v3792 = vunpack.c.l.s4 1966171168
        %v3793 = vunpack.c.0.s8 %v3792
        %v3794 = vlaneseq
        %v3795 = vshrl.u32 %v3794, 7
        %v3796 = vsub.s32 %v3793, %v3795
        %v3797 = vrot.slane %v3783, %v3796
        %v3798 = vcombine.low %v3790, %v3797
        %v3799 = vcombine.low %v2302, %v2306
        %v3800 = vcombine.low %v2310, %v2314
        %v3801 = vcombine.low %v2318, %v2322
        %v3802 = vcombine.low %v2326, %v2330
        %v3804 = vunpack.c.l.s4 1966171168
        %v3805 = vunpack.c.0.s8 %v3804
        %v3806 = vlaneseq
        %v3807 = vshrl.u32 %v3806, 7
        %v3808 = vsub.s32 %v3805, %v3807
        %v3809 = vrot.slane %v3799, %v3808
        %v3811 = vunpack.c.l.s4 1966171168
        %v3812 = vunpack.c.0.s8 %v3811
        %v3813 = vlaneseq
        %v3814 = vshrl.u32 %v3813, 7
        %v3815 = vsub.s32 %v3812, %v3814
        %v3816 = vrot.slane %v3800, %v3815
        %v3818 = vunpack.c.l.s4 1966171168
        %v3819 = vunpack.c.0.s8 %v3818
        %v3820 = vlaneseq
        %v3821 = vshrl.u32 %v3820, 7
        %v3822 = vsub.s32 %v3819, %v3821
        %v3823 = vrot.slane %v3801, %v3822
        %v3825 = vunpack.c.l.s4 1966171168
        %v3826 = vunpack.c.0.s8 %v3825
        %v3827 = vlaneseq
        %v3828 = vshrl.u32 %v3827, 7
        %v3829 = vsub.s32 %v3826, %v3828
        %v3830 = vrot.slane %v3802, %v3829
        %v3831 = vcombine.low %v3809, %v3816
        %v3832 = vcombine.low %v3823, %v3830
        %v3834 = vunpack.c.l.s4 1966171168
        %v3835 = vunpack.c.0.s8 %v3834
        %v3836 = vlaneseq
        %v3837 = vshrl.u32 %v3836, 7
        %v3838 = vsub.s32 %v3835, %v3837
        %v3839 = vrot.slane %v3831, %v3838
        %v3841 = vunpack.c.l.s4 1966171168
        %v3842 = vunpack.c.0.s8 %v3841
        %v3843 = vlaneseq
        %v3844 = vshrl.u32 %v3843, 7
        %v3845 = vsub.s32 %v3842, %v3844
        %v3846 = vrot.slane %v3832, %v3845
        %v3847 = vcombine.low %v3839, %v3846
        %v3848 = vcombine.low %v2334, %v2338
        %v3849 = vcombine.low %v2342, %v2346
        %v3850 = vcombine.low %v2350, %v2354
        %v3851 = vcombine.low %v2358, %v2362
        %v3853 = vunpack.c.l.s4 1966171168
        %v3854 = vunpack.c.0.s8 %v3853
        %v3855 = vlaneseq
        %v3856 = vshrl.u32 %v3855, 7
        %v3857 = vsub.s32 %v3854, %v3856
        %v3858 = vrot.slane %v3848, %v3857
        %v3860 = vunpack.c.l.s4 1966171168
        %v3861 = vunpack.c.0.s8 %v3860
        %v3862 = vlaneseq
        %v3863 = vshrl.u32 %v3862, 7
        %v3864 = vsub.s32 %v3861, %v3863
        %v3865 = vrot.slane %v3849, %v3864
        %v3867 = vunpack.c.l.s4 1966171168
        %v3868 = vunpack.c.0.s8 %v3867
        %v3869 = vlaneseq
        %v3870 = vshrl.u32 %v3869, 7
        %v3871 = vsub.s32 %v3868, %v3870
        %v3872 = vrot.slane %v3850, %v3871
        %v3874 = vunpack.c.l.s4 1966171168
        %v3875 = vunpack.c.0.s8 %v3874
        %v3876 = vlaneseq
        %v3877 = vshrl.u32 %v3876, 7
        %v3878 = vsub.s32 %v3875, %v3877
        %v3879 = vrot.slane %v3851, %v3878
        %v3880 = vcombine.low %v3858, %v3865
        %v3881 = vcombine.low %v3872, %v3879
        %v3883 = vunpack.c.l.s4 1966171168
        %v3884 = vunpack.c.0.s8 %v3883
        %v3885 = vlaneseq
        %v3886 = vshrl.u32 %v3885, 7
        %v3887 = vsub.s32 %v3884, %v3886
        %v3888 = vrot.slane %v3880, %v3887
        %v3890 = vunpack.c.l.s4 1966171168
        %v3891 = vunpack.c.0.s8 %v3890
        %v3892 = vlaneseq
        %v3893 = vshrl.u32 %v3892, 7
        %v3894 = vsub.s32 %v3891, %v3893
        %v3895 = vrot.slane %v3881, %v3894
        %v3896 = vcombine.low %v3888, %v3895
        %v3897 = vcombine.low %v2366, %v2370
        %v3898 = vcombine.low %v2374, %v2378
        %v3899 = vcombine.low %v2382, %v2386
        %v3900 = vcombine.low %v2390, %v2394
        %v3902 = vunpack.c.l.s4 1966171168
        %v3903 = vunpack.c.0.s8 %v3902
        %v3904 = vlaneseq
        %v3905 = vshrl.u32 %v3904, 7
        %v3906 = vsub.s32 %v3903, %v3905
        %v3907 = vrot.slane %v3897, %v3906
        %v3909 = vunpack.c.l.s4 1966171168
        %v3910 = vunpack.c.0.s8 %v3909
        %v3911 = vlaneseq
        %v3912 = vshrl.u32 %v3911, 7
        %v3913 = vsub.s32 %v3910, %v3912
        %v3914 = vrot.slane %v3898, %v3913
        %v3916 = vunpack.c.l.s4 1966171168
        %v3917 = vunpack.c.0.s8 %v3916
        %v3918 = vlaneseq
        %v3919 = vshrl.u32 %v3918, 7
        %v3920 = vsub.s32 %v3917, %v3919
        %v3921 = vrot.slane %v3899, %v3920
        %v3923 = vunpack.c.l.s4 1966171168
        %v3924 = vunpack.c.0.s8 %v3923
        %v3925 = vlaneseq
        %v3926 = vshrl.u32 %v3925, 7
        %v3927 = vsub.s32 %v3924, %v3926
        %v3928 = vrot.slane %v3900, %v3927
        %v3929 = vcombine.low %v3907, %v3914
        %v3930 = vcombine.low %v3921, %v3928
        %v3932 = vunpack.c.l.s4 1966171168
        %v3933 = vunpack.c.0.s8 %v3932
        %v3934 = vlaneseq
        %v3935 = vshrl.u32 %v3934, 7
        %v3936 = vsub.s32 %v3933, %v3935
        %v3937 = vrot.slane %v3929, %v3936
        %v3939 = vunpack.c.l.s4 1966171168
        %v3940 = vunpack.c.0.s8 %v3939
        %v3941 = vlaneseq
        %v3942 = vshrl.u32 %v3941, 7
        %v3943 = vsub.s32 %v3940, %v3942
        %v3944 = vrot.slane %v3930, %v3943
        %v3945 = vcombine.low %v3937, %v3944
        %v3946 = vcombine.low %v2398, %v2402
        %v3947 = vcombine.low %v2406, %v2410
        %v3948 = vcombine.low %v2414, %v2418
        %v3949 = vcombine.low %v2422, %v2426
        %v3951 = vunpack.c.l.s4 1966171168
        %v3952 = vunpack.c.0.s8 %v3951
        %v3953 = vlaneseq
        %v3954 = vshrl.u32 %v3953, 7
        %v3955 = vsub.s32 %v3952, %v3954
        %v3956 = vrot.slane %v3946, %v3955
        %v3958 = vunpack.c.l.s4 1966171168
        %v3959 = vunpack.c.0.s8 %v3958
        %v3960 = vlaneseq
        %v3961 = vshrl.u32 %v3960, 7
        %v3962 = vsub.s32 %v3959, %v3961
        %v3963 = vrot.slane %v3947, %v3962
        %v3965 = vunpack.c.l.s4 1966171168
        %v3966 = vunpack.c.0.s8 %v3965
        %v3967 = vlaneseq
        %v3968 = vshrl.u32 %v3967, 7
        %v3969 = vsub.s32 %v3966, %v3968
        %v3970 = vrot.slane %v3948, %v3969
        %v3972 = vunpack.c.l.s4 1966171168
        %v3973 = vunpack.c.0.s8 %v3972
        %v3974 = vlaneseq
        %v3975 = vshrl.u32 %v3974, 7
        %v3976 = vsub.s32 %v3973, %v3975
        %v3977 = vrot.slane %v3949, %v3976
        %v3978 = vcombine.low %v3956, %v3963
        %v3979 = vcombine.low %v3970, %v3977
        %v3981 = vunpack.c.l.s4 1966171168
        %v3982 = vunpack.c.0.s8 %v3981
        %v3983 = vlaneseq
        %v3984 = vshrl.u32 %v3983, 7
        %v3985 = vsub.s32 %v3982, %v3984
        %v3986 = vrot.slane %v3978, %v3985
        %v3988 = vunpack.c.l.s4 1966171168
        %v3989 = vunpack.c.0.s8 %v3988
        %v3990 = vlaneseq
        %v3991 = vshrl.u32 %v3990, 7
        %v3992 = vsub.s32 %v3989, %v3991
        %v3993 = vrot.slane %v3979, %v3992
        %v3994 = vcombine.low %v3986, %v3993
        %3995 = vset.pattern.permute.xlu0 0
        %3996 = vperm.xlu0 %3995, %v2475
        %v3997 = vpop.permute.xlu0 %3996
        %3998 = vset.pattern.permute.xlu0 0
        %3999 = vperm.xlu0 %3998, %v2524
        %v4000 = vpop.permute.xlu0 %3999
        %4001 = vset.pattern.permute.xlu0 0
        %4002 = vperm.xlu0 %4001, %v2573
        %v4003 = vpop.permute.xlu0 %4002
        %4004 = vset.pattern.permute.xlu0 0
        %4005 = vperm.xlu0 %4004, %v2622
        %v4006 = vpop.permute.xlu0 %4005
        %4007 = vset.pattern.permute.xlu0 0
        %4008 = vperm.xlu0 %4007, %v2671
        %v4009 = vpop.permute.xlu0 %4008
        %4010 = vset.pattern.permute.xlu0 0
        %4011 = vperm.xlu0 %4010, %v2720
        %v4012 = vpop.permute.xlu0 %4011
        %4013 = vset.pattern.permute.xlu0 0
        %4014 = vperm.xlu0 %4013, %v2769
        %v4015 = vpop.permute.xlu0 %4014
        %4016 = vset.pattern.permute.xlu0 0
        %4017 = vperm.xlu0 %4016, %v2818
        %v4018 = vpop.permute.xlu0 %4017
        %4019 = vset.pattern.permute.xlu0 0
        %4020 = vperm.xlu0 %4019, %v2867
        %v4021 = vpop.permute.xlu0 %4020
        %4022 = vset.pattern.permute.xlu0 0
        %4023 = vperm.xlu0 %4022, %v2916
        %v4024 = vpop.permute.xlu0 %4023
        %4025 = vset.pattern.permute.xlu0 0
        %4026 = vperm.xlu0 %4025, %v2965
        %v4027 = vpop.permute.xlu0 %4026
        %4028 = vset.pattern.permute.xlu0 0
        %4029 = vperm.xlu0 %4028, %v3014
        %v4030 = vpop.permute.xlu0 %4029
        %4031 = vset.pattern.permute.xlu0 0
        %4032 = vperm.xlu0 %4031, %v3063
        %v4033 = vpop.permute.xlu0 %4032
        %4034 = vset.pattern.permute.xlu0 0
        %4035 = vperm.xlu0 %4034, %v3112
        %v4036 = vpop.permute.xlu0 %4035
        %4037 = vset.pattern.permute.xlu0 0
        %4038 = vperm.xlu0 %4037, %v3161
        %v4039 = vpop.permute.xlu0 %4038
        %4040 = vset.pattern.permute.xlu0 0
        %4041 = vperm.xlu0 %4040, %v3210
        %v4042 = vpop.permute.xlu0 %4041
        %4043 = vset.pattern.permute.xlu0 0
        %4044 = vperm.xlu0 %4043, %v3259
        %v4045 = vpop.permute.xlu0 %4044
        %4046 = vset.pattern.permute.xlu0 0
        %4047 = vperm.xlu0 %4046, %v3308
        %v4048 = vpop.permute.xlu0 %4047
        %4049 = vset.pattern.permute.xlu0 0
        %4050 = vperm.xlu0 %4049, %v3357
        %v4051 = vpop.permute.xlu0 %4050
        %4052 = vset.pattern.permute.xlu0 0
        %4053 = vperm.xlu0 %4052, %v3406
        %v4054 = vpop.permute.xlu0 %4053
        %4055 = vset.pattern.permute.xlu0 0
        %4056 = vperm.xlu0 %4055, %v3455
        %v4057 = vpop.permute.xlu0 %4056
        %4058 = vset.pattern.permute.xlu0 0
        %4059 = vperm.xlu0 %4058, %v3504
        %v4060 = vpop.permute.xlu0 %4059
        %4061 = vset.pattern.permute.xlu0 0
        %4062 = vperm.xlu0 %4061, %v3553
        %v4063 = vpop.permute.xlu0 %4062
        %4064 = vset.pattern.permute.xlu0 0
        %4065 = vperm.xlu0 %4064, %v3602
        %v4066 = vpop.permute.xlu0 %4065
        %4067 = vset.pattern.permute.xlu0 0
        %4068 = vperm.xlu0 %4067, %v3651
        %v4069 = vpop.permute.xlu0 %4068
        %4070 = vset.pattern.permute.xlu0 0
        %4071 = vperm.xlu0 %4070, %v3700
        %v4072 = vpop.permute.xlu0 %4071
        %4073 = vset.pattern.permute.xlu0 0
        %4074 = vperm.xlu0 %4073, %v3749
        %v4075 = vpop.permute.xlu0 %4074
        %4076 = vset.pattern.permute.xlu0 0
        %4077 = vperm.xlu0 %4076, %v3798
        %v4078 = vpop.permute.xlu0 %4077
        %4079 = vset.pattern.permute.xlu0 0
        %4080 = vperm.xlu0 %4079, %v3847
        %v4081 = vpop.permute.xlu0 %4080
        %4082 = vset.pattern.permute.xlu0 0
        %4083 = vperm.xlu0 %4082, %v3896
        %v4084 = vpop.permute.xlu0 %4083
        %4085 = vset.pattern.permute.xlu0 0
        %4086 = vperm.xlu0 %4085, %v3945
        %v4087 = vpop.permute.xlu0 %4086
        %4088 = vset.pattern.permute.xlu0 0
        %4089 = vperm.xlu0 %4088, %v3994
        %v4090 = vpop.permute.xlu0 %4089
        %v4091 = vlaneseq
        %v4092 = vand.u32 %v4091, 127
        %v4093 = vlaneseq
        %v4094 = vshrl.u32 %v4093, 7
        %v4095 = vsub.s32 %v4092, %v4094
        %v4096 = vrot.slane %v3997, %v4095
        %v4097 = vadd.s32 %v4092, 4294967288
        %v4098 = vlaneseq
        %v4099 = vshrl.u32 %v4098, 7
        %v4100 = vsub.s32 %v4097, %v4099
        %v4101 = vrot.slane %v4000, %v4100
        %vm4102 = vcmask 130112
        %v4103 = vsel %vm4102, %v4101, %v4096
        %v4104 = vadd.s32 %v4092, 4294967280
        %v4105 = vlaneseq
        %v4106 = vshrl.u32 %v4105, 7
        %v4107 = vsub.s32 %v4104, %v4106
        %v4108 = vrot.slane %v4003, %v4107
        %vm4109 = vcmask 195712
        %v4110 = vsel %vm4109, %v4108, %v4103
        %v4111 = vadd.s32 %v4092, 4294967272
        %v4112 = vlaneseq
        %v4113 = vshrl.u32 %v4112, 7
        %v4114 = vsub.s32 %v4111, %v4113
        %v4115 = vrot.slane %v4006, %v4114
        %vm4116 = vcmask 261312
        %v4117 = vsel %vm4116, %v4115, %v4110
        %v4118 = vadd.s32 %v4092, 4294967264
        %v4119 = vlaneseq
        %v4120 = vshrl.u32 %v4119, 7
        %v4121 = vsub.s32 %v4118, %v4120
        %v4122 = vrot.slane %v4009, %v4121
        %vm4123 = vcmask 326912
        %v4124 = vsel %vm4123, %v4122, %v4117
        %v4125 = vadd.s32 %v4092, 4294967256
        %v4126 = vlaneseq
        %v4127 = vshrl.u32 %v4126, 7
        %v4128 = vsub.s32 %v4125, %v4127
        %v4129 = vrot.slane %v4012, %v4128
        %vm4130 = vcmask 392512
        %v4131 = vsel %vm4130, %v4129, %v4124
        %v4132 = vadd.s32 %v4092, 4294967248
        %v4133 = vlaneseq
        %v4134 = vshrl.u32 %v4133, 7
        %v4135 = vsub.s32 %v4132, %v4134
        %v4136 = vrot.slane %v4015, %v4135
        %vm4137 = vcmask 458112
        %v4138 = vsel %vm4137, %v4136, %v4131
        %v4139 = vadd.s32 %v4092, 4294967240
        %v4140 = vlaneseq
        %v4141 = vshrl.u32 %v4140, 7
        %v4142 = vsub.s32 %v4139, %v4141
        %v4143 = vrot.slane %v4018, %v4142
        %vm4144 = vcmask 523712
        %v4145 = vsel %vm4144, %v4143, %v4138
        %v4146 = vadd.s32 %v4092, 4294967232
        %v4147 = vlaneseq
        %v4148 = vshrl.u32 %v4147, 7
        %v4149 = vsub.s32 %v4146, %v4148
        %v4150 = vrot.slane %v4021, %v4149
        %vm4151 = vcmask 589312
        %v4152 = vsel %vm4151, %v4150, %v4145
        %v4153 = vadd.s32 %v4092, 4294967224
        %v4154 = vlaneseq
        %v4155 = vshrl.u32 %v4154, 7
        %v4156 = vsub.s32 %v4153, %v4155
        %v4157 = vrot.slane %v4024, %v4156
        %vm4158 = vcmask 654912
        %v4159 = vsel %vm4158, %v4157, %v4152
        %v4160 = vadd.s32 %v4092, 4294967216
        %v4161 = vlaneseq
        %v4162 = vshrl.u32 %v4161, 7
        %v4163 = vsub.s32 %v4160, %v4162
        %v4164 = vrot.slane %v4027, %v4163
        %vm4165 = vcmask 720512
        %v4166 = vsel %vm4165, %v4164, %v4159
        %v4167 = vadd.s32 %v4092, 4294967208
        %v4168 = vlaneseq
        %v4169 = vshrl.u32 %v4168, 7
        %v4170 = vsub.s32 %v4167, %v4169
        %v4171 = vrot.slane %v4030, %v4170
        %vm4172 = vcmask 786112
        %v4173 = vsel %vm4172, %v4171, %v4166
        %v4174 = vadd.s32 %v4092, 4294967200
        %v4175 = vlaneseq
        %v4176 = vshrl.u32 %v4175, 7
        %v4177 = vsub.s32 %v4174, %v4176
        %v4178 = vrot.slane %v4033, %v4177
        %vm4179 = vcmask 851712
        %v4180 = vsel %vm4179, %v4178, %v4173
        %v4181 = vadd.s32 %v4092, 4294967192
        %v4182 = vlaneseq
        %v4183 = vshrl.u32 %v4182, 7
        %v4184 = vsub.s32 %v4181, %v4183
        %v4185 = vrot.slane %v4036, %v4184
        %vm4186 = vcmask 917312
        %v4187 = vsel %vm4186, %v4185, %v4180
        %v4188 = vadd.s32 %v4092, 4294967184
        %v4189 = vlaneseq
        %v4190 = vshrl.u32 %v4189, 7
        %v4191 = vsub.s32 %v4188, %v4190
        %v4192 = vrot.slane %v4039, %v4191
        %vm4193 = vcmask 982912
        %v4194 = vsel %vm4193, %v4192, %v4187
        %v4195 = vadd.s32 %v4092, 4294967176
        %v4196 = vlaneseq
        %v4197 = vshrl.u32 %v4196, 7
        %v4198 = vsub.s32 %v4195, %v4197
        %v4199 = vrot.slane %v4042, %v4198
        %vm4200 = vcmask 1048512
        %v4201 = vsel %vm4200, %v4199, %v4194
        %v4202 = vlaneseq
        %v4203 = vshrl.u32 %v4202, 7
        %v4204 = vsub.s32 %v4092, %v4203
        %v4205 = vrot.slane %v4045, %v4204
        %v4206 = vlaneseq
        %v4207 = vshrl.u32 %v4206, 7
        %v4208 = vsub.s32 %v4097, %v4207
        %v4209 = vrot.slane %v4048, %v4208
        %v4210 = vsel %vm4102, %v4209, %v4205
        %v4211 = vlaneseq
        %v4212 = vshrl.u32 %v4211, 7
        %v4213 = vsub.s32 %v4104, %v4212
        %v4214 = vrot.slane %v4051, %v4213
        %v4215 = vsel %vm4109, %v4214, %v4210
        %v4216 = vlaneseq
        %v4217 = vshrl.u32 %v4216, 7
        %v4218 = vsub.s32 %v4111, %v4217
        %v4219 = vrot.slane %v4054, %v4218
        %v4220 = vsel %vm4116, %v4219, %v4215
        %v4221 = vlaneseq
        %v4222 = vshrl.u32 %v4221, 7
        %v4223 = vsub.s32 %v4118, %v4222
        %v4224 = vrot.slane %v4057, %v4223
        %v4225 = vsel %vm4123, %v4224, %v4220
        %v4226 = vlaneseq
        %v4227 = vshrl.u32 %v4226, 7
        %v4228 = vsub.s32 %v4125, %v4227
        %v4229 = vrot.slane %v4060, %v4228
        %v4230 = vsel %vm4130, %v4229, %v4225
        %v4231 = vlaneseq
        %v4232 = vshrl.u32 %v4231, 7
        %v4233 = vsub.s32 %v4132, %v4232
        %v4234 = vrot.slane %v4063, %v4233
        %v4235 = vsel %vm4137, %v4234, %v4230
        %v4236 = vlaneseq
        %v4237 = vshrl.u32 %v4236, 7
        %v4238 = vsub.s32 %v4139, %v4237
        %v4239 = vrot.slane %v4066, %v4238
        %v4240 = vsel %vm4144, %v4239, %v4235
        %v4241 = vlaneseq
        %v4242 = vshrl.u32 %v4241, 7
        %v4243 = vsub.s32 %v4146, %v4242
        %v4244 = vrot.slane %v4069, %v4243
        %v4245 = vsel %vm4151, %v4244, %v4240
        %v4246 = vlaneseq
        %v4247 = vshrl.u32 %v4246, 7
        %v4248 = vsub.s32 %v4153, %v4247
        %v4249 = vrot.slane %v4072, %v4248
        %v4250 = vsel %vm4158, %v4249, %v4245
        %v4251 = vlaneseq
        %v4252 = vshrl.u32 %v4251, 7
        %v4253 = vsub.s32 %v4160, %v4252
        %v4254 = vrot.slane %v4075, %v4253
        %v4255 = vsel %vm4165, %v4254, %v4250
        %v4256 = vlaneseq
        %v4257 = vshrl.u32 %v4256, 7
        %v4258 = vsub.s32 %v4167, %v4257
        %v4259 = vrot.slane %v4078, %v4258
        %v4260 = vsel %vm4172, %v4259, %v4255
        %v4261 = vlaneseq
        %v4262 = vshrl.u32 %v4261, 7
        %v4263 = vsub.s32 %v4174, %v4262
        %v4264 = vrot.slane %v4081, %v4263
        %v4265 = vsel %vm4179, %v4264, %v4260
        %v4266 = vlaneseq
        %v4267 = vshrl.u32 %v4266, 7
        %v4268 = vsub.s32 %v4181, %v4267
        %v4269 = vrot.slane %v4084, %v4268
        %v4270 = vsel %vm4186, %v4269, %v4265
        %v4271 = vlaneseq
        %v4272 = vshrl.u32 %v4271, 7
        %v4273 = vsub.s32 %v4188, %v4272
        %v4274 = vrot.slane %v4087, %v4273
        %v4275 = vsel %vm4193, %v4274, %v4270
        %v4276 = vlaneseq
        %v4277 = vshrl.u32 %v4276, 7
        %v4278 = vsub.s32 %v4195, %v4277
        %v4279 = vrot.slane %v4090, %v4278
        %v4280 = vsel %vm4200, %v4279, %v4275
        %v4281 = vcombine.low %v4201, %v4280
        %v4283 = vunpack.c.l.s4 1966171168
        %v4284 = vunpack.c.0.s8 %v4283
        %v4285 = vlaneseq
        %v4286 = vshrl.u32 %v4285, 7
        %v4287 = vsub.s32 %v4284, %v4286
        %v4288 = vrot.slane %v4281, %v4287
        %v4290 = vunpack.c.l.s4 1966171168
        %v4291 = vunpack.c.0.s8 %v4290
        %v4292 = vlaneseq
        %v4293 = vshrl.u32 %v4292, 7
        %v4294 = vsub.s32 %v4291, %v4293
        %v4295 = vrot.slane %v4288, %v4294
        %v4297 = vlaneseq
        %vm4298 = vcmp.ge.s32.totalorder %v4297, 0
        %vm4299 = vcmp.lt.s32.totalorder %v4297, 256
        %vm4300 = vmand %vm4298, %vm4299
        %4301 = vst.msk [vmem:[%s273] sm:$0x3] %vm4300, %v4295
        %s4302 = sand.u32 %s182, 1
        %s4303 = scalar_lea.sflag [#allocation4], %s4302
        %s4304 = sand.u32 %s182, 1
        %s4305 = smul.addr %s4304, 2
        %s4306 = scalar_lea.vmem [#allocation3], %s4305
        // Predicated region
        $region49: #{tpu_custom_call.1} parent=47 // pred_check
          %p4307 = pneg %p192
        $region50: #{tpu_custom_call.1} parent=47 // pred_check_branch
          %4309 = sbr.rel (%p4307) target = $region52
        $region51: #{tpu_custom_call.1} parent=47 // pred_region
          %s4310 = smul.u32 2, %s22
          %s4312 = ssub.s32 32, 32
          %4313 = vsyncadd %s4303, %s4312
          %s4314 = smul.addr %s4310, 16
          %s4315 = scalar_lea.hbm %s7, %s4314
          %s4317 = sshll.u32 %s4306, 4
          %s4318 = int_to_ptr.vmem [resolvable:$true] %s4317
          %4320 = dma.vmem_to_hbm [thread:$0]  %s4318, 32, %s4315, %s4303
        $region52: #{tpu_custom_call.1} parent=47 // pred_fallthru
          _
      $region48: #{tpu_custom_call.1} parent=5 // pred_fallthru
        _
      %p4321 = scmp.le.s32.totalorder 2, %s17
      // Predicated region
      $region53: #{tpu_custom_call.1} parent=5 // pred_check
        %p4322 = pneg %p4321
      $region54: #{tpu_custom_call.1} parent=5 // pred_check_branch
        %4324 = sbr.rel (%p4322) target = $region56
      $region55: #{tpu_custom_call.1} parent=5 // pred_region
        %s4325 = ssub.s32 %s17, 2
        // Predicated region
        $region57: #{tpu_custom_call.1} parent=55 // pred_check
          %p4326 = pneg %p198
        $region58: #{tpu_custom_call.1} parent=55 // pred_check_branch
          %4328 = sbr.rel (%p4326) target = $region60
        $region59: #{tpu_custom_call.1} parent=55 // pred_region
          %s4329 = sand.u32 %s183, 1
          %s4330 = scalar_lea.sflag [#allocation4], %s4329
          %s4331 = sand.u32 %s183, 1
          %s4332 = smul.addr %s4331, 2
          %s4333 = scalar_lea.vmem [#allocation3], %s4332
          %4334 = dma.done %s4330, 32
        $region60: #{tpu_custom_call.1} parent=55 // pred_fallthru
          _
      $region56: #{tpu_custom_call.1} parent=5 // pred_fallthru
        _
    $region6: #{tpu_custom_call.1} parent=1 // loop_footer
      %s21 = sadd.s32 1, %s17
    $region7: #{tpu_custom_call.1} parent=1 // loop_footer_branch
      %16 = sbr.rel target = $region3
    $region8: #{tpu_custom_call.1} parent=1 // loop_exit
      _
    %4335 = vsyncpa [#allocation4], 1
    %s4336 = scalar_lea.sflag [#allocation4], 1
    %4337 = vsyncpa %s4336, 1

// kernel: tpu_custom_call.1
$region0: #{tpu_custom_call.1}
  #allocation0 [shape = 'u32[]', space=smem, size = 0x4, offset = 0x4, fixed_abs, tag = 'smem constant byte address 0x4 - core index']
  #allocation1 [shape = 'u32[144,128]{1,0:T(1,128)}', space=vmem, size = 0x12000, scoped, tag = 'internal scratch']
  #allocation2 [shape = 'f32[1]{0:T(128)S(6)}', space=smem, size = 0x200, scoped, tag = 'scoped memory for tpu_custom_call.1']
  %s0 = inlined_call_operand.vmem [shape: f32[512,32], index: 0, kind: input, shape index: {}]
  %s1 = inlined_call_operand.vmem [shape: bf16[32,256], index: 1, kind: input, shape index: {}]
  %s2 = inlined_call_operand.vmem [shape: f32[1,256], index: 2, kind: input, shape index: {}]
  %s3 = inlined_call_operand.vmem [shape: bf16[256,256], index: 3, kind: input, shape index: {}]
  %s4 = inlined_call_operand.vmem [shape: f32[1,256], index: 4, kind: input, shape index: {}]
  %s5 = inlined_call_operand.vmem [shape: f32[1,256], index: 5, kind: input, shape index: {}]
  %s6 = inlined_call_operand.<no memory space> [shape: f32[1], index: 6, kind: input, shape index: {}]
  %s7 = inlined_call_operand.hbm [shape: f32[1,512], index: 7, kind: output, shape index: {}]
  %s8 = sld [smem:[#allocation0]]
  $region61: #{tpu_custom_call.1} parent=0
    _
  %s10 = ssub.s32 1, %s8
  %s11 = scalar_select 0, %s10, %s8
  %12 = sst [smem:[#allocation2]] %s6
  $region1: #{tpu_custom_call.1} parent=0
    #allocation3 [shape = 'u8[2048]{0}', space=vmem, size = 0x800, scoped, tag = 'output window, operand 0']
    #allocation4 [shape = 's32[2]{0}', space=sflag, size = 0x8, scoped, tag = 'scoped memory for tpu_custom_call.1']
    %13 = vsyncpa [#allocation4], 0
    %s14 = scalar_lea.sflag [#allocation4], 1
    %15 = vsyncpa %s14, 0
    loop: start=0, step=1, limit=4
    $region2: #{tpu_custom_call.1} parent=1 // loop_pre_header
      _
    $region3: #{tpu_custom_call.1} parent=1 // loop_header
      %s17 = sphi 0, %s21
      %p18 = scmp.ge.s32.totalorder %s17, 4
      %s27 = sphi 0, %s29
      %s30 = sphi 0, %s27
      %s31 = sphi 0, %s30
      %s47 = sphi 0, %s31
      %s51 = sphi 0, %s51
      %s53 = sphi 0, %s51
      %s54 = sphi 0, %s53
      %s68 = sphi 0, %s54
      %s72 = sphi 0, %s72
      %s74 = sphi 0, %s72
      %s75 = sphi 0, %s74
      %s89 = sphi 0, %s75
      %s93 = sphi 0, %s93
      %s95 = sphi 0, %s93
      %s96 = sphi 0, %s95
      %s110 = sphi 0, %s96
      %s114 = sphi 0, %s114
      %s116 = sphi 0, %s114
      %s117 = sphi 0, %s116
      %s131 = sphi 0, %s117
      %s135 = sphi 0, %s135
      %s137 = sphi 0, %s135
      %s138 = sphi 0, %s137
      %s152 = sphi 0, %s138
      %s156 = sphi 0, %s156
      %s158 = sphi 0, %s156
      %s159 = sphi 0, %s158
      %s173 = sphi 0, %s159
      %s179 = sphi 0, %s181
      %s182 = sphi 0, %s179
      %s183 = sphi 0, %s182
      %s199 = sphi 0, %s183
    $region4: #{tpu_custom_call.1} parent=1 // loop_header_branch
      %20 = sbr.rel (%p18) target = $region8
    $region5: #{tpu_custom_call.1} parent=1 // loop_body
      %s22 = ssub.s32 %s17, 1
      %s23 = ssub.s32 %s17, 2
      %s24 = sadd.s32 %s17, 1
      %s25 = ssub.s32 %s17, %s24
      %p26 = scmp.eq.s32.totalorder %s25, 0
      %s28 = sadd.s32 %s27, 1
      %s29 = scalar_select %p26, %s27, %s28
      %p32 = pneg %p26
      %p33 = scmp.eq.s32.totalorder %s17, 1
      %p34 = por %p32, %p33
      %p35 = scmp.ne.s32.totalorder %s27, %s30
      %p36 = scmp.eq.s32.totalorder %s17, 0
      %p37 = por %p35, %p36
      %p38 = scmp.ne.s32.totalorder %s27, %s30
      %p39 = scmp.eq.s32.totalorder %s22, 1
      %p40 = por %p38, %p39
      %p41 = scmp.ne.s32.totalorder %s30, %s31
      %p42 = scmp.eq.s32.totalorder %s22, 0
      %p43 = por %p41, %p42
      %p44 = scmp.ne.s32.totalorder %s30, %s31
      %p45 = scmp.eq.s32.totalorder %s23, 1
      %p46 = por %p44, %p45
      %p48 = scmp.ne.s32.totalorder %s31, %s47
      %p49 = scmp.eq.s32.totalorder %s23, 0
      %p50 = por %p48, %p49
      %s52 = sadd.s32 %s51, 1
      %p55 = scmp.eq.s32.totalorder %s17, 1
      %p56 = scmp.ne.s32.totalorder %s51, %s53
      %p57 = scmp.eq.s32.totalorder %s17, 0
      %p58 = por %p56, %p57
      %p59 = scmp.ne.s32.totalorder %s51, %s53
      %p60 = scmp.eq.s32.totalorder %s22, 1
      %p61 = por %p59, %p60
      %p62 = scmp.ne.s32.totalorder %s53, %s54
      %p63 = scmp.eq.s32.totalorder %s22, 0
      %p64 = por %p62, %p63
      %p65 = scmp.ne.s32.totalorder %s53, %s54
      %p66 = scmp.eq.s32.totalorder %s23, 1
      %p67 = por %p65, %p66
      %p69 = scmp.ne.s32.totalorder %s54, %s68
      %p70 = scmp.eq.s32.totalorder %s23, 0
      %p71 = por %p69, %p70
      %s73 = sadd.s32 %s72, 1
      %p76 = scmp.eq.s32.totalorder %s17, 1
      %p77 = scmp.ne.s32.totalorder %s72, %s74
      %p78 = scmp.eq.s32.totalorder %s17, 0
      %p79 = por %p77, %p78
      %p80 = scmp.ne.s32.totalorder %s72, %s74
      %p81 = scmp.eq.s32.totalorder %s22, 1
      %p82 = por %p80, %p81
      %p83 = scmp.ne.s32.totalorder %s74, %s75
      %p84 = scmp.eq.s32.totalorder %s22, 0
      %p85 = por %p83, %p84
      %p86 = scmp.ne.s32.totalorder %s74, %s75
      %p87 = scmp.eq.s32.totalorder %s23, 1
      %p88 = por %p86, %p87
      %p90 = scmp.ne.s32.totalorder %s75, %s89
      %p91 = scmp.eq.s32.totalorder %s23, 0
      %p92 = por %p90, %p91
      %s94 = sadd.s32 %s93, 1
      %p97 = scmp.eq.s32.totalorder %s17, 1
      %p98 = scmp.ne.s32.totalorder %s93, %s95
      %p99 = scmp.eq.s32.totalorder %s17, 0
      %p100 = por %p98, %p99
      %p101 = scmp.ne.s32.totalorder %s93, %s95
      %p102 = scmp.eq.s32.totalorder %s22, 1
      %p103 = por %p101, %p102
      %p104 = scmp.ne.s32.totalorder %s95, %s96
      %p105 = scmp.eq.s32.totalorder %s22, 0
      %p106 = por %p104, %p105
      %p107 = scmp.ne.s32.totalorder %s95, %s96
      %p108 = scmp.eq.s32.totalorder %s23, 1
      %p109 = por %p107, %p108
      %p111 = scmp.ne.s32.totalorder %s96, %s110
      %p112 = scmp.eq.s32.totalorder %s23, 0
      %p113 = por %p111, %p112
      %s115 = sadd.s32 %s114, 1
      %p118 = scmp.eq.s32.totalorder %s17, 1
      %p119 = scmp.ne.s32.totalorder %s114, %s116
      %p120 = scmp.eq.s32.totalorder %s17, 0
      %p121 = por %p119, %p120
      %p122 = scmp.ne.s32.totalorder %s114, %s116
      %p123 = scmp.eq.s32.totalorder %s22, 1
      %p124 = por %p122, %p123
      %p125 = scmp.ne.s32.totalorder %s116, %s117
      %p126 = scmp.eq.s32.totalorder %s22, 0
      %p127 = por %p125, %p126
      %p128 = scmp.ne.s32.totalorder %s116, %s117
      %p129 = scmp.eq.s32.totalorder %s23, 1
      %p130 = por %p128, %p129
      %p132 = scmp.ne.s32.totalorder %s117, %s131
      %p133 = scmp.eq.s32.totalorder %s23, 0
      %p134 = por %p132, %p133
      %s136 = sadd.s32 %s135, 1
      %p139 = scmp.eq.s32.totalorder %s17, 1
      %p140 = scmp.ne.s32.totalorder %s135, %s137
      %p141 = scmp.eq.s32.totalorder %s17, 0
      %p142 = por %p140, %p141
      %p143 = scmp.ne.s32.totalorder %s135, %s137
      %p144 = scmp.eq.s32.totalorder %s22, 1
      %p145 = por %p143, %p144
      %p146 = scmp.ne.s32.totalorder %s137, %s138
      %p147 = scmp.eq.s32.totalorder %s22, 0
      %p148 = por %p146, %p147
      %p149 = scmp.ne.s32.totalorder %s137, %s138
      %p150 = scmp.eq.s32.totalorder %s23, 1
      %p151 = por %p149, %p150
      %p153 = scmp.ne.s32.totalorder %s138, %s152
      %p154 = scmp.eq.s32.totalorder %s23, 0
      %p155 = por %p153, %p154
      %s157 = sadd.s32 %s156, 1
      %p160 = scmp.eq.s32.totalorder %s17, 1
      %p161 = scmp.ne.s32.totalorder %s156, %s158
      %p162 = scmp.eq.s32.totalorder %s17, 0
      %p163 = por %p161, %p162
      %p164 = scmp.ne.s32.totalorder %s156, %s158
      %p165 = scmp.eq.s32.totalorder %s22, 1
      %p166 = por %p164, %p165
      %p167 = scmp.ne.s32.totalorder %s158, %s159
      %p168 = scmp.eq.s32.totalorder %s22, 0
      %p169 = por %p167, %p168
      %p170 = scmp.ne.s32.totalorder %s158, %s159
      %p171 = scmp.eq.s32.totalorder %s23, 1
      %p172 = por %p170, %p171
      %p174 = scmp.ne.s32.totalorder %s159, %s173
      %p175 = scmp.eq.s32.totalorder %s23, 0
      %p176 = por %p174, %p175
      %s177 = ssub.s32 %s17, %s24
      %p178 = scmp.eq.s32.totalorder %s177, 0
      %s180 = sadd.s32 %s179, 1
      %s181 = scalar_select %p178, %s179, %s180
      %p184 = pneg %p178
      %p185 = scmp.eq.s32.totalorder %s17, 1
      %p186 = por %p184, %p185
      %p187 = scmp.ne.s32.totalorder %s179, %s182
      %p188 = scmp.eq.s32.totalorder %s17, 0
      %p189 = por %p187, %p188
      %p190 = scmp.ne.s32.totalorder %s179, %s182
      %p191 = scmp.eq.s32.totalorder %s22, 1
      %p192 = por %p190, %p191
      %p193 = scmp.ne.s32.totalorder %s182, %s183
      %p194 = scmp.eq.s32.totalorder %s22, 0
      %p195 = por %p193, %p194
      %p196 = scmp.ne.s32.totalorder %s182, %s183
      %p197 = scmp.eq.s32.totalorder %s23, 1
      %p198 = por %p196, %p197
      %p200 = scmp.ne.s32.totalorder %s183, %s199
      %p201 = scmp.eq.s32.totalorder %s23, 0
      %p202 = por %p200, %p201
      %p203 = scmp.le.s32.totalorder 1, %s17
      %p204 = scmp.lt.s32.totalorder %s17, 3
      %p205 = pnand %p203, %p204
      %p206 = pneg %p205
      // Predicated region
      $region9: #{tpu_custom_call.1} parent=5 // pred_check
        _
      $region10: #{tpu_custom_call.1} parent=5 // pred_check_branch
        %208 = sbr.rel (%p205) target = $region12
      $region11: #{tpu_custom_call.1} parent=5 // pred_region
        %s209 = ssub.s32 %s17, 1
        // Predicated region
        $region13: #{tpu_custom_call.1} parent=11 // pred_check
          %p210 = pneg %p64
        $region14: #{tpu_custom_call.1} parent=11 // pred_check_branch
          %212 = sbr.rel (%p210) target = $region16
        $region15: #{tpu_custom_call.1} parent=11 // pred_region
          _
        $region16: #{tpu_custom_call.1} parent=11 // pred_fallthru
          _
        // Predicated region
        $region17: #{tpu_custom_call.1} parent=11 // pred_check
          %p213 = pneg %p85
        $region18: #{tpu_custom_call.1} parent=11 // pred_check_branch
          %215 = sbr.rel (%p213) target = $region20
        $region19: #{tpu_custom_call.1} parent=11 // pred_region
          _
        $region20: #{tpu_custom_call.1} parent=11 // pred_fallthru
          _
        // Predicated region
        $region21: #{tpu_custom_call.1} parent=11 // pred_check
          %p216 = pneg %p106
        $region22: #{tpu_custom_call.1} parent=11 // pred_check_branch
          %218 = sbr.rel (%p216) target = $region24
        $region23: #{tpu_custom_call.1} parent=11 // pred_region
          _
        $region24: #{tpu_custom_call.1} parent=11 // pred_fallthru
          _
        // Predicated region
        $region25: #{tpu_custom_call.1} parent=11 // pred_check
          %p219 = pneg %p127
        $region26: #{tpu_custom_call.1} parent=11 // pred_check_branch
          %221 = sbr.rel (%p219) target = $region28
        $region27: #{tpu_custom_call.1} parent=11 // pred_region
          _
        $region28: #{tpu_custom_call.1} parent=11 // pred_fallthru
          _
        // Predicated region
        $region29: #{tpu_custom_call.1} parent=11 // pred_check
          %p222 = pneg %p148
        $region30: #{tpu_custom_call.1} parent=11 // pred_check_branch
          %224 = sbr.rel (%p222) target = $region32
        $region31: #{tpu_custom_call.1} parent=11 // pred_region
          _
        $region32: #{tpu_custom_call.1} parent=11 // pred_fallthru
          _
        // Predicated region
        $region33: #{tpu_custom_call.1} parent=11 // pred_check
          %p225 = pneg %p169
        $region34: #{tpu_custom_call.1} parent=11 // pred_check_branch
          %227 = sbr.rel (%p225) target = $region36
        $region35: #{tpu_custom_call.1} parent=11 // pred_region
          _
        $region36: #{tpu_custom_call.1} parent=11 // pred_fallthru
          _
      $region12: #{tpu_custom_call.1} parent=5 // pred_fallthru
        _
      %p228 = scmp.lt.s32.totalorder %s17, 2
      // Predicated region
      $region37: #{tpu_custom_call.1} parent=5 // pred_check
        %p229 = pneg %p228
      $region38: #{tpu_custom_call.1} parent=5 // pred_check_branch
        %231 = sbr.rel (%p229) target = $region40
      $region39: #{tpu_custom_call.1} parent=5 // pred_region
        // Predicated region
        $region41: #{tpu_custom_call.1} parent=39 // pred_check
          %p232 = pneg %p37
        $region42: #{tpu_custom_call.1} parent=39 // pred_check_branch
          %234 = sbr.rel (%p232) target = $region44
        $region43: #{tpu_custom_call.1} parent=39 // pred_region
          %s235 = smul.u32 32, %s17
          %p236 = scmp.lt.s32.totalorder %s235, 63
          %s237 = scalar_select %p236, %s235, 63
          %s238 = smul.addr %s237, 8
          %s239 = scalar_lea.vmem %s0, %s238
          %s240 = smul.u32 32, %s17
        $region44: #{tpu_custom_call.1} parent=39 // pred_fallthru
          _
      $region40: #{tpu_custom_call.1} parent=5 // pred_fallthru
        _
      %p241 = scmp.le.s32.totalorder 1, %s17
      %p242 = scmp.lt.s32.totalorder %s17, 3
      %p243 = pnand %p241, %p242
      %p244 = pneg %p243
      // Predicated region
      $region45: #{tpu_custom_call.1} parent=5 // pred_check
        _
      $region46: #{tpu_custom_call.1} parent=5 // pred_check_branch
        %246 = sbr.rel (%p243) target = $region48
      $region47: #{tpu_custom_call.1} parent=5 // pred_region
        %s247 = ssub.s32 %s17, 1
        %s248 = smul.u32 32, %s22
        %p249 = scmp.lt.s32.totalorder %s248, 63
        %s250 = scalar_select %p249, %s248, 63
        %s251 = smul.addr %s250, 8
        %s252 = scalar_lea.vmem %s0, %s251
        %p253 = pneg %p43
        %p254 = pneg %p40
        %p255 = pneg %p64
        %p256 = pneg %p61
        %p257 = pneg %p85
        %p258 = pneg %p82
        %p259 = pneg %p106
        %p260 = pneg %p103
        %p261 = pneg %p127
        %p262 = pneg %p124
        %p263 = pneg %p148
        %p264 = pneg %p145
        %p265 = pneg %p169
        %p266 = pneg %p166
        %p267 = pneg %p195
        %p268 = pneg %p192
        %s269 = sand.u32 %s182, 1
        %s270 = scalar_lea.sflag [#allocation4], %s269
        %s271 = sand.u32 %s182, 1
        %s272 = smul.addr %s271, 2
        %s273 = scalar_lea.vmem [#allocation3], %s272
        %s274 = smul.u32 32, %s22
        %p275 = scmp.lt.s32.totalorder %s274, 63
        %s276 = scalar_select %p275, %s274, 63
        %s277 = smul.addr %s276, 8
        %s278 = scalar_lea.vmem %s0, %s277
        %s279 = smul.u32 32, %s22
        %s280 = smul.u32 2, %s22
        %v282 = vld [vmem:[%s278] sm:$0xff]
        %v283 = vld [vmem:[%s278 + $0x8] sm:$0xff]
        %v284 = vld [vmem:[%s278 + $0x10] sm:$0xff]
        %v285 = vld [vmem:[%s278 + $0x18] sm:$0xff]
        %v286 = vld [vmem:[%s278 + $0x20] sm:$0xff]
        %v287 = vld [vmem:[%s278 + $0x28] sm:$0xff]
        %v288 = vld [vmem:[%s278 + $0x30] sm:$0xff]
        %v289 = vld [vmem:[%s278 + $0x38] sm:$0xff]
        %v290 = vld [vmem:[%s278 + $0x40] sm:$0xff]
        %v291 = vld [vmem:[%s278 + $0x48] sm:$0xff]
        %v292 = vld [vmem:[%s278 + $0x50] sm:$0xff]
        %v293 = vld [vmem:[%s278 + $0x58] sm:$0xff]
        %v294 = vld [vmem:[%s278 + $0x60] sm:$0xff]
        %v295 = vld [vmem:[%s278 + $0x68] sm:$0xff]
        %v296 = vld [vmem:[%s278 + $0x70] sm:$0xff]
        %v297 = vld [vmem:[%s278 + $0x78] sm:$0xff]
        %v298 = vld [vmem:[%s278 + $0x80] sm:$0xff]
        %v299 = vld [vmem:[%s278 + $0x88] sm:$0xff]
        %v300 = vld [vmem:[%s278 + $0x90] sm:$0xff]
        %v301 = vld [vmem:[%s278 + $0x98] sm:$0xff]
        %v302 = vld [vmem:[%s278 + $0xa0] sm:$0xff]
        %v303 = vld [vmem:[%s278 + $0xa8] sm:$0xff]
        %v304 = vld [vmem:[%s278 + $0xb0] sm:$0xff]
        %v305 = vld [vmem:[%s278 + $0xb8] sm:$0xff]
        %v306 = vld [vmem:[%s278 + $0xc0] sm:$0xff]
        %v307 = vld [vmem:[%s278 + $0xc8] sm:$0xff]
        %v308 = vld [vmem:[%s278 + $0xd0] sm:$0xff]
        %v309 = vld [vmem:[%s278 + $0xd8] sm:$0xff]
        %v310 = vld [vmem:[%s278 + $0xe0] sm:$0xff]
        %v311 = vld [vmem:[%s278 + $0xe8] sm:$0xff]
        %v312 = vld [vmem:[%s278 + $0xf0] sm:$0xff]
        %v313 = vld [vmem:[%s278 + $0xf8] sm:$0xff]
        %v314 = vpack.c.bf16 %v283, %v282
        %v315 = vpack.c.bf16 %v285, %v284
        %v316 = vpack.c.bf16 %v287, %v286
        %v317 = vpack.c.bf16 %v289, %v288
        %v318 = vpack.c.bf16 %v291, %v290
        %v319 = vpack.c.bf16 %v293, %v292
        %v320 = vpack.c.bf16 %v295, %v294
        %v321 = vpack.c.bf16 %v297, %v296
        %v322 = vpack.c.bf16 %v299, %v298
        %v323 = vpack.c.bf16 %v301, %v300
        %v324 = vpack.c.bf16 %v303, %v302
        %v325 = vpack.c.bf16 %v305, %v304
        %v326 = vpack.c.bf16 %v307, %v306
        %v327 = vpack.c.bf16 %v309, %v308
        %v328 = vpack.c.bf16 %v311, %v310
        %v329 = vpack.c.bf16 %v313, %v312
        %v330 = vld [vmem:[%s1] sm:$0xff]
        %v331 = vld [vmem:[%s1 + $0x8] sm:$0xff]
        %v332 = vld [vmem:[%s1 + $0x10] sm:$0xff]
        %v333 = vld [vmem:[%s1 + $0x18] sm:$0xff]
        %v334 = vld [vmem:[%s2] sm:$0x3]
        %v336 = vlaneseq
        %v337 = vshrl.u32 %v336, 7
        %v338 = vsub.s32 0, %v337
        %v339 = vrot.slane %v334, %v338
        %v340 = vlaneseq
        %v341 = vshrl.u32 %v340, 7
        %v342 = vsub.s32 1, %v341
        %v343 = vrot.slane %v334, %v342
        %v350 = vunpack.c.l.b16 %v330
        %v351 = vunpack.c.h.b16 %v330
        %v352 = vunpack.c.l.b16 %v331
        %v353 = vunpack.c.h.b16 %v331
        %v354 = vunpack.c.l.b16 %v332
        %v355 = vunpack.c.h.b16 %v332
        %v356 = vunpack.c.l.b16 %v333
        %v357 = vunpack.c.h.b16 %v333
        %v358 = vpack.c.b16 %v352, %v350
        %v359 = vpack.c.b16 %v353, %v351
        %v360 = vpack.c.b16 %v356, %v354
        %v361 = vpack.c.b16 %v357, %v355
        %vm366 = vcmask 261120
        %v368 = vsel %vm366, %v314, 0
        %v371 = vsel %vm366, %v315, 0
        %v374 = vsel %vm366, %v316, 0
        %v377 = vsel %vm366, %v317, 0
        %v380 = vsel %vm366, %v318, 0
        %v383 = vsel %vm366, %v319, 0
        %v386 = vsel %vm366, %v320, 0
        %v389 = vsel %vm366, %v321, 0
        %v392 = vsel %vm366, %v322, 0
        %v395 = vsel %vm366, %v323, 0
        %v398 = vsel %vm366, %v324, 0
        %v401 = vsel %vm366, %v325, 0
        %v404 = vsel %vm366, %v326, 0
        %v407 = vsel %vm366, %v327, 0
        %v410 = vsel %vm366, %v328, 0
        %v413 = vsel %vm366, %v329, 0
        %415 = vmatprep.subr.bf16.mxu0 %v359
        %416 = vmatpush1.bf16.msra.mxu0 %v358
        %417 = vmatprep.subr.bf16.mxu0 %v361
        %418 = vmatpush1.bf16.msra.mxu0 %v360
        %419 = vmatprep.subr.bf16.mxu0 0
        %420 = vmatpush1.bf16.msra.mxu0 0
        %421 = vmatprep.subr.bf16.mxu0 0
        %422 = vmatpush1.bf16.msra.mxu0 0
        %423 = vmatprep.subr.bf16.mxu0 0
        %424 = vmatpush1.bf16.msra.mxu0 0
        %425 = vmatprep.subr.bf16.mxu0 0
        %426 = vmatpush1.bf16.msra.mxu0 0
        %427 = vmatprep.subr.bf16.mxu0 0
        %428 = vmatpush1.bf16.msra.mxu0 0
        %429 = vmatprep.subr.bf16.mxu0 0
        %430 = vmatpush1.bf16.msra.mxu0 0
        %431 = vmatprep.subr.bf16.mxu0 0
        %432 = vmatpush1.bf16.msra.mxu0 0
        %433 = vmatprep.subr.bf16.mxu0 0
        %434 = vmatpush1.bf16.msra.mxu0 0
        %435 = vmatprep.subr.bf16.mxu0 0
        %436 = vmatpush1.bf16.msra.mxu0 0
        %437 = vmatprep.subr.bf16.mxu0 0
        %438 = vmatpush1.bf16.msra.mxu0 0
        %439 = vmatprep.subr.bf16.mxu0 0
        %440 = vmatpush1.bf16.msra.mxu0 0
        %441 = vmatprep.subr.bf16.mxu0 0
        %442 = vmatpush1.bf16.msra.mxu0 0
        %443 = vmatprep.subr.bf16.mxu0 0
        %444 = vmatpush1.bf16.msra.mxu0 0
        %445 = vmatprep.subr.bf16.mxu0 0
        %446 = vmatpush1.bf16.msra.mxu0 0
        %447 = vmatprep.mubr.bf16.mxu0 0
        %448 = vmatmul.mubr.bf16.gmra.mrb[0].mxu0 %v368
        %v449 = vpop.f32.mrb[0].mxu0
        %v450 = vadd.f32 %v339, %v449
        %v451 = vpop.f32.mrb[0].mxu0
        %v452 = vadd.f32 %v343, %v451
        %v453 = vpop.f32.mrb[0].mxu0
        %v454 = vadd.f32 %v339, %v453
        %v455 = vpop.f32.mrb[0].mxu0
        %v456 = vadd.f32 %v343, %v455
        %457 = vmatprep.mubr.bf16.mxu0 0
        %458 = vmatmul.mubr.bf16.gmra.mrb[0].mxu0 %v371
        %v459 = vpop.f32.mrb[0].mxu0
        %v460 = vadd.f32 %v339, %v459
        %v461 = vpop.f32.mrb[0].mxu0
        %v462 = vadd.f32 %v343, %v461
        %v463 = vpop.f32.mrb[0].mxu0
        %v464 = vadd.f32 %v339, %v463
        %v465 = vpop.f32.mrb[0].mxu0
        %v466 = vadd.f32 %v343, %v465
        %467 = vmatprep.mubr.bf16.mxu0 0
        %468 = vmatmul.mubr.bf16.gmra.mrb[0].mxu0 %v374
        %v469 = vpop.f32.mrb[0].mxu0
        %v470 = vadd.f32 %v339, %v469
        %v471 = vpop.f32.mrb[0].mxu0
        %v472 = vadd.f32 %v343, %v471
        %v473 = vpop.f32.mrb[0].mxu0
        %v474 = vadd.f32 %v339, %v473
        %v475 = vpop.f32.mrb[0].mxu0
        %v476 = vadd.f32 %v343, %v475
        %477 = vmatprep.mubr.bf16.mxu0 0
        %478 = vmatmul.mubr.bf16.gmra.mrb[0].mxu0 %v377
        %v479 = vpop.f32.mrb[0].mxu0
        %v480 = vadd.f32 %v339, %v479
        %v481 = vpop.f32.mrb[0].mxu0
        %v482 = vadd.f32 %v343, %v481
        %v483 = vpop.f32.mrb[0].mxu0
        %v484 = vadd.f32 %v339, %v483
        %v485 = vpop.f32.mrb[0].mxu0
        %v486 = vadd.f32 %v343, %v485
        %487 = vmatprep.mubr.bf16.mxu0 0
        %488 = vmatmul.mubr.bf16.gmra.mrb[0].mxu0 %v380
        %v489 = vpop.f32.mrb[0].mxu0
        %v490 = vadd.f32 %v339, %v489
        %v491 = vpop.f32.mrb[0].mxu0
        %v492 = vadd.f32 %v343, %v491
        %v493 = vpop.f32.mrb[0].mxu0
        %v494 = vadd.f32 %v339, %v493
        %v495 = vpop.f32.mrb[0].mxu0
        %v496 = vadd.f32 %v343, %v495
        %497 = vmatprep.mubr.bf16.mxu0 0
        %498 = vmatmul.mubr.bf16.gmra.mrb[0].mxu0 %v383
        %v499 = vpop.f32.mrb[0].mxu0
        %v500 = vadd.f32 %v339, %v499
        %v501 = vpop.f32.mrb[0].mxu0
        %v502 = vadd.f32 %v343, %v501
        %v503 = vpop.f32.mrb[0].mxu0
        %v504 = vadd.f32 %v339, %v503
        %v505 = vpop.f32.mrb[0].mxu0
        %v506 = vadd.f32 %v343, %v505
        %507 = vmatprep.mubr.bf16.mxu0 0
        %508 = vmatmul.mubr.bf16.gmra.mrb[0].mxu0 %v386
        %v509 = vpop.f32.mrb[0].mxu0
        %v510 = vadd.f32 %v339, %v509
        %v511 = vpop.f32.mrb[0].mxu0
        %v512 = vadd.f32 %v343, %v511
        %v513 = vpop.f32.mrb[0].mxu0
        %v514 = vadd.f32 %v339, %v513
        %v515 = vpop.f32.mrb[0].mxu0
        %v516 = vadd.f32 %v343, %v515
        %517 = vmatprep.mubr.bf16.mxu0 0
        %518 = vmatmul.mubr.bf16.gmra.mrb[0].mxu0 %v389
        %v519 = vpop.f32.mrb[0].mxu0
        %v520 = vadd.f32 %v339, %v519
        %v521 = vpop.f32.mrb[0].mxu0
        %v522 = vadd.f32 %v343, %v521
        %v523 = vpop.f32.mrb[0].mxu0
        %v524 = vadd.f32 %v339, %v523
        %v525 = vpop.f32.mrb[0].mxu0
        %v526 = vadd.f32 %v343, %v525
        %527 = vmatprep.mubr.bf16.mxu0 0
        %528 = vmatmul.mubr.bf16.gmra.mrb[0].mxu0 %v392
        %v529 = vpop.f32.mrb[0].mxu0
        %v530 = vadd.f32 %v339, %v529
        %v531 = vpop.f32.mrb[0].mxu0
        %v532 = vadd.f32 %v343, %v531
        %v533 = vpop.f32.mrb[0].mxu0
        %v534 = vadd.f32 %v339, %v533
        %v535 = vpop.f32.mrb[0].mxu0
        %v536 = vadd.f32 %v343, %v535
        %537 = vmatprep.mubr.bf16.mxu0 0
        %538 = vmatmul.mubr.bf16.gmra.mrb[0].mxu0 %v395
        %v539 = vpop.f32.mrb[0].mxu0
        %v540 = vadd.f32 %v339, %v539
        %v541 = vpop.f32.mrb[0].mxu0
        %v542 = vadd.f32 %v343, %v541
        %v543 = vpop.f32.mrb[0].mxu0
        %v544 = vadd.f32 %v339, %v543
        %v545 = vpop.f32.mrb[0].mxu0
        %v546 = vadd.f32 %v343, %v545
        %547 = vmatprep.mubr.bf16.mxu0 0
        %548 = vmatmul.mubr.bf16.gmra.mrb[0].mxu0 %v398
        %v549 = vpop.f32.mrb[0].mxu0
        %v550 = vadd.f32 %v339, %v549
        %v551 = vpop.f32.mrb[0].mxu0
        %v552 = vadd.f32 %v343, %v551
        %v553 = vpop.f32.mrb[0].mxu0
        %v554 = vadd.f32 %v339, %v553
        %v555 = vpop.f32.mrb[0].mxu0
        %v556 = vadd.f32 %v343, %v555
        %557 = vmatprep.mubr.bf16.mxu0 0
        %558 = vmatmul.mubr.bf16.gmra.mrb[0].mxu0 %v401
        %v559 = vpop.f32.mrb[0].mxu0
        %v560 = vadd.f32 %v339, %v559
        %v561 = vpop.f32.mrb[0].mxu0
        %v562 = vadd.f32 %v343, %v561
        %v563 = vpop.f32.mrb[0].mxu0
        %v564 = vadd.f32 %v339, %v563
        %v565 = vpop.f32.mrb[0].mxu0
        %v566 = vadd.f32 %v343, %v565
        %567 = vmatprep.mubr.bf16.mxu0 0
        %568 = vmatmul.mubr.bf16.gmra.mrb[0].mxu0 %v404
        %v569 = vpop.f32.mrb[0].mxu0
        %v570 = vadd.f32 %v339, %v569
        %v571 = vpop.f32.mrb[0].mxu0
        %v572 = vadd.f32 %v343, %v571
        %v573 = vpop.f32.mrb[0].mxu0
        %v574 = vadd.f32 %v339, %v573
        %v575 = vpop.f32.mrb[0].mxu0
        %v576 = vadd.f32 %v343, %v575
        %577 = vmatprep.mubr.bf16.mxu0 0
        %578 = vmatmul.mubr.bf16.gmra.mrb[0].mxu0 %v407
        %v579 = vpop.f32.mrb[0].mxu0
        %v580 = vadd.f32 %v339, %v579
        %v581 = vpop.f32.mrb[0].mxu0
        %v582 = vadd.f32 %v343, %v581
        %v583 = vpop.f32.mrb[0].mxu0
        %v584 = vadd.f32 %v339, %v583
        %v585 = vpop.f32.mrb[0].mxu0
        %v586 = vadd.f32 %v343, %v585
        %587 = vmatprep.mubr.bf16.mxu0 0
        %588 = vmatmul.mubr.bf16.gmra.mrb[0].mxu0 %v410
        %v589 = vpop.f32.mrb[0].mxu0
        %v590 = vadd.f32 %v339, %v589
        %v591 = vpop.f32.mrb[0].mxu0
        %v592 = vadd.f32 %v343, %v591
        %v593 = vpop.f32.mrb[0].mxu0
        %v594 = vadd.f32 %v339, %v593
        %v595 = vpop.f32.mrb[0].mxu0
        %v596 = vadd.f32 %v343, %v595
        %597 = vmatprep.mubr.bf16.mxu0 0
        %598 = vmatmul.mubr.bf16.gmra.mrb[0].mxu0 %v413
        %v599 = vpop.f32.mrb[0].mxu0
        %v600 = vadd.f32 %v339, %v599
        %v601 = vpop.f32.mrb[0].mxu0
        %v602 = vadd.f32 %v343, %v601
        %v603 = vpop.f32.mrb[0].mxu0
        %v604 = vadd.f32 %v339, %v603
        %v605 = vpop.f32.mrb[0].mxu0
        %v606 = vadd.f32 %v343, %v605
        %607 = vdwg.mxu0
        %v608 = vmax.f32 %v450, 0.0
        %v609 = vmax.f32 %v452, 0.0
        %v610 = vmax.f32 %v454, 0.0
        %v611 = vmax.f32 %v456, 0.0
        %v612 = vmax.f32 %v460, 0.0
        %v613 = vmax.f32 %v462, 0.0
        %v614 = vmax.f32 %v464, 0.0
        %v615 = vmax.f32 %v466, 0.0
        %v616 = vmax.f32 %v470, 0.0
        %v617 = vmax.f32 %v472, 0.0
        %v618 = vmax.f32 %v474, 0.0
        %v619 = vmax.f32 %v476, 0.0
        %v620 = vmax.f32 %v480, 0.0
        %v621 = vmax.f32 %v482, 0.0
        %v622 = vmax.f32 %v484, 0.0
        %v623 = vmax.f32 %v486, 0.0
        %v624 = vmax.f32 %v490, 0.0
        %v625 = vmax.f32 %v492, 0.0
        %v626 = vmax.f32 %v494, 0.0
        %v627 = vmax.f32 %v496, 0.0
        %v628 = vmax.f32 %v500, 0.0
        %v629 = vmax.f32 %v502, 0.0
        %v630 = vmax.f32 %v504, 0.0
        %v631 = vmax.f32 %v506, 0.0
        %v632 = vmax.f32 %v510, 0.0
        %v633 = vmax.f32 %v512, 0.0
        %v634 = vmax.f32 %v514, 0.0
        %v635 = vmax.f32 %v516, 0.0
        %v636 = vmax.f32 %v520, 0.0
        %v637 = vmax.f32 %v522, 0.0
        %v638 = vmax.f32 %v524, 0.0
        %v639 = vmax.f32 %v526, 0.0
        %v640 = vmax.f32 %v530, 0.0
        %v641 = vmax.f32 %v532, 0.0
        %v642 = vmax.f32 %v534, 0.0
        %v643 = vmax.f32 %v536, 0.0
        %v644 = vmax.f32 %v540, 0.0
        %v645 = vmax.f32 %v542, 0.0
        %v646 = vmax.f32 %v544, 0.0
        %v647 = vmax.f32 %v546, 0.0
        %v648 = vmax.f32 %v550, 0.0
        %v649 = vmax.f32 %v552, 0.0
        %v650 = vmax.f32 %v554, 0.0
        %v651 = vmax.f32 %v556, 0.0
        %v652 = vmax.f32 %v560, 0.0
        %v653 = vmax.f32 %v562, 0.0
        %v654 = vmax.f32 %v564, 0.0
        %v655 = vmax.f32 %v566, 0.0
        %v656 = vmax.f32 %v570, 0.0
        %v657 = vmax.f32 %v572, 0.0
        %v658 = vmax.f32 %v574, 0.0
        %v659 = vmax.f32 %v576, 0.0
        %v660 = vmax.f32 %v580, 0.0
        %v661 = vmax.f32 %v582, 0.0
        %v662 = vmax.f32 %v584, 0.0
        %v663 = vmax.f32 %v586, 0.0
        %v664 = vmax.f32 %v590, 0.0
        %v665 = vmax.f32 %v592, 0.0
        %v666 = vmax.f32 %v594, 0.0
        %v667 = vmax.f32 %v596, 0.0
        %v668 = vmax.f32 %v600, 0.0
        %v669 = vmax.f32 %v602, 0.0
        %v670 = vmax.f32 %v604, 0.0
        %v671 = vmax.f32 %v606, 0.0
        %v672 = vpack.c.bf16 %v610, %v608
        %v673 = vpack.c.bf16 %v611, %v609
        %v674 = vpack.c.bf16 %v614, %v612
        %v675 = vpack.c.bf16 %v615, %v613
        %v676 = vpack.c.bf16 %v618, %v616
        %v677 = vpack.c.bf16 %v619, %v617
        %v678 = vpack.c.bf16 %v622, %v620
        %v679 = vpack.c.bf16 %v623, %v621
        %v680 = vpack.c.bf16 %v626, %v624
        %v681 = vpack.c.bf16 %v627, %v625
        %v682 = vpack.c.bf16 %v630, %v628
        %v683 = vpack.c.bf16 %v631, %v629
        %v684 = vpack.c.bf16 %v634, %v632
        %v685 = vpack.c.bf16 %v635, %v633
        %v686 = vpack.c.bf16 %v638, %v636
        %v687 = vpack.c.bf16 %v639, %v637
        %v688 = vpack.c.bf16 %v642, %v640
        %v689 = vpack.c.bf16 %v643, %v641
        %v690 = vpack.c.bf16 %v646, %v644
        %v691 = vpack.c.bf16 %v647, %v645
        %v692 = vpack.c.bf16 %v650, %v648
        %v693 = vpack.c.bf16 %v651, %v649
        %v694 = vpack.c.bf16 %v654, %v652
        %v695 = vpack.c.bf16 %v655, %v653
        %v696 = vpack.c.bf16 %v658, %v656
        %v697 = vpack.c.bf16 %v659, %v657
        %v698 = vpack.c.bf16 %v662, %v660
        %v699 = vpack.c.bf16 %v663, %v661
        %v700 = vpack.c.bf16 %v666, %v664
        %v701 = vpack.c.bf16 %v667, %v665
        %v702 = vpack.c.bf16 %v670, %v668
        %v703 = vpack.c.bf16 %v671, %v669
        %v704 = vld [vmem:[%s3] sm:$0xff]
        %v705 = vld [vmem:[%s3 + $0x8] sm:$0xff]
        %v706 = vld [vmem:[%s3 + $0x10] sm:$0xff]
        %v707 = vld [vmem:[%s3 + $0x18] sm:$0xff]
        %v708 = vld [vmem:[%s3 + $0x20] sm:$0xff]
        %v709 = vld [vmem:[%s3 + $0x28] sm:$0xff]
        %v710 = vld [vmem:[%s3 + $0x30] sm:$0xff]
        %v711 = vld [vmem:[%s3 + $0x38] sm:$0xff]
        %v712 = vld [vmem:[%s3 + $0x40] sm:$0xff]
        %v713 = vld [vmem:[%s3 + $0x48] sm:$0xff]
        %v714 = vld [vmem:[%s3 + $0x50] sm:$0xff]
        %v715 = vld [vmem:[%s3 + $0x58] sm:$0xff]
        %v716 = vld [vmem:[%s3 + $0x60] sm:$0xff]
        %v717 = vld [vmem:[%s3 + $0x68] sm:$0xff]
        %v718 = vld [vmem:[%s3 + $0x70] sm:$0xff]
        %v719 = vld [vmem:[%s3 + $0x78] sm:$0xff]
        %v720 = vld [vmem:[%s3 + $0x80] sm:$0xff]
        %v721 = vld [vmem:[%s3 + $0x88] sm:$0xff]
        %v722 = vld [vmem:[%s3 + $0x90] sm:$0xff]
        %v723 = vld [vmem:[%s3 + $0x98] sm:$0xff]
        %v724 = vld [vmem:[%s3 + $0xa0] sm:$0xff]
        %v725 = vld [vmem:[%s3 + $0xa8] sm:$0xff]
        %v726 = vld [vmem:[%s3 + $0xb0] sm:$0xff]
        %v727 = vld [vmem:[%s3 + $0xb8] sm:$0xff]
        %v728 = vld [vmem:[%s3 + $0xc0] sm:$0xff]
        %v729 = vld [vmem:[%s3 + $0xc8] sm:$0xff]
        %v730 = vld [vmem:[%s3 + $0xd0] sm:$0xff]
        %v731 = vld [vmem:[%s3 + $0xd8] sm:$0xff]
        %v732 = vld [vmem:[%s3 + $0xe0] sm:$0xff]
        %v733 = vld [vmem:[%s3 + $0xe8] sm:$0xff]
        %v734 = vld [vmem:[%s3 + $0xf0] sm:$0xff]
        %v735 = vld [vmem:[%s3 + $0xf8] sm:$0xff]
        %v736 = vld [vmem:[%s4] sm:$0x3]
        %v738 = vlaneseq
        %v739 = vshrl.u32 %v738, 7
        %v740 = vsub.s32 0, %v739
        %v741 = vrot.slane %v736, %v740
        %v742 = vlaneseq
        %v743 = vshrl.u32 %v742, 7
        %v744 = vsub.s32 1, %v743
        %v745 = vrot.slane %v736, %v744
        %v780 = vunpack.c.l.b16 %v704
        %v781 = vunpack.c.h.b16 %v704
        %v782 = vunpack.c.l.b16 %v705
        %v783 = vunpack.c.h.b16 %v705
        %v784 = vunpack.c.l.b16 %v706
        %v785 = vunpack.c.h.b16 %v706
        %v786 = vunpack.c.l.b16 %v707
        %v787 = vunpack.c.h.b16 %v707
        %v788 = vunpack.c.l.b16 %v708
        %v789 = vunpack.c.h.b16 %v708
        %v790 = vunpack.c.l.b16 %v709
        %v791 = vunpack.c.h.b16 %v709
        %v792 = vunpack.c.l.b16 %v710
        %v793 = vunpack.c.h.b16 %v710
        %v794 = vunpack.c.l.b16 %v711
        %v795 = vunpack.c.h.b16 %v711
        %v796 = vunpack.c.l.b16 %v712
        %v797 = vunpack.c.h.b16 %v712
        %v798 = vunpack.c.l.b16 %v713
        %v799 = vunpack.c.h.b16 %v713
        %v800 = vunpack.c.l.b16 %v714
        %v801 = vunpack.c.h.b16 %v714
        %v802 = vunpack.c.l.b16 %v715
        %v803 = vunpack.c.h.b16 %v715
        %v804 = vunpack.c.l.b16 %v716
        %v805 = vunpack.c.h.b16 %v716
        %v806 = vunpack.c.l.b16 %v717
        %v807 = vunpack.c.h.b16 %v717
        %v808 = vunpack.c.l.b16 %v718
        %v809 = vunpack.c.h.b16 %v718
        %v810 = vunpack.c.l.b16 %v719
        %v811 = vunpack.c.h.b16 %v719
        %v812 = vunpack.c.l.b16 %v720
        %v813 = vunpack.c.h.b16 %v720
        %v814 = vunpack.c.l.b16 %v721
        %v815 = vunpack.c.h.b16 %v721
        %v816 = vunpack.c.l.b16 %v722
        %v817 = vunpack.c.h.b16 %v722
        %v818 = vunpack.c.l.b16 %v723
        %v819 = vunpack.c.h.b16 %v723
        %v820 = vunpack.c.l.b16 %v724
        %v821 = vunpack.c.h.b16 %v724
        %v822 = vunpack.c.l.b16 %v725
        %v823 = vunpack.c.h.b16 %v725
        %v824 = vunpack.c.l.b16 %v726
        %v825 = vunpack.c.h.b16 %v726
        %v826 = vunpack.c.l.b16 %v727
        %v827 = vunpack.c.h.b16 %v727
        %v828 = vunpack.c.l.b16 %v728
        %v829 = vunpack.c.h.b16 %v728
        %v830 = vunpack.c.l.b16 %v729
        %v831 = vunpack.c.h.b16 %v729
        %v832 = vunpack.c.l.b16 %v730
        %v833 = vunpack.c.h.b16 %v730
        %v834 = vunpack.c.l.b16 %v731
        %v835 = vunpack.c.h.b16 %v731
        %v836 = vunpack.c.l.b16 %v732
        %v837 = vunpack.c.h.b16 %v732
        %v838 = vunpack.c.l.b16 %v733
        %v839 = vunpack.c.h.b16 %v733
        %v840 = vunpack.c.l.b16 %v734
        %v841 = vunpack.c.h.b16 %v734
        %v842 = vunpack.c.l.b16 %v735
        %v843 = vunpack.c.h.b16 %v735
        %v844 = vpack.c.b16 %v782, %v780
        %v845 = vpack.c.b16 %v783, %v781
        %v846 = vpack.c.b16 %v786, %v784
        %v847 = vpack.c.b16 %v787, %v785
        %v848 = vpack.c.b16 %v790, %v788
        %v849 = vpack.c.b16 %v791, %v789
        %v850 = vpack.c.b16 %v794, %v792
        %v851 = vpack.c.b16 %v795, %v793
        %v852 = vpack.c.b16 %v798, %v796
        %v853 = vpack.c.b16 %v799, %v797
        %v854 = vpack.c.b16 %v802, %v800
        %v855 = vpack.c.b16 %v803, %v801
        %v856 = vpack.c.b16 %v806, %v804
        %v857 = vpack.c.b16 %v807, %v805
        %v858 = vpack.c.b16 %v810, %v808
        %v859 = vpack.c.b16 %v811, %v809
        %v860 = vpack.c.b16 %v814, %v812
        %v861 = vpack.c.b16 %v815, %v813
        %v862 = vpack.c.b16 %v818, %v816
        %v863 = vpack.c.b16 %v819, %v817
        %v864 = vpack.c.b16 %v822, %v820
        %v865 = vpack.c.b16 %v823, %v821
        %v866 = vpack.c.b16 %v826, %v824
        %v867 = vpack.c.b16 %v827, %v825
        %v868 = vpack.c.b16 %v830, %v828
        %v869 = vpack.c.b16 %v831, %v829
        %v870 = vpack.c.b16 %v834, %v832
        %v871 = vpack.c.b16 %v835, %v833
        %v872 = vpack.c.b16 %v838, %v836
        %v873 = vpack.c.b16 %v839, %v837
        %v874 = vpack.c.b16 %v842, %v840
        %v875 = vpack.c.b16 %v843, %v841
        %908 = vmatprep.subr.bf16.mxu0 %v845
        %909 = vmatpush1.bf16.msra.mxu0 %v844
        %910 = vmatprep.subr.bf16.mxu0 %v847
        %911 = vmatpush1.bf16.msra.mxu0 %v846
        %912 = vmatprep.subr.bf16.mxu0 %v849
        %913 = vmatpush1.bf16.msra.mxu0 %v848
        %914 = vmatprep.subr.bf16.mxu0 %v851
        %915 = vmatpush1.bf16.msra.mxu0 %v850
        %916 = vmatprep.subr.bf16.mxu0 %v853
        %917 = vmatpush1.bf16.msra.mxu0 %v852
        %918 = vmatprep.subr.bf16.mxu0 %v855
        %919 = vmatpush1.bf16.msra.mxu0 %v854
        %920 = vmatprep.subr.bf16.mxu0 %v857
        %921 = vmatpush1.bf16.msra.mxu0 %v856
        %922 = vmatprep.subr.bf16.mxu0 %v859
        %923 = vmatpush1.bf16.msra.mxu0 %v858
        %924 = vmatprep.subr.bf16.mxu0 %v861
        %925 = vmatpush1.bf16.msra.mxu0 %v860
        %926 = vmatprep.subr.bf16.mxu0 %v863
        %927 = vmatpush1.bf16.msra.mxu0 %v862
        %928 = vmatprep.subr.bf16.mxu0 %v865
        %929 = vmatpush1.bf16.msra.mxu0 %v864
        %930 = vmatprep.subr.bf16.mxu0 %v867
        %931 = vmatpush1.bf16.msra.mxu0 %v866
        %932 = vmatprep.subr.bf16.mxu0 %v869
        %933 = vmatpush1.bf16.msra.mxu0 %v868
        %934 = vmatprep.subr.bf16.mxu0 %v871
        %935 = vmatpush1.bf16.msra.mxu0 %v870
        %936 = vmatprep.subr.bf16.mxu0 %v873
        %937 = vmatpush1.bf16.msra.mxu0 %v872
        %938 = vmatprep.subr.bf16.mxu0 %v875
        %939 = vmatpush1.bf16.msra.mxu0 %v874
        %940 = vmatprep.mubr.bf16.mxu0 %v673
        %941 = vmatmul.mubr.bf16.gmra.mrb[0].mxu0 %v672
        %v942 = vpop.f32.mrb[0].mxu0
        %v943 = vadd.f32 %v741, %v942
        %v944 = vpop.f32.mrb[0].mxu0
        %v945 = vadd.f32 %v745, %v944
        %v946 = vpop.f32.mrb[0].mxu0
        %v947 = vadd.f32 %v741, %v946
        %v948 = vpop.f32.mrb[0].mxu0
        %v949 = vadd.f32 %v745, %v948
        %950 = vmatprep.mubr.bf16.mxu0 %v675
        %951 = vmatmul.mubr.bf16.gmra.mrb[0].mxu0 %v674
        %v952 = vpop.f32.mrb[0].mxu0
        %v953 = vadd.f32 %v741, %v952
        %v954 = vpop.f32.mrb[0].mxu0
        %v955 = vadd.f32 %v745, %v954
        %v956 = vpop.f32.mrb[0].mxu0
        %v957 = vadd.f32 %v741, %v956
        %v958 = vpop.f32.mrb[0].mxu0
        %v959 = vadd.f32 %v745, %v958
        %960 = vmatprep.mubr.bf16.mxu0 %v677
        %961 = vmatmul.mubr.bf16.gmra.mrb[0].mxu0 %v676
        %v962 = vpop.f32.mrb[0].mxu0
        %v963 = vadd.f32 %v741, %v962
        %v964 = vpop.f32.mrb[0].mxu0
        %v965 = vadd.f32 %v745, %v964
        %v966 = vpop.f32.mrb[0].mxu0
        %v967 = vadd.f32 %v741, %v966
        %v968 = vpop.f32.mrb[0].mxu0
        %v969 = vadd.f32 %v745, %v968
        %970 = vmatprep.mubr.bf16.mxu0 %v679
        %971 = vmatmul.mubr.bf16.gmra.mrb[0].mxu0 %v678
        %v972 = vpop.f32.mrb[0].mxu0
        %v973 = vadd.f32 %v741, %v972
        %v974 = vpop.f32.mrb[0].mxu0
        %v975 = vadd.f32 %v745, %v974
        %v976 = vpop.f32.mrb[0].mxu0
        %v977 = vadd.f32 %v741, %v976
        %v978 = vpop.f32.mrb[0].mxu0
        %v979 = vadd.f32 %v745, %v978
        %980 = vmatprep.mubr.bf16.mxu0 %v681
        %981 = vmatmul.mubr.bf16.gmra.mrb[0].mxu0 %v680
        %v982 = vpop.f32.mrb[0].mxu0
        %v983 = vadd.f32 %v741, %v982
        %v984 = vpop.f32.mrb[0].mxu0
        %v985 = vadd.f32 %v745, %v984
        %v986 = vpop.f32.mrb[0].mxu0
        %v987 = vadd.f32 %v741, %v986
        %v988 = vpop.f32.mrb[0].mxu0
        %v989 = vadd.f32 %v745, %v988
        %990 = vmatprep.mubr.bf16.mxu0 %v683
        %991 = vmatmul.mubr.bf16.gmra.mrb[0].mxu0 %v682
        %v992 = vpop.f32.mrb[0].mxu0
        %v993 = vadd.f32 %v741, %v992
        %v994 = vpop.f32.mrb[0].mxu0
        %v995 = vadd.f32 %v745, %v994
        %v996 = vpop.f32.mrb[0].mxu0
        %v997 = vadd.f32 %v741, %v996
        %v998 = vpop.f32.mrb[0].mxu0
        %v999 = vadd.f32 %v745, %v998
        %1000 = vmatprep.mubr.bf16.mxu0 %v685
        %1001 = vmatmul.mubr.bf16.gmra.mrb[0].mxu0 %v684
        %v1002 = vpop.f32.mrb[0].mxu0
        %v1003 = vadd.f32 %v741, %v1002
        %v1004 = vpop.f32.mrb[0].mxu0
        %v1005 = vadd.f32 %v745, %v1004
        %v1006 = vpop.f32.mrb[0].mxu0
        %v1007 = vadd.f32 %v741, %v1006
        %v1008 = vpop.f32.mrb[0].mxu0
        %v1009 = vadd.f32 %v745, %v1008
        %1010 = vmatprep.mubr.bf16.mxu0 %v687
        %1011 = vmatmul.mubr.bf16.gmra.mrb[0].mxu0 %v686
        %v1012 = vpop.f32.mrb[0].mxu0
        %v1013 = vadd.f32 %v741, %v1012
        %v1014 = vpop.f32.mrb[0].mxu0
        %v1015 = vadd.f32 %v745, %v1014
        %v1016 = vpop.f32.mrb[0].mxu0
        %v1017 = vadd.f32 %v741, %v1016
        %v1018 = vpop.f32.mrb[0].mxu0
        %v1019 = vadd.f32 %v745, %v1018
        %1020 = vmatprep.mubr.bf16.mxu0 %v689
        %1021 = vmatmul.mubr.bf16.gmra.mrb[0].mxu0 %v688
        %v1022 = vpop.f32.mrb[0].mxu0
        %v1023 = vadd.f32 %v741, %v1022
        %v1024 = vpop.f32.mrb[0].mxu0
        %v1025 = vadd.f32 %v745, %v1024
        %v1026 = vpop.f32.mrb[0].mxu0
        %v1027 = vadd.f32 %v741, %v1026
        %v1028 = vpop.f32.mrb[0].mxu0
        %v1029 = vadd.f32 %v745, %v1028
        %1030 = vmatprep.mubr.bf16.mxu0 %v691
        %1031 = vmatmul.mubr.bf16.gmra.mrb[0].mxu0 %v690
        %v1032 = vpop.f32.mrb[0].mxu0
        %v1033 = vadd.f32 %v741, %v1032
        %v1034 = vpop.f32.mrb[0].mxu0
        %v1035 = vadd.f32 %v745, %v1034
        %v1036 = vpop.f32.mrb[0].mxu0
        %v1037 = vadd.f32 %v741, %v1036
        %v1038 = vpop.f32.mrb[0].mxu0
        %v1039 = vadd.f32 %v745, %v1038
        %1040 = vmatprep.mubr.bf16.mxu0 %v693
        %1041 = vmatmul.mubr.bf16.gmra.mrb[0].mxu0 %v692
        %v1042 = vpop.f32.mrb[0].mxu0
        %v1043 = vadd.f32 %v741, %v1042
        %v1044 = vpop.f32.mrb[0].mxu0
        %v1045 = vadd.f32 %v745, %v1044
        %v1046 = vpop.f32.mrb[0].mxu0
        %v1047 = vadd.f32 %v741, %v1046
        %v1048 = vpop.f32.mrb[0].mxu0
        %v1049 = vadd.f32 %v745, %v1048
        %1050 = vmatprep.mubr.bf16.mxu0 %v695
        %1051 = vmatmul.mubr.bf16.gmra.mrb[0].mxu0 %v694
        %v1052 = vpop.f32.mrb[0].mxu0
        %v1053 = vadd.f32 %v741, %v1052
        %v1054 = vpop.f32.mrb[0].mxu0
        %v1055 = vadd.f32 %v745, %v1054
        %v1056 = vpop.f32.mrb[0].mxu0
        %v1057 = vadd.f32 %v741, %v1056
        %v1058 = vpop.f32.mrb[0].mxu0
        %v1059 = vadd.f32 %v745, %v1058
        %1060 = vmatprep.mubr.bf16.mxu0 %v697
        %1061 = vmatmul.mubr.bf16.gmra.mrb[0].mxu0 %v696
        %v1062 = vpop.f32.mrb[0].mxu0
        %v1063 = vadd.f32 %v741, %v1062
        %v1064 = vpop.f32.mrb[0].mxu0
        %v1065 = vadd.f32 %v745, %v1064
        %v1066 = vpop.f32.mrb[0].mxu0
        %v1067 = vadd.f32 %v741, %v1066
        %v1068 = vpop.f32.mrb[0].mxu0
        %v1069 = vadd.f32 %v745, %v1068
        %1070 = vmatprep.mubr.bf16.mxu0 %v699
        %1071 = vmatmul.mubr.bf16.gmra.mrb[0].mxu0 %v698
        %v1072 = vpop.f32.mrb[0].mxu0
        %v1073 = vadd.f32 %v741, %v1072
        %v1074 = vpop.f32.mrb[0].mxu0
        %v1075 = vadd.f32 %v745, %v1074
        %v1076 = vpop.f32.mrb[0].mxu0
        %v1077 = vadd.f32 %v741, %v1076
        %v1078 = vpop.f32.mrb[0].mxu0
        %v1079 = vadd.f32 %v745, %v1078
        %1080 = vmatprep.mubr.bf16.mxu0 %v701
        %1081 = vmatmul.mubr.bf16.gmra.mrb[0].mxu0 %v700
        %v1082 = vpop.f32.mrb[0].mxu0
        %v1083 = vadd.f32 %v741, %v1082
        %v1084 = vpop.f32.mrb[0].mxu0
        %v1085 = vadd.f32 %v745, %v1084
        %v1086 = vpop.f32.mrb[0].mxu0
        %v1087 = vadd.f32 %v741, %v1086
        %v1088 = vpop.f32.mrb[0].mxu0
        %v1089 = vadd.f32 %v745, %v1088
        %1090 = vmatprep.mubr.bf16.mxu0 %v703
        %1091 = vmatmul.mubr.bf16.gmra.mrb[0].mxu0 %v702
        %v1092 = vpop.f32.mrb[0].mxu0
        %v1093 = vadd.f32 %v741, %v1092
        %v1094 = vpop.f32.mrb[0].mxu0
        %v1095 = vadd.f32 %v745, %v1094
        %v1096 = vpop.f32.mrb[0].mxu0
        %v1097 = vadd.f32 %v741, %v1096
        %v1098 = vpop.f32.mrb[0].mxu0
        %v1099 = vadd.f32 %v745, %v1098
        %1100 = vdwg.mxu0
        %v1101 = vmax.f32 %v943, 0.0
        %v1102 = vmax.f32 %v945, 0.0
        %v1103 = vmax.f32 %v947, 0.0
        %v1104 = vmax.f32 %v949, 0.0
        %v1105 = vmax.f32 %v953, 0.0
        %v1106 = vmax.f32 %v955, 0.0
        %v1107 = vmax.f32 %v957, 0.0
        %v1108 = vmax.f32 %v959, 0.0
        %v1109 = vmax.f32 %v963, 0.0
        %v1110 = vmax.f32 %v965, 0.0
        %v1111 = vmax.f32 %v967, 0.0
        %v1112 = vmax.f32 %v969, 0.0
        %v1113 = vmax.f32 %v973, 0.0
        %v1114 = vmax.f32 %v975, 0.0
        %v1115 = vmax.f32 %v977, 0.0
        %v1116 = vmax.f32 %v979, 0.0
        %v1117 = vmax.f32 %v983, 0.0
        %v1118 = vmax.f32 %v985, 0.0
        %v1119 = vmax.f32 %v987, 0.0
        %v1120 = vmax.f32 %v989, 0.0
        %v1121 = vmax.f32 %v993, 0.0
        %v1122 = vmax.f32 %v995, 0.0
        %v1123 = vmax.f32 %v997, 0.0
        %v1124 = vmax.f32 %v999, 0.0
        %v1125 = vmax.f32 %v1003, 0.0
        %v1126 = vmax.f32 %v1005, 0.0
        %v1127 = vmax.f32 %v1007, 0.0
        %v1128 = vmax.f32 %v1009, 0.0
        %v1129 = vmax.f32 %v1013, 0.0
        %v1130 = vmax.f32 %v1015, 0.0
        %v1131 = vmax.f32 %v1017, 0.0
        %v1132 = vmax.f32 %v1019, 0.0
        %v1133 = vmax.f32 %v1023, 0.0
        %v1134 = vmax.f32 %v1025, 0.0
        %v1135 = vmax.f32 %v1027, 0.0
        %v1136 = vmax.f32 %v1029, 0.0
        %v1137 = vmax.f32 %v1033, 0.0
        %v1138 = vmax.f32 %v1035, 0.0
        %v1139 = vmax.f32 %v1037, 0.0
        %v1140 = vmax.f32 %v1039, 0.0
        %v1141 = vmax.f32 %v1043, 0.0
        %v1142 = vmax.f32 %v1045, 0.0
        %v1143 = vmax.f32 %v1047, 0.0
        %v1144 = vmax.f32 %v1049, 0.0
        %v1145 = vmax.f32 %v1053, 0.0
        %v1146 = vmax.f32 %v1055, 0.0
        %v1147 = vmax.f32 %v1057, 0.0
        %v1148 = vmax.f32 %v1059, 0.0
        %v1149 = vmax.f32 %v1063, 0.0
        %v1150 = vmax.f32 %v1065, 0.0
        %v1151 = vmax.f32 %v1067, 0.0
        %v1152 = vmax.f32 %v1069, 0.0
        %v1153 = vmax.f32 %v1073, 0.0
        %v1154 = vmax.f32 %v1075, 0.0
        %v1155 = vmax.f32 %v1077, 0.0
        %v1156 = vmax.f32 %v1079, 0.0
        %v1157 = vmax.f32 %v1083, 0.0
        %v1158 = vmax.f32 %v1085, 0.0
        %v1159 = vmax.f32 %v1087, 0.0
        %v1160 = vmax.f32 %v1089, 0.0
        %v1161 = vmax.f32 %v1093, 0.0
        %v1162 = vmax.f32 %v1095, 0.0
        %v1163 = vmax.f32 %v1097, 0.0
        %v1164 = vmax.f32 %v1099, 0.0
        %v1165 = vld [vmem:[%s5] sm:$0x3]
        %v1167 = vlaneseq
        %v1168 = vshrl.u32 %v1167, 7
        %v1169 = vsub.s32 0, %v1168
        %v1170 = vrot.slane %v1165, %v1169
        %v1171 = vlaneseq
        %v1172 = vshrl.u32 %v1171, 7
        %v1173 = vsub.s32 1, %v1172
        %v1174 = vrot.slane %v1165, %v1173
        %v1177 = vmul.f32 %v1101, %v1170
        %v1178 = vmul.f32 %v1102, %v1174
        %v1179 = vmul.f32 %v1103, %v1170
        %v1180 = vmul.f32 %v1104, %v1174
        %v1181 = vmul.f32 %v1105, %v1170
        %v1182 = vmul.f32 %v1106, %v1174
        %v1183 = vmul.f32 %v1107, %v1170
        %v1184 = vmul.f32 %v1108, %v1174
        %v1185 = vmul.f32 %v1109, %v1170
        %v1186 = vmul.f32 %v1110, %v1174
        %v1187 = vmul.f32 %v1111, %v1170
        %v1188 = vmul.f32 %v1112, %v1174
        %v1189 = vmul.f32 %v1113, %v1170
        %v1190 = vmul.f32 %v1114, %v1174
        %v1191 = vmul.f32 %v1115, %v1170
        %v1192 = vmul.f32 %v1116, %v1174
        %v1193 = vmul.f32 %v1117, %v1170
        %v1194 = vmul.f32 %v1118, %v1174
        %v1195 = vmul.f32 %v1119, %v1170
        %v1196 = vmul.f32 %v1120, %v1174
        %v1197 = vmul.f32 %v1121, %v1170
        %v1198 = vmul.f32 %v1122, %v1174
        %v1199 = vmul.f32 %v1123, %v1170
        %v1200 = vmul.f32 %v1124, %v1174
        %v1201 = vmul.f32 %v1125, %v1170
        %v1202 = vmul.f32 %v1126, %v1174
        %v1203 = vmul.f32 %v1127, %v1170
        %v1204 = vmul.f32 %v1128, %v1174
        %v1205 = vmul.f32 %v1129, %v1170
        %v1206 = vmul.f32 %v1130, %v1174
        %v1207 = vmul.f32 %v1131, %v1170
        %v1208 = vmul.f32 %v1132, %v1174
        %v1209 = vmul.f32 %v1133, %v1170
        %v1210 = vmul.f32 %v1134, %v1174
        %v1211 = vmul.f32 %v1135, %v1170
        %v1212 = vmul.f32 %v1136, %v1174
        %v1213 = vmul.f32 %v1137, %v1170
        %v1214 = vmul.f32 %v1138, %v1174
        %v1215 = vmul.f32 %v1139, %v1170
        %v1216 = vmul.f32 %v1140, %v1174
        %v1217 = vmul.f32 %v1141, %v1170
        %v1218 = vmul.f32 %v1142, %v1174
        %v1219 = vmul.f32 %v1143, %v1170
        %v1220 = vmul.f32 %v1144, %v1174
        %v1221 = vmul.f32 %v1145, %v1170
        %v1222 = vmul.f32 %v1146, %v1174
        %v1223 = vmul.f32 %v1147, %v1170
        %v1224 = vmul.f32 %v1148, %v1174
        %v1225 = vmul.f32 %v1149, %v1170
        %v1226 = vmul.f32 %v1150, %v1174
        %v1227 = vmul.f32 %v1151, %v1170
        %v1228 = vmul.f32 %v1152, %v1174
        %v1229 = vmul.f32 %v1153, %v1170
        %v1230 = vmul.f32 %v1154, %v1174
        %v1231 = vmul.f32 %v1155, %v1170
        %v1232 = vmul.f32 %v1156, %v1174
        %v1233 = vmul.f32 %v1157, %v1170
        %v1234 = vmul.f32 %v1158, %v1174
        %v1235 = vmul.f32 %v1159, %v1170
        %v1236 = vmul.f32 %v1160, %v1174
        %v1237 = vmul.f32 %v1161, %v1170
        %v1238 = vmul.f32 %v1162, %v1174
        %v1239 = vmul.f32 %v1163, %v1170
        %v1240 = vmul.f32 %v1164, %v1174
        %v1241 = vadd.f32 %v1177, %v1178
        %1242 = vadd.xlane.f32.xlu0 %v1241
        %v1243 = vpop.xlane.xlu0 %1242
        %v1244 = vadd.f32 %v1179, %v1180
        %1245 = vadd.xlane.f32.xlu0 %v1244
        %v1246 = vpop.xlane.xlu0 %1245
        %v1247 = vadd.f32 %v1181, %v1182
        %1248 = vadd.xlane.f32.xlu0 %v1247
        %v1249 = vpop.xlane.xlu0 %1248
        %v1250 = vadd.f32 %v1183, %v1184
        %1251 = vadd.xlane.f32.xlu0 %v1250
        %v1252 = vpop.xlane.xlu0 %1251
        %v1253 = vadd.f32 %v1185, %v1186
        %1254 = vadd.xlane.f32.xlu0 %v1253
        %v1255 = vpop.xlane.xlu0 %1254
        %v1256 = vadd.f32 %v1187, %v1188
        %1257 = vadd.xlane.f32.xlu0 %v1256
        %v1258 = vpop.xlane.xlu0 %1257
        %v1259 = vadd.f32 %v1189, %v1190
        %1260 = vadd.xlane.f32.xlu0 %v1259
        %v1261 = vpop.xlane.xlu0 %1260
        %v1262 = vadd.f32 %v1191, %v1192
        %1263 = vadd.xlane.f32.xlu0 %v1262
        %v1264 = vpop.xlane.xlu0 %1263
        %v1265 = vadd.f32 %v1193, %v1194
        %1266 = vadd.xlane.f32.xlu0 %v1265
        %v1267 = vpop.xlane.xlu0 %1266
        %v1268 = vadd.f32 %v1195, %v1196
        %1269 = vadd.xlane.f32.xlu0 %v1268
        %v1270 = vpop.xlane.xlu0 %1269
        %v1271 = vadd.f32 %v1197, %v1198
        %1272 = vadd.xlane.f32.xlu0 %v1271
        %v1273 = vpop.xlane.xlu0 %1272
        %v1274 = vadd.f32 %v1199, %v1200
        %1275 = vadd.xlane.f32.xlu0 %v1274
        %v1276 = vpop.xlane.xlu0 %1275
        %v1277 = vadd.f32 %v1201, %v1202
        %1278 = vadd.xlane.f32.xlu0 %v1277
        %v1279 = vpop.xlane.xlu0 %1278
        %v1280 = vadd.f32 %v1203, %v1204
        %1281 = vadd.xlane.f32.xlu0 %v1280
        %v1282 = vpop.xlane.xlu0 %1281
        %v1283 = vadd.f32 %v1205, %v1206
        %1284 = vadd.xlane.f32.xlu0 %v1283
        %v1285 = vpop.xlane.xlu0 %1284
        %v1286 = vadd.f32 %v1207, %v1208
        %1287 = vadd.xlane.f32.xlu0 %v1286
        %v1288 = vpop.xlane.xlu0 %1287
        %v1289 = vadd.f32 %v1209, %v1210
        %1290 = vadd.xlane.f32.xlu0 %v1289
        %v1291 = vpop.xlane.xlu0 %1290
        %v1292 = vadd.f32 %v1211, %v1212
        %1293 = vadd.xlane.f32.xlu0 %v1292
        %v1294 = vpop.xlane.xlu0 %1293
        %v1295 = vadd.f32 %v1213, %v1214
        %1296 = vadd.xlane.f32.xlu0 %v1295
        %v1297 = vpop.xlane.xlu0 %1296
        %v1298 = vadd.f32 %v1215, %v1216
        %1299 = vadd.xlane.f32.xlu0 %v1298
        %v1300 = vpop.xlane.xlu0 %1299
        %v1301 = vadd.f32 %v1217, %v1218
        %1302 = vadd.xlane.f32.xlu0 %v1301
        %v1303 = vpop.xlane.xlu0 %1302
        %v1304 = vadd.f32 %v1219, %v1220
        %1305 = vadd.xlane.f32.xlu0 %v1304
        %v1306 = vpop.xlane.xlu0 %1305
        %v1307 = vadd.f32 %v1221, %v1222
        %1308 = vadd.xlane.f32.xlu0 %v1307
        %v1309 = vpop.xlane.xlu0 %1308
        %v1310 = vadd.f32 %v1223, %v1224
        %1311 = vadd.xlane.f32.xlu0 %v1310
        %v1312 = vpop.xlane.xlu0 %1311
        %v1313 = vadd.f32 %v1225, %v1226
        %1314 = vadd.xlane.f32.xlu0 %v1313
        %v1315 = vpop.xlane.xlu0 %1314
        %v1316 = vadd.f32 %v1227, %v1228
        %1317 = vadd.xlane.f32.xlu0 %v1316
        %v1318 = vpop.xlane.xlu0 %1317
        %v1319 = vadd.f32 %v1229, %v1230
        %1320 = vadd.xlane.f32.xlu0 %v1319
        %v1321 = vpop.xlane.xlu0 %1320
        %v1322 = vadd.f32 %v1231, %v1232
        %1323 = vadd.xlane.f32.xlu0 %v1322
        %v1324 = vpop.xlane.xlu0 %1323
        %v1325 = vadd.f32 %v1233, %v1234
        %1326 = vadd.xlane.f32.xlu0 %v1325
        %v1327 = vpop.xlane.xlu0 %1326
        %v1328 = vadd.f32 %v1235, %v1236
        %1329 = vadd.xlane.f32.xlu0 %v1328
        %v1330 = vpop.xlane.xlu0 %1329
        %v1331 = vadd.f32 %v1237, %v1238
        %1332 = vadd.xlane.f32.xlu0 %v1331
        %v1333 = vpop.xlane.xlu0 %1332
        %v1334 = vadd.f32 %v1239, %v1240
        %1335 = vadd.xlane.f32.xlu0 %v1334
        %v1336 = vpop.xlane.xlu0 %1335
        %s1337 = sld [smem:[#allocation2]]
        %v1338 = vstv %s1337
        %v1339 = vadd.f32 %v1243, %v1338
        %v1340 = vadd.f32 %v1246, %v1338
        %v1341 = vadd.f32 %v1249, %v1338
        %v1342 = vadd.f32 %v1252, %v1338
        %v1343 = vadd.f32 %v1255, %v1338
        %v1344 = vadd.f32 %v1258, %v1338
        %v1345 = vadd.f32 %v1261, %v1338
        %v1346 = vadd.f32 %v1264, %v1338
        %v1347 = vadd.f32 %v1267, %v1338
        %v1348 = vadd.f32 %v1270, %v1338
        %v1349 = vadd.f32 %v1273, %v1338
        %v1350 = vadd.f32 %v1276, %v1338
        %v1351 = vadd.f32 %v1279, %v1338
        %v1352 = vadd.f32 %v1282, %v1338
        %v1353 = vadd.f32 %v1285, %v1338
        %v1354 = vadd.f32 %v1288, %v1338
        %v1355 = vadd.f32 %v1291, %v1338
        %v1356 = vadd.f32 %v1294, %v1338
        %v1357 = vadd.f32 %v1297, %v1338
        %v1358 = vadd.f32 %v1300, %v1338
        %v1359 = vadd.f32 %v1303, %v1338
        %v1360 = vadd.f32 %v1306, %v1338
        %v1361 = vadd.f32 %v1309, %v1338
        %v1362 = vadd.f32 %v1312, %v1338
        %v1363 = vadd.f32 %v1315, %v1338
        %v1364 = vadd.f32 %v1318, %v1338
        %v1365 = vadd.f32 %v1321, %v1338
        %v1366 = vadd.f32 %v1324, %v1338
        %v1367 = vadd.f32 %v1327, %v1338
        %v1368 = vadd.f32 %v1330, %v1338
        %v1369 = vadd.f32 %v1333, %v1338
        %v1370 = vadd.f32 %v1336, %v1338
        %v1403 = vlaneseq
        %v1404 = vshrl.u32 %v1403, 7
        %v1405 = vsub.s32 0, %v1404
        %v1406 = vrot.slane %v1339, %v1405
        %v1407 = vlaneseq
        %v1408 = vshrl.u32 %v1407, 7
        %v1409 = vsub.s32 1, %v1408
        %v1410 = vrot.slane %v1339, %v1409
        %v1411 = vlaneseq
        %v1412 = vshrl.u32 %v1411, 7
        %v1413 = vsub.s32 2, %v1412
        %v1414 = vrot.slane %v1339, %v1413
        %v1415 = vlaneseq
        %v1416 = vshrl.u32 %v1415, 7
        %v1417 = vsub.s32 3, %v1416
        %v1418 = vrot.slane %v1339, %v1417
        %v1419 = vlaneseq
        %v1420 = vshrl.u32 %v1419, 7
        %v1421 = vsub.s32 4, %v1420
        %v1422 = vrot.slane %v1339, %v1421
        %v1423 = vlaneseq
        %v1424 = vshrl.u32 %v1423, 7
        %v1425 = vsub.s32 5, %v1424
        %v1426 = vrot.slane %v1339, %v1425
        %v1427 = vlaneseq
        %v1428 = vshrl.u32 %v1427, 7
        %v1429 = vsub.s32 6, %v1428
        %v1430 = vrot.slane %v1339, %v1429
        %v1431 = vlaneseq
        %v1432 = vshrl.u32 %v1431, 7
        %v1433 = vsub.s32 7, %v1432
        %v1434 = vrot.slane %v1339, %v1433
        %v1435 = vlaneseq
        %v1436 = vshrl.u32 %v1435, 7
        %v1437 = vsub.s32 0, %v1436
        %v1438 = vrot.slane %v1340, %v1437
        %v1439 = vlaneseq
        %v1440 = vshrl.u32 %v1439, 7
        %v1441 = vsub.s32 1, %v1440
        %v1442 = vrot.slane %v1340, %v1441
        %v1443 = vlaneseq
        %v1444 = vshrl.u32 %v1443, 7
        %v1445 = vsub.s32 2, %v1444
        %v1446 = vrot.slane %v1340, %v1445
        %v1447 = vlaneseq
        %v1448 = vshrl.u32 %v1447, 7
        %v1449 = vsub.s32 3, %v1448
        %v1450 = vrot.slane %v1340, %v1449
        %v1451 = vlaneseq
        %v1452 = vshrl.u32 %v1451, 7
        %v1453 = vsub.s32 4, %v1452
        %v1454 = vrot.slane %v1340, %v1453
        %v1455 = vlaneseq
        %v1456 = vshrl.u32 %v1455, 7
        %v1457 = vsub.s32 5, %v1456
        %v1458 = vrot.slane %v1340, %v1457
        %v1459 = vlaneseq
        %v1460 = vshrl.u32 %v1459, 7
        %v1461 = vsub.s32 6, %v1460
        %v1462 = vrot.slane %v1340, %v1461
        %v1463 = vlaneseq
        %v1464 = vshrl.u32 %v1463, 7
        %v1465 = vsub.s32 7, %v1464
        %v1466 = vrot.slane %v1340, %v1465
        %v1467 = vlaneseq
        %v1468 = vshrl.u32 %v1467, 7
        %v1469 = vsub.s32 0, %v1468
        %v1470 = vrot.slane %v1341, %v1469
        %v1471 = vlaneseq
        %v1472 = vshrl.u32 %v1471, 7
        %v1473 = vsub.s32 1, %v1472
        %v1474 = vrot.slane %v1341, %v1473
        %v1475 = vlaneseq
        %v1476 = vshrl.u32 %v1475, 7
        %v1477 = vsub.s32 2, %v1476
        %v1478 = vrot.slane %v1341, %v1477
        %v1479 = vlaneseq
        %v1480 = vshrl.u32 %v1479, 7
        %v1481 = vsub.s32 3, %v1480
        %v1482 = vrot.slane %v1341, %v1481
        %v1483 = vlaneseq
        %v1484 = vshrl.u32 %v1483, 7
        %v1485 = vsub.s32 4, %v1484
        %v1486 = vrot.slane %v1341, %v1485
        %v1487 = vlaneseq
        %v1488 = vshrl.u32 %v1487, 7
        %v1489 = vsub.s32 5, %v1488
        %v1490 = vrot.slane %v1341, %v1489
        %v1491 = vlaneseq
        %v1492 = vshrl.u32 %v1491, 7
        %v1493 = vsub.s32 6, %v1492
        %v1494 = vrot.slane %v1341, %v1493
        %v1495 = vlaneseq
        %v1496 = vshrl.u32 %v1495, 7
        %v1497 = vsub.s32 7, %v1496
        %v1498 = vrot.slane %v1341, %v1497
        %v1499 = vlaneseq
        %v1500 = vshrl.u32 %v1499, 7
        %v1501 = vsub.s32 0, %v1500
        %v1502 = vrot.slane %v1342, %v1501
        %v1503 = vlaneseq
        %v1504 = vshrl.u32 %v1503, 7
        %v1505 = vsub.s32 1, %v1504
        %v1506 = vrot.slane %v1342, %v1505
        %v1507 = vlaneseq
        %v1508 = vshrl.u32 %v1507, 7
        %v1509 = vsub.s32 2, %v1508
        %v1510 = vrot.slane %v1342, %v1509
        %v1511 = vlaneseq
        %v1512 = vshrl.u32 %v1511, 7
        %v1513 = vsub.s32 3, %v1512
        %v1514 = vrot.slane %v1342, %v1513
        %v1515 = vlaneseq
        %v1516 = vshrl.u32 %v1515, 7
        %v1517 = vsub.s32 4, %v1516
        %v1518 = vrot.slane %v1342, %v1517
        %v1519 = vlaneseq
        %v1520 = vshrl.u32 %v1519, 7
        %v1521 = vsub.s32 5, %v1520
        %v1522 = vrot.slane %v1342, %v1521
        %v1523 = vlaneseq
        %v1524 = vshrl.u32 %v1523, 7
        %v1525 = vsub.s32 6, %v1524
        %v1526 = vrot.slane %v1342, %v1525
        %v1527 = vlaneseq
        %v1528 = vshrl.u32 %v1527, 7
        %v1529 = vsub.s32 7, %v1528
        %v1530 = vrot.slane %v1342, %v1529
        %v1531 = vlaneseq
        %v1532 = vshrl.u32 %v1531, 7
        %v1533 = vsub.s32 0, %v1532
        %v1534 = vrot.slane %v1343, %v1533
        %v1535 = vlaneseq
        %v1536 = vshrl.u32 %v1535, 7
        %v1537 = vsub.s32 1, %v1536
        %v1538 = vrot.slane %v1343, %v1537
        %v1539 = vlaneseq
        %v1540 = vshrl.u32 %v1539, 7
        %v1541 = vsub.s32 2, %v1540
        %v1542 = vrot.slane %v1343, %v1541
        %v1543 = vlaneseq
        %v1544 = vshrl.u32 %v1543, 7
        %v1545 = vsub.s32 3, %v1544
        %v1546 = vrot.slane %v1343, %v1545
        %v1547 = vlaneseq
        %v1548 = vshrl.u32 %v1547, 7
        %v1549 = vsub.s32 4, %v1548
        %v1550 = vrot.slane %v1343, %v1549
        %v1551 = vlaneseq
        %v1552 = vshrl.u32 %v1551, 7
        %v1553 = vsub.s32 5, %v1552
        %v1554 = vrot.slane %v1343, %v1553
        %v1555 = vlaneseq
        %v1556 = vshrl.u32 %v1555, 7
        %v1557 = vsub.s32 6, %v1556
        %v1558 = vrot.slane %v1343, %v1557
        %v1559 = vlaneseq
        %v1560 = vshrl.u32 %v1559, 7
        %v1561 = vsub.s32 7, %v1560
        %v1562 = vrot.slane %v1343, %v1561
        %v1563 = vlaneseq
        %v1564 = vshrl.u32 %v1563, 7
        %v1565 = vsub.s32 0, %v1564
        %v1566 = vrot.slane %v1344, %v1565
        %v1567 = vlaneseq
        %v1568 = vshrl.u32 %v1567, 7
        %v1569 = vsub.s32 1, %v1568
        %v1570 = vrot.slane %v1344, %v1569
        %v1571 = vlaneseq
        %v1572 = vshrl.u32 %v1571, 7
        %v1573 = vsub.s32 2, %v1572
        %v1574 = vrot.slane %v1344, %v1573
        %v1575 = vlaneseq
        %v1576 = vshrl.u32 %v1575, 7
        %v1577 = vsub.s32 3, %v1576
        %v1578 = vrot.slane %v1344, %v1577
        %v1579 = vlaneseq
        %v1580 = vshrl.u32 %v1579, 7
        %v1581 = vsub.s32 4, %v1580
        %v1582 = vrot.slane %v1344, %v1581
        %v1583 = vlaneseq
        %v1584 = vshrl.u32 %v1583, 7
        %v1585 = vsub.s32 5, %v1584
        %v1586 = vrot.slane %v1344, %v1585
        %v1587 = vlaneseq
        %v1588 = vshrl.u32 %v1587, 7
        %v1589 = vsub.s32 6, %v1588
        %v1590 = vrot.slane %v1344, %v1589
        %v1591 = vlaneseq
        %v1592 = vshrl.u32 %v1591, 7
        %v1593 = vsub.s32 7, %v1592
        %v1594 = vrot.slane %v1344, %v1593
        %v1595 = vlaneseq
        %v1596 = vshrl.u32 %v1595, 7
        %v1597 = vsub.s32 0, %v1596
        %v1598 = vrot.slane %v1345, %v1597
        %v1599 = vlaneseq
        %v1600 = vshrl.u32 %v1599, 7
        %v1601 = vsub.s32 1, %v1600
        %v1602 = vrot.slane %v1345, %v1601
        %v1603 = vlaneseq
        %v1604 = vshrl.u32 %v1603, 7
        %v1605 = vsub.s32 2, %v1604
        %v1606 = vrot.slane %v1345, %v1605
        %v1607 = vlaneseq
        %v1608 = vshrl.u32 %v1607, 7
        %v1609 = vsub.s32 3, %v1608
        %v1610 = vrot.slane %v1345, %v1609
        %v1611 = vlaneseq
        %v1612 = vshrl.u32 %v1611, 7
        %v1613 = vsub.s32 4, %v1612
        %v1614 = vrot.slane %v1345, %v1613
        %v1615 = vlaneseq
        %v1616 = vshrl.u32 %v1615, 7
        %v1617 = vsub.s32 5, %v1616
        %v1618 = vrot.slane %v1345, %v1617
        %v1619 = vlaneseq
        %v1620 = vshrl.u32 %v1619, 7
        %v1621 = vsub.s32 6, %v1620
        %v1622 = vrot.slane %v1345, %v1621
        %v1623 = vlaneseq
        %v1624 = vshrl.u32 %v1623, 7
        %v1625 = vsub.s32 7, %v1624
        %v1626 = vrot.slane %v1345, %v1625
        %v1627 = vlaneseq
        %v1628 = vshrl.u32 %v1627, 7
        %v1629 = vsub.s32 0, %v1628
        %v1630 = vrot.slane %v1346, %v1629
        %v1631 = vlaneseq
        %v1632 = vshrl.u32 %v1631, 7
        %v1633 = vsub.s32 1, %v1632
        %v1634 = vrot.slane %v1346, %v1633
        %v1635 = vlaneseq
        %v1636 = vshrl.u32 %v1635, 7
        %v1637 = vsub.s32 2, %v1636
        %v1638 = vrot.slane %v1346, %v1637
        %v1639 = vlaneseq
        %v1640 = vshrl.u32 %v1639, 7
        %v1641 = vsub.s32 3, %v1640
        %v1642 = vrot.slane %v1346, %v1641
        %v1643 = vlaneseq
        %v1644 = vshrl.u32 %v1643, 7
        %v1645 = vsub.s32 4, %v1644
        %v1646 = vrot.slane %v1346, %v1645
        %v1647 = vlaneseq
        %v1648 = vshrl.u32 %v1647, 7
        %v1649 = vsub.s32 5, %v1648
        %v1650 = vrot.slane %v1346, %v1649
        %v1651 = vlaneseq
        %v1652 = vshrl.u32 %v1651, 7
        %v1653 = vsub.s32 6, %v1652
        %v1654 = vrot.slane %v1346, %v1653
        %v1655 = vlaneseq
        %v1656 = vshrl.u32 %v1655, 7
        %v1657 = vsub.s32 7, %v1656
        %v1658 = vrot.slane %v1346, %v1657
        %v1659 = vlaneseq
        %v1660 = vshrl.u32 %v1659, 7
        %v1661 = vsub.s32 0, %v1660
        %v1662 = vrot.slane %v1347, %v1661
        %v1663 = vlaneseq
        %v1664 = vshrl.u32 %v1663, 7
        %v1665 = vsub.s32 1, %v1664
        %v1666 = vrot.slane %v1347, %v1665
        %v1667 = vlaneseq
        %v1668 = vshrl.u32 %v1667, 7
        %v1669 = vsub.s32 2, %v1668
        %v1670 = vrot.slane %v1347, %v1669
        %v1671 = vlaneseq
        %v1672 = vshrl.u32 %v1671, 7
        %v1673 = vsub.s32 3, %v1672
        %v1674 = vrot.slane %v1347, %v1673
        %v1675 = vlaneseq
        %v1676 = vshrl.u32 %v1675, 7
        %v1677 = vsub.s32 4, %v1676
        %v1678 = vrot.slane %v1347, %v1677
        %v1679 = vlaneseq
        %v1680 = vshrl.u32 %v1679, 7
        %v1681 = vsub.s32 5, %v1680
        %v1682 = vrot.slane %v1347, %v1681
        %v1683 = vlaneseq
        %v1684 = vshrl.u32 %v1683, 7
        %v1685 = vsub.s32 6, %v1684
        %v1686 = vrot.slane %v1347, %v1685
        %v1687 = vlaneseq
        %v1688 = vshrl.u32 %v1687, 7
        %v1689 = vsub.s32 7, %v1688
        %v1690 = vrot.slane %v1347, %v1689
        %v1691 = vlaneseq
        %v1692 = vshrl.u32 %v1691, 7
        %v1693 = vsub.s32 0, %v1692
        %v1694 = vrot.slane %v1348, %v1693
        %v1695 = vlaneseq
        %v1696 = vshrl.u32 %v1695, 7
        %v1697 = vsub.s32 1, %v1696
        %v1698 = vrot.slane %v1348, %v1697
        %v1699 = vlaneseq
        %v1700 = vshrl.u32 %v1699, 7
        %v1701 = vsub.s32 2, %v1700
        %v1702 = vrot.slane %v1348, %v1701
        %v1703 = vlaneseq
        %v1704 = vshrl.u32 %v1703, 7
        %v1705 = vsub.s32 3, %v1704
        %v1706 = vrot.slane %v1348, %v1705
        %v1707 = vlaneseq
        %v1708 = vshrl.u32 %v1707, 7
        %v1709 = vsub.s32 4, %v1708
        %v1710 = vrot.slane %v1348, %v1709
        %v1711 = vlaneseq
        %v1712 = vshrl.u32 %v1711, 7
        %v1713 = vsub.s32 5, %v1712
        %v1714 = vrot.slane %v1348, %v1713
        %v1715 = vlaneseq
        %v1716 = vshrl.u32 %v1715, 7
        %v1717 = vsub.s32 6, %v1716
        %v1718 = vrot.slane %v1348, %v1717
        %v1719 = vlaneseq
        %v1720 = vshrl.u32 %v1719, 7
        %v1721 = vsub.s32 7, %v1720
        %v1722 = vrot.slane %v1348, %v1721
        %v1723 = vlaneseq
        %v1724 = vshrl.u32 %v1723, 7
        %v1725 = vsub.s32 0, %v1724
        %v1726 = vrot.slane %v1349, %v1725
        %v1727 = vlaneseq
        %v1728 = vshrl.u32 %v1727, 7
        %v1729 = vsub.s32 1, %v1728
        %v1730 = vrot.slane %v1349, %v1729
        %v1731 = vlaneseq
        %v1732 = vshrl.u32 %v1731, 7
        %v1733 = vsub.s32 2, %v1732
        %v1734 = vrot.slane %v1349, %v1733
        %v1735 = vlaneseq
        %v1736 = vshrl.u32 %v1735, 7
        %v1737 = vsub.s32 3, %v1736
        %v1738 = vrot.slane %v1349, %v1737
        %v1739 = vlaneseq
        %v1740 = vshrl.u32 %v1739, 7
        %v1741 = vsub.s32 4, %v1740
        %v1742 = vrot.slane %v1349, %v1741
        %v1743 = vlaneseq
        %v1744 = vshrl.u32 %v1743, 7
        %v1745 = vsub.s32 5, %v1744
        %v1746 = vrot.slane %v1349, %v1745
        %v1747 = vlaneseq
        %v1748 = vshrl.u32 %v1747, 7
        %v1749 = vsub.s32 6, %v1748
        %v1750 = vrot.slane %v1349, %v1749
        %v1751 = vlaneseq
        %v1752 = vshrl.u32 %v1751, 7
        %v1753 = vsub.s32 7, %v1752
        %v1754 = vrot.slane %v1349, %v1753
        %v1755 = vlaneseq
        %v1756 = vshrl.u32 %v1755, 7
        %v1757 = vsub.s32 0, %v1756
        %v1758 = vrot.slane %v1350, %v1757
        %v1759 = vlaneseq
        %v1760 = vshrl.u32 %v1759, 7
        %v1761 = vsub.s32 1, %v1760
        %v1762 = vrot.slane %v1350, %v1761
        %v1763 = vlaneseq
        %v1764 = vshrl.u32 %v1763, 7
        %v1765 = vsub.s32 2, %v1764
        %v1766 = vrot.slane %v1350, %v1765
        %v1767 = vlaneseq
        %v1768 = vshrl.u32 %v1767, 7
        %v1769 = vsub.s32 3, %v1768
        %v1770 = vrot.slane %v1350, %v1769
        %v1771 = vlaneseq
        %v1772 = vshrl.u32 %v1771, 7
        %v1773 = vsub.s32 4, %v1772
        %v1774 = vrot.slane %v1350, %v1773
        %v1775 = vlaneseq
        %v1776 = vshrl.u32 %v1775, 7
        %v1777 = vsub.s32 5, %v1776
        %v1778 = vrot.slane %v1350, %v1777
        %v1779 = vlaneseq
        %v1780 = vshrl.u32 %v1779, 7
        %v1781 = vsub.s32 6, %v1780
        %v1782 = vrot.slane %v1350, %v1781
        %v1783 = vlaneseq
        %v1784 = vshrl.u32 %v1783, 7
        %v1785 = vsub.s32 7, %v1784
        %v1786 = vrot.slane %v1350, %v1785
        %v1787 = vlaneseq
        %v1788 = vshrl.u32 %v1787, 7
        %v1789 = vsub.s32 0, %v1788
        %v1790 = vrot.slane %v1351, %v1789
        %v1791 = vlaneseq
        %v1792 = vshrl.u32 %v1791, 7
        %v1793 = vsub.s32 1, %v1792
        %v1794 = vrot.slane %v1351, %v1793
        %v1795 = vlaneseq
        %v1796 = vshrl.u32 %v1795, 7
        %v1797 = vsub.s32 2, %v1796
        %v1798 = vrot.slane %v1351, %v1797
        %v1799 = vlaneseq
        %v1800 = vshrl.u32 %v1799, 7
        %v1801 = vsub.s32 3, %v1800
        %v1802 = vrot.slane %v1351, %v1801
        %v1803 = vlaneseq
        %v1804 = vshrl.u32 %v1803, 7
        %v1805 = vsub.s32 4, %v1804
        %v1806 = vrot.slane %v1351, %v1805
        %v1807 = vlaneseq
        %v1808 = vshrl.u32 %v1807, 7
        %v1809 = vsub.s32 5, %v1808
        %v1810 = vrot.slane %v1351, %v1809
        %v1811 = vlaneseq
        %v1812 = vshrl.u32 %v1811, 7
        %v1813 = vsub.s32 6, %v1812
        %v1814 = vrot.slane %v1351, %v1813
        %v1815 = vlaneseq
        %v1816 = vshrl.u32 %v1815, 7
        %v1817 = vsub.s32 7, %v1816
        %v1818 = vrot.slane %v1351, %v1817
        %v1819 = vlaneseq
        %v1820 = vshrl.u32 %v1819, 7
        %v1821 = vsub.s32 0, %v1820
        %v1822 = vrot.slane %v1352, %v1821
        %v1823 = vlaneseq
        %v1824 = vshrl.u32 %v1823, 7
        %v1825 = vsub.s32 1, %v1824
        %v1826 = vrot.slane %v1352, %v1825
        %v1827 = vlaneseq
        %v1828 = vshrl.u32 %v1827, 7
        %v1829 = vsub.s32 2, %v1828
        %v1830 = vrot.slane %v1352, %v1829
        %v1831 = vlaneseq
        %v1832 = vshrl.u32 %v1831, 7
        %v1833 = vsub.s32 3, %v1832
        %v1834 = vrot.slane %v1352, %v1833
        %v1835 = vlaneseq
        %v1836 = vshrl.u32 %v1835, 7
        %v1837 = vsub.s32 4, %v1836
        %v1838 = vrot.slane %v1352, %v1837
        %v1839 = vlaneseq
        %v1840 = vshrl.u32 %v1839, 7
        %v1841 = vsub.s32 5, %v1840
        %v1842 = vrot.slane %v1352, %v1841
        %v1843 = vlaneseq
        %v1844 = vshrl.u32 %v1843, 7
        %v1845 = vsub.s32 6, %v1844
        %v1846 = vrot.slane %v1352, %v1845
        %v1847 = vlaneseq
        %v1848 = vshrl.u32 %v1847, 7
        %v1849 = vsub.s32 7, %v1848
        %v1850 = vrot.slane %v1352, %v1849
        %v1851 = vlaneseq
        %v1852 = vshrl.u32 %v1851, 7
        %v1853 = vsub.s32 0, %v1852
        %v1854 = vrot.slane %v1353, %v1853
        %v1855 = vlaneseq
        %v1856 = vshrl.u32 %v1855, 7
        %v1857 = vsub.s32 1, %v1856
        %v1858 = vrot.slane %v1353, %v1857
        %v1859 = vlaneseq
        %v1860 = vshrl.u32 %v1859, 7
        %v1861 = vsub.s32 2, %v1860
        %v1862 = vrot.slane %v1353, %v1861
        %v1863 = vlaneseq
        %v1864 = vshrl.u32 %v1863, 7
        %v1865 = vsub.s32 3, %v1864
        %v1866 = vrot.slane %v1353, %v1865
        %v1867 = vlaneseq
        %v1868 = vshrl.u32 %v1867, 7
        %v1869 = vsub.s32 4, %v1868
        %v1870 = vrot.slane %v1353, %v1869
        %v1871 = vlaneseq
        %v1872 = vshrl.u32 %v1871, 7
        %v1873 = vsub.s32 5, %v1872
        %v1874 = vrot.slane %v1353, %v1873
        %v1875 = vlaneseq
        %v1876 = vshrl.u32 %v1875, 7
        %v1877 = vsub.s32 6, %v1876
        %v1878 = vrot.slane %v1353, %v1877
        %v1879 = vlaneseq
        %v1880 = vshrl.u32 %v1879, 7
        %v1881 = vsub.s32 7, %v1880
        %v1882 = vrot.slane %v1353, %v1881
        %v1883 = vlaneseq
        %v1884 = vshrl.u32 %v1883, 7
        %v1885 = vsub.s32 0, %v1884
        %v1886 = vrot.slane %v1354, %v1885
        %v1887 = vlaneseq
        %v1888 = vshrl.u32 %v1887, 7
        %v1889 = vsub.s32 1, %v1888
        %v1890 = vrot.slane %v1354, %v1889
        %v1891 = vlaneseq
        %v1892 = vshrl.u32 %v1891, 7
        %v1893 = vsub.s32 2, %v1892
        %v1894 = vrot.slane %v1354, %v1893
        %v1895 = vlaneseq
        %v1896 = vshrl.u32 %v1895, 7
        %v1897 = vsub.s32 3, %v1896
        %v1898 = vrot.slane %v1354, %v1897
        %v1899 = vlaneseq
        %v1900 = vshrl.u32 %v1899, 7
        %v1901 = vsub.s32 4, %v1900
        %v1902 = vrot.slane %v1354, %v1901
        %v1903 = vlaneseq
        %v1904 = vshrl.u32 %v1903, 7
        %v1905 = vsub.s32 5, %v1904
        %v1906 = vrot.slane %v1354, %v1905
        %v1907 = vlaneseq
        %v1908 = vshrl.u32 %v1907, 7
        %v1909 = vsub.s32 6, %v1908
        %v1910 = vrot.slane %v1354, %v1909
        %v1911 = vlaneseq
        %v1912 = vshrl.u32 %v1911, 7
        %v1913 = vsub.s32 7, %v1912
        %v1914 = vrot.slane %v1354, %v1913
        %v1915 = vlaneseq
        %v1916 = vshrl.u32 %v1915, 7
        %v1917 = vsub.s32 0, %v1916
        %v1918 = vrot.slane %v1355, %v1917
        %v1919 = vlaneseq
        %v1920 = vshrl.u32 %v1919, 7
        %v1921 = vsub.s32 1, %v1920
        %v1922 = vrot.slane %v1355, %v1921
        %v1923 = vlaneseq
        %v1924 = vshrl.u32 %v1923, 7
        %v1925 = vsub.s32 2, %v1924
        %v1926 = vrot.slane %v1355, %v1925
        %v1927 = vlaneseq
        %v1928 = vshrl.u32 %v1927, 7
        %v1929 = vsub.s32 3, %v1928
        %v1930 = vrot.slane %v1355, %v1929
        %v1931 = vlaneseq
        %v1932 = vshrl.u32 %v1931, 7
        %v1933 = vsub.s32 4, %v1932
        %v1934 = vrot.slane %v1355, %v1933
        %v1935 = vlaneseq
        %v1936 = vshrl.u32 %v1935, 7
        %v1937 = vsub.s32 5, %v1936
        %v1938 = vrot.slane %v1355, %v1937
        %v1939 = vlaneseq
        %v1940 = vshrl.u32 %v1939, 7
        %v1941 = vsub.s32 6, %v1940
        %v1942 = vrot.slane %v1355, %v1941
        %v1943 = vlaneseq
        %v1944 = vshrl.u32 %v1943, 7
        %v1945 = vsub.s32 7, %v1944
        %v1946 = vrot.slane %v1355, %v1945
        %v1947 = vlaneseq
        %v1948 = vshrl.u32 %v1947, 7
        %v1949 = vsub.s32 0, %v1948
        %v1950 = vrot.slane %v1356, %v1949
        %v1951 = vlaneseq
        %v1952 = vshrl.u32 %v1951, 7
        %v1953 = vsub.s32 1, %v1952
        %v1954 = vrot.slane %v1356, %v1953
        %v1955 = vlaneseq
        %v1956 = vshrl.u32 %v1955, 7
        %v1957 = vsub.s32 2, %v1956
        %v1958 = vrot.slane %v1356, %v1957
        %v1959 = vlaneseq
        %v1960 = vshrl.u32 %v1959, 7
        %v1961 = vsub.s32 3, %v1960
        %v1962 = vrot.slane %v1356, %v1961
        %v1963 = vlaneseq
        %v1964 = vshrl.u32 %v1963, 7
        %v1965 = vsub.s32 4, %v1964
        %v1966 = vrot.slane %v1356, %v1965
        %v1967 = vlaneseq
        %v1968 = vshrl.u32 %v1967, 7
        %v1969 = vsub.s32 5, %v1968
        %v1970 = vrot.slane %v1356, %v1969
        %v1971 = vlaneseq
        %v1972 = vshrl.u32 %v1971, 7
        %v1973 = vsub.s32 6, %v1972
        %v1974 = vrot.slane %v1356, %v1973
        %v1975 = vlaneseq
        %v1976 = vshrl.u32 %v1975, 7
        %v1977 = vsub.s32 7, %v1976
        %v1978 = vrot.slane %v1356, %v1977
        %v1979 = vlaneseq
        %v1980 = vshrl.u32 %v1979, 7
        %v1981 = vsub.s32 0, %v1980
        %v1982 = vrot.slane %v1357, %v1981
        %v1983 = vlaneseq
        %v1984 = vshrl.u32 %v1983, 7
        %v1985 = vsub.s32 1, %v1984
        %v1986 = vrot.slane %v1357, %v1985
        %v1987 = vlaneseq
        %v1988 = vshrl.u32 %v1987, 7
        %v1989 = vsub.s32 2, %v1988
        %v1990 = vrot.slane %v1357, %v1989
        %v1991 = vlaneseq
        %v1992 = vshrl.u32 %v1991, 7
        %v1993 = vsub.s32 3, %v1992
        %v1994 = vrot.slane %v1357, %v1993
        %v1995 = vlaneseq
        %v1996 = vshrl.u32 %v1995, 7
        %v1997 = vsub.s32 4, %v1996
        %v1998 = vrot.slane %v1357, %v1997
        %v1999 = vlaneseq
        %v2000 = vshrl.u32 %v1999, 7
        %v2001 = vsub.s32 5, %v2000
        %v2002 = vrot.slane %v1357, %v2001
        %v2003 = vlaneseq
        %v2004 = vshrl.u32 %v2003, 7
        %v2005 = vsub.s32 6, %v2004
        %v2006 = vrot.slane %v1357, %v2005
        %v2007 = vlaneseq
        %v2008 = vshrl.u32 %v2007, 7
        %v2009 = vsub.s32 7, %v2008
        %v2010 = vrot.slane %v1357, %v2009
        %v2011 = vlaneseq
        %v2012 = vshrl.u32 %v2011, 7
        %v2013 = vsub.s32 0, %v2012
        %v2014 = vrot.slane %v1358, %v2013
        %v2015 = vlaneseq
        %v2016 = vshrl.u32 %v2015, 7
        %v2017 = vsub.s32 1, %v2016
        %v2018 = vrot.slane %v1358, %v2017
        %v2019 = vlaneseq
        %v2020 = vshrl.u32 %v2019, 7
        %v2021 = vsub.s32 2, %v2020
        %v2022 = vrot.slane %v1358, %v2021
        %v2023 = vlaneseq
        %v2024 = vshrl.u32 %v2023, 7
        %v2025 = vsub.s32 3, %v2024
        %v2026 = vrot.slane %v1358, %v2025
        %v2027 = vlaneseq
        %v2028 = vshrl.u32 %v2027, 7
        %v2029 = vsub.s32 4, %v2028
        %v2030 = vrot.slane %v1358, %v2029
        %v2031 = vlaneseq
        %v2032 = vshrl.u32 %v2031, 7
        %v2033 = vsub.s32 5, %v2032
        %v2034 = vrot.slane %v1358, %v2033
        %v2035 = vlaneseq
        %v2036 = vshrl.u32 %v2035, 7
        %v2037 = vsub.s32 6, %v2036
        %v2038 = vrot.slane %v1358, %v2037
        %v2039 = vlaneseq
        %v2040 = vshrl.u32 %v2039, 7
        %v2041 = vsub.s32 7, %v2040
        %v2042 = vrot.slane %v1358, %v2041
        %v2043 = vlaneseq
        %v2044 = vshrl.u32 %v2043, 7
        %v2045 = vsub.s32 0, %v2044
        %v2046 = vrot.slane %v1359, %v2045
        %v2047 = vlaneseq
        %v2048 = vshrl.u32 %v2047, 7
        %v2049 = vsub.s32 1, %v2048
        %v2050 = vrot.slane %v1359, %v2049
        %v2051 = vlaneseq
        %v2052 = vshrl.u32 %v2051, 7
        %v2053 = vsub.s32 2, %v2052
        %v2054 = vrot.slane %v1359, %v2053
        %v2055 = vlaneseq
        %v2056 = vshrl.u32 %v2055, 7
        %v2057 = vsub.s32 3, %v2056
        %v2058 = vrot.slane %v1359, %v2057
        %v2059 = vlaneseq
        %v2060 = vshrl.u32 %v2059, 7
        %v2061 = vsub.s32 4, %v2060
        %v2062 = vrot.slane %v1359, %v2061
        %v2063 = vlaneseq
        %v2064 = vshrl.u32 %v2063, 7
        %v2065 = vsub.s32 5, %v2064
        %v2066 = vrot.slane %v1359, %v2065
        %v2067 = vlaneseq
        %v2068 = vshrl.u32 %v2067, 7
        %v2069 = vsub.s32 6, %v2068
        %v2070 = vrot.slane %v1359, %v2069
        %v2071 = vlaneseq
        %v2072 = vshrl.u32 %v2071, 7
        %v2073 = vsub.s32 7, %v2072
        %v2074 = vrot.slane %v1359, %v2073
        %v2075 = vlaneseq
        %v2076 = vshrl.u32 %v2075, 7
        %v2077 = vsub.s32 0, %v2076
        %v2078 = vrot.slane %v1360, %v2077
        %v2079 = vlaneseq
        %v2080 = vshrl.u32 %v2079, 7
        %v2081 = vsub.s32 1, %v2080
        %v2082 = vrot.slane %v1360, %v2081
        %v2083 = vlaneseq
        %v2084 = vshrl.u32 %v2083, 7
        %v2085 = vsub.s32 2, %v2084
        %v2086 = vrot.slane %v1360, %v2085
        %v2087 = vlaneseq
        %v2088 = vshrl.u32 %v2087, 7
        %v2089 = vsub.s32 3, %v2088
        %v2090 = vrot.slane %v1360, %v2089
        %v2091 = vlaneseq
        %v2092 = vshrl.u32 %v2091, 7
        %v2093 = vsub.s32 4, %v2092
        %v2094 = vrot.slane %v1360, %v2093
        %v2095 = vlaneseq
        %v2096 = vshrl.u32 %v2095, 7
        %v2097 = vsub.s32 5, %v2096
        %v2098 = vrot.slane %v1360, %v2097
        %v2099 = vlaneseq
        %v2100 = vshrl.u32 %v2099, 7
        %v2101 = vsub.s32 6, %v2100
        %v2102 = vrot.slane %v1360, %v2101
        %v2103 = vlaneseq
        %v2104 = vshrl.u32 %v2103, 7
        %v2105 = vsub.s32 7, %v2104
        %v2106 = vrot.slane %v1360, %v2105
        %v2107 = vlaneseq
        %v2108 = vshrl.u32 %v2107, 7
        %v2109 = vsub.s32 0, %v2108
        %v2110 = vrot.slane %v1361, %v2109
        %v2111 = vlaneseq
        %v2112 = vshrl.u32 %v2111, 7
        %v2113 = vsub.s32 1, %v2112
        %v2114 = vrot.slane %v1361, %v2113
        %v2115 = vlaneseq
        %v2116 = vshrl.u32 %v2115, 7
        %v2117 = vsub.s32 2, %v2116
        %v2118 = vrot.slane %v1361, %v2117
        %v2119 = vlaneseq
        %v2120 = vshrl.u32 %v2119, 7
        %v2121 = vsub.s32 3, %v2120
        %v2122 = vrot.slane %v1361, %v2121
        %v2123 = vlaneseq
        %v2124 = vshrl.u32 %v2123, 7
        %v2125 = vsub.s32 4, %v2124
        %v2126 = vrot.slane %v1361, %v2125
        %v2127 = vlaneseq
        %v2128 = vshrl.u32 %v2127, 7
        %v2129 = vsub.s32 5, %v2128
        %v2130 = vrot.slane %v1361, %v2129
        %v2131 = vlaneseq
        %v2132 = vshrl.u32 %v2131, 7
        %v2133 = vsub.s32 6, %v2132
        %v2134 = vrot.slane %v1361, %v2133
        %v2135 = vlaneseq
        %v2136 = vshrl.u32 %v2135, 7
        %v2137 = vsub.s32 7, %v2136
        %v2138 = vrot.slane %v1361, %v2137
        %v2139 = vlaneseq
        %v2140 = vshrl.u32 %v2139, 7
        %v2141 = vsub.s32 0, %v2140
        %v2142 = vrot.slane %v1362, %v2141
        %v2143 = vlaneseq
        %v2144 = vshrl.u32 %v2143, 7
        %v2145 = vsub.s32 1, %v2144
        %v2146 = vrot.slane %v1362, %v2145
        %v2147 = vlaneseq
        %v2148 = vshrl.u32 %v2147, 7
        %v2149 = vsub.s32 2, %v2148
        %v2150 = vrot.slane %v1362, %v2149
        %v2151 = vlaneseq
        %v2152 = vshrl.u32 %v2151, 7
        %v2153 = vsub.s32 3, %v2152
        %v2154 = vrot.slane %v1362, %v2153
        %v2155 = vlaneseq
        %v2156 = vshrl.u32 %v2155, 7
        %v2157 = vsub.s32 4, %v2156
        %v2158 = vrot.slane %v1362, %v2157
        %v2159 = vlaneseq
        %v2160 = vshrl.u32 %v2159, 7
        %v2161 = vsub.s32 5, %v2160
        %v2162 = vrot.slane %v1362, %v2161
        %v2163 = vlaneseq
        %v2164 = vshrl.u32 %v2163, 7
        %v2165 = vsub.s32 6, %v2164
        %v2166 = vrot.slane %v1362, %v2165
        %v2167 = vlaneseq
        %v2168 = vshrl.u32 %v2167, 7
        %v2169 = vsub.s32 7, %v2168
        %v2170 = vrot.slane %v1362, %v2169
        %v2171 = vlaneseq
        %v2172 = vshrl.u32 %v2171, 7
        %v2173 = vsub.s32 0, %v2172
        %v2174 = vrot.slane %v1363, %v2173
        %v2175 = vlaneseq
        %v2176 = vshrl.u32 %v2175, 7
        %v2177 = vsub.s32 1, %v2176
        %v2178 = vrot.slane %v1363, %v2177
        %v2179 = vlaneseq
        %v2180 = vshrl.u32 %v2179, 7
        %v2181 = vsub.s32 2, %v2180
        %v2182 = vrot.slane %v1363, %v2181
        %v2183 = vlaneseq
        %v2184 = vshrl.u32 %v2183, 7
        %v2185 = vsub.s32 3, %v2184
        %v2186 = vrot.slane %v1363, %v2185
        %v2187 = vlaneseq
        %v2188 = vshrl.u32 %v2187, 7
        %v2189 = vsub.s32 4, %v2188
        %v2190 = vrot.slane %v1363, %v2189
        %v2191 = vlaneseq
        %v2192 = vshrl.u32 %v2191, 7
        %v2193 = vsub.s32 5, %v2192
        %v2194 = vrot.slane %v1363, %v2193
        %v2195 = vlaneseq
        %v2196 = vshrl.u32 %v2195, 7
        %v2197 = vsub.s32 6, %v2196
        %v2198 = vrot.slane %v1363, %v2197
        %v2199 = vlaneseq
        %v2200 = vshrl.u32 %v2199, 7
        %v2201 = vsub.s32 7, %v2200
        %v2202 = vrot.slane %v1363, %v2201
        %v2203 = vlaneseq
        %v2204 = vshrl.u32 %v2203, 7
        %v2205 = vsub.s32 0, %v2204
        %v2206 = vrot.slane %v1364, %v2205
        %v2207 = vlaneseq
        %v2208 = vshrl.u32 %v2207, 7
        %v2209 = vsub.s32 1, %v2208
        %v2210 = vrot.slane %v1364, %v2209
        %v2211 = vlaneseq
        %v2212 = vshrl.u32 %v2211, 7
        %v2213 = vsub.s32 2, %v2212
        %v2214 = vrot.slane %v1364, %v2213
        %v2215 = vlaneseq
        %v2216 = vshrl.u32 %v2215, 7
        %v2217 = vsub.s32 3, %v2216
        %v2218 = vrot.slane %v1364, %v2217
        %v2219 = vlaneseq
        %v2220 = vshrl.u32 %v2219, 7
        %v2221 = vsub.s32 4, %v2220
        %v2222 = vrot.slane %v1364, %v2221
        %v2223 = vlaneseq
        %v2224 = vshrl.u32 %v2223, 7
        %v2225 = vsub.s32 5, %v2224
        %v2226 = vrot.slane %v1364, %v2225
        %v2227 = vlaneseq
        %v2228 = vshrl.u32 %v2227, 7
        %v2229 = vsub.s32 6, %v2228
        %v2230 = vrot.slane %v1364, %v2229
        %v2231 = vlaneseq
        %v2232 = vshrl.u32 %v2231, 7
        %v2233 = vsub.s32 7, %v2232
        %v2234 = vrot.slane %v1364, %v2233
        %v2235 = vlaneseq
        %v2236 = vshrl.u32 %v2235, 7
        %v2237 = vsub.s32 0, %v2236
        %v2238 = vrot.slane %v1365, %v2237
        %v2239 = vlaneseq
        %v2240 = vshrl.u32 %v2239, 7
        %v2241 = vsub.s32 1, %v2240
        %v2242 = vrot.slane %v1365, %v2241
        %v2243 = vlaneseq
        %v2244 = vshrl.u32 %v2243, 7
        %v2245 = vsub.s32 2, %v2244
        %v2246 = vrot.slane %v1365, %v2245
        %v2247 = vlaneseq
        %v2248 = vshrl.u32 %v2247, 7
        %v2249 = vsub.s32 3, %v2248
        %v2250 = vrot.slane %v1365, %v2249
        %v2251 = vlaneseq
        %v2252 = vshrl.u32 %v2251, 7
        %v2253 = vsub.s32 4, %v2252
        %v2254 = vrot.slane %v1365, %v2253
        %v2255 = vlaneseq
        %v2256 = vshrl.u32 %v2255, 7
        %v2257 = vsub.s32 5, %v2256
        %v2258 = vrot.slane %v1365, %v2257
        %v2259 = vlaneseq
        %v2260 = vshrl.u32 %v2259, 7
        %v2261 = vsub.s32 6, %v2260
        %v2262 = vrot.slane %v1365, %v2261
        %v2263 = vlaneseq
        %v2264 = vshrl.u32 %v2263, 7
        %v2265 = vsub.s32 7, %v2264
        %v2266 = vrot.slane %v1365, %v2265
        %v2267 = vlaneseq
        %v2268 = vshrl.u32 %v2267, 7
        %v2269 = vsub.s32 0, %v2268
        %v2270 = vrot.slane %v1366, %v2269
        %v2271 = vlaneseq
        %v2272 = vshrl.u32 %v2271, 7
        %v2273 = vsub.s32 1, %v2272
        %v2274 = vrot.slane %v1366, %v2273
        %v2275 = vlaneseq
        %v2276 = vshrl.u32 %v2275, 7
        %v2277 = vsub.s32 2, %v2276
        %v2278 = vrot.slane %v1366, %v2277
        %v2279 = vlaneseq
        %v2280 = vshrl.u32 %v2279, 7
        %v2281 = vsub.s32 3, %v2280
        %v2282 = vrot.slane %v1366, %v2281
        %v2283 = vlaneseq
        %v2284 = vshrl.u32 %v2283, 7
        %v2285 = vsub.s32 4, %v2284
        %v2286 = vrot.slane %v1366, %v2285
        %v2287 = vlaneseq
        %v2288 = vshrl.u32 %v2287, 7
        %v2289 = vsub.s32 5, %v2288
        %v2290 = vrot.slane %v1366, %v2289
        %v2291 = vlaneseq
        %v2292 = vshrl.u32 %v2291, 7
        %v2293 = vsub.s32 6, %v2292
        %v2294 = vrot.slane %v1366, %v2293
        %v2295 = vlaneseq
        %v2296 = vshrl.u32 %v2295, 7
        %v2297 = vsub.s32 7, %v2296
        %v2298 = vrot.slane %v1366, %v2297
        %v2299 = vlaneseq
        %v2300 = vshrl.u32 %v2299, 7
        %v2301 = vsub.s32 0, %v2300
        %v2302 = vrot.slane %v1367, %v2301
        %v2303 = vlaneseq
        %v2304 = vshrl.u32 %v2303, 7
        %v2305 = vsub.s32 1, %v2304
        %v2306 = vrot.slane %v1367, %v2305
        %v2307 = vlaneseq
        %v2308 = vshrl.u32 %v2307, 7
        %v2309 = vsub.s32 2, %v2308
        %v2310 = vrot.slane %v1367, %v2309
        %v2311 = vlaneseq
        %v2312 = vshrl.u32 %v2311, 7
        %v2313 = vsub.s32 3, %v2312
        %v2314 = vrot.slane %v1367, %v2313
        %v2315 = vlaneseq
        %v2316 = vshrl.u32 %v2315, 7
        %v2317 = vsub.s32 4, %v2316
        %v2318 = vrot.slane %v1367, %v2317
        %v2319 = vlaneseq
        %v2320 = vshrl.u32 %v2319, 7
        %v2321 = vsub.s32 5, %v2320
        %v2322 = vrot.slane %v1367, %v2321
        %v2323 = vlaneseq
        %v2324 = vshrl.u32 %v2323, 7
        %v2325 = vsub.s32 6, %v2324
        %v2326 = vrot.slane %v1367, %v2325
        %v2327 = vlaneseq
        %v2328 = vshrl.u32 %v2327, 7
        %v2329 = vsub.s32 7, %v2328
        %v2330 = vrot.slane %v1367, %v2329
        %v2331 = vlaneseq
        %v2332 = vshrl.u32 %v2331, 7
        %v2333 = vsub.s32 0, %v2332
        %v2334 = vrot.slane %v1368, %v2333
        %v2335 = vlaneseq
        %v2336 = vshrl.u32 %v2335, 7
        %v2337 = vsub.s32 1, %v2336
        %v2338 = vrot.slane %v1368, %v2337
        %v2339 = vlaneseq
        %v2340 = vshrl.u32 %v2339, 7
        %v2341 = vsub.s32 2, %v2340
        %v2342 = vrot.slane %v1368, %v2341
        %v2343 = vlaneseq
        %v2344 = vshrl.u32 %v2343, 7
        %v2345 = vsub.s32 3, %v2344
        %v2346 = vrot.slane %v1368, %v2345
        %v2347 = vlaneseq
        %v2348 = vshrl.u32 %v2347, 7
        %v2349 = vsub.s32 4, %v2348
        %v2350 = vrot.slane %v1368, %v2349
        %v2351 = vlaneseq
        %v2352 = vshrl.u32 %v2351, 7
        %v2353 = vsub.s32 5, %v2352
        %v2354 = vrot.slane %v1368, %v2353
        %v2355 = vlaneseq
        %v2356 = vshrl.u32 %v2355, 7
        %v2357 = vsub.s32 6, %v2356
        %v2358 = vrot.slane %v1368, %v2357
        %v2359 = vlaneseq
        %v2360 = vshrl.u32 %v2359, 7
        %v2361 = vsub.s32 7, %v2360
        %v2362 = vrot.slane %v1368, %v2361
        %v2363 = vlaneseq
        %v2364 = vshrl.u32 %v2363, 7
        %v2365 = vsub.s32 0, %v2364
        %v2366 = vrot.slane %v1369, %v2365
        %v2367 = vlaneseq
        %v2368 = vshrl.u32 %v2367, 7
        %v2369 = vsub.s32 1, %v2368
        %v2370 = vrot.slane %v1369, %v2369
        %v2371 = vlaneseq
        %v2372 = vshrl.u32 %v2371, 7
        %v2373 = vsub.s32 2, %v2372
        %v2374 = vrot.slane %v1369, %v2373
        %v2375 = vlaneseq
        %v2376 = vshrl.u32 %v2375, 7
        %v2377 = vsub.s32 3, %v2376
        %v2378 = vrot.slane %v1369, %v2377
        %v2379 = vlaneseq
        %v2380 = vshrl.u32 %v2379, 7
        %v2381 = vsub.s32 4, %v2380
        %v2382 = vrot.slane %v1369, %v2381
        %v2383 = vlaneseq
        %v2384 = vshrl.u32 %v2383, 7
        %v2385 = vsub.s32 5, %v2384
        %v2386 = vrot.slane %v1369, %v2385
        %v2387 = vlaneseq
        %v2388 = vshrl.u32 %v2387, 7
        %v2389 = vsub.s32 6, %v2388
        %v2390 = vrot.slane %v1369, %v2389
        %v2391 = vlaneseq
        %v2392 = vshrl.u32 %v2391, 7
        %v2393 = vsub.s32 7, %v2392
        %v2394 = vrot.slane %v1369, %v2393
        %v2395 = vlaneseq
        %v2396 = vshrl.u32 %v2395, 7
        %v2397 = vsub.s32 0, %v2396
        %v2398 = vrot.slane %v1370, %v2397
        %v2399 = vlaneseq
        %v2400 = vshrl.u32 %v2399, 7
        %v2401 = vsub.s32 1, %v2400
        %v2402 = vrot.slane %v1370, %v2401
        %v2403 = vlaneseq
        %v2404 = vshrl.u32 %v2403, 7
        %v2405 = vsub.s32 2, %v2404
        %v2406 = vrot.slane %v1370, %v2405
        %v2407 = vlaneseq
        %v2408 = vshrl.u32 %v2407, 7
        %v2409 = vsub.s32 3, %v2408
        %v2410 = vrot.slane %v1370, %v2409
        %v2411 = vlaneseq
        %v2412 = vshrl.u32 %v2411, 7
        %v2413 = vsub.s32 4, %v2412
        %v2414 = vrot.slane %v1370, %v2413
        %v2415 = vlaneseq
        %v2416 = vshrl.u32 %v2415, 7
        %v2417 = vsub.s32 5, %v2416
        %v2418 = vrot.slane %v1370, %v2417
        %v2419 = vlaneseq
        %v2420 = vshrl.u32 %v2419, 7
        %v2421 = vsub.s32 6, %v2420
        %v2422 = vrot.slane %v1370, %v2421
        %v2423 = vlaneseq
        %v2424 = vshrl.u32 %v2423, 7
        %v2425 = vsub.s32 7, %v2424
        %v2426 = vrot.slane %v1370, %v2425
        %v2427 = vcombine.low %v1406, %v1410
        %v2428 = vcombine.low %v1414, %v1418
        %v2429 = vcombine.low %v1422, %v1426
        %v2430 = vcombine.low %v1430, %v1434
        %v2432 = vunpack.c.l.s4 1966171168
        %v2433 = vunpack.c.0.s8 %v2432
        %v2434 = vlaneseq
        %v2435 = vshrl.u32 %v2434, 7
        %v2436 = vsub.s32 %v2433, %v2435
        %v2437 = vrot.slane %v2427, %v2436
        %v2439 = vunpack.c.l.s4 1966171168
        %v2440 = vunpack.c.0.s8 %v2439
        %v2441 = vlaneseq
        %v2442 = vshrl.u32 %v2441, 7
        %v2443 = vsub.s32 %v2440, %v2442
        %v2444 = vrot.slane %v2428, %v2443
        %v2446 = vunpack.c.l.s4 1966171168
        %v2447 = vunpack.c.0.s8 %v2446
        %v2448 = vlaneseq
        %v2449 = vshrl.u32 %v2448, 7
        %v2450 = vsub.s32 %v2447, %v2449
        %v2451 = vrot.slane %v2429, %v2450
        %v2453 = vunpack.c.l.s4 1966171168
        %v2454 = vunpack.c.0.s8 %v2453
        %v2455 = vlaneseq
        %v2456 = vshrl.u32 %v2455, 7
        %v2457 = vsub.s32 %v2454, %v2456
        %v2458 = vrot.slane %v2430, %v2457
        %v2459 = vcombine.low %v2437, %v2444
        %v2460 = vcombine.low %v2451, %v2458
        %v2462 = vunpack.c.l.s4 1966171168
        %v2463 = vunpack.c.0.s8 %v2462
        %v2464 = vlaneseq
        %v2465 = vshrl.u32 %v2464, 7
        %v2466 = vsub.s32 %v2463, %v2465
        %v2467 = vrot.slane %v2459, %v2466
        %v2469 = vunpack.c.l.s4 1966171168
        %v2470 = vunpack.c.0.s8 %v2469
        %v2471 = vlaneseq
        %v2472 = vshrl.u32 %v2471, 7
        %v2473 = vsub.s32 %v2470, %v2472
        %v2474 = vrot.slane %v2460, %v2473
        %v2475 = vcombine.low %v2467, %v2474
        %v2476 = vcombine.low %v1438, %v1442
        %v2477 = vcombine.low %v1446, %v1450
        %v2478 = vcombine.low %v1454, %v1458
        %v2479 = vcombine.low %v1462, %v1466
        %v2481 = vunpack.c.l.s4 1966171168
        %v2482 = vunpack.c.0.s8 %v2481
        %v2483 = vlaneseq
        %v2484 = vshrl.u32 %v2483, 7
        %v2485 = vsub.s32 %v2482, %v2484
        %v2486 = vrot.slane %v2476, %v2485
        %v2488 = vunpack.c.l.s4 1966171168
        %v2489 = vunpack.c.0.s8 %v2488
        %v2490 = vlaneseq
        %v2491 = vshrl.u32 %v2490, 7
        %v2492 = vsub.s32 %v2489, %v2491
        %v2493 = vrot.slane %v2477, %v2492
        %v2495 = vunpack.c.l.s4 1966171168
        %v2496 = vunpack.c.0.s8 %v2495
        %v2497 = vlaneseq
        %v2498 = vshrl.u32 %v2497, 7
        %v2499 = vsub.s32 %v2496, %v2498
        %v2500 = vrot.slane %v2478, %v2499
        %v2502 = vunpack.c.l.s4 1966171168
        %v2503 = vunpack.c.0.s8 %v2502
        %v2504 = vlaneseq
        %v2505 = vshrl.u32 %v2504, 7
        %v2506 = vsub.s32 %v2503, %v2505
        %v2507 = vrot.slane %v2479, %v2506
        %v2508 = vcombine.low %v2486, %v2493
        %v2509 = vcombine.low %v2500, %v2507
        %v2511 = vunpack.c.l.s4 1966171168
        %v2512 = vunpack.c.0.s8 %v2511
        %v2513 = vlaneseq
        %v2514 = vshrl.u32 %v2513, 7
        %v2515 = vsub.s32 %v2512, %v2514
        %v2516 = vrot.slane %v2508, %v2515
        %v2518 = vunpack.c.l.s4 1966171168
        %v2519 = vunpack.c.0.s8 %v2518
        %v2520 = vlaneseq
        %v2521 = vshrl.u32 %v2520, 7
        %v2522 = vsub.s32 %v2519, %v2521
        %v2523 = vrot.slane %v2509, %v2522
        %v2524 = vcombine.low %v2516, %v2523
        %v2525 = vcombine.low %v1470, %v1474
        %v2526 = vcombine.low %v1478, %v1482
        %v2527 = vcombine.low %v1486, %v1490
        %v2528 = vcombine.low %v1494, %v1498
        %v2530 = vunpack.c.l.s4 1966171168
        %v2531 = vunpack.c.0.s8 %v2530
        %v2532 = vlaneseq
        %v2533 = vshrl.u32 %v2532, 7
        %v2534 = vsub.s32 %v2531, %v2533
        %v2535 = vrot.slane %v2525, %v2534
        %v2537 = vunpack.c.l.s4 1966171168
        %v2538 = vunpack.c.0.s8 %v2537
        %v2539 = vlaneseq
        %v2540 = vshrl.u32 %v2539, 7
        %v2541 = vsub.s32 %v2538, %v2540
        %v2542 = vrot.slane %v2526, %v2541
        %v2544 = vunpack.c.l.s4 1966171168
        %v2545 = vunpack.c.0.s8 %v2544
        %v2546 = vlaneseq
        %v2547 = vshrl.u32 %v2546, 7
        %v2548 = vsub.s32 %v2545, %v2547
        %v2549 = vrot.slane %v2527, %v2548
        %v2551 = vunpack.c.l.s4 1966171168
        %v2552 = vunpack.c.0.s8 %v2551
        %v2553 = vlaneseq
        %v2554 = vshrl.u32 %v2553, 7
        %v2555 = vsub.s32 %v2552, %v2554
        %v2556 = vrot.slane %v2528, %v2555
        %v2557 = vcombine.low %v2535, %v2542
        %v2558 = vcombine.low %v2549, %v2556
        %v2560 = vunpack.c.l.s4 1966171168
        %v2561 = vunpack.c.0.s8 %v2560
        %v2562 = vlaneseq
        %v2563 = vshrl.u32 %v2562, 7
        %v2564 = vsub.s32 %v2561, %v2563
        %v2565 = vrot.slane %v2557, %v2564
        %v2567 = vunpack.c.l.s4 1966171168
        %v2568 = vunpack.c.0.s8 %v2567
        %v2569 = vlaneseq
        %v2570 = vshrl.u32 %v2569, 7
        %v2571 = vsub.s32 %v2568, %v2570
        %v2572 = vrot.slane %v2558, %v2571
        %v2573 = vcombine.low %v2565, %v2572
        %v2574 = vcombine.low %v1502, %v1506
        %v2575 = vcombine.low %v1510, %v1514
        %v2576 = vcombine.low %v1518, %v1522
        %v2577 = vcombine.low %v1526, %v1530
        %v2579 = vunpack.c.l.s4 1966171168
        %v2580 = vunpack.c.0.s8 %v2579
        %v2581 = vlaneseq
        %v2582 = vshrl.u32 %v2581, 7
        %v2583 = vsub.s32 %v2580, %v2582
        %v2584 = vrot.slane %v2574, %v2583
        %v2586 = vunpack.c.l.s4 1966171168
        %v2587 = vunpack.c.0.s8 %v2586
        %v2588 = vlaneseq
        %v2589 = vshrl.u32 %v2588, 7
        %v2590 = vsub.s32 %v2587, %v2589
        %v2591 = vrot.slane %v2575, %v2590
        %v2593 = vunpack.c.l.s4 1966171168
        %v2594 = vunpack.c.0.s8 %v2593
        %v2595 = vlaneseq
        %v2596 = vshrl.u32 %v2595, 7
        %v2597 = vsub.s32 %v2594, %v2596
        %v2598 = vrot.slane %v2576, %v2597
        %v2600 = vunpack.c.l.s4 1966171168
        %v2601 = vunpack.c.0.s8 %v2600
        %v2602 = vlaneseq
        %v2603 = vshrl.u32 %v2602, 7
        %v2604 = vsub.s32 %v2601, %v2603
        %v2605 = vrot.slane %v2577, %v2604
        %v2606 = vcombine.low %v2584, %v2591
        %v2607 = vcombine.low %v2598, %v2605
        %v2609 = vunpack.c.l.s4 1966171168
        %v2610 = vunpack.c.0.s8 %v2609
        %v2611 = vlaneseq
        %v2612 = vshrl.u32 %v2611, 7
        %v2613 = vsub.s32 %v2610, %v2612
        %v2614 = vrot.slane %v2606, %v2613
        %v2616 = vunpack.c.l.s4 1966171168
        %v2617 = vunpack.c.0.s8 %v2616
        %v2618 = vlaneseq
        %v2619 = vshrl.u32 %v2618, 7
        %v2620 = vsub.s32 %v2617, %v2619
        %v2621 = vrot.slane %v2607, %v2620
        %v2622 = vcombine.low %v2614, %v2621
        %v2623 = vcombine.low %v1534, %v1538
        %v2624 = vcombine.low %v1542, %v1546
        %v2625 = vcombine.low %v1550, %v1554
        %v2626 = vcombine.low %v1558, %v1562
        %v2628 = vunpack.c.l.s4 1966171168
        %v2629 = vunpack.c.0.s8 %v2628
        %v2630 = vlaneseq
        %v2631 = vshrl.u32 %v2630, 7
        %v2632 = vsub.s32 %v2629, %v2631
        %v2633 = vrot.slane %v2623, %v2632
        %v2635 = vunpack.c.l.s4 1966171168
        %v2636 = vunpack.c.0.s8 %v2635
        %v2637 = vlaneseq
        %v2638 = vshrl.u32 %v2637, 7
        %v2639 = vsub.s32 %v2636, %v2638
        %v2640 = vrot.slane %v2624, %v2639
        %v2642 = vunpack.c.l.s4 1966171168
        %v2643 = vunpack.c.0.s8 %v2642
        %v2644 = vlaneseq
        %v2645 = vshrl.u32 %v2644, 7
        %v2646 = vsub.s32 %v2643, %v2645
        %v2647 = vrot.slane %v2625, %v2646
        %v2649 = vunpack.c.l.s4 1966171168
        %v2650 = vunpack.c.0.s8 %v2649
        %v2651 = vlaneseq
        %v2652 = vshrl.u32 %v2651, 7
        %v2653 = vsub.s32 %v2650, %v2652
        %v2654 = vrot.slane %v2626, %v2653
        %v2655 = vcombine.low %v2633, %v2640
        %v2656 = vcombine.low %v2647, %v2654
        %v2658 = vunpack.c.l.s4 1966171168
        %v2659 = vunpack.c.0.s8 %v2658
        %v2660 = vlaneseq
        %v2661 = vshrl.u32 %v2660, 7
        %v2662 = vsub.s32 %v2659, %v2661
        %v2663 = vrot.slane %v2655, %v2662
        %v2665 = vunpack.c.l.s4 1966171168
        %v2666 = vunpack.c.0.s8 %v2665
        %v2667 = vlaneseq
        %v2668 = vshrl.u32 %v2667, 7
        %v2669 = vsub.s32 %v2666, %v2668
        %v2670 = vrot.slane %v2656, %v2669
        %v2671 = vcombine.low %v2663, %v2670
        %v2672 = vcombine.low %v1566, %v1570
        %v2673 = vcombine.low %v1574, %v1578
        %v2674 = vcombine.low %v1582, %v1586
        %v2675 = vcombine.low %v1590, %v1594
        %v2677 = vunpack.c.l.s4 1966171168
        %v2678 = vunpack.c.0.s8 %v2677
        %v2679 = vlaneseq
        %v2680 = vshrl.u32 %v2679, 7
        %v2681 = vsub.s32 %v2678, %v2680
        %v2682 = vrot.slane %v2672, %v2681
        %v2684 = vunpack.c.l.s4 1966171168
        %v2685 = vunpack.c.0.s8 %v2684
        %v2686 = vlaneseq
        %v2687 = vshrl.u32 %v2686, 7
        %v2688 = vsub.s32 %v2685, %v2687
        %v2689 = vrot.slane %v2673, %v2688
        %v2691 = vunpack.c.l.s4 1966171168
        %v2692 = vunpack.c.0.s8 %v2691
        %v2693 = vlaneseq
        %v2694 = vshrl.u32 %v2693, 7
        %v2695 = vsub.s32 %v2692, %v2694
        %v2696 = vrot.slane %v2674, %v2695
        %v2698 = vunpack.c.l.s4 1966171168
        %v2699 = vunpack.c.0.s8 %v2698
        %v2700 = vlaneseq
        %v2701 = vshrl.u32 %v2700, 7
        %v2702 = vsub.s32 %v2699, %v2701
        %v2703 = vrot.slane %v2675, %v2702
        %v2704 = vcombine.low %v2682, %v2689
        %v2705 = vcombine.low %v2696, %v2703
        %v2707 = vunpack.c.l.s4 1966171168
        %v2708 = vunpack.c.0.s8 %v2707
        %v2709 = vlaneseq
        %v2710 = vshrl.u32 %v2709, 7
        %v2711 = vsub.s32 %v2708, %v2710
        %v2712 = vrot.slane %v2704, %v2711
        %v2714 = vunpack.c.l.s4 1966171168
        %v2715 = vunpack.c.0.s8 %v2714
        %v2716 = vlaneseq
        %v2717 = vshrl.u32 %v2716, 7
        %v2718 = vsub.s32 %v2715, %v2717
        %v2719 = vrot.slane %v2705, %v2718
        %v2720 = vcombine.low %v2712, %v2719
        %v2721 = vcombine.low %v1598, %v1602
        %v2722 = vcombine.low %v1606, %v1610
        %v2723 = vcombine.low %v1614, %v1618
        %v2724 = vcombine.low %v1622, %v1626
        %v2726 = vunpack.c.l.s4 1966171168
        %v2727 = vunpack.c.0.s8 %v2726
        %v2728 = vlaneseq
        %v2729 = vshrl.u32 %v2728, 7
        %v2730 = vsub.s32 %v2727, %v2729
        %v2731 = vrot.slane %v2721, %v2730
        %v2733 = vunpack.c.l.s4 1966171168
        %v2734 = vunpack.c.0.s8 %v2733
        %v2735 = vlaneseq
        %v2736 = vshrl.u32 %v2735, 7
        %v2737 = vsub.s32 %v2734, %v2736
        %v2738 = vrot.slane %v2722, %v2737
        %v2740 = vunpack.c.l.s4 1966171168
        %v2741 = vunpack.c.0.s8 %v2740
        %v2742 = vlaneseq
        %v2743 = vshrl.u32 %v2742, 7
        %v2744 = vsub.s32 %v2741, %v2743
        %v2745 = vrot.slane %v2723, %v2744
        %v2747 = vunpack.c.l.s4 1966171168
        %v2748 = vunpack.c.0.s8 %v2747
        %v2749 = vlaneseq
        %v2750 = vshrl.u32 %v2749, 7
        %v2751 = vsub.s32 %v2748, %v2750
        %v2752 = vrot.slane %v2724, %v2751
        %v2753 = vcombine.low %v2731, %v2738
        %v2754 = vcombine.low %v2745, %v2752
        %v2756 = vunpack.c.l.s4 1966171168
        %v2757 = vunpack.c.0.s8 %v2756
        %v2758 = vlaneseq
        %v2759 = vshrl.u32 %v2758, 7
        %v2760 = vsub.s32 %v2757, %v2759
        %v2761 = vrot.slane %v2753, %v2760
        %v2763 = vunpack.c.l.s4 1966171168
        %v2764 = vunpack.c.0.s8 %v2763
        %v2765 = vlaneseq
        %v2766 = vshrl.u32 %v2765, 7
        %v2767 = vsub.s32 %v2764, %v2766
        %v2768 = vrot.slane %v2754, %v2767
        %v2769 = vcombine.low %v2761, %v2768
        %v2770 = vcombine.low %v1630, %v1634
        %v2771 = vcombine.low %v1638, %v1642
        %v2772 = vcombine.low %v1646, %v1650
        %v2773 = vcombine.low %v1654, %v1658
        %v2775 = vunpack.c.l.s4 1966171168
        %v2776 = vunpack.c.0.s8 %v2775
        %v2777 = vlaneseq
        %v2778 = vshrl.u32 %v2777, 7
        %v2779 = vsub.s32 %v2776, %v2778
        %v2780 = vrot.slane %v2770, %v2779
        %v2782 = vunpack.c.l.s4 1966171168
        %v2783 = vunpack.c.0.s8 %v2782
        %v2784 = vlaneseq
        %v2785 = vshrl.u32 %v2784, 7
        %v2786 = vsub.s32 %v2783, %v2785
        %v2787 = vrot.slane %v2771, %v2786
        %v2789 = vunpack.c.l.s4 1966171168
        %v2790 = vunpack.c.0.s8 %v2789
        %v2791 = vlaneseq
        %v2792 = vshrl.u32 %v2791, 7
        %v2793 = vsub.s32 %v2790, %v2792
        %v2794 = vrot.slane %v2772, %v2793
        %v2796 = vunpack.c.l.s4 1966171168
        %v2797 = vunpack.c.0.s8 %v2796
        %v2798 = vlaneseq
        %v2799 = vshrl.u32 %v2798, 7
        %v2800 = vsub.s32 %v2797, %v2799
        %v2801 = vrot.slane %v2773, %v2800
        %v2802 = vcombine.low %v2780, %v2787
        %v2803 = vcombine.low %v2794, %v2801
        %v2805 = vunpack.c.l.s4 1966171168
        %v2806 = vunpack.c.0.s8 %v2805
        %v2807 = vlaneseq
        %v2808 = vshrl.u32 %v2807, 7
        %v2809 = vsub.s32 %v2806, %v2808
        %v2810 = vrot.slane %v2802, %v2809
        %v2812 = vunpack.c.l.s4 1966171168
        %v2813 = vunpack.c.0.s8 %v2812
        %v2814 = vlaneseq
        %v2815 = vshrl.u32 %v2814, 7
        %v2816 = vsub.s32 %v2813, %v2815
        %v2817 = vrot.slane %v2803, %v2816
        %v2818 = vcombine.low %v2810, %v2817
        %v2819 = vcombine.low %v1662, %v1666
        %v2820 = vcombine.low %v1670, %v1674
        %v2821 = vcombine.low %v1678, %v1682
        %v2822 = vcombine.low %v1686, %v1690
        %v2824 = vunpack.c.l.s4 1966171168
        %v2825 = vunpack.c.0.s8 %v2824
        %v2826 = vlaneseq
        %v2827 = vshrl.u32 %v2826, 7
        %v2828 = vsub.s32 %v2825, %v2827
        %v2829 = vrot.slane %v2819, %v2828
        %v2831 = vunpack.c.l.s4 1966171168
        %v2832 = vunpack.c.0.s8 %v2831
        %v2833 = vlaneseq
        %v2834 = vshrl.u32 %v2833, 7
        %v2835 = vsub.s32 %v2832, %v2834
        %v2836 = vrot.slane %v2820, %v2835
        %v2838 = vunpack.c.l.s4 1966171168
        %v2839 = vunpack.c.0.s8 %v2838
        %v2840 = vlaneseq
        %v2841 = vshrl.u32 %v2840, 7
        %v2842 = vsub.s32 %v2839, %v2841
        %v2843 = vrot.slane %v2821, %v2842
        %v2845 = vunpack.c.l.s4 1966171168
        %v2846 = vunpack.c.0.s8 %v2845
        %v2847 = vlaneseq
        %v2848 = vshrl.u32 %v2847, 7
        %v2849 = vsub.s32 %v2846, %v2848
        %v2850 = vrot.slane %v2822, %v2849
        %v2851 = vcombine.low %v2829, %v2836
        %v2852 = vcombine.low %v2843, %v2850
        %v2854 = vunpack.c.l.s4 1966171168
        %v2855 = vunpack.c.0.s8 %v2854
        %v2856 = vlaneseq
        %v2857 = vshrl.u32 %v2856, 7
        %v2858 = vsub.s32 %v2855, %v2857
        %v2859 = vrot.slane %v2851, %v2858
        %v2861 = vunpack.c.l.s4 1966171168
        %v2862 = vunpack.c.0.s8 %v2861
        %v2863 = vlaneseq
        %v2864 = vshrl.u32 %v2863, 7
        %v2865 = vsub.s32 %v2862, %v2864
        %v2866 = vrot.slane %v2852, %v2865
        %v2867 = vcombine.low %v2859, %v2866
        %v2868 = vcombine.low %v1694, %v1698
        %v2869 = vcombine.low %v1702, %v1706
        %v2870 = vcombine.low %v1710, %v1714
        %v2871 = vcombine.low %v1718, %v1722
        %v2873 = vunpack.c.l.s4 1966171168
        %v2874 = vunpack.c.0.s8 %v2873
        %v2875 = vlaneseq
        %v2876 = vshrl.u32 %v2875, 7
        %v2877 = vsub.s32 %v2874, %v2876
        %v2878 = vrot.slane %v2868, %v2877
        %v2880 = vunpack.c.l.s4 1966171168
        %v2881 = vunpack.c.0.s8 %v2880
        %v2882 = vlaneseq
        %v2883 = vshrl.u32 %v2882, 7
        %v2884 = vsub.s32 %v2881, %v2883
        %v2885 = vrot.slane %v2869, %v2884
        %v2887 = vunpack.c.l.s4 1966171168
        %v2888 = vunpack.c.0.s8 %v2887
        %v2889 = vlaneseq
        %v2890 = vshrl.u32 %v2889, 7
        %v2891 = vsub.s32 %v2888, %v2890
        %v2892 = vrot.slane %v2870, %v2891
        %v2894 = vunpack.c.l.s4 1966171168
        %v2895 = vunpack.c.0.s8 %v2894
        %v2896 = vlaneseq
        %v2897 = vshrl.u32 %v2896, 7
        %v2898 = vsub.s32 %v2895, %v2897
        %v2899 = vrot.slane %v2871, %v2898
        %v2900 = vcombine.low %v2878, %v2885
        %v2901 = vcombine.low %v2892, %v2899
        %v2903 = vunpack.c.l.s4 1966171168
        %v2904 = vunpack.c.0.s8 %v2903
        %v2905 = vlaneseq
        %v2906 = vshrl.u32 %v2905, 7
        %v2907 = vsub.s32 %v2904, %v2906
        %v2908 = vrot.slane %v2900, %v2907
        %v2910 = vunpack.c.l.s4 1966171168
        %v2911 = vunpack.c.0.s8 %v2910
        %v2912 = vlaneseq
        %v2913 = vshrl.u32 %v2912, 7
        %v2914 = vsub.s32 %v2911, %v2913
        %v2915 = vrot.slane %v2901, %v2914
        %v2916 = vcombine.low %v2908, %v2915
        %v2917 = vcombine.low %v1726, %v1730
        %v2918 = vcombine.low %v1734, %v1738
        %v2919 = vcombine.low %v1742, %v1746
        %v2920 = vcombine.low %v1750, %v1754
        %v2922 = vunpack.c.l.s4 1966171168
        %v2923 = vunpack.c.0.s8 %v2922
        %v2924 = vlaneseq
        %v2925 = vshrl.u32 %v2924, 7
        %v2926 = vsub.s32 %v2923, %v2925
        %v2927 = vrot.slane %v2917, %v2926
        %v2929 = vunpack.c.l.s4 1966171168
        %v2930 = vunpack.c.0.s8 %v2929
        %v2931 = vlaneseq
        %v2932 = vshrl.u32 %v2931, 7
        %v2933 = vsub.s32 %v2930, %v2932
        %v2934 = vrot.slane %v2918, %v2933
        %v2936 = vunpack.c.l.s4 1966171168
        %v2937 = vunpack.c.0.s8 %v2936
        %v2938 = vlaneseq
        %v2939 = vshrl.u32 %v2938, 7
        %v2940 = vsub.s32 %v2937, %v2939
        %v2941 = vrot.slane %v2919, %v2940
        %v2943 = vunpack.c.l.s4 1966171168
        %v2944 = vunpack.c.0.s8 %v2943
        %v2945 = vlaneseq
        %v2946 = vshrl.u32 %v2945, 7
        %v2947 = vsub.s32 %v2944, %v2946
        %v2948 = vrot.slane %v2920, %v2947
        %v2949 = vcombine.low %v2927, %v2934
        %v2950 = vcombine.low %v2941, %v2948
        %v2952 = vunpack.c.l.s4 1966171168
        %v2953 = vunpack.c.0.s8 %v2952
        %v2954 = vlaneseq
        %v2955 = vshrl.u32 %v2954, 7
        %v2956 = vsub.s32 %v2953, %v2955
        %v2957 = vrot.slane %v2949, %v2956
        %v2959 = vunpack.c.l.s4 1966171168
        %v2960 = vunpack.c.0.s8 %v2959
        %v2961 = vlaneseq
        %v2962 = vshrl.u32 %v2961, 7
        %v2963 = vsub.s32 %v2960, %v2962
        %v2964 = vrot.slane %v2950, %v2963
        %v2965 = vcombine.low %v2957, %v2964
        %v2966 = vcombine.low %v1758, %v1762
        %v2967 = vcombine.low %v1766, %v1770
        %v2968 = vcombine.low %v1774, %v1778
        %v2969 = vcombine.low %v1782, %v1786
        %v2971 = vunpack.c.l.s4 1966171168
        %v2972 = vunpack.c.0.s8 %v2971
        %v2973 = vlaneseq
        %v2974 = vshrl.u32 %v2973, 7
        %v2975 = vsub.s32 %v2972, %v2974
        %v2976 = vrot.slane %v2966, %v2975
        %v2978 = vunpack.c.l.s4 1966171168
        %v2979 = vunpack.c.0.s8 %v2978
        %v2980 = vlaneseq
        %v2981 = vshrl.u32 %v2980, 7
        %v2982 = vsub.s32 %v2979, %v2981
        %v2983 = vrot.slane %v2967, %v2982
        %v2985 = vunpack.c.l.s4 1966171168
        %v2986 = vunpack.c.0.s8 %v2985
        %v2987 = vlaneseq
        %v2988 = vshrl.u32 %v2987, 7
        %v2989 = vsub.s32 %v2986, %v2988
        %v2990 = vrot.slane %v2968, %v2989
        %v2992 = vunpack.c.l.s4 1966171168
        %v2993 = vunpack.c.0.s8 %v2992
        %v2994 = vlaneseq
        %v2995 = vshrl.u32 %v2994, 7
        %v2996 = vsub.s32 %v2993, %v2995
        %v2997 = vrot.slane %v2969, %v2996
        %v2998 = vcombine.low %v2976, %v2983
        %v2999 = vcombine.low %v2990, %v2997
        %v3001 = vunpack.c.l.s4 1966171168
        %v3002 = vunpack.c.0.s8 %v3001
        %v3003 = vlaneseq
        %v3004 = vshrl.u32 %v3003, 7
        %v3005 = vsub.s32 %v3002, %v3004
        %v3006 = vrot.slane %v2998, %v3005
        %v3008 = vunpack.c.l.s4 1966171168
        %v3009 = vunpack.c.0.s8 %v3008
        %v3010 = vlaneseq
        %v3011 = vshrl.u32 %v3010, 7
        %v3012 = vsub.s32 %v3009, %v3011
        %v3013 = vrot.slane %v2999, %v3012
        %v3014 = vcombine.low %v3006, %v3013
        %v3015 = vcombine.low %v1790, %v1794
        %v3016 = vcombine.low %v1798, %v1802
        %v3017 = vcombine.low %v1806, %v1810
        %v3018 = vcombine.low %v1814, %v1818
        %v3020 = vunpack.c.l.s4 1966171168
        %v3021 = vunpack.c.0.s8 %v3020
        %v3022 = vlaneseq
        %v3023 = vshrl.u32 %v3022, 7
        %v3024 = vsub.s32 %v3021, %v3023
        %v3025 = vrot.slane %v3015, %v3024
        %v3027 = vunpack.c.l.s4 1966171168
        %v3028 = vunpack.c.0.s8 %v3027
        %v3029 = vlaneseq
        %v3030 = vshrl.u32 %v3029, 7
        %v3031 = vsub.s32 %v3028, %v3030
        %v3032 = vrot.slane %v3016, %v3031
        %v3034 = vunpack.c.l.s4 1966171168
        %v3035 = vunpack.c.0.s8 %v3034
        %v3036 = vlaneseq
        %v3037 = vshrl.u32 %v3036, 7
        %v3038 = vsub.s32 %v3035, %v3037
        %v3039 = vrot.slane %v3017, %v3038
        %v3041 = vunpack.c.l.s4 1966171168
        %v3042 = vunpack.c.0.s8 %v3041
        %v3043 = vlaneseq
        %v3044 = vshrl.u32 %v3043, 7
        %v3045 = vsub.s32 %v3042, %v3044
        %v3046 = vrot.slane %v3018, %v3045
        %v3047 = vcombine.low %v3025, %v3032
        %v3048 = vcombine.low %v3039, %v3046
        %v3050 = vunpack.c.l.s4 1966171168
        %v3051 = vunpack.c.0.s8 %v3050
        %v3052 = vlaneseq
        %v3053 = vshrl.u32 %v3052, 7
        %v3054 = vsub.s32 %v3051, %v3053
        %v3055 = vrot.slane %v3047, %v3054
        %v3057 = vunpack.c.l.s4 1966171168
        %v3058 = vunpack.c.0.s8 %v3057
        %v3059 = vlaneseq
        %v3060 = vshrl.u32 %v3059, 7
        %v3061 = vsub.s32 %v3058, %v3060
        %v3062 = vrot.slane %v3048, %v3061
        %v3063 = vcombine.low %v3055, %v3062
        %v3064 = vcombine.low %v1822, %v1826
        %v3065 = vcombine.low %v1830, %v1834
        %v3066 = vcombine.low %v1838, %v1842
        %v3067 = vcombine.low %v1846, %v1850
        %v3069 = vunpack.c.l.s4 1966171168
        %v3070 = vunpack.c.0.s8 %v3069
        %v3071 = vlaneseq
        %v3072 = vshrl.u32 %v3071, 7
        %v3073 = vsub.s32 %v3070, %v3072
        %v3074 = vrot.slane %v3064, %v3073
        %v3076 = vunpack.c.l.s4 1966171168
        %v3077 = vunpack.c.0.s8 %v3076
        %v3078 = vlaneseq
        %v3079 = vshrl.u32 %v3078, 7
        %v3080 = vsub.s32 %v3077, %v3079
        %v3081 = vrot.slane %v3065, %v3080
        %v3083 = vunpack.c.l.s4 1966171168
        %v3084 = vunpack.c.0.s8 %v3083
        %v3085 = vlaneseq
        %v3086 = vshrl.u32 %v3085, 7
        %v3087 = vsub.s32 %v3084, %v3086
        %v3088 = vrot.slane %v3066, %v3087
        %v3090 = vunpack.c.l.s4 1966171168
        %v3091 = vunpack.c.0.s8 %v3090
        %v3092 = vlaneseq
        %v3093 = vshrl.u32 %v3092, 7
        %v3094 = vsub.s32 %v3091, %v3093
        %v3095 = vrot.slane %v3067, %v3094
        %v3096 = vcombine.low %v3074, %v3081
        %v3097 = vcombine.low %v3088, %v3095
        %v3099 = vunpack.c.l.s4 1966171168
        %v3100 = vunpack.c.0.s8 %v3099
        %v3101 = vlaneseq
        %v3102 = vshrl.u32 %v3101, 7
        %v3103 = vsub.s32 %v3100, %v3102
        %v3104 = vrot.slane %v3096, %v3103
        %v3106 = vunpack.c.l.s4 1966171168
        %v3107 = vunpack.c.0.s8 %v3106
        %v3108 = vlaneseq
        %v3109 = vshrl.u32 %v3108, 7
        %v3110 = vsub.s32 %v3107, %v3109
        %v3111 = vrot.slane %v3097, %v3110
        %v3112 = vcombine.low %v3104, %v3111
        %v3113 = vcombine.low %v1854, %v1858
        %v3114 = vcombine.low %v1862, %v1866
        %v3115 = vcombine.low %v1870, %v1874
        %v3116 = vcombine.low %v1878, %v1882
        %v3118 = vunpack.c.l.s4 1966171168
        %v3119 = vunpack.c.0.s8 %v3118
        %v3120 = vlaneseq
        %v3121 = vshrl.u32 %v3120, 7
        %v3122 = vsub.s32 %v3119, %v3121
        %v3123 = vrot.slane %v3113, %v3122
        %v3125 = vunpack.c.l.s4 1966171168
        %v3126 = vunpack.c.0.s8 %v3125
        %v3127 = vlaneseq
        %v3128 = vshrl.u32 %v3127, 7
        %v3129 = vsub.s32 %v3126, %v3128
        %v3130 = vrot.slane %v3114, %v3129
        %v3132 = vunpack.c.l.s4 1966171168
        %v3133 = vunpack.c.0.s8 %v3132
        %v3134 = vlaneseq
        %v3135 = vshrl.u32 %v3134, 7
        %v3136 = vsub.s32 %v3133, %v3135
        %v3137 = vrot.slane %v3115, %v3136
        %v3139 = vunpack.c.l.s4 1966171168
        %v3140 = vunpack.c.0.s8 %v3139
        %v3141 = vlaneseq
        %v3142 = vshrl.u32 %v3141, 7
        %v3143 = vsub.s32 %v3140, %v3142
        %v3144 = vrot.slane %v3116, %v3143
        %v3145 = vcombine.low %v3123, %v3130
        %v3146 = vcombine.low %v3137, %v3144
        %v3148 = vunpack.c.l.s4 1966171168
        %v3149 = vunpack.c.0.s8 %v3148
        %v3150 = vlaneseq
        %v3151 = vshrl.u32 %v3150, 7
        %v3152 = vsub.s32 %v3149, %v3151
        %v3153 = vrot.slane %v3145, %v3152
        %v3155 = vunpack.c.l.s4 1966171168
        %v3156 = vunpack.c.0.s8 %v3155
        %v3157 = vlaneseq
        %v3158 = vshrl.u32 %v3157, 7
        %v3159 = vsub.s32 %v3156, %v3158
        %v3160 = vrot.slane %v3146, %v3159
        %v3161 = vcombine.low %v3153, %v3160
        %v3162 = vcombine.low %v1886, %v1890
        %v3163 = vcombine.low %v1894, %v1898
        %v3164 = vcombine.low %v1902, %v1906
        %v3165 = vcombine.low %v1910, %v1914
        %v3167 = vunpack.c.l.s4 1966171168
        %v3168 = vunpack.c.0.s8 %v3167
        %v3169 = vlaneseq
        %v3170 = vshrl.u32 %v3169, 7
        %v3171 = vsub.s32 %v3168, %v3170
        %v3172 = vrot.slane %v3162, %v3171
        %v3174 = vunpack.c.l.s4 1966171168
        %v3175 = vunpack.c.0.s8 %v3174
        %v3176 = vlaneseq
        %v3177 = vshrl.u32 %v3176, 7
        %v3178 = vsub.s32 %v3175, %v3177
        %v3179 = vrot.slane %v3163, %v3178
        %v3181 = vunpack.c.l.s4 1966171168
        %v3182 = vunpack.c.0.s8 %v3181
        %v3183 = vlaneseq
        %v3184 = vshrl.u32 %v3183, 7
        %v3185 = vsub.s32 %v3182, %v3184
        %v3186 = vrot.slane %v3164, %v3185
        %v3188 = vunpack.c.l.s4 1966171168
        %v3189 = vunpack.c.0.s8 %v3188
        %v3190 = vlaneseq
        %v3191 = vshrl.u32 %v3190, 7
        %v3192 = vsub.s32 %v3189, %v3191
        %v3193 = vrot.slane %v3165, %v3192
        %v3194 = vcombine.low %v3172, %v3179
        %v3195 = vcombine.low %v3186, %v3193
        %v3197 = vunpack.c.l.s4 1966171168
        %v3198 = vunpack.c.0.s8 %v3197
        %v3199 = vlaneseq
        %v3200 = vshrl.u32 %v3199, 7
        %v3201 = vsub.s32 %v3198, %v3200
        %v3202 = vrot.slane %v3194, %v3201
        %v3204 = vunpack.c.l.s4 1966171168
        %v3205 = vunpack.c.0.s8 %v3204
        %v3206 = vlaneseq
        %v3207 = vshrl.u32 %v3206, 7
        %v3208 = vsub.s32 %v3205, %v3207
        %v3209 = vrot.slane %v3195, %v3208
        %v3210 = vcombine.low %v3202, %v3209
        %v3211 = vcombine.low %v1918, %v1922
        %v3212 = vcombine.low %v1926, %v1930
        %v3213 = vcombine.low %v1934, %v1938
        %v3214 = vcombine.low %v1942, %v1946
        %v3216 = vunpack.c.l.s4 1966171168
        %v3217 = vunpack.c.0.s8 %v3216
        %v3218 = vlaneseq
        %v3219 = vshrl.u32 %v3218, 7
        %v3220 = vsub.s32 %v3217, %v3219
        %v3221 = vrot.slane %v3211, %v3220
        %v3223 = vunpack.c.l.s4 1966171168
        %v3224 = vunpack.c.0.s8 %v3223
        %v3225 = vlaneseq
        %v3226 = vshrl.u32 %v3225, 7
        %v3227 = vsub.s32 %v3224, %v3226
        %v3228 = vrot.slane %v3212, %v3227
        %v3230 = vunpack.c.l.s4 1966171168
        %v3231 = vunpack.c.0.s8 %v3230
        %v3232 = vlaneseq
        %v3233 = vshrl.u32 %v3232, 7
        %v3234 = vsub.s32 %v3231, %v3233
        %v3235 = vrot.slane %v3213, %v3234
        %v3237 = vunpack.c.l.s4 1966171168
        %v3238 = vunpack.c.0.s8 %v3237
        %v3239 = vlaneseq
        %v3240 = vshrl.u32 %v3239, 7
        %v3241 = vsub.s32 %v3238, %v3240
        %v3242 = vrot.slane %v3214, %v3241
        %v3243 = vcombine.low %v3221, %v3228
        %v3244 = vcombine.low %v3235, %v3242
        %v3246 = vunpack.c.l.s4 1966171168
        %v3247 = vunpack.c.0.s8 %v3246
        %v3248 = vlaneseq
        %v3249 = vshrl.u32 %v3248, 7
        %v3250 = vsub.s32 %v3247, %v3249
        %v3251 = vrot.slane %v3243, %v3250
        %v3253 = vunpack.c.l.s4 1966171168
        %v3254 = vunpack.c.0.s8 %v3253
        %v3255 = vlaneseq
        %v3256 = vshrl.u32 %v3255, 7
        %v3257 = vsub.s32 %v3254, %v3256
        %v3258 = vrot.slane %v3244, %v3257
        %v3259 = vcombine.low %v3251, %v3258
        %v3260 = vcombine.low %v1950, %v1954
        %v3261 = vcombine.low %v1958, %v1962
        %v3262 = vcombine.low %v1966, %v1970
        %v3263 = vcombine.low %v1974, %v1978
        %v3265 = vunpack.c.l.s4 1966171168
        %v3266 = vunpack.c.0.s8 %v3265
        %v3267 = vlaneseq
        %v3268 = vshrl.u32 %v3267, 7
        %v3269 = vsub.s32 %v3266, %v3268
        %v3270 = vrot.slane %v3260, %v3269
        %v3272 = vunpack.c.l.s4 1966171168
        %v3273 = vunpack.c.0.s8 %v3272
        %v3274 = vlaneseq
        %v3275 = vshrl.u32 %v3274, 7
        %v3276 = vsub.s32 %v3273, %v3275
        %v3277 = vrot.slane %v3261, %v3276
        %v3279 = vunpack.c.l.s4 1966171168
        %v3280 = vunpack.c.0.s8 %v3279
        %v3281 = vlaneseq
        %v3282 = vshrl.u32 %v3281, 7
        %v3283 = vsub.s32 %v3280, %v3282
        %v3284 = vrot.slane %v3262, %v3283
        %v3286 = vunpack.c.l.s4 1966171168
        %v3287 = vunpack.c.0.s8 %v3286
        %v3288 = vlaneseq
        %v3289 = vshrl.u32 %v3288, 7
        %v3290 = vsub.s32 %v3287, %v3289
        %v3291 = vrot.slane %v3263, %v3290
        %v3292 = vcombine.low %v3270, %v3277
        %v3293 = vcombine.low %v3284, %v3291
        %v3295 = vunpack.c.l.s4 1966171168
        %v3296 = vunpack.c.0.s8 %v3295
        %v3297 = vlaneseq
        %v3298 = vshrl.u32 %v3297, 7
        %v3299 = vsub.s32 %v3296, %v3298
        %v3300 = vrot.slane %v3292, %v3299
        %v3302 = vunpack.c.l.s4 1966171168
        %v3303 = vunpack.c.0.s8 %v3302
        %v3304 = vlaneseq
        %v3305 = vshrl.u32 %v3304, 7
        %v3306 = vsub.s32 %v3303, %v3305
        %v3307 = vrot.slane %v3293, %v3306
        %v3308 = vcombine.low %v3300, %v3307
        %v3309 = vcombine.low %v1982, %v1986
        %v3310 = vcombine.low %v1990, %v1994
        %v3311 = vcombine.low %v1998, %v2002
        %v3312 = vcombine.low %v2006, %v2010
        %v3314 = vunpack.c.l.s4 1966171168
        %v3315 = vunpack.c.0.s8 %v3314
        %v3316 = vlaneseq
        %v3317 = vshrl.u32 %v3316, 7
        %v3318 = vsub.s32 %v3315, %v3317
        %v3319 = vrot.slane %v3309, %v3318
        %v3321 = vunpack.c.l.s4 1966171168
        %v3322 = vunpack.c.0.s8 %v3321
        %v3323 = vlaneseq
        %v3324 = vshrl.u32 %v3323, 7
        %v3325 = vsub.s32 %v3322, %v3324
        %v3326 = vrot.slane %v3310, %v3325
        %v3328 = vunpack.c.l.s4 1966171168
        %v3329 = vunpack.c.0.s8 %v3328
        %v3330 = vlaneseq
        %v3331 = vshrl.u32 %v3330, 7
        %v3332 = vsub.s32 %v3329, %v3331
        %v3333 = vrot.slane %v3311, %v3332
        %v3335 = vunpack.c.l.s4 1966171168
        %v3336 = vunpack.c.0.s8 %v3335
        %v3337 = vlaneseq
        %v3338 = vshrl.u32 %v3337, 7
        %v3339 = vsub.s32 %v3336, %v3338
        %v3340 = vrot.slane %v3312, %v3339
        %v3341 = vcombine.low %v3319, %v3326
        %v3342 = vcombine.low %v3333, %v3340
        %v3344 = vunpack.c.l.s4 1966171168
        %v3345 = vunpack.c.0.s8 %v3344
        %v3346 = vlaneseq
        %v3347 = vshrl.u32 %v3346, 7
        %v3348 = vsub.s32 %v3345, %v3347
        %v3349 = vrot.slane %v3341, %v3348
        %v3351 = vunpack.c.l.s4 1966171168
        %v3352 = vunpack.c.0.s8 %v3351
        %v3353 = vlaneseq
        %v3354 = vshrl.u32 %v3353, 7
        %v3355 = vsub.s32 %v3352, %v3354
        %v3356 = vrot.slane %v3342, %v3355
        %v3357 = vcombine.low %v3349, %v3356
        %v3358 = vcombine.low %v2014, %v2018
        %v3359 = vcombine.low %v2022, %v2026
        %v3360 = vcombine.low %v2030, %v2034
        %v3361 = vcombine.low %v2038, %v2042
        %v3363 = vunpack.c.l.s4 1966171168
        %v3364 = vunpack.c.0.s8 %v3363
        %v3365 = vlaneseq
        %v3366 = vshrl.u32 %v3365, 7
        %v3367 = vsub.s32 %v3364, %v3366
        %v3368 = vrot.slane %v3358, %v3367
        %v3370 = vunpack.c.l.s4 1966171168
        %v3371 = vunpack.c.0.s8 %v3370
        %v3372 = vlaneseq
        %v3373 = vshrl.u32 %v3372, 7
        %v3374 = vsub.s32 %v3371, %v3373
        %v3375 = vrot.slane %v3359, %v3374
        %v3377 = vunpack.c.l.s4 1966171168
        %v3378 = vunpack.c.0.s8 %v3377
        %v3379 = vlaneseq
        %v3380 = vshrl.u32 %v3379, 7
        %v3381 = vsub.s32 %v3378, %v3380
        %v3382 = vrot.slane %v3360, %v3381
        %v3384 = vunpack.c.l.s4 1966171168
        %v3385 = vunpack.c.0.s8 %v3384
        %v3386 = vlaneseq
        %v3387 = vshrl.u32 %v3386, 7
        %v3388 = vsub.s32 %v3385, %v3387
        %v3389 = vrot.slane %v3361, %v3388
        %v3390 = vcombine.low %v3368, %v3375
        %v3391 = vcombine.low %v3382, %v3389
        %v3393 = vunpack.c.l.s4 1966171168
        %v3394 = vunpack.c.0.s8 %v3393
        %v3395 = vlaneseq
        %v3396 = vshrl.u32 %v3395, 7
        %v3397 = vsub.s32 %v3394, %v3396
        %v3398 = vrot.slane %v3390, %v3397
        %v3400 = vunpack.c.l.s4 1966171168
        %v3401 = vunpack.c.0.s8 %v3400
        %v3402 = vlaneseq
        %v3403 = vshrl.u32 %v3402, 7
        %v3404 = vsub.s32 %v3401, %v3403
        %v3405 = vrot.slane %v3391, %v3404
        %v3406 = vcombine.low %v3398, %v3405
        %v3407 = vcombine.low %v2046, %v2050
        %v3408 = vcombine.low %v2054, %v2058
        %v3409 = vcombine.low %v2062, %v2066
        %v3410 = vcombine.low %v2070, %v2074
        %v3412 = vunpack.c.l.s4 1966171168
        %v3413 = vunpack.c.0.s8 %v3412
        %v3414 = vlaneseq
        %v3415 = vshrl.u32 %v3414, 7
        %v3416 = vsub.s32 %v3413, %v3415
        %v3417 = vrot.slane %v3407, %v3416
        %v3419 = vunpack.c.l.s4 1966171168
        %v3420 = vunpack.c.0.s8 %v3419
        %v3421 = vlaneseq
        %v3422 = vshrl.u32 %v3421, 7
        %v3423 = vsub.s32 %v3420, %v3422
        %v3424 = vrot.slane %v3408, %v3423
        %v3426 = vunpack.c.l.s4 1966171168
        %v3427 = vunpack.c.0.s8 %v3426
        %v3428 = vlaneseq
        %v3429 = vshrl.u32 %v3428, 7
        %v3430 = vsub.s32 %v3427, %v3429
        %v3431 = vrot.slane %v3409, %v3430
        %v3433 = vunpack.c.l.s4 1966171168
        %v3434 = vunpack.c.0.s8 %v3433
        %v3435 = vlaneseq
        %v3436 = vshrl.u32 %v3435, 7
        %v3437 = vsub.s32 %v3434, %v3436
        %v3438 = vrot.slane %v3410, %v3437
        %v3439 = vcombine.low %v3417, %v3424
        %v3440 = vcombine.low %v3431, %v3438
        %v3442 = vunpack.c.l.s4 1966171168
        %v3443 = vunpack.c.0.s8 %v3442
        %v3444 = vlaneseq
        %v3445 = vshrl.u32 %v3444, 7
        %v3446 = vsub.s32 %v3443, %v3445
        %v3447 = vrot.slane %v3439, %v3446
        %v3449 = vunpack.c.l.s4 1966171168
        %v3450 = vunpack.c.0.s8 %v3449
        %v3451 = vlaneseq
        %v3452 = vshrl.u32 %v3451, 7
        %v3453 = vsub.s32 %v3450, %v3452
        %v3454 = vrot.slane %v3440, %v3453
        %v3455 = vcombine.low %v3447, %v3454
        %v3456 = vcombine.low %v2078, %v2082
        %v3457 = vcombine.low %v2086, %v2090
        %v3458 = vcombine.low %v2094, %v2098
        %v3459 = vcombine.low %v2102, %v2106
        %v3461 = vunpack.c.l.s4 1966171168
        %v3462 = vunpack.c.0.s8 %v3461
        %v3463 = vlaneseq
        %v3464 = vshrl.u32 %v3463, 7
        %v3465 = vsub.s32 %v3462, %v3464
        %v3466 = vrot.slane %v3456, %v3465
        %v3468 = vunpack.c.l.s4 1966171168
        %v3469 = vunpack.c.0.s8 %v3468
        %v3470 = vlaneseq
        %v3471 = vshrl.u32 %v3470, 7
        %v3472 = vsub.s32 %v3469, %v3471
        %v3473 = vrot.slane %v3457, %v3472
        %v3475 = vunpack.c.l.s4 1966171168
        %v3476 = vunpack.c.0.s8 %v3475
        %v3477 = vlaneseq
        %v3478 = vshrl.u32 %v3477, 7
        %v3479 = vsub.s32 %v3476, %v3478
        %v3480 = vrot.slane %v3458, %v3479
        %v3482 = vunpack.c.l.s4 1966171168
        %v3483 = vunpack.c.0.s8 %v3482
        %v3484 = vlaneseq
        %v3485 = vshrl.u32 %v3484, 7
        %v3486 = vsub.s32 %v3483, %v3485
        %v3487 = vrot.slane %v3459, %v3486
        %v3488 = vcombine.low %v3466, %v3473
        %v3489 = vcombine.low %v3480, %v3487
        %v3491 = vunpack.c.l.s4 1966171168
        %v3492 = vunpack.c.0.s8 %v3491
        %v3493 = vlaneseq
        %v3494 = vshrl.u32 %v3493, 7
        %v3495 = vsub.s32 %v3492, %v3494
        %v3496 = vrot.slane %v3488, %v3495
        %v3498 = vunpack.c.l.s4 1966171168
        %v3499 = vunpack.c.0.s8 %v3498
        %v3500 = vlaneseq
        %v3501 = vshrl.u32 %v3500, 7
        %v3502 = vsub.s32 %v3499, %v3501
        %v3503 = vrot.slane %v3489, %v3502
        %v3504 = vcombine.low %v3496, %v3503
        %v3505 = vcombine.low %v2110, %v2114
        %v3506 = vcombine.low %v2118, %v2122
        %v3507 = vcombine.low %v2126, %v2130
        %v3508 = vcombine.low %v2134, %v2138
        %v3510 = vunpack.c.l.s4 1966171168
        %v3511 = vunpack.c.0.s8 %v3510
        %v3512 = vlaneseq
        %v3513 = vshrl.u32 %v3512, 7
        %v3514 = vsub.s32 %v3511, %v3513
        %v3515 = vrot.slane %v3505, %v3514
        %v3517 = vunpack.c.l.s4 1966171168
        %v3518 = vunpack.c.0.s8 %v3517
        %v3519 = vlaneseq
        %v3520 = vshrl.u32 %v3519, 7
        %v3521 = vsub.s32 %v3518, %v3520
        %v3522 = vrot.slane %v3506, %v3521
        %v3524 = vunpack.c.l.s4 1966171168
        %v3525 = vunpack.c.0.s8 %v3524
        %v3526 = vlaneseq
        %v3527 = vshrl.u32 %v3526, 7
        %v3528 = vsub.s32 %v3525, %v3527
        %v3529 = vrot.slane %v3507, %v3528
        %v3531 = vunpack.c.l.s4 1966171168
        %v3532 = vunpack.c.0.s8 %v3531
        %v3533 = vlaneseq
        %v3534 = vshrl.u32 %v3533, 7
        %v3535 = vsub.s32 %v3532, %v3534
        %v3536 = vrot.slane %v3508, %v3535
        %v3537 = vcombine.low %v3515, %v3522
        %v3538 = vcombine.low %v3529, %v3536
        %v3540 = vunpack.c.l.s4 1966171168
        %v3541 = vunpack.c.0.s8 %v3540
        %v3542 = vlaneseq
        %v3543 = vshrl.u32 %v3542, 7
        %v3544 = vsub.s32 %v3541, %v3543
        %v3545 = vrot.slane %v3537, %v3544
        %v3547 = vunpack.c.l.s4 1966171168
        %v3548 = vunpack.c.0.s8 %v3547
        %v3549 = vlaneseq
        %v3550 = vshrl.u32 %v3549, 7
        %v3551 = vsub.s32 %v3548, %v3550
        %v3552 = vrot.slane %v3538, %v3551
        %v3553 = vcombine.low %v3545, %v3552
        %v3554 = vcombine.low %v2142, %v2146
        %v3555 = vcombine.low %v2150, %v2154
        %v3556 = vcombine.low %v2158, %v2162
        %v3557 = vcombine.low %v2166, %v2170
        %v3559 = vunpack.c.l.s4 1966171168
        %v3560 = vunpack.c.0.s8 %v3559
        %v3561 = vlaneseq
        %v3562 = vshrl.u32 %v3561, 7
        %v3563 = vsub.s32 %v3560, %v3562
        %v3564 = vrot.slane %v3554, %v3563
        %v3566 = vunpack.c.l.s4 1966171168
        %v3567 = vunpack.c.0.s8 %v3566
        %v3568 = vlaneseq
        %v3569 = vshrl.u32 %v3568, 7
        %v3570 = vsub.s32 %v3567, %v3569
        %v3571 = vrot.slane %v3555, %v3570
        %v3573 = vunpack.c.l.s4 1966171168
        %v3574 = vunpack.c.0.s8 %v3573
        %v3575 = vlaneseq
        %v3576 = vshrl.u32 %v3575, 7
        %v3577 = vsub.s32 %v3574, %v3576
        %v3578 = vrot.slane %v3556, %v3577
        %v3580 = vunpack.c.l.s4 1966171168
        %v3581 = vunpack.c.0.s8 %v3580
        %v3582 = vlaneseq
        %v3583 = vshrl.u32 %v3582, 7
        %v3584 = vsub.s32 %v3581, %v3583
        %v3585 = vrot.slane %v3557, %v3584
        %v3586 = vcombine.low %v3564, %v3571
        %v3587 = vcombine.low %v3578, %v3585
        %v3589 = vunpack.c.l.s4 1966171168
        %v3590 = vunpack.c.0.s8 %v3589
        %v3591 = vlaneseq
        %v3592 = vshrl.u32 %v3591, 7
        %v3593 = vsub.s32 %v3590, %v3592
        %v3594 = vrot.slane %v3586, %v3593
        %v3596 = vunpack.c.l.s4 1966171168
        %v3597 = vunpack.c.0.s8 %v3596
        %v3598 = vlaneseq
        %v3599 = vshrl.u32 %v3598, 7
        %v3600 = vsub.s32 %v3597, %v3599
        %v3601 = vrot.slane %v3587, %v3600
        %v3602 = vcombine.low %v3594, %v3601
        %v3603 = vcombine.low %v2174, %v2178
        %v3604 = vcombine.low %v2182, %v2186
        %v3605 = vcombine.low %v2190, %v2194
        %v3606 = vcombine.low %v2198, %v2202
        %v3608 = vunpack.c.l.s4 1966171168
        %v3609 = vunpack.c.0.s8 %v3608
        %v3610 = vlaneseq
        %v3611 = vshrl.u32 %v3610, 7
        %v3612 = vsub.s32 %v3609, %v3611
        %v3613 = vrot.slane %v3603, %v3612
        %v3615 = vunpack.c.l.s4 1966171168
        %v3616 = vunpack.c.0.s8 %v3615
        %v3617 = vlaneseq
        %v3618 = vshrl.u32 %v3617, 7
        %v3619 = vsub.s32 %v3616, %v3618
        %v3620 = vrot.slane %v3604, %v3619
        %v3622 = vunpack.c.l.s4 1966171168
        %v3623 = vunpack.c.0.s8 %v3622
        %v3624 = vlaneseq
        %v3625 = vshrl.u32 %v3624, 7
        %v3626 = vsub.s32 %v3623, %v3625
        %v3627 = vrot.slane %v3605, %v3626
        %v3629 = vunpack.c.l.s4 1966171168
        %v3630 = vunpack.c.0.s8 %v3629
        %v3631 = vlaneseq
        %v3632 = vshrl.u32 %v3631, 7
        %v3633 = vsub.s32 %v3630, %v3632
        %v3634 = vrot.slane %v3606, %v3633
        %v3635 = vcombine.low %v3613, %v3620
        %v3636 = vcombine.low %v3627, %v3634
        %v3638 = vunpack.c.l.s4 1966171168
        %v3639 = vunpack.c.0.s8 %v3638
        %v3640 = vlaneseq
        %v3641 = vshrl.u32 %v3640, 7
        %v3642 = vsub.s32 %v3639, %v3641
        %v3643 = vrot.slane %v3635, %v3642
        %v3645 = vunpack.c.l.s4 1966171168
        %v3646 = vunpack.c.0.s8 %v3645
        %v3647 = vlaneseq
        %v3648 = vshrl.u32 %v3647, 7
        %v3649 = vsub.s32 %v3646, %v3648
        %v3650 = vrot.slane %v3636, %v3649
        %v3651 = vcombine.low %v3643, %v3650
        %v3652 = vcombine.low %v2206, %v2210
        %v3653 = vcombine.low %v2214, %v2218
        %v3654 = vcombine.low %v2222, %v2226
        %v3655 = vcombine.low %v2230, %v2234
        %v3657 = vunpack.c.l.s4 1966171168
        %v3658 = vunpack.c.0.s8 %v3657
        %v3659 = vlaneseq
        %v3660 = vshrl.u32 %v3659, 7
        %v3661 = vsub.s32 %v3658, %v3660
        %v3662 = vrot.slane %v3652, %v3661
        %v3664 = vunpack.c.l.s4 1966171168
        %v3665 = vunpack.c.0.s8 %v3664
        %v3666 = vlaneseq
        %v3667 = vshrl.u32 %v3666, 7
        %v3668 = vsub.s32 %v3665, %v3667
        %v3669 = vrot.slane %v3653, %v3668
        %v3671 = vunpack.c.l.s4 1966171168
        %v3672 = vunpack.c.0.s8 %v3671
        %v3673 = vlaneseq
        %v3674 = vshrl.u32 %v3673, 7
        %v3675 = vsub.s32 %v3672, %v3674
        %v3676 = vrot.slane %v3654, %v3675
        %v3678 = vunpack.c.l.s4 1966171168
        %v3679 = vunpack.c.0.s8 %v3678
        %v3680 = vlaneseq
        %v3681 = vshrl.u32 %v3680, 7
        %v3682 = vsub.s32 %v3679, %v3681
        %v3683 = vrot.slane %v3655, %v3682
        %v3684 = vcombine.low %v3662, %v3669
        %v3685 = vcombine.low %v3676, %v3683
        %v3687 = vunpack.c.l.s4 1966171168
        %v3688 = vunpack.c.0.s8 %v3687
        %v3689 = vlaneseq
        %v3690 = vshrl.u32 %v3689, 7
        %v3691 = vsub.s32 %v3688, %v3690
        %v3692 = vrot.slane %v3684, %v3691
        %v3694 = vunpack.c.l.s4 1966171168
        %v3695 = vunpack.c.0.s8 %v3694
        %v3696 = vlaneseq
        %v3697 = vshrl.u32 %v3696, 7
        %v3698 = vsub.s32 %v3695, %v3697
        %v3699 = vrot.slane %v3685, %v3698
        %v3700 = vcombine.low %v3692, %v3699
        %v3701 = vcombine.low %v2238, %v2242
        %v3702 = vcombine.low %v2246, %v2250
        %v3703 = vcombine.low %v2254, %v2258
        %v3704 = vcombine.low %v2262, %v2266
        %v3706 = vunpack.c.l.s4 1966171168
        %v3707 = vunpack.c.0.s8 %v3706
        %v3708 = vlaneseq
        %v3709 = vshrl.u32 %v3708, 7
        %v3710 = vsub.s32 %v3707, %v3709
        %v3711 = vrot.slane %v3701, %v3710
        %v3713 = vunpack.c.l.s4 1966171168
        %v3714 = vunpack.c.0.s8 %v3713
        %v3715 = vlaneseq
        %v3716 = vshrl.u32 %v3715, 7
        %v3717 = vsub.s32 %v3714, %v3716
        %v3718 = vrot.slane %v3702, %v3717
        %v3720 = vunpack.c.l.s4 1966171168
        %v3721 = vunpack.c.0.s8 %v3720
        %v3722 = vlaneseq
        %v3723 = vshrl.u32 %v3722, 7
        %v3724 = vsub.s32 %v3721, %v3723
        %v3725 = vrot.slane %v3703, %v3724
        %v3727 = vunpack.c.l.s4 1966171168
        %v3728 = vunpack.c.0.s8 %v3727
        %v3729 = vlaneseq
        %v3730 = vshrl.u32 %v3729, 7
        %v3731 = vsub.s32 %v3728, %v3730
        %v3732 = vrot.slane %v3704, %v3731
        %v3733 = vcombine.low %v3711, %v3718
        %v3734 = vcombine.low %v3725, %v3732
        %v3736 = vunpack.c.l.s4 1966171168
        %v3737 = vunpack.c.0.s8 %v3736
        %v3738 = vlaneseq
        %v3739 = vshrl.u32 %v3738, 7
        %v3740 = vsub.s32 %v3737, %v3739
        %v3741 = vrot.slane %v3733, %v3740
        %v3743 = vunpack.c.l.s4 1966171168
        %v3744 = vunpack.c.0.s8 %v3743
        %v3745 = vlaneseq
        %v3746 = vshrl.u32 %v3745, 7
        %v3747 = vsub.s32 %v3744, %v3746
        %v3748 = vrot.slane %v3734, %v3747
        %v3749 = vcombine.low %v3741, %v3748
        %v3750 = vcombine.low %v2270, %v2274
        %v3751 = vcombine.low %v2278, %v2282
        %v3752 = vcombine.low %v2286, %v2290
        %v3753 = vcombine.low %v2294, %v2298
        %v3755 = vunpack.c.l.s4 1966171168
        %v3756 = vunpack.c.0.s8 %v3755
        %v3757 = vlaneseq
        %v3758 = vshrl.u32 %v3757, 7
        %v3759 = vsub.s32 %v3756, %v3758
        %v3760 = vrot.slane %v3750, %v3759
        %v3762 = vunpack.c.l.s4 1966171168
        %v3763 = vunpack.c.0.s8 %v3762
        %v3764 = vlaneseq
        %v3765 = vshrl.u32 %v3764, 7
        %v3766 = vsub.s32 %v3763, %v3765
        %v3767 = vrot.slane %v3751, %v3766
        %v3769 = vunpack.c.l.s4 1966171168
        %v3770 = vunpack.c.0.s8 %v3769
        %v3771 = vlaneseq
        %v3772 = vshrl.u32 %v3771, 7
        %v3773 = vsub.s32 %v3770, %v3772
        %v3774 = vrot.slane %v3752, %v3773
        %v3776 = vunpack.c.l.s4 1966171168
        %v3777 = vunpack.c.0.s8 %v3776
        %v3778 = vlaneseq
        %v3779 = vshrl.u32 %v3778, 7
        %v3780 = vsub.s32 %v3777, %v3779
        %v3781 = vrot.slane %v3753, %v3780
        %v3782 = vcombine.low %v3760, %v3767
        %v3783 = vcombine.low %v3774, %v3781
        %v3785 = vunpack.c.l.s4 1966171168
        %v3786 = vunpack.c.0.s8 %v3785
        %v3787 = vlaneseq
        %v3788 = vshrl.u32 %v3787, 7
        %v3789 = vsub.s32 %v3786, %v3788
        %v3790 = vrot.slane %v3782, %v3789
        %v3792 = vunpack.c.l.s4 1966171168
        %v3793 = vunpack.c.0.s8 %v3792
        %v3794 = vlaneseq
        %v3795 = vshrl.u32 %v3794, 7
        %v3796 = vsub.s32 %v3793, %v3795
        %v3797 = vrot.slane %v3783, %v3796
        %v3798 = vcombine.low %v3790, %v3797
        %v3799 = vcombine.low %v2302, %v2306
        %v3800 = vcombine.low %v2310, %v2314
        %v3801 = vcombine.low %v2318, %v2322
        %v3802 = vcombine.low %v2326, %v2330
        %v3804 = vunpack.c.l.s4 1966171168
        %v3805 = vunpack.c.0.s8 %v3804
        %v3806 = vlaneseq
        %v3807 = vshrl.u32 %v3806, 7
        %v3808 = vsub.s32 %v3805, %v3807
        %v3809 = vrot.slane %v3799, %v3808
        %v3811 = vunpack.c.l.s4 1966171168
        %v3812 = vunpack.c.0.s8 %v3811
        %v3813 = vlaneseq
        %v3814 = vshrl.u32 %v3813, 7
        %v3815 = vsub.s32 %v3812, %v3814
        %v3816 = vrot.slane %v3800, %v3815
        %v3818 = vunpack.c.l.s4 1966171168
        %v3819 = vunpack.c.0.s8 %v3818
        %v3820 = vlaneseq
        %v3821 = vshrl.u32 %v3820, 7
        %v3822 = vsub.s32 %v3819, %v3821
        %v3823 = vrot.slane %v3801, %v3822
        %v3825 = vunpack.c.l.s4 1966171168
        %v3826 = vunpack.c.0.s8 %v3825
        %v3827 = vlaneseq
        %v3828 = vshrl.u32 %v3827, 7
        %v3829 = vsub.s32 %v3826, %v3828
        %v3830 = vrot.slane %v3802, %v3829
        %v3831 = vcombine.low %v3809, %v3816
        %v3832 = vcombine.low %v3823, %v3830
        %v3834 = vunpack.c.l.s4 1966171168
        %v3835 = vunpack.c.0.s8 %v3834
        %v3836 = vlaneseq
        %v3837 = vshrl.u32 %v3836, 7
        %v3838 = vsub.s32 %v3835, %v3837
        %v3839 = vrot.slane %v3831, %v3838
        %v3841 = vunpack.c.l.s4 1966171168
        %v3842 = vunpack.c.0.s8 %v3841
        %v3843 = vlaneseq
        %v3844 = vshrl.u32 %v3843, 7
        %v3845 = vsub.s32 %v3842, %v3844
        %v3846 = vrot.slane %v3832, %v3845
        %v3847 = vcombine.low %v3839, %v3846
        %v3848 = vcombine.low %v2334, %v2338
        %v3849 = vcombine.low %v2342, %v2346
        %v3850 = vcombine.low %v2350, %v2354
        %v3851 = vcombine.low %v2358, %v2362
        %v3853 = vunpack.c.l.s4 1966171168
        %v3854 = vunpack.c.0.s8 %v3853
        %v3855 = vlaneseq
        %v3856 = vshrl.u32 %v3855, 7
        %v3857 = vsub.s32 %v3854, %v3856
        %v3858 = vrot.slane %v3848, %v3857
        %v3860 = vunpack.c.l.s4 1966171168
        %v3861 = vunpack.c.0.s8 %v3860
        %v3862 = vlaneseq
        %v3863 = vshrl.u32 %v3862, 7
        %v3864 = vsub.s32 %v3861, %v3863
        %v3865 = vrot.slane %v3849, %v3864
        %v3867 = vunpack.c.l.s4 1966171168
        %v3868 = vunpack.c.0.s8 %v3867
        %v3869 = vlaneseq
        %v3870 = vshrl.u32 %v3869, 7
        %v3871 = vsub.s32 %v3868, %v3870
        %v3872 = vrot.slane %v3850, %v3871
        %v3874 = vunpack.c.l.s4 1966171168
        %v3875 = vunpack.c.0.s8 %v3874
        %v3876 = vlaneseq
        %v3877 = vshrl.u32 %v3876, 7
        %v3878 = vsub.s32 %v3875, %v3877
        %v3879 = vrot.slane %v3851, %v3878
        %v3880 = vcombine.low %v3858, %v3865
        %v3881 = vcombine.low %v3872, %v3879
        %v3883 = vunpack.c.l.s4 1966171168
        %v3884 = vunpack.c.0.s8 %v3883
        %v3885 = vlaneseq
        %v3886 = vshrl.u32 %v3885, 7
        %v3887 = vsub.s32 %v3884, %v3886
        %v3888 = vrot.slane %v3880, %v3887
        %v3890 = vunpack.c.l.s4 1966171168
        %v3891 = vunpack.c.0.s8 %v3890
        %v3892 = vlaneseq
        %v3893 = vshrl.u32 %v3892, 7
        %v3894 = vsub.s32 %v3891, %v3893
        %v3895 = vrot.slane %v3881, %v3894
        %v3896 = vcombine.low %v3888, %v3895
        %v3897 = vcombine.low %v2366, %v2370
        %v3898 = vcombine.low %v2374, %v2378
        %v3899 = vcombine.low %v2382, %v2386
        %v3900 = vcombine.low %v2390, %v2394
        %v3902 = vunpack.c.l.s4 1966171168
        %v3903 = vunpack.c.0.s8 %v3902
        %v3904 = vlaneseq
        %v3905 = vshrl.u32 %v3904, 7
        %v3906 = vsub.s32 %v3903, %v3905
        %v3907 = vrot.slane %v3897, %v3906
        %v3909 = vunpack.c.l.s4 1966171168
        %v3910 = vunpack.c.0.s8 %v3909
        %v3911 = vlaneseq
        %v3912 = vshrl.u32 %v3911, 7
        %v3913 = vsub.s32 %v3910, %v3912
        %v3914 = vrot.slane %v3898, %v3913
        %v3916 = vunpack.c.l.s4 1966171168
        %v3917 = vunpack.c.0.s8 %v3916
        %v3918 = vlaneseq
        %v3919 = vshrl.u32 %v3918, 7
        %v3920 = vsub.s32 %v3917, %v3919
        %v3921 = vrot.slane %v3899, %v3920
        %v3923 = vunpack.c.l.s4 1966171168
        %v3924 = vunpack.c.0.s8 %v3923
        %v3925 = vlaneseq
        %v3926 = vshrl.u32 %v3925, 7
        %v3927 = vsub.s32 %v3924, %v3926
        %v3928 = vrot.slane %v3900, %v3927
        %v3929 = vcombine.low %v3907, %v3914
        %v3930 = vcombine.low %v3921, %v3928
        %v3932 = vunpack.c.l.s4 1966171168
        %v3933 = vunpack.c.0.s8 %v3932
        %v3934 = vlaneseq
        %v3935 = vshrl.u32 %v3934, 7
        %v3936 = vsub.s32 %v3933, %v3935
        %v3937 = vrot.slane %v3929, %v3936
        %v3939 = vunpack.c.l.s4 1966171168
        %v3940 = vunpack.c.0.s8 %v3939
        %v3941 = vlaneseq
        %v3942 = vshrl.u32 %v3941, 7
        %v3943 = vsub.s32 %v3940, %v3942
        %v3944 = vrot.slane %v3930, %v3943
        %v3945 = vcombine.low %v3937, %v3944
        %v3946 = vcombine.low %v2398, %v2402
        %v3947 = vcombine.low %v2406, %v2410
        %v3948 = vcombine.low %v2414, %v2418
        %v3949 = vcombine.low %v2422, %v2426
        %v3951 = vunpack.c.l.s4 1966171168
        %v3952 = vunpack.c.0.s8 %v3951
        %v3953 = vlaneseq
        %v3954 = vshrl.u32 %v3953, 7
        %v3955 = vsub.s32 %v3952, %v3954
        %v3956 = vrot.slane %v3946, %v3955
        %v3958 = vunpack.c.l.s4 1966171168
        %v3959 = vunpack.c.0.s8 %v3958
        %v3960 = vlaneseq
        %v3961 = vshrl.u32 %v3960, 7
        %v3962 = vsub.s32 %v3959, %v3961
        %v3963 = vrot.slane %v3947, %v3962
        %v3965 = vunpack.c.l.s4 1966171168
        %v3966 = vunpack.c.0.s8 %v3965
        %v3967 = vlaneseq
        %v3968 = vshrl.u32 %v3967, 7
        %v3969 = vsub.s32 %v3966, %v3968
        %v3970 = vrot.slane %v3948, %v3969
        %v3972 = vunpack.c.l.s4 1966171168
        %v3973 = vunpack.c.0.s8 %v3972
        %v3974 = vlaneseq
        %v3975 = vshrl.u32 %v3974, 7
        %v3976 = vsub.s32 %v3973, %v3975
        %v3977 = vrot.slane %v3949, %v3976
        %v3978 = vcombine.low %v3956, %v3963
        %v3979 = vcombine.low %v3970, %v3977
        %v3981 = vunpack.c.l.s4 1966171168
        %v3982 = vunpack.c.0.s8 %v3981
        %v3983 = vlaneseq
        %v3984 = vshrl.u32 %v3983, 7
        %v3985 = vsub.s32 %v3982, %v3984
        %v3986 = vrot.slane %v3978, %v3985
        %v3988 = vunpack.c.l.s4 1966171168
        %v3989 = vunpack.c.0.s8 %v3988
        %v3990 = vlaneseq
        %v3991 = vshrl.u32 %v3990, 7
        %v3992 = vsub.s32 %v3989, %v3991
        %v3993 = vrot.slane %v3979, %v3992
        %v3994 = vcombine.low %v3986, %v3993
        %3995 = vset.pattern.permute.xlu0 0
        %3996 = vperm.xlu0 %3995, %v2475
        %v3997 = vpop.permute.xlu0 %3996
        %3998 = vset.pattern.permute.xlu0 0
        %3999 = vperm.xlu0 %3998, %v2524
        %v4000 = vpop.permute.xlu0 %3999
        %4001 = vset.pattern.permute.xlu0 0
        %4002 = vperm.xlu0 %4001, %v2573
        %v4003 = vpop.permute.xlu0 %4002
        %4004 = vset.pattern.permute.xlu0 0
        %4005 = vperm.xlu0 %4004, %v2622
        %v4006 = vpop.permute.xlu0 %4005
        %4007 = vset.pattern.permute.xlu0 0
        %4008 = vperm.xlu0 %4007, %v2671
        %v4009 = vpop.permute.xlu0 %4008
        %4010 = vset.pattern.permute.xlu0 0
        %4011 = vperm.xlu0 %4010, %v2720
        %v4012 = vpop.permute.xlu0 %4011
        %4013 = vset.pattern.permute.xlu0 0
        %4014 = vperm.xlu0 %4013, %v2769
        %v4015 = vpop.permute.xlu0 %4014
        %4016 = vset.pattern.permute.xlu0 0
        %4017 = vperm.xlu0 %4016, %v2818
        %v4018 = vpop.permute.xlu0 %4017
        %4019 = vset.pattern.permute.xlu0 0
        %4020 = vperm.xlu0 %4019, %v2867
        %v4021 = vpop.permute.xlu0 %4020
        %4022 = vset.pattern.permute.xlu0 0
        %4023 = vperm.xlu0 %4022, %v2916
        %v4024 = vpop.permute.xlu0 %4023
        %4025 = vset.pattern.permute.xlu0 0
        %4026 = vperm.xlu0 %4025, %v2965
        %v4027 = vpop.permute.xlu0 %4026
        %4028 = vset.pattern.permute.xlu0 0
        %4029 = vperm.xlu0 %4028, %v3014
        %v4030 = vpop.permute.xlu0 %4029
        %4031 = vset.pattern.permute.xlu0 0
        %4032 = vperm.xlu0 %4031, %v3063
        %v4033 = vpop.permute.xlu0 %4032
        %4034 = vset.pattern.permute.xlu0 0
        %4035 = vperm.xlu0 %4034, %v3112
        %v4036 = vpop.permute.xlu0 %4035
        %4037 = vset.pattern.permute.xlu0 0
        %4038 = vperm.xlu0 %4037, %v3161
        %v4039 = vpop.permute.xlu0 %4038
        %4040 = vset.pattern.permute.xlu0 0
        %4041 = vperm.xlu0 %4040, %v3210
        %v4042 = vpop.permute.xlu0 %4041
        %4043 = vset.pattern.permute.xlu0 0
        %4044 = vperm.xlu0 %4043, %v3259
        %v4045 = vpop.permute.xlu0 %4044
        %4046 = vset.pattern.permute.xlu0 0
        %4047 = vperm.xlu0 %4046, %v3308
        %v4048 = vpop.permute.xlu0 %4047
        %4049 = vset.pattern.permute.xlu0 0
        %4050 = vperm.xlu0 %4049, %v3357
        %v4051 = vpop.permute.xlu0 %4050
        %4052 = vset.pattern.permute.xlu0 0
        %4053 = vperm.xlu0 %4052, %v3406
        %v4054 = vpop.permute.xlu0 %4053
        %4055 = vset.pattern.permute.xlu0 0
        %4056 = vperm.xlu0 %4055, %v3455
        %v4057 = vpop.permute.xlu0 %4056
        %4058 = vset.pattern.permute.xlu0 0
        %4059 = vperm.xlu0 %4058, %v3504
        %v4060 = vpop.permute.xlu0 %4059
        %4061 = vset.pattern.permute.xlu0 0
        %4062 = vperm.xlu0 %4061, %v3553
        %v4063 = vpop.permute.xlu0 %4062
        %4064 = vset.pattern.permute.xlu0 0
        %4065 = vperm.xlu0 %4064, %v3602
        %v4066 = vpop.permute.xlu0 %4065
        %4067 = vset.pattern.permute.xlu0 0
        %4068 = vperm.xlu0 %4067, %v3651
        %v4069 = vpop.permute.xlu0 %4068
        %4070 = vset.pattern.permute.xlu0 0
        %4071 = vperm.xlu0 %4070, %v3700
        %v4072 = vpop.permute.xlu0 %4071
        %4073 = vset.pattern.permute.xlu0 0
        %4074 = vperm.xlu0 %4073, %v3749
        %v4075 = vpop.permute.xlu0 %4074
        %4076 = vset.pattern.permute.xlu0 0
        %4077 = vperm.xlu0 %4076, %v3798
        %v4078 = vpop.permute.xlu0 %4077
        %4079 = vset.pattern.permute.xlu0 0
        %4080 = vperm.xlu0 %4079, %v3847
        %v4081 = vpop.permute.xlu0 %4080
        %4082 = vset.pattern.permute.xlu0 0
        %4083 = vperm.xlu0 %4082, %v3896
        %v4084 = vpop.permute.xlu0 %4083
        %4085 = vset.pattern.permute.xlu0 0
        %4086 = vperm.xlu0 %4085, %v3945
        %v4087 = vpop.permute.xlu0 %4086
        %4088 = vset.pattern.permute.xlu0 0
        %4089 = vperm.xlu0 %4088, %v3994
        %v4090 = vpop.permute.xlu0 %4089
        %v4091 = vlaneseq
        %v4092 = vand.u32 %v4091, 127
        %v4093 = vlaneseq
        %v4094 = vshrl.u32 %v4093, 7
        %v4095 = vsub.s32 %v4092, %v4094
        %v4096 = vrot.slane %v3997, %v4095
        %v4097 = vadd.s32 %v4092, 4294967288
        %v4098 = vlaneseq
        %v4099 = vshrl.u32 %v4098, 7
        %v4100 = vsub.s32 %v4097, %v4099
        %v4101 = vrot.slane %v4000, %v4100
        %vm4102 = vcmask 130112
        %v4103 = vsel %vm4102, %v4101, %v4096
        %v4104 = vadd.s32 %v4092, 4294967280
        %v4105 = vlaneseq
        %v4106 = vshrl.u32 %v4105, 7
        %v4107 = vsub.s32 %v4104, %v4106
        %v4108 = vrot.slane %v4003, %v4107
        %vm4109 = vcmask 195712
        %v4110 = vsel %vm4109, %v4108, %v4103
        %v4111 = vadd.s32 %v4092, 4294967272
        %v4112 = vlaneseq
        %v4113 = vshrl.u32 %v4112, 7
        %v4114 = vsub.s32 %v4111, %v4113
        %v4115 = vrot.slane %v4006, %v4114
        %vm4116 = vcmask 261312
        %v4117 = vsel %vm4116, %v4115, %v4110
        %v4118 = vadd.s32 %v4092, 4294967264
        %v4119 = vlaneseq
        %v4120 = vshrl.u32 %v4119, 7
        %v4121 = vsub.s32 %v4118, %v4120
        %v4122 = vrot.slane %v4009, %v4121
        %vm4123 = vcmask 326912
        %v4124 = vsel %vm4123, %v4122, %v4117
        %v4125 = vadd.s32 %v4092, 4294967256
        %v4126 = vlaneseq
        %v4127 = vshrl.u32 %v4126, 7
        %v4128 = vsub.s32 %v4125, %v4127
        %v4129 = vrot.slane %v4012, %v4128
        %vm4130 = vcmask 392512
        %v4131 = vsel %vm4130, %v4129, %v4124
        %v4132 = vadd.s32 %v4092, 4294967248
        %v4133 = vlaneseq
        %v4134 = vshrl.u32 %v4133, 7
        %v4135 = vsub.s32 %v4132, %v4134
        %v4136 = vrot.slane %v4015, %v4135
        %vm4137 = vcmask 458112
        %v4138 = vsel %vm4137, %v4136, %v4131
        %v4139 = vadd.s32 %v4092, 4294967240
        %v4140 = vlaneseq
        %v4141 = vshrl.u32 %v4140, 7
        %v4142 = vsub.s32 %v4139, %v4141
        %v4143 = vrot.slane %v4018, %v4142
        %vm4144 = vcmask 523712
        %v4145 = vsel %vm4144, %v4143, %v4138
        %v4146 = vadd.s32 %v4092, 4294967232
        %v4147 = vlaneseq
        %v4148 = vshrl.u32 %v4147, 7
        %v4149 = vsub.s32 %v4146, %v4148
        %v4150 = vrot.slane %v4021, %v4149
        %vm4151 = vcmask 589312
        %v4152 = vsel %vm4151, %v4150, %v4145
        %v4153 = vadd.s32 %v4092, 4294967224
        %v4154 = vlaneseq
        %v4155 = vshrl.u32 %v4154, 7
        %v4156 = vsub.s32 %v4153, %v4155
        %v4157 = vrot.slane %v4024, %v4156
        %vm4158 = vcmask 654912
        %v4159 = vsel %vm4158, %v4157, %v4152
        %v4160 = vadd.s32 %v4092, 4294967216
        %v4161 = vlaneseq
        %v4162 = vshrl.u32 %v4161, 7
        %v4163 = vsub.s32 %v4160, %v4162
        %v4164 = vrot.slane %v4027, %v4163
        %vm4165 = vcmask 720512
        %v4166 = vsel %vm4165, %v4164, %v4159
        %v4167 = vadd.s32 %v4092, 4294967208
        %v4168 = vlaneseq
        %v4169 = vshrl.u32 %v4168, 7
        %v4170 = vsub.s32 %v4167, %v4169
        %v4171 = vrot.slane %v4030, %v4170
        %vm4172 = vcmask 786112
        %v4173 = vsel %vm4172, %v4171, %v4166
        %v4174 = vadd.s32 %v4092, 4294967200
        %v4175 = vlaneseq
        %v4176 = vshrl.u32 %v4175, 7
        %v4177 = vsub.s32 %v4174, %v4176
        %v4178 = vrot.slane %v4033, %v4177
        %vm4179 = vcmask 851712
        %v4180 = vsel %vm4179, %v4178, %v4173
        %v4181 = vadd.s32 %v4092, 4294967192
        %v4182 = vlaneseq
        %v4183 = vshrl.u32 %v4182, 7
        %v4184 = vsub.s32 %v4181, %v4183
        %v4185 = vrot.slane %v4036, %v4184
        %vm4186 = vcmask 917312
        %v4187 = vsel %vm4186, %v4185, %v4180
        %v4188 = vadd.s32 %v4092, 4294967184
        %v4189 = vlaneseq
        %v4190 = vshrl.u32 %v4189, 7
        %v4191 = vsub.s32 %v4188, %v4190
        %v4192 = vrot.slane %v4039, %v4191
        %vm4193 = vcmask 982912
        %v4194 = vsel %vm4193, %v4192, %v4187
        %v4195 = vadd.s32 %v4092, 4294967176
        %v4196 = vlaneseq
        %v4197 = vshrl.u32 %v4196, 7
        %v4198 = vsub.s32 %v4195, %v4197
        %v4199 = vrot.slane %v4042, %v4198
        %vm4200 = vcmask 1048512
        %v4201 = vsel %vm4200, %v4199, %v4194
        %v4202 = vlaneseq
        %v4203 = vshrl.u32 %v4202, 7
        %v4204 = vsub.s32 %v4092, %v4203
        %v4205 = vrot.slane %v4045, %v4204
        %v4206 = vlaneseq
        %v4207 = vshrl.u32 %v4206, 7
        %v4208 = vsub.s32 %v4097, %v4207
        %v4209 = vrot.slane %v4048, %v4208
        %v4210 = vsel %vm4102, %v4209, %v4205
        %v4211 = vlaneseq
        %v4212 = vshrl.u32 %v4211, 7
        %v4213 = vsub.s32 %v4104, %v4212
        %v4214 = vrot.slane %v4051, %v4213
        %v4215 = vsel %vm4109, %v4214, %v4210
        %v4216 = vlaneseq
        %v4217 = vshrl.u32 %v4216, 7
        %v4218 = vsub.s32 %v4111, %v4217
        %v4219 = vrot.slane %v4054, %v4218
        %v4220 = vsel %vm4116, %v4219, %v4215
        %v4221 = vlaneseq
        %v4222 = vshrl.u32 %v4221, 7
        %v4223 = vsub.s32 %v4118, %v4222
        %v4224 = vrot.slane %v4057, %v4223
        %v4225 = vsel %vm4123, %v4224, %v4220
        %v4226 = vlaneseq
        %v4227 = vshrl.u32 %v4226, 7
        %v4228 = vsub.s32 %v4125, %v4227
        %v4229 = vrot.slane %v4060, %v4228
        %v4230 = vsel %vm4130, %v4229, %v4225
        %v4231 = vlaneseq
        %v4232 = vshrl.u32 %v4231, 7
        %v4233 = vsub.s32 %v4132, %v4232
        %v4234 = vrot.slane %v4063, %v4233
        %v4235 = vsel %vm4137, %v4234, %v4230
        %v4236 = vlaneseq
        %v4237 = vshrl.u32 %v4236, 7
        %v4238 = vsub.s32 %v4139, %v4237
        %v4239 = vrot.slane %v4066, %v4238
        %v4240 = vsel %vm4144, %v4239, %v4235
        %v4241 = vlaneseq
        %v4242 = vshrl.u32 %v4241, 7
        %v4243 = vsub.s32 %v4146, %v4242
        %v4244 = vrot.slane %v4069, %v4243
        %v4245 = vsel %vm4151, %v4244, %v4240
        %v4246 = vlaneseq
        %v4247 = vshrl.u32 %v4246, 7
        %v4248 = vsub.s32 %v4153, %v4247
        %v4249 = vrot.slane %v4072, %v4248
        %v4250 = vsel %vm4158, %v4249, %v4245
        %v4251 = vlaneseq
        %v4252 = vshrl.u32 %v4251, 7
        %v4253 = vsub.s32 %v4160, %v4252
        %v4254 = vrot.slane %v4075, %v4253
        %v4255 = vsel %vm4165, %v4254, %v4250
        %v4256 = vlaneseq
        %v4257 = vshrl.u32 %v4256, 7
        %v4258 = vsub.s32 %v4167, %v4257
        %v4259 = vrot.slane %v4078, %v4258
        %v4260 = vsel %vm4172, %v4259, %v4255
        %v4261 = vlaneseq
        %v4262 = vshrl.u32 %v4261, 7
        %v4263 = vsub.s32 %v4174, %v4262
        %v4264 = vrot.slane %v4081, %v4263
        %v4265 = vsel %vm4179, %v4264, %v4260
        %v4266 = vlaneseq
        %v4267 = vshrl.u32 %v4266, 7
        %v4268 = vsub.s32 %v4181, %v4267
        %v4269 = vrot.slane %v4084, %v4268
        %v4270 = vsel %vm4186, %v4269, %v4265
        %v4271 = vlaneseq
        %v4272 = vshrl.u32 %v4271, 7
        %v4273 = vsub.s32 %v4188, %v4272
        %v4274 = vrot.slane %v4087, %v4273
        %v4275 = vsel %vm4193, %v4274, %v4270
        %v4276 = vlaneseq
        %v4277 = vshrl.u32 %v4276, 7
        %v4278 = vsub.s32 %v4195, %v4277
        %v4279 = vrot.slane %v4090, %v4278
        %v4280 = vsel %vm4200, %v4279, %v4275
        %v4281 = vcombine.low %v4201, %v4280
        %v4283 = vunpack.c.l.s4 1966171168
        %v4284 = vunpack.c.0.s8 %v4283
        %v4285 = vlaneseq
        %v4286 = vshrl.u32 %v4285, 7
        %v4287 = vsub.s32 %v4284, %v4286
        %v4288 = vrot.slane %v4281, %v4287
        %v4290 = vunpack.c.l.s4 1966171168
        %v4291 = vunpack.c.0.s8 %v4290
        %v4292 = vlaneseq
        %v4293 = vshrl.u32 %v4292, 7
        %v4294 = vsub.s32 %v4291, %v4293
        %v4295 = vrot.slane %v4288, %v4294
        %v4297 = vlaneseq
        %vm4298 = vcmp.ge.s32.totalorder %v4297, 0
        %vm4299 = vcmp.lt.s32.totalorder %v4297, 256
        %vm4300 = vmand %vm4298, %vm4299
        %4301 = vst.msk [vmem:[%s273] sm:$0x3] %vm4300, %v4295
        %s4302 = sand.u32 %s182, 1
        %s4303 = scalar_lea.sflag [#allocation4], %s4302
        %s4304 = sand.u32 %s182, 1
        %s4305 = smul.addr %s4304, 2
        %s4306 = scalar_lea.vmem [#allocation3], %s4305
        // Predicated region
        $region49: #{tpu_custom_call.1} parent=47 // pred_check
          %p4307 = pneg %p192
        $region50: #{tpu_custom_call.1} parent=47 // pred_check_branch
          %4309 = sbr.rel (%p4307) target = $region52
        $region51: #{tpu_custom_call.1} parent=47 // pred_region
          %s4310 = smul.u32 2, %s22
          %s4312 = ssub.s32 32, 32
          %4313 = vsyncadd %s4303, %s4312
          %s4314 = smul.addr %s4310, 16
          %s4315 = scalar_lea.hbm %s7, %s4314
          %s4317 = sshll.u32 %s4306, 4
          %s4318 = int_to_ptr.vmem [resolvable:$true] %s4317
          %4320 = dma.vmem_to_hbm [thread:$0]  %s4318, 32, %s4315, %s4303
        $region52: #{tpu_custom_call.1} parent=47 // pred_fallthru
          _
      $region48: #{tpu_custom_call.1} parent=5 // pred_fallthru
        _
      %p4321 = scmp.le.s32.totalorder 2, %s17
      // Predicated region
      $region53: #{tpu_custom_call.1} parent=5 // pred_check
        %p4322 = pneg %p4321
      $region54: #{tpu_custom_call.1} parent=5 // pred_check_branch
        %4324 = sbr.rel (%p4322) target = $region56
      $region55: #{tpu_custom_call.1} parent=5 // pred_region
        %s4325 = ssub.s32 %s17, 2
        // Predicated region
        $region57: #{tpu_custom_call.1} parent=55 // pred_check
          %p4326 = pneg %p198
        $region58: #{tpu_custom_call.1} parent=55 // pred_check_branch
          %4328 = sbr.rel (%p4326) target = $region60
        $region59: #{tpu_custom_call.1} parent=55 // pred_region
          %s4329 = sand.u32 %s183, 1
          %s4330 = scalar_lea.sflag [#allocation4], %s4329
          %s4331 = sand.u32 %s183, 1
          %s4332 = smul.addr %s4331, 2
          %s4333 = scalar_lea.vmem [#allocation3], %s4332
          %4334 = dma.done %s4330, 32
        $region60: #{tpu_custom_call.1} parent=55 // pred_fallthru
          _
      $region56: #{tpu_custom_call.1} parent=5 // pred_fallthru
        _
    $region6: #{tpu_custom_call.1} parent=1 // loop_footer
      %s21 = sadd.s32 1, %s17
    $region7: #{tpu_custom_call.1} parent=1 // loop_footer_branch
      %16 = sbr.rel target = $region3
    $region8: #{tpu_custom_call.1} parent=1 // loop_exit
      _
    %4335 = vsyncpa [#allocation4], 1
    %s4336 = scalar_lea.sflag [#allocation4], 1
    %4337 = vsyncpa %s4336, 1

</llo_original>
